<compile_context>
chip_gen: v6e
topology: v6e:2x2x1
jax: 0.10.0
libtpu: 0.0.40
codegen_flags: <defaults>
</compile_context>

<pallas_src>
import functools

import jax
import jax.numpy as jnp
from jax import lax
from jax.experimental import pallas as pl
from jax.experimental.pallas import tpu as pltpu


# ----------------------------------------------------------------------------
# Helpers
# ----------------------------------------------------------------------------
def _round_up(x, m):
    return (x + m - 1) // m * m


def _pick_time_block(S, max_tb):
    tb = max(1, min(max_tb, S))
    while S % tb:
        tb -= 1
    return tb


# ----------------------------------------------------------------------------
# Parallel tiled Linear kernel:  out = x @ w_t + b   (lane-dense, 128-padded N)
# Used for (a) the hoisted input->gates precompute and (b) the vocab projection.
# ----------------------------------------------------------------------------
def _linear_bias_kernel(x_ref, w_ref, b_ref, o_ref):
    acc = jnp.dot(x_ref[...], w_ref[...], preferred_element_type=jnp.float32)
    o_ref[...] = (acc + b_ref[...]).astype(o_ref.dtype)


def pallas_linear(x, w_t, b, *, matmul_dtype=jnp.float32):
    """x: (M, K), w_t: (K, N), b: (N,) or (1, N)  ->  (M, N) float32."""
    M, K = x.shape
    N = w_t.shape[1]

    Mp = _round_up(M, 8) if M <= 128 else _round_up(M, 128)
    Np = _round_up(N, 128)
    tm = min(Mp, 128)
    tn = 256 if Np % 256 == 0 else 128

    xp = x.astype(matmul_dtype)
    wp = w_t.astype(matmul_dtype)
    bp = b.reshape(1, N).astype(jnp.float32)
    if Mp != M:
        xp = jnp.pad(xp, ((0, Mp - M), (0, 0)))
    if Np != N:
        wp = jnp.pad(wp, ((0, 0), (0, Np - N)))
        bp = jnp.pad(bp, ((0, 0), (0, Np - N)))

    out = pl.pallas_call(
        _linear_bias_kernel,
        out_shape=jax.ShapeDtypeStruct((Mp, Np), jnp.float32),
        grid_spec=pltpu.PrefetchScalarGridSpec(
            num_scalar_prefetch=0,
            grid=(Mp // tm, Np // tn),
            in_specs=[
                pl.BlockSpec((tm, K), lambda i, j: (i, 0)),
                pl.BlockSpec((K, tn), lambda i, j: (0, j)),
                pl.BlockSpec((1, tn), lambda i, j: (0, j)),
            ],
            out_specs=pl.BlockSpec((tm, tn), lambda i, j: (i, j)),
        ),
        compiler_params=pltpu.CompilerParams(
            dimension_semantics=("parallel", "parallel"),
        ),
        cost_estimate=pl.CostEstimate(
            flops=2 * Mp * K * Np,
            transcendentals=0,
            bytes_accessed=(Mp * K + K * Np + Np + Mp * Np) * 4,
        ),
    )(xp, wp, bp)
    return out[:M, :N]


# ----------------------------------------------------------------------------
# Sequential LSTM recurrence kernel.
# Inputs per grid step: gx (TB, 4, B, H) = precomputed x@W_ih^T + bias (gate-major).
# Only the h @ W_hh^T path + gate nonlinearities + cell update run here.
# ----------------------------------------------------------------------------
def _lstm_scan_kernel(gx_ref, h0_ref, c0_ref, whh_ref,
                      hs_ref, hn_ref, cn_ref,
                      h_sc, c_sc):
    @pl.when(pl.program_id(0) == 0)
    def _():
        h_sc[...] = h0_ref[...].astype(jnp.float32)
        c_sc[...] = c0_ref[...].astype(jnp.float32)

    tb = gx_ref.shape[0]
    mm_dtype = whh_ref.dtype

    def step(t, carry):
        h = h_sc[...]                       # (B, H) f32
        c = c_sc[...]                       # (B, H) f32
        gx_t = gx_ref[t]                    # (4, B, H) f32 (includes biases)
        hm = h.astype(mm_dtype)

        # Gate-major layout: each gate is a whole (B, H) array -> no sub-vreg
        # cross-lane slicing inside the serial loop.
        g = [gx_t[k] + jnp.dot(hm, whh_ref[k], preferred_element_type=jnp.float32)
             for k in range(4)]              # PyTorch gate order [i, f, g, o]

        i_gate = jax.nn.sigmoid(g[0])
        f_gate = jax.nn.sigmoid(g[1])
        g_gate = jnp.tanh(g[2])
        o_gate = jax.nn.sigmoid(g[3])

        c_new = f_gate * c + i_gate * g_gate
        h_new = o_gate * jnp.tanh(c_new)

        h_sc[...] = h_new
        c_sc[...] = c_new
        hs_ref[t] = h_new.astype(hs_ref.dtype)
        return carry

    lax.fori_loop(0, tb, step, 0, unroll=True)

    hn_ref[...] = h_sc[...].astype(hn_ref.dtype)
    cn_ref[...] = c_sc[...].astype(cn_ref.dtype)


def lstm_layer(gates_x, h0, c0, w_hh_g, *, time_block=8):
    """gates_x: (S, 4, B, H) f32 (x-path gates incl. bias), w_hh_g: (4, H, H).

    Returns (hidden_states (S,B,H) f32, h_n (B,H) f32, c_n (B,H) f32).
    """
    S, G, B, H = gates_x.shape
    assert G == 4
    tb = _pick_time_block(S, time_block)

    cost = pl.CostEstimate(
        flops=2 * S * B * 4 * H * H + 12 * S * B * H,
        transcendentals=5 * S * B * H,
        bytes_accessed=(gates_x.size + S * B * H + 4 * B * H) * 4
        + w_hh_g.size * w_hh_g.dtype.itemsize,
    )

    grid_spec = pltpu.PrefetchScalarGridSpec(
        num_scalar_prefetch=0,
        grid=(S // tb,),
        in_specs=[
            pl.BlockSpec((tb, 4, B, H), lambda i: (i, 0, 0, 0)),   # gx per time block
            pl.BlockSpec((B, H), lambda i: (0, 0)),                # h0
            pl.BlockSpec((B, H), lambda i: (0, 0)),                # c0
            # Loop-invariant weight: fully resident in VMEM, no double buffering.
            pl.BlockSpec(memory_space=pltpu.MemorySpace.VMEM),     # W_hh (4,H,H)
        ],
        out_specs=[
            pl.BlockSpec((tb, B, H), lambda i: (i, 0, 0)),         # hidden states
            pl.BlockSpec((B, H), lambda i: (0, 0)),                # final h
            pl.BlockSpec((B, H), lambda i: (0, 0)),                # final c
        ],
        scratch_shapes=[
            pltpu.VMEM((B, H), jnp.float32),
            pltpu.VMEM((B, H), jnp.float32),
        ],
    )

    hs, h_n, c_n = pl.pallas_call(
        _lstm_scan_kernel,
        out_shape=(
            jax.ShapeDtypeStruct((S, B, H), jnp.float32),
            jax.ShapeDtypeStruct((B, H), jnp.float32),
            jax.ShapeDtypeStruct((B, H), jnp.float32),
        ),
        grid_spec=grid_spec,
        compiler_params=pltpu.CompilerParams(
            dimension_semantics=("arbitrary",),   # true recurrence: sequential
        ),
        cost_estimate=cost,
    )(gates_x, h0, c0, w_hh_g)
    return hs, h_n, c_n


# ----------------------------------------------------------------------------
# Hoisted x-path gate precompute: one big parallel matmul over all timesteps.
# ----------------------------------------------------------------------------
def _input_gates(emb, w_ih_t, b_gates, matmul_dtype):
    S, B, E = emb.shape
    H = w_ih_t.shape[1] // 4
    gx = pallas_linear(emb.reshape(S * B, E), w_ih_t, b_gates,
                       matmul_dtype=matmul_dtype)          # (S*B, 4H) f32
    return gx.reshape(S, B, 4, H).transpose(0, 2, 1, 3)    # (S, 4, B, H)


# ----------------------------------------------------------------------------
# Seq2Seq forward (attn=False, valid=False path of the PyTorch module).
# ----------------------------------------------------------------------------
def seq2seq_forward(source, target, params, *, matmul_dtype=jnp.float32,
                    time_block=8):
    """source: (S_src, B) int32, target: (S_tgt, B) int32.

    Returns (decoder_outputs (S_tgt, B, V) f32,
             (h_n (1, B, H) f32, c_n (1, B, H) f32)).
    """
    H = params["enc_w_hh_g"].shape[-1]
    E = params["enc_w_ih_t"].shape[0]
    B = source.shape[1]
    # The PyTorch DecoderRNN silently requires embedding_size == hidden_size.
    assert params["dec_embedding"].shape[1] == params["dec_w_ih_t"].shape[0]

    enc_w_hh = params["enc_w_hh_g"].astype(matmul_dtype)
    dec_w_hh = params["dec_w_hh_g"].astype(matmul_dtype)

    # ---- Encoder: embedding -> LSTM (initial hidden = zeros) ----
    h0 = jnp.zeros((B, H), jnp.float32)
    c0 = jnp.zeros((B, H), jnp.float32)
    src_emb = jnp.take(params["enc_embedding"], source, axis=0)       # (S_src, B, E)
    enc_gx = _input_gates(src_emb, params["enc_w_ih_t"],
                          params["enc_b_gates"], matmul_dtype)
    _enc_outputs, enc_hn, enc_cn = lstm_layer(enc_gx, h0, c0, enc_w_hh,
                                              time_block=time_block)
    # (encoder_outputs are unused by DecoderRNN.forward; hidden reshape for
    #  n_layers=1 is the identity.)

    # ---- Decoder: embedding -> dropout(eval) -> LSTM -> Linear ----
    # TODO(synk): nn.Dropout is identity in eval mode; training-mode dropout omitted.
    tgt_emb = jnp.take(params["dec_embedding"], target, axis=0)       # (S_tgt, B, H==E)
    dec_gx = _input_gates(tgt_emb, params["dec_w_ih_t"],
                          params["dec_b_gates"], matmul_dtype)
    dec_hs, dec_hn, dec_cn = lstm_layer(dec_gx, enc_hn, enc_cn, dec_w_hh,
                                        time_block=time_block)

    # Output projection over ALL timesteps at once (parallel grid, 128-padded V).
    S_t = dec_hs.shape[0]
    logits = pallas_linear(dec_hs.reshape(S_t * B, H), params["dec_w_out_t"],
                           params["dec_b_out"], matmul_dtype=matmul_dtype)
    logits = logits.reshape(S_t, B, -1)

    return logits, (dec_hn[None], dec_cn[None])


# ----------------------------------------------------------------------------
# Deterministic parameter init (shapes follow the PyTorch module's __init__).
# ----------------------------------------------------------------------------
def init_params(key, input_size, output_size, embedding_size, hidden_size):
    E, H, Vi, Vo = embedding_size, hidden_size, input_size, output_size
    ks = jax.random.split(key, 12)
    bound = 1.0 / float(H) ** 0.5

    def uni(k, shape):
        return jax.random.uniform(k, shape, jnp.float32, -bound, bound)

    def gate_major(w_hh):   # (4H, H) -> (4, H, H), [k] = W_hh^T[:, kH:(k+1)H]
        return w_hh.T.reshape(H, 4, H).transpose(1, 0, 2)

    enc_embedding = jax.random.normal(ks[0], (Vi, E), jnp.float32)
    enc_w_ih = uni(ks[1], (4 * H, E))
    enc_w_hh = uni(ks[2], (4 * H, H))
    enc_b = uni(ks[3], (4 * H,)) + uni(ks[4], (4 * H,))

    dec_embedding = jax.random.normal(ks[5], (Vo, H), jnp.float32)
    dec_w_ih = uni(ks[6], (4 * H, E))
    dec_w_hh = uni(ks[7], (4 * H, H))
    dec_b = uni(ks[8], (4 * H,)) + uni(ks[9], (4 * H,))

    w_out = uni(ks[10], (Vo, H))
    b_out = uni(ks[11], (Vo,))

    return {
        "enc_embedding": enc_embedding,
        "enc_w_ih_t": enc_w_ih.T,            # (E, 4H)
        "enc_w_hh_g": gate_major(enc_w_hh),  # (4, H, H)
        "enc_b_gates": enc_b,                # (4H,)
        "dec_embedding": dec_embedding,
        "dec_w_ih_t": dec_w_ih.T,            # (E, 4H)
        "dec_w_hh_g": gate_major(dec_w_hh),  # (4, H, H)
        "dec_b_gates": dec_b,                # (4H,)
        "dec_w_out_t": w_out.T,              # (H, V)
        "dec_b_out": b_out[None, :],         # (1, V)
    }


# ----------------------------------------------------------------------------
# Pure-JAX reference (mirrors torch semantics) for a correctness check.
# ----------------------------------------------------------------------------
def seq2seq_reference(source, target, params):
    H = params["enc_w_hh_g"].shape[-1]
    B = source.shape[1]

    def lstm_ref(emb, h0, c0, w_ih_t, w_hh_g, b_gates):
        w_hh_t = jnp.transpose(w_hh_g, (1, 0, 2)).reshape(H, 4 * H)
        b = b_gates[None, :]

        def step(carry, x):
            h, c = carry
            gates = x @ w_ih_t + h @ w_hh_t + b
            i = jax.nn.sigmoid(gates[:, 0 * H:1 * H])
            f = jax.nn.sigmoid(gates[:, 1 * H:2 * H])
            g = jnp.tanh(gates[:, 2 * H:3 * H])
            o = jax.nn.sigmoid(gates[:, 3 * H:4 * H])
            c_new = f * c + i * g
            h_new = o * jnp.tanh(c_new)
            return (h_new, c_new), h_new

        (hn, cn), hs = lax.scan(step, (h0, c0), emb)
        return hs, hn, cn

    h0 = jnp.zeros((B, H), jnp.float32)
    c0 = jnp.zeros((B, H), jnp.float32)
    src_emb = jnp.take(params["enc_embedding"], source, axis=0)
    _enc_hs, enc_hn, enc_cn = lstm_ref(src_emb, h0, c0, params["enc_w_ih_t"],
                                       params["enc_w_hh_g"], params["enc_b_gates"])
    tgt_emb = jnp.take(params["dec_embedding"], target, axis=0)
    dec_hs, dec_hn, dec_cn = lstm_ref(tgt_emb, enc_hn, enc_cn, params["dec_w_ih_t"],
                                      params["dec_w_hh_g"], params["dec_b_gates"])
    logits = dec_hs @ params["dec_w_out_t"] + params["dec_b_out"]
    return logits, (dec_hn[None], dec_cn[None])


if __name__ == "__main__":
    SRC_SEQ, TGT_SEQ, BATCH = 8, 8, 2
    EMBED = HIDDEN = 32          # module requires embedding_size == hidden_size
    IN_VOCAB, OUT_VOCAB = 50, 64

    key = jax.random.PRNGKey(0)
    kp, ksrc, ktgt = jax.random.split(key, 3)
    params = init_params(kp, IN_VOCAB, OUT_VOCAB, EMBED, HIDDEN)

    source = jax.random.randint(ksrc, (SRC_SEQ, BATCH), 0, IN_VOCAB, dtype=jnp.int32)
    target = jax.random.randint(ktgt, (TGT_SEQ, BATCH), 0, OUT_VOCAB, dtype=jnp.int32)

    # f32 path (tight correctness check vs pure-JAX reference)
    fwd = jax.jit(functools.partial(seq2seq_forward, params=params))
    logits, (h_n, c_n) = fwd(source, target)
    jax.block_until_ready((logits, h_n, c_n))

    ref_logits, (ref_h, ref_c) = seq2seq_reference(source, target, params)
    assert logits.shape == (TGT_SEQ, BATCH, OUT_VOCAB)
    assert h_n.shape == (1, BATCH, HIDDEN) and c_n.shape == (1, BATCH, HIDDEN)
    assert jnp.allclose(logits, ref_logits, atol=1e-5, rtol=1e-5)
    assert jnp.allclose(h_n, ref_h, atol=1e-5, rtol=1e-5)
    assert jnp.allclose(c_n, ref_c, atol=1e-5, rtol=1e-5)

    # bf16 matmul-operand variant (v6e/v7x MXU-rate + VMEM feedback);
    # elementwise/cell math stays f32. Looser tolerance is expected.
    fwd_bf16 = jax.jit(lambda s, t: seq2seq_forward(
        s, t, params, matmul_dtype=jnp.bfloat16))
    logits_bf16, _ = fwd_bf16(source, target)
    jax.block_until_ready(logits_bf16)
    assert jnp.allclose(logits_bf16, ref_logits, atol=1e-1, rtol=1e-1)

    print("KERNEL_OK")
</pallas_src>

<mosaic_0001>
module attributes {stable_mosaic.version = 11 : i64} {
  func.func @_lstm_scan_kernel(%arg0: i32, %arg1: memref<8x4x2x32xf32, #tpu.memory_space<vmem>>, %arg2: memref<2x32xf32, #tpu.memory_space<vmem>>, %arg3: memref<2x32xf32, #tpu.memory_space<vmem>>, %arg4: memref<4x32x32xf32, #tpu.memory_space<vmem>>, %arg5: memref<8x2x32xf32, #tpu.memory_space<vmem>>, %arg6: memref<2x32xf32, #tpu.memory_space<vmem>>, %arg7: memref<2x32xf32, #tpu.memory_space<vmem>>, %arg8: memref<2x32xf32, #tpu.memory_space<vmem>>, %arg9: memref<2x32xf32, #tpu.memory_space<vmem>>) attributes {dimension_semantics = [#tpu.dimension_semantics<arbitrary>], iteration_bounds = array<i64: 1>, scalar_prefetch = 0 : i64, scratch_operands = 2 : i64, tpu.core_type = #tpu.core_type<tc>, window_params = [{transform_indices = @transform_0, window_bounds = array<i64: 8, 4, 2, 32>}, {pipeline_mode = #tpu.pipeline_mode<synchronous>, transform_indices = @transform_1, window_bounds = array<i64: 2, 32>}, {pipeline_mode = #tpu.pipeline_mode<synchronous>, transform_indices = @transform_2, window_bounds = array<i64: 2, 32>}, {pipeline_mode = #tpu.pipeline_mode<synchronous>, transform_indices = @transform_3, window_bounds = array<i64: 4, 32, 32>}, {transform_indices = @transform_4, window_bounds = array<i64: 8, 2, 32>}, {pipeline_mode = #tpu.pipeline_mode<synchronous>, transform_indices = @transform_5, window_bounds = array<i64: 2, 32>}, {pipeline_mode = #tpu.pipeline_mode<synchronous>, transform_indices = @transform_6, window_bounds = array<i64: 2, 32>}]} {
    %c0_i32 = arith.constant 0 : i32
    %0 = arith.cmpi eq, %arg0, %c0_i32 : i32
    %1 = arith.extui %0 : i1 to i32
    %c0_i32_0 = arith.constant 0 : i32
    %2 = arith.cmpi ne, %1, %c0_i32_0 : i32
    scf.if %2 {
      %c0_261 = arith.constant 0 : index
      %c0_262 = arith.constant 0 : index
      %455 = vector.load %arg2[%c0_261, %c0_262] : memref<2x32xf32, #tpu.memory_space<vmem>>, vector<2x32xf32>
      %c0_263 = arith.constant 0 : index
      %c0_264 = arith.constant 0 : index
      %456 = vector.load %arg8[%c0_263, %c0_264] : memref<2x32xf32, #tpu.memory_space<vmem>>, vector<2x32xf32>
      tpu.vector_store %arg8[%c0_263, %c0_264], %455 {strides = array<i32>} : memref<2x32xf32, #tpu.memory_space<vmem>>, vector<2x32xf32>,
      %c0_265 = arith.constant 0 : index
      %c0_266 = arith.constant 0 : index
      %457 = vector.load %arg3[%c0_265, %c0_266] : memref<2x32xf32, #tpu.memory_space<vmem>>, vector<2x32xf32>
      %c0_267 = arith.constant 0 : index
      %c0_268 = arith.constant 0 : index
      %458 = vector.load %arg9[%c0_267, %c0_268] : memref<2x32xf32, #tpu.memory_space<vmem>>, vector<2x32xf32>
      tpu.vector_store %arg9[%c0_267, %c0_268], %457 {strides = array<i32>} : memref<2x32xf32, #tpu.memory_space<vmem>>, vector<2x32xf32>,
    } else {
    }
    %c0_i32_1 = arith.constant 0 : i32
    %c0 = arith.constant 0 : index
    %c0_2 = arith.constant 0 : index
    %3 = vector.load %arg8[%c0, %c0_2] : memref<2x32xf32, #tpu.memory_space<vmem>>, vector<2x32xf32>
    %c0_3 = arith.constant 0 : index
    %c0_4 = arith.constant 0 : index
    %4 = vector.load %arg9[%c0_3, %c0_4] : memref<2x32xf32, #tpu.memory_space<vmem>>, vector<2x32xf32>
    %5 = arith.index_cast %c0_i32_1 : i32 to index
    %c0_5 = arith.constant 0 : index
    %c0_6 = arith.constant 0 : index
    %c0_7 = arith.constant 0 : index
    %6 = vector.load %arg1[%5, %c0_5, %c0_6, %c0_7] : memref<8x4x2x32xf32, #tpu.memory_space<vmem>>, vector<1x4x2x32xf32>
    %7 = vector.shape_cast %6 : vector<1x4x2x32xf32> to vector<4x2x32xf32>
    %8 = vector.extract_strided_slice %7 {offsets = [0, 0, 0], sizes = [1, 2, 32], strides = [1, 1, 1]} : vector<4x2x32xf32> to vector<1x2x32xf32>
    %9 = vector.shape_cast %8 : vector<1x2x32xf32> to vector<2x32xf32>
    %c0_8 = arith.constant 0 : index
    %c0_9 = arith.constant 0 : index
    %c0_10 = arith.constant 0 : index
    %10 = vector.load %arg4[%c0_8, %c0_9, %c0_10] : memref<4x32x32xf32, #tpu.memory_space<vmem>>, vector<1x32x32xf32>
    %11 = vector.shape_cast %10 : vector<1x32x32xf32> to vector<32x32xf32>
    %cst = arith.constant dense<0.000000e+00> : vector<2x32xf32>
    %12 = tpu.matmul %3, %11, %cst {dimension_numbers = #tpu.dot_dimension_numbers<[1], [0], [0], [1], [0, 0, 1, 1], [], []>} : vector<2x32xf32>, vector<32x32xf32>, vector<2x32xf32> -> vector<2x32xf32>
    %13 = arith.addf %9, %12 : vector<2x32xf32>
    %14 = vector.extract_strided_slice %7 {offsets = [1, 0, 0], sizes = [1, 2, 32], strides = [1, 1, 1]} : vector<4x2x32xf32> to vector<1x2x32xf32>
    %15 = vector.shape_cast %14 : vector<1x2x32xf32> to vector<2x32xf32>
    %c1 = arith.constant 1 : index
    %c0_11 = arith.constant 0 : index
    %c0_12 = arith.constant 0 : index
    %16 = vector.load %arg4[%c1, %c0_11, %c0_12] : memref<4x32x32xf32, #tpu.memory_space<vmem>>, vector<1x32x32xf32>
    %17 = vector.shape_cast %16 : vector<1x32x32xf32> to vector<32x32xf32>
    %cst_13 = arith.constant dense<0.000000e+00> : vector<2x32xf32>
    %18 = tpu.matmul %3, %17, %cst_13 {dimension_numbers = #tpu.dot_dimension_numbers<[1], [0], [0], [1], [0, 0, 1, 1], [], []>} : vector<2x32xf32>, vector<32x32xf32>, vector<2x32xf32> -> vector<2x32xf32>
    %19 = arith.addf %15, %18 : vector<2x32xf32>
    %20 = vector.extract_strided_slice %7 {offsets = [2, 0, 0], sizes = [1, 2, 32], strides = [1, 1, 1]} : vector<4x2x32xf32> to vector<1x2x32xf32>
    %21 = vector.shape_cast %20 : vector<1x2x32xf32> to vector<2x32xf32>
    %c2 = arith.constant 2 : index
    %c0_14 = arith.constant 0 : index
    %c0_15 = arith.constant 0 : index
    %22 = vector.load %arg4[%c2, %c0_14, %c0_15] : memref<4x32x32xf32, #tpu.memory_space<vmem>>, vector<1x32x32xf32>
    %23 = vector.shape_cast %22 : vector<1x32x32xf32> to vector<32x32xf32>
    %cst_16 = arith.constant dense<0.000000e+00> : vector<2x32xf32>
    %24 = tpu.matmul %3, %23, %cst_16 {dimension_numbers = #tpu.dot_dimension_numbers<[1], [0], [0], [1], [0, 0, 1, 1], [], []>} : vector<2x32xf32>, vector<32x32xf32>, vector<2x32xf32> -> vector<2x32xf32>
    %25 = arith.addf %21, %24 : vector<2x32xf32>
    %26 = vector.extract_strided_slice %7 {offsets = [3, 0, 0], sizes = [1, 2, 32], strides = [1, 1, 1]} : vector<4x2x32xf32> to vector<1x2x32xf32>
    %27 = vector.shape_cast %26 : vector<1x2x32xf32> to vector<2x32xf32>
    %c3 = arith.constant 3 : index
    %c0_17 = arith.constant 0 : index
    %c0_18 = arith.constant 0 : index
    %28 = vector.load %arg4[%c3, %c0_17, %c0_18] : memref<4x32x32xf32, #tpu.memory_space<vmem>>, vector<1x32x32xf32>
    %29 = vector.shape_cast %28 : vector<1x32x32xf32> to vector<32x32xf32>
    %cst_19 = arith.constant dense<0.000000e+00> : vector<2x32xf32>
    %30 = tpu.matmul %3, %29, %cst_19 {dimension_numbers = #tpu.dot_dimension_numbers<[1], [0], [0], [1], [0, 0, 1, 1], [], []>} : vector<2x32xf32>, vector<32x32xf32>, vector<2x32xf32> -> vector<2x32xf32>
    %31 = arith.addf %27, %30 : vector<2x32xf32>
    %32 = arith.negf %13 : vector<2x32xf32>
    %33 = math.exp %32 : vector<2x32xf32>
    %cst_20 = arith.constant 1.000000e+00 : f32
    %34 = vector.broadcast %cst_20 : f32 to vector<2x32xf32>
    %35 = arith.addf %34, %33 : vector<2x32xf32>
    %36 = arith.divf %34, %35 : vector<2x32xf32>
    %37 = arith.negf %19 : vector<2x32xf32>
    %38 = math.exp %37 : vector<2x32xf32>
    %cst_21 = arith.constant 1.000000e+00 : f32
    %39 = vector.broadcast %cst_21 : f32 to vector<2x32xf32>
    %40 = arith.addf %39, %38 : vector<2x32xf32>
    %41 = arith.divf %39, %40 : vector<2x32xf32>
    %42 = math.tanh %25 : vector<2x32xf32>
    %43 = arith.negf %31 : vector<2x32xf32>
    %44 = math.exp %43 : vector<2x32xf32>
    %cst_22 = arith.constant 1.000000e+00 : f32
    %45 = vector.broadcast %cst_22 : f32 to vector<2x32xf32>
    %46 = arith.addf %45, %44 : vector<2x32xf32>
    %47 = arith.divf %45, %46 : vector<2x32xf32>
    %48 = arith.mulf %41, %4 : vector<2x32xf32>
    %49 = arith.mulf %36, %42 : vector<2x32xf32>
    %50 = arith.addf %48, %49 : vector<2x32xf32>
    %51 = math.tanh %50 : vector<2x32xf32>
    %52 = arith.mulf %47, %51 : vector<2x32xf32>
    %c0_23 = arith.constant 0 : index
    %c0_24 = arith.constant 0 : index
    %53 = vector.load %arg8[%c0_23, %c0_24] : memref<2x32xf32, #tpu.memory_space<vmem>>, vector<2x32xf32>
    tpu.vector_store %arg8[%c0_23, %c0_24], %52 {strides = array<i32>} : memref<2x32xf32, #tpu.memory_space<vmem>>, vector<2x32xf32>,
    %c0_25 = arith.constant 0 : index
    %c0_26 = arith.constant 0 : index
    %54 = vector.load %arg9[%c0_25, %c0_26] : memref<2x32xf32, #tpu.memory_space<vmem>>, vector<2x32xf32>
    tpu.vector_store %arg9[%c0_25, %c0_26], %50 {strides = array<i32>} : memref<2x32xf32, #tpu.memory_space<vmem>>, vector<2x32xf32>,
    %55 = arith.index_cast %c0_i32_1 : i32 to index
    %c0_27 = arith.constant 0 : index
    %c0_28 = arith.constant 0 : index
    %56 = vector.load %arg5[%55, %c0_27, %c0_28] : memref<8x2x32xf32, #tpu.memory_space<vmem>>, vector<1x2x32xf32>
    %57 = vector.shape_cast %56 : vector<1x2x32xf32> to vector<2x32xf32>
    %58 = vector.shape_cast %52 : vector<2x32xf32> to vector<1x2x32xf32>
    tpu.vector_store %arg5[%55, %c0_27, %c0_28], %58 {strides = array<i32>} : memref<8x2x32xf32, #tpu.memory_space<vmem>>, vector<1x2x32xf32>,
    %c1_i32 = arith.constant 1 : i32
    %c0_29 = arith.constant 0 : index
    %c0_30 = arith.constant 0 : index
    %59 = vector.load %arg8[%c0_29, %c0_30] : memref<2x32xf32, #tpu.memory_space<vmem>>, vector<2x32xf32>
    %c0_31 = arith.constant 0 : index
    %c0_32 = arith.constant 0 : index
    %60 = vector.load %arg9[%c0_31, %c0_32] : memref<2x32xf32, #tpu.memory_space<vmem>>, vector<2x32xf32>
    %61 = arith.index_cast %c1_i32 : i32 to index
    %c0_33 = arith.constant 0 : index
    %c0_34 = arith.constant 0 : index
    %c0_35 = arith.constant 0 : index
    %62 = vector.load %arg1[%61, %c0_33, %c0_34, %c0_35] : memref<8x4x2x32xf32, #tpu.memory_space<vmem>>, vector<1x4x2x32xf32>
    %63 = vector.shape_cast %62 : vector<1x4x2x32xf32> to vector<4x2x32xf32>
    %64 = vector.extract_strided_slice %63 {offsets = [0, 0, 0], sizes = [1, 2, 32], strides = [1, 1, 1]} : vector<4x2x32xf32> to vector<1x2x32xf32>
    %65 = vector.shape_cast %64 : vector<1x2x32xf32> to vector<2x32xf32>
    %c0_36 = arith.constant 0 : index
    %c0_37 = arith.constant 0 : index
    %c0_38 = arith.constant 0 : index
    %66 = vector.load %arg4[%c0_36, %c0_37, %c0_38] : memref<4x32x32xf32, #tpu.memory_space<vmem>>, vector<1x32x32xf32>
    %67 = vector.shape_cast %66 : vector<1x32x32xf32> to vector<32x32xf32>
    %cst_39 = arith.constant dense<0.000000e+00> : vector<2x32xf32>
    %68 = tpu.matmul %59, %67, %cst_39 {dimension_numbers = #tpu.dot_dimension_numbers<[1], [0], [0], [1], [0, 0, 1, 1], [], []>} : vector<2x32xf32>, vector<32x32xf32>, vector<2x32xf32> -> vector<2x32xf32>
    %69 = arith.addf %65, %68 : vector<2x32xf32>
    %70 = vector.extract_strided_slice %63 {offsets = [1, 0, 0], sizes = [1, 2, 32], strides = [1, 1, 1]} : vector<4x2x32xf32> to vector<1x2x32xf32>
    %71 = vector.shape_cast %70 : vector<1x2x32xf32> to vector<2x32xf32>
    %c1_40 = arith.constant 1 : index
    %c0_41 = arith.constant 0 : index
    %c0_42 = arith.constant 0 : index
    %72 = vector.load %arg4[%c1_40, %c0_41, %c0_42] : memref<4x32x32xf32, #tpu.memory_space<vmem>>, vector<1x32x32xf32>
    %73 = vector.shape_cast %72 : vector<1x32x32xf32> to vector<32x32xf32>
    %cst_43 = arith.constant dense<0.000000e+00> : vector<2x32xf32>
    %74 = tpu.matmul %59, %73, %cst_43 {dimension_numbers = #tpu.dot_dimension_numbers<[1], [0], [0], [1], [0, 0, 1, 1], [], []>} : vector<2x32xf32>, vector<32x32xf32>, vector<2x32xf32> -> vector<2x32xf32>
    %75 = arith.addf %71, %74 : vector<2x32xf32>
    %76 = vector.extract_strided_slice %63 {offsets = [2, 0, 0], sizes = [1, 2, 32], strides = [1, 1, 1]} : vector<4x2x32xf32> to vector<1x2x32xf32>
    %77 = vector.shape_cast %76 : vector<1x2x32xf32> to vector<2x32xf32>
    %c2_44 = arith.constant 2 : index
    %c0_45 = arith.constant 0 : index
    %c0_46 = arith.constant 0 : index
    %78 = vector.load %arg4[%c2_44, %c0_45, %c0_46] : memref<4x32x32xf32, #tpu.memory_space<vmem>>, vector<1x32x32xf32>
    %79 = vector.shape_cast %78 : vector<1x32x32xf32> to vector<32x32xf32>
    %cst_47 = arith.constant dense<0.000000e+00> : vector<2x32xf32>
    %80 = tpu.matmul %59, %79, %cst_47 {dimension_numbers = #tpu.dot_dimension_numbers<[1], [0], [0], [1], [0, 0, 1, 1], [], []>} : vector<2x32xf32>, vector<32x32xf32>, vector<2x32xf32> -> vector<2x32xf32>
    %81 = arith.addf %77, %80 : vector<2x32xf32>
    %82 = vector.extract_strided_slice %63 {offsets = [3, 0, 0], sizes = [1, 2, 32], strides = [1, 1, 1]} : vector<4x2x32xf32> to vector<1x2x32xf32>
    %83 = vector.shape_cast %82 : vector<1x2x32xf32> to vector<2x32xf32>
    %c3_48 = arith.constant 3 : index
    %c0_49 = arith.constant 0 : index
    %c0_50 = arith.constant 0 : index
    %84 = vector.load %arg4[%c3_48, %c0_49, %c0_50] : memref<4x32x32xf32, #tpu.memory_space<vmem>>, vector<1x32x32xf32>
    %85 = vector.shape_cast %84 : vector<1x32x32xf32> to vector<32x32xf32>
    %cst_51 = arith.constant dense<0.000000e+00> : vector<2x32xf32>
    %86 = tpu.matmul %59, %85, %cst_51 {dimension_numbers = #tpu.dot_dimension_numbers<[1], [0], [0], [1], [0, 0, 1, 1], [], []>} : vector<2x32xf32>, vector<32x32xf32>, vector<2x32xf32> -> vector<2x32xf32>
    %87 = arith.addf %83, %86 : vector<2x32xf32>
    %88 = arith.negf %69 : vector<2x32xf32>
    %89 = math.exp %88 : vector<2x32xf32>
    %cst_52 = arith.constant 1.000000e+00 : f32
    %90 = vector.broadcast %cst_52 : f32 to vector<2x32xf32>
    %91 = arith.addf %90, %89 : vector<2x32xf32>
    %92 = arith.divf %90, %91 : vector<2x32xf32>
    %93 = arith.negf %75 : vector<2x32xf32>
    %94 = math.exp %93 : vector<2x32xf32>
    %cst_53 = arith.constant 1.000000e+00 : f32
    %95 = vector.broadcast %cst_53 : f32 to vector<2x32xf32>
    %96 = arith.addf %95, %94 : vector<2x32xf32>
    %97 = arith.divf %95, %96 : vector<2x32xf32>
    %98 = math.tanh %81 : vector<2x32xf32>
    %99 = arith.negf %87 : vector<2x32xf32>
    %100 = math.exp %99 : vector<2x32xf32>
    %cst_54 = arith.constant 1.000000e+00 : f32
    %101 = vector.broadcast %cst_54 : f32 to vector<2x32xf32>
    %102 = arith.addf %101, %100 : vector<2x32xf32>
    %103 = arith.divf %101, %102 : vector<2x32xf32>
    %104 = arith.mulf %97, %60 : vector<2x32xf32>
    %105 = arith.mulf %92, %98 : vector<2x32xf32>
    %106 = arith.addf %104, %105 : vector<2x32xf32>
    %107 = math.tanh %106 : vector<2x32xf32>
    %108 = arith.mulf %103, %107 : vector<2x32xf32>
    %c0_55 = arith.constant 0 : index
    %c0_56 = arith.constant 0 : index
    %109 = vector.load %arg8[%c0_55, %c0_56] : memref<2x32xf32, #tpu.memory_space<vmem>>, vector<2x32xf32>
    tpu.vector_store %arg8[%c0_55, %c0_56], %108 {strides = array<i32>} : memref<2x32xf32, #tpu.memory_space<vmem>>, vector<2x32xf32>,
    %c0_57 = arith.constant 0 : index
    %c0_58 = arith.constant 0 : index
    %110 = vector.load %arg9[%c0_57, %c0_58] : memref<2x32xf32, #tpu.memory_space<vmem>>, vector<2x32xf32>
    tpu.vector_store %arg9[%c0_57, %c0_58], %106 {strides = array<i32>} : memref<2x32xf32, #tpu.memory_space<vmem>>, vector<2x32xf32>,
    %111 = arith.index_cast %c1_i32 : i32 to index
    %c0_59 = arith.constant 0 : index
    %c0_60 = arith.constant 0 : index
    %112 = vector.load %arg5[%111, %c0_59, %c0_60] : memref<8x2x32xf32, #tpu.memory_space<vmem>>, vector<1x2x32xf32>
    %113 = vector.shape_cast %112 : vector<1x2x32xf32> to vector<2x32xf32>
    %114 = vector.shape_cast %108 : vector<2x32xf32> to vector<1x2x32xf32>
    tpu.vector_store %arg5[%111, %c0_59, %c0_60], %114 {strides = array<i32>} : memref<8x2x32xf32, #tpu.memory_space<vmem>>, vector<1x2x32xf32>,
    %c2_i32 = arith.constant 2 : i32
    %c0_61 = arith.constant 0 : index
    %c0_62 = arith.constant 0 : index
    %115 = vector.load %arg8[%c0_61, %c0_62] : memref<2x32xf32, #tpu.memory_space<vmem>>, vector<2x32xf32>
    %c0_63 = arith.constant 0 : index
    %c0_64 = arith.constant 0 : index
    %116 = vector.load %arg9[%c0_63, %c0_64] : memref<2x32xf32, #tpu.memory_space<vmem>>, vector<2x32xf32>
    %117 = arith.index_cast %c2_i32 : i32 to index
    %c0_65 = arith.constant 0 : index
    %c0_66 = arith.constant 0 : index
    %c0_67 = arith.constant 0 : index
    %118 = vector.load %arg1[%117, %c0_65, %c0_66, %c0_67] : memref<8x4x2x32xf32, #tpu.memory_space<vmem>>, vector<1x4x2x32xf32>
    %119 = vector.shape_cast %118 : vector<1x4x2x32xf32> to vector<4x2x32xf32>
    %120 = vector.extract_strided_slice %119 {offsets = [0, 0, 0], sizes = [1, 2, 32], strides = [1, 1, 1]} : vector<4x2x32xf32> to vector<1x2x32xf32>
    %121 = vector.shape_cast %120 : vector<1x2x32xf32> to vector<2x32xf32>
    %c0_68 = arith.constant 0 : index
    %c0_69 = arith.constant 0 : index
    %c0_70 = arith.constant 0 : index
    %122 = vector.load %arg4[%c0_68, %c0_69, %c0_70] : memref<4x32x32xf32, #tpu.memory_space<vmem>>, vector<1x32x32xf32>
    %123 = vector.shape_cast %122 : vector<1x32x32xf32> to vector<32x32xf32>
    %cst_71 = arith.constant dense<0.000000e+00> : vector<2x32xf32>
    %124 = tpu.matmul %115, %123, %cst_71 {dimension_numbers = #tpu.dot_dimension_numbers<[1], [0], [0], [1], [0, 0, 1, 1], [], []>} : vector<2x32xf32>, vector<32x32xf32>, vector<2x32xf32> -> vector<2x32xf32>
    %125 = arith.addf %121, %124 : vector<2x32xf32>
    %126 = vector.extract_strided_slice %119 {offsets = [1, 0, 0], sizes = [1, 2, 32], strides = [1, 1, 1]} : vector<4x2x32xf32> to vector<1x2x32xf32>
    %127 = vector.shape_cast %126 : vector<1x2x32xf32> to vector<2x32xf32>
    %c1_72 = arith.constant 1 : index
    %c0_73 = arith.constant 0 : index
    %c0_74 = arith.constant 0 : index
    %128 = vector.load %arg4[%c1_72, %c0_73, %c0_74] : memref<4x32x32xf32, #tpu.memory_space<vmem>>, vector<1x32x32xf32>
    %129 = vector.shape_cast %128 : vector<1x32x32xf32> to vector<32x32xf32>
    %cst_75 = arith.constant dense<0.000000e+00> : vector<2x32xf32>
    %130 = tpu.matmul %115, %129, %cst_75 {dimension_numbers = #tpu.dot_dimension_numbers<[1], [0], [0], [1], [0, 0, 1, 1], [], []>} : vector<2x32xf32>, vector<32x32xf32>, vector<2x32xf32> -> vector<2x32xf32>
    %131 = arith.addf %127, %130 : vector<2x32xf32>
    %132 = vector.extract_strided_slice %119 {offsets = [2, 0, 0], sizes = [1, 2, 32], strides = [1, 1, 1]} : vector<4x2x32xf32> to vector<1x2x32xf32>
    %133 = vector.shape_cast %132 : vector<1x2x32xf32> to vector<2x32xf32>
    %c2_76 = arith.constant 2 : index
    %c0_77 = arith.constant 0 : index
    %c0_78 = arith.constant 0 : index
    %134 = vector.load %arg4[%c2_76, %c0_77, %c0_78] : memref<4x32x32xf32, #tpu.memory_space<vmem>>, vector<1x32x32xf32>
    %135 = vector.shape_cast %134 : vector<1x32x32xf32> to vector<32x32xf32>
    %cst_79 = arith.constant dense<0.000000e+00> : vector<2x32xf32>
    %136 = tpu.matmul %115, %135, %cst_79 {dimension_numbers = #tpu.dot_dimension_numbers<[1], [0], [0], [1], [0, 0, 1, 1], [], []>} : vector<2x32xf32>, vector<32x32xf32>, vector<2x32xf32> -> vector<2x32xf32>
    %137 = arith.addf %133, %136 : vector<2x32xf32>
    %138 = vector.extract_strided_slice %119 {offsets = [3, 0, 0], sizes = [1, 2, 32], strides = [1, 1, 1]} : vector<4x2x32xf32> to vector<1x2x32xf32>
    %139 = vector.shape_cast %138 : vector<1x2x32xf32> to vector<2x32xf32>
    %c3_80 = arith.constant 3 : index
    %c0_81 = arith.constant 0 : index
    %c0_82 = arith.constant 0 : index
    %140 = vector.load %arg4[%c3_80, %c0_81, %c0_82] : memref<4x32x32xf32, #tpu.memory_space<vmem>>, vector<1x32x32xf32>
    %141 = vector.shape_cast %140 : vector<1x32x32xf32> to vector<32x32xf32>
    %cst_83 = arith.constant dense<0.000000e+00> : vector<2x32xf32>
    %142 = tpu.matmul %115, %141, %cst_83 {dimension_numbers = #tpu.dot_dimension_numbers<[1], [0], [0], [1], [0, 0, 1, 1], [], []>} : vector<2x32xf32>, vector<32x32xf32>, vector<2x32xf32> -> vector<2x32xf32>
    %143 = arith.addf %139, %142 : vector<2x32xf32>
    %144 = arith.negf %125 : vector<2x32xf32>
    %145 = math.exp %144 : vector<2x32xf32>
    %cst_84 = arith.constant 1.000000e+00 : f32
    %146 = vector.broadcast %cst_84 : f32 to vector<2x32xf32>
    %147 = arith.addf %146, %145 : vector<2x32xf32>
    %148 = arith.divf %146, %147 : vector<2x32xf32>
    %149 = arith.negf %131 : vector<2x32xf32>
    %150 = math.exp %149 : vector<2x32xf32>
    %cst_85 = arith.constant 1.000000e+00 : f32
    %151 = vector.broadcast %cst_85 : f32 to vector<2x32xf32>
    %152 = arith.addf %151, %150 : vector<2x32xf32>
    %153 = arith.divf %151, %152 : vector<2x32xf32>
    %154 = math.tanh %137 : vector<2x32xf32>
    %155 = arith.negf %143 : vector<2x32xf32>
    %156 = math.exp %155 : vector<2x32xf32>
    %cst_86 = arith.constant 1.000000e+00 : f32
    %157 = vector.broadcast %cst_86 : f32 to vector<2x32xf32>
    %158 = arith.addf %157, %156 : vector<2x32xf32>
    %159 = arith.divf %157, %158 : vector<2x32xf32>
    %160 = arith.mulf %153, %116 : vector<2x32xf32>
    %161 = arith.mulf %148, %154 : vector<2x32xf32>
    %162 = arith.addf %160, %161 : vector<2x32xf32>
    %163 = math.tanh %162 : vector<2x32xf32>
    %164 = arith.mulf %159, %163 : vector<2x32xf32>
    %c0_87 = arith.constant 0 : index
    %c0_88 = arith.constant 0 : index
    %165 = vector.load %arg8[%c0_87, %c0_88] : memref<2x32xf32, #tpu.memory_space<vmem>>, vector<2x32xf32>
    tpu.vector_store %arg8[%c0_87, %c0_88], %164 {strides = array<i32>} : memref<2x32xf32, #tpu.memory_space<vmem>>, vector<2x32xf32>,
    %c0_89 = arith.constant 0 : index
    %c0_90 = arith.constant 0 : index
    %166 = vector.load %arg9[%c0_89, %c0_90] : memref<2x32xf32, #tpu.memory_space<vmem>>, vector<2x32xf32>
    tpu.vector_store %arg9[%c0_89, %c0_90], %162 {strides = array<i32>} : memref<2x32xf32, #tpu.memory_space<vmem>>, vector<2x32xf32>,
    %167 = arith.index_cast %c2_i32 : i32 to index
    %c0_91 = arith.constant 0 : index
    %c0_92 = arith.constant 0 : index
    %168 = vector.load %arg5[%167, %c0_91, %c0_92] : memref<8x2x32xf32, #tpu.memory_space<vmem>>, vector<1x2x32xf32>
    %169 = vector.shape_cast %168 : vector<1x2x32xf32> to vector<2x32xf32>
    %170 = vector.shape_cast %164 : vector<2x32xf32> to vector<1x2x32xf32>
    tpu.vector_store %arg5[%167, %c0_91, %c0_92], %170 {strides = array<i32>} : memref<8x2x32xf32, #tpu.memory_space<vmem>>, vector<1x2x32xf32>,
    %c3_i32 = arith.constant 3 : i32
    %c0_93 = arith.constant 0 : index
    %c0_94 = arith.constant 0 : index
    %171 = vector.load %arg8[%c0_93, %c0_94] : memref<2x32xf32, #tpu.memory_space<vmem>>, vector<2x32xf32>
    %c0_95 = arith.constant 0 : index
    %c0_96 = arith.constant 0 : index
    %172 = vector.load %arg9[%c0_95, %c0_96] : memref<2x32xf32, #tpu.memory_space<vmem>>, vector<2x32xf32>
    %173 = arith.index_cast %c3_i32 : i32 to index
    %c0_97 = arith.constant 0 : index
    %c0_98 = arith.constant 0 : index
    %c0_99 = arith.constant 0 : index
    %174 = vector.load %arg1[%173, %c0_97, %c0_98, %c0_99] : memref<8x4x2x32xf32, #tpu.memory_space<vmem>>, vector<1x4x2x32xf32>
    %175 = vector.shape_cast %174 : vector<1x4x2x32xf32> to vector<4x2x32xf32>
    %176 = vector.extract_strided_slice %175 {offsets = [0, 0, 0], sizes = [1, 2, 32], strides = [1, 1, 1]} : vector<4x2x32xf32> to vector<1x2x32xf32>
    %177 = vector.shape_cast %176 : vector<1x2x32xf32> to vector<2x32xf32>
    %c0_100 = arith.constant 0 : index
    %c0_101 = arith.constant 0 : index
    %c0_102 = arith.constant 0 : index
    %178 = vector.load %arg4[%c0_100, %c0_101, %c0_102] : memref<4x32x32xf32, #tpu.memory_space<vmem>>, vector<1x32x32xf32>
    %179 = vector.shape_cast %178 : vector<1x32x32xf32> to vector<32x32xf32>
    %cst_103 = arith.constant dense<0.000000e+00> : vector<2x32xf32>
    %180 = tpu.matmul %171, %179, %cst_103 {dimension_numbers = #tpu.dot_dimension_numbers<[1], [0], [0], [1], [0, 0, 1, 1], [], []>} : vector<2x32xf32>, vector<32x32xf32>, vector<2x32xf32> -> vector<2x32xf32>
    %181 = arith.addf %177, %180 : vector<2x32xf32>
    %182 = vector.extract_strided_slice %175 {offsets = [1, 0, 0], sizes = [1, 2, 32], strides = [1, 1, 1]} : vector<4x2x32xf32> to vector<1x2x32xf32>
    %183 = vector.shape_cast %182 : vector<1x2x32xf32> to vector<2x32xf32>
    %c1_104 = arith.constant 1 : index
    %c0_105 = arith.constant 0 : index
    %c0_106 = arith.constant 0 : index
    %184 = vector.load %arg4[%c1_104, %c0_105, %c0_106] : memref<4x32x32xf32, #tpu.memory_space<vmem>>, vector<1x32x32xf32>
    %185 = vector.shape_cast %184 : vector<1x32x32xf32> to vector<32x32xf32>
    %cst_107 = arith.constant dense<0.000000e+00> : vector<2x32xf32>
    %186 = tpu.matmul %171, %185, %cst_107 {dimension_numbers = #tpu.dot_dimension_numbers<[1], [0], [0], [1], [0, 0, 1, 1], [], []>} : vector<2x32xf32>, vector<32x32xf32>, vector<2x32xf32> -> vector<2x32xf32>
    %187 = arith.addf %183, %186 : vector<2x32xf32>
    %188 = vector.extract_strided_slice %175 {offsets = [2, 0, 0], sizes = [1, 2, 32], strides = [1, 1, 1]} : vector<4x2x32xf32> to vector<1x2x32xf32>
    %189 = vector.shape_cast %188 : vector<1x2x32xf32> to vector<2x32xf32>
    %c2_108 = arith.constant 2 : index
    %c0_109 = arith.constant 0 : index
    %c0_110 = arith.constant 0 : index
    %190 = vector.load %arg4[%c2_108, %c0_109, %c0_110] : memref<4x32x32xf32, #tpu.memory_space<vmem>>, vector<1x32x32xf32>
    %191 = vector.shape_cast %190 : vector<1x32x32xf32> to vector<32x32xf32>
    %cst_111 = arith.constant dense<0.000000e+00> : vector<2x32xf32>
    %192 = tpu.matmul %171, %191, %cst_111 {dimension_numbers = #tpu.dot_dimension_numbers<[1], [0], [0], [1], [0, 0, 1, 1], [], []>} : vector<2x32xf32>, vector<32x32xf32>, vector<2x32xf32> -> vector<2x32xf32>
    %193 = arith.addf %189, %192 : vector<2x32xf32>
    %194 = vector.extract_strided_slice %175 {offsets = [3, 0, 0], sizes = [1, 2, 32], strides = [1, 1, 1]} : vector<4x2x32xf32> to vector<1x2x32xf32>
    %195 = vector.shape_cast %194 : vector<1x2x32xf32> to vector<2x32xf32>
    %c3_112 = arith.constant 3 : index
    %c0_113 = arith.constant 0 : index
    %c0_114 = arith.constant 0 : index
    %196 = vector.load %arg4[%c3_112, %c0_113, %c0_114] : memref<4x32x32xf32, #tpu.memory_space<vmem>>, vector<1x32x32xf32>
    %197 = vector.shape_cast %196 : vector<1x32x32xf32> to vector<32x32xf32>
    %cst_115 = arith.constant dense<0.000000e+00> : vector<2x32xf32>
    %198 = tpu.matmul %171, %197, %cst_115 {dimension_numbers = #tpu.dot_dimension_numbers<[1], [0], [0], [1], [0, 0, 1, 1], [], []>} : vector<2x32xf32>, vector<32x32xf32>, vector<2x32xf32> -> vector<2x32xf32>
    %199 = arith.addf %195, %198 : vector<2x32xf32>
    %200 = arith.negf %181 : vector<2x32xf32>
    %201 = math.exp %200 : vector<2x32xf32>
    %cst_116 = arith.constant 1.000000e+00 : f32
    %202 = vector.broadcast %cst_116 : f32 to vector<2x32xf32>
    %203 = arith.addf %202, %201 : vector<2x32xf32>
    %204 = arith.divf %202, %203 : vector<2x32xf32>
    %205 = arith.negf %187 : vector<2x32xf32>
    %206 = math.exp %205 : vector<2x32xf32>
    %cst_117 = arith.constant 1.000000e+00 : f32
    %207 = vector.broadcast %cst_117 : f32 to vector<2x32xf32>
    %208 = arith.addf %207, %206 : vector<2x32xf32>
    %209 = arith.divf %207, %208 : vector<2x32xf32>
    %210 = math.tanh %193 : vector<2x32xf32>
    %211 = arith.negf %199 : vector<2x32xf32>
    %212 = math.exp %211 : vector<2x32xf32>
    %cst_118 = arith.constant 1.000000e+00 : f32
    %213 = vector.broadcast %cst_118 : f32 to vector<2x32xf32>
    %214 = arith.addf %213, %212 : vector<2x32xf32>
    %215 = arith.divf %213, %214 : vector<2x32xf32>
    %216 = arith.mulf %209, %172 : vector<2x32xf32>
    %217 = arith.mulf %204, %210 : vector<2x32xf32>
    %218 = arith.addf %216, %217 : vector<2x32xf32>
    %219 = math.tanh %218 : vector<2x32xf32>
    %220 = arith.mulf %215, %219 : vector<2x32xf32>
    %c0_119 = arith.constant 0 : index
    %c0_120 = arith.constant 0 : index
    %221 = vector.load %arg8[%c0_119, %c0_120] : memref<2x32xf32, #tpu.memory_space<vmem>>, vector<2x32xf32>
    tpu.vector_store %arg8[%c0_119, %c0_120], %220 {strides = array<i32>} : memref<2x32xf32, #tpu.memory_space<vmem>>, vector<2x32xf32>,
    %c0_121 = arith.constant 0 : index
    %c0_122 = arith.constant 0 : index
    %222 = vector.load %arg9[%c0_121, %c0_122] : memref<2x32xf32, #tpu.memory_space<vmem>>, vector<2x32xf32>
    tpu.vector_store %arg9[%c0_121, %c0_122], %218 {strides = array<i32>} : memref<2x32xf32, #tpu.memory_space<vmem>>, vector<2x32xf32>,
    %223 = arith.index_cast %c3_i32 : i32 to index
    %c0_123 = arith.constant 0 : index
    %c0_124 = arith.constant 0 : index
    %224 = vector.load %arg5[%223, %c0_123, %c0_124] : memref<8x2x32xf32, #tpu.memory_space<vmem>>, vector<1x2x32xf32>
    %225 = vector.shape_cast %224 : vector<1x2x32xf32> to vector<2x32xf32>
    %226 = vector.shape_cast %220 : vector<2x32xf32> to vector<1x2x32xf32>
    tpu.vector_store %arg5[%223, %c0_123, %c0_124], %226 {strides = array<i32>} : memref<8x2x32xf32, #tpu.memory_space<vmem>>, vector<1x2x32xf32>,
    %c4_i32 = arith.constant 4 : i32
    %c0_125 = arith.constant 0 : index
    %c0_126 = arith.constant 0 : index
    %227 = vector.load %arg8[%c0_125, %c0_126] : memref<2x32xf32, #tpu.memory_space<vmem>>, vector<2x32xf32>
    %c0_127 = arith.constant 0 : index
    %c0_128 = arith.constant 0 : index
    %228 = vector.load %arg9[%c0_127, %c0_128] : memref<2x32xf32, #tpu.memory_space<vmem>>, vector<2x32xf32>
    %229 = arith.index_cast %c4_i32 : i32 to index
    %c0_129 = arith.constant 0 : index
    %c0_130 = arith.constant 0 : index
    %c0_131 = arith.constant 0 : index
    %230 = vector.load %arg1[%229, %c0_129, %c0_130, %c0_131] : memref<8x4x2x32xf32, #tpu.memory_space<vmem>>, vector<1x4x2x32xf32>
    %231 = vector.shape_cast %230 : vector<1x4x2x32xf32> to vector<4x2x32xf32>
    %232 = vector.extract_strided_slice %231 {offsets = [0, 0, 0], sizes = [1, 2, 32], strides = [1, 1, 1]} : vector<4x2x32xf32> to vector<1x2x32xf32>
    %233 = vector.shape_cast %232 : vector<1x2x32xf32> to vector<2x32xf32>
    %c0_132 = arith.constant 0 : index
    %c0_133 = arith.constant 0 : index
    %c0_134 = arith.constant 0 : index
    %234 = vector.load %arg4[%c0_132, %c0_133, %c0_134] : memref<4x32x32xf32, #tpu.memory_space<vmem>>, vector<1x32x32xf32>
    %235 = vector.shape_cast %234 : vector<1x32x32xf32> to vector<32x32xf32>
    %cst_135 = arith.constant dense<0.000000e+00> : vector<2x32xf32>
    %236 = tpu.matmul %227, %235, %cst_135 {dimension_numbers = #tpu.dot_dimension_numbers<[1], [0], [0], [1], [0, 0, 1, 1], [], []>} : vector<2x32xf32>, vector<32x32xf32>, vector<2x32xf32> -> vector<2x32xf32>
    %237 = arith.addf %233, %236 : vector<2x32xf32>
    %238 = vector.extract_strided_slice %231 {offsets = [1, 0, 0], sizes = [1, 2, 32], strides = [1, 1, 1]} : vector<4x2x32xf32> to vector<1x2x32xf32>
    %239 = vector.shape_cast %238 : vector<1x2x32xf32> to vector<2x32xf32>
    %c1_136 = arith.constant 1 : index
    %c0_137 = arith.constant 0 : index
    %c0_138 = arith.constant 0 : index
    %240 = vector.load %arg4[%c1_136, %c0_137, %c0_138] : memref<4x32x32xf32, #tpu.memory_space<vmem>>, vector<1x32x32xf32>
    %241 = vector.shape_cast %240 : vector<1x32x32xf32> to vector<32x32xf32>
    %cst_139 = arith.constant dense<0.000000e+00> : vector<2x32xf32>
    %242 = tpu.matmul %227, %241, %cst_139 {dimension_numbers = #tpu.dot_dimension_numbers<[1], [0], [0], [1], [0, 0, 1, 1], [], []>} : vector<2x32xf32>, vector<32x32xf32>, vector<2x32xf32> -> vector<2x32xf32>
    %243 = arith.addf %239, %242 : vector<2x32xf32>
    %244 = vector.extract_strided_slice %231 {offsets = [2, 0, 0], sizes = [1, 2, 32], strides = [1, 1, 1]} : vector<4x2x32xf32> to vector<1x2x32xf32>
    %245 = vector.shape_cast %244 : vector<1x2x32xf32> to vector<2x32xf32>
    %c2_140 = arith.constant 2 : index
    %c0_141 = arith.constant 0 : index
    %c0_142 = arith.constant 0 : index
    %246 = vector.load %arg4[%c2_140, %c0_141, %c0_142] : memref<4x32x32xf32, #tpu.memory_space<vmem>>, vector<1x32x32xf32>
    %247 = vector.shape_cast %246 : vector<1x32x32xf32> to vector<32x32xf32>
    %cst_143 = arith.constant dense<0.000000e+00> : vector<2x32xf32>
    %248 = tpu.matmul %227, %247, %cst_143 {dimension_numbers = #tpu.dot_dimension_numbers<[1], [0], [0], [1], [0, 0, 1, 1], [], []>} : vector<2x32xf32>, vector<32x32xf32>, vector<2x32xf32> -> vector<2x32xf32>
    %249 = arith.addf %245, %248 : vector<2x32xf32>
    %250 = vector.extract_strided_slice %231 {offsets = [3, 0, 0], sizes = [1, 2, 32], strides = [1, 1, 1]} : vector<4x2x32xf32> to vector<1x2x32xf32>
    %251 = vector.shape_cast %250 : vector<1x2x32xf32> to vector<2x32xf32>
    %c3_144 = arith.constant 3 : index
    %c0_145 = arith.constant 0 : index
    %c0_146 = arith.constant 0 : index
    %252 = vector.load %arg4[%c3_144, %c0_145, %c0_146] : memref<4x32x32xf32, #tpu.memory_space<vmem>>, vector<1x32x32xf32>
    %253 = vector.shape_cast %252 : vector<1x32x32xf32> to vector<32x32xf32>
    %cst_147 = arith.constant dense<0.000000e+00> : vector<2x32xf32>
    %254 = tpu.matmul %227, %253, %cst_147 {dimension_numbers = #tpu.dot_dimension_numbers<[1], [0], [0], [1], [0, 0, 1, 1], [], []>} : vector<2x32xf32>, vector<32x32xf32>, vector<2x32xf32> -> vector<2x32xf32>
    %255 = arith.addf %251, %254 : vector<2x32xf32>
    %256 = arith.negf %237 : vector<2x32xf32>
    %257 = math.exp %256 : vector<2x32xf32>
    %cst_148 = arith.constant 1.000000e+00 : f32
    %258 = vector.broadcast %cst_148 : f32 to vector<2x32xf32>
    %259 = arith.addf %258, %257 : vector<2x32xf32>
    %260 = arith.divf %258, %259 : vector<2x32xf32>
    %261 = arith.negf %243 : vector<2x32xf32>
    %262 = math.exp %261 : vector<2x32xf32>
    %cst_149 = arith.constant 1.000000e+00 : f32
    %263 = vector.broadcast %cst_149 : f32 to vector<2x32xf32>
    %264 = arith.addf %263, %262 : vector<2x32xf32>
    %265 = arith.divf %263, %264 : vector<2x32xf32>
    %266 = math.tanh %249 : vector<2x32xf32>
    %267 = arith.negf %255 : vector<2x32xf32>
    %268 = math.exp %267 : vector<2x32xf32>
    %cst_150 = arith.constant 1.000000e+00 : f32
    %269 = vector.broadcast %cst_150 : f32 to vector<2x32xf32>
    %270 = arith.addf %269, %268 : vector<2x32xf32>
    %271 = arith.divf %269, %270 : vector<2x32xf32>
    %272 = arith.mulf %265, %228 : vector<2x32xf32>
    %273 = arith.mulf %260, %266 : vector<2x32xf32>
    %274 = arith.addf %272, %273 : vector<2x32xf32>
    %275 = math.tanh %274 : vector<2x32xf32>
    %276 = arith.mulf %271, %275 : vector<2x32xf32>
    %c0_151 = arith.constant 0 : index
    %c0_152 = arith.constant 0 : index
    %277 = vector.load %arg8[%c0_151, %c0_152] : memref<2x32xf32, #tpu.memory_space<vmem>>, vector<2x32xf32>
    tpu.vector_store %arg8[%c0_151, %c0_152], %276 {strides = array<i32>} : memref<2x32xf32, #tpu.memory_space<vmem>>, vector<2x32xf32>,
    %c0_153 = arith.constant 0 : index
    %c0_154 = arith.constant 0 : index
    %278 = vector.load %arg9[%c0_153, %c0_154] : memref<2x32xf32, #tpu.memory_space<vmem>>, vector<2x32xf32>
    tpu.vector_store %arg9[%c0_153, %c0_154], %274 {strides = array<i32>} : memref<2x32xf32, #tpu.memory_space<vmem>>, vector<2x32xf32>,
    %279 = arith.index_cast %c4_i32 : i32 to index
    %c0_155 = arith.constant 0 : index
    %c0_156 = arith.constant 0 : index
    %280 = vector.load %arg5[%279, %c0_155, %c0_156] : memref<8x2x32xf32, #tpu.memory_space<vmem>>, vector<1x2x32xf32>
    %281 = vector.shape_cast %280 : vector<1x2x32xf32> to vector<2x32xf32>
    %282 = vector.shape_cast %276 : vector<2x32xf32> to vector<1x2x32xf32>
    tpu.vector_store %arg5[%279, %c0_155, %c0_156], %282 {strides = array<i32>} : memref<8x2x32xf32, #tpu.memory_space<vmem>>, vector<1x2x32xf32>,
    %c5_i32 = arith.constant 5 : i32
    %c0_157 = arith.constant 0 : index
    %c0_158 = arith.constant 0 : index
    %283 = vector.load %arg8[%c0_157, %c0_158] : memref<2x32xf32, #tpu.memory_space<vmem>>, vector<2x32xf32>
    %c0_159 = arith.constant 0 : index
    %c0_160 = arith.constant 0 : index
    %284 = vector.load %arg9[%c0_159, %c0_160] : memref<2x32xf32, #tpu.memory_space<vmem>>, vector<2x32xf32>
    %285 = arith.index_cast %c5_i32 : i32 to index
    %c0_161 = arith.constant 0 : index
    %c0_162 = arith.constant 0 : index
    %c0_163 = arith.constant 0 : index
    %286 = vector.load %arg1[%285, %c0_161, %c0_162, %c0_163] : memref<8x4x2x32xf32, #tpu.memory_space<vmem>>, vector<1x4x2x32xf32>
    %287 = vector.shape_cast %286 : vector<1x4x2x32xf32> to vector<4x2x32xf32>
    %288 = vector.extract_strided_slice %287 {offsets = [0, 0, 0], sizes = [1, 2, 32], strides = [1, 1, 1]} : vector<4x2x32xf32> to vector<1x2x32xf32>
    %289 = vector.shape_cast %288 : vector<1x2x32xf32> to vector<2x32xf32>
    %c0_164 = arith.constant 0 : index
    %c0_165 = arith.constant 0 : index
    %c0_166 = arith.constant 0 : index
    %290 = vector.load %arg4[%c0_164, %c0_165, %c0_166] : memref<4x32x32xf32, #tpu.memory_space<vmem>>, vector<1x32x32xf32>
    %291 = vector.shape_cast %290 : vector<1x32x32xf32> to vector<32x32xf32>
    %cst_167 = arith.constant dense<0.000000e+00> : vector<2x32xf32>
    %292 = tpu.matmul %283, %291, %cst_167 {dimension_numbers = #tpu.dot_dimension_numbers<[1], [0], [0], [1], [0, 0, 1, 1], [], []>} : vector<2x32xf32>, vector<32x32xf32>, vector<2x32xf32> -> vector<2x32xf32>
    %293 = arith.addf %289, %292 : vector<2x32xf32>
    %294 = vector.extract_strided_slice %287 {offsets = [1, 0, 0], sizes = [1, 2, 32], strides = [1, 1, 1]} : vector<4x2x32xf32> to vector<1x2x32xf32>
    %295 = vector.shape_cast %294 : vector<1x2x32xf32> to vector<2x32xf32>
    %c1_168 = arith.constant 1 : index
    %c0_169 = arith.constant 0 : index
    %c0_170 = arith.constant 0 : index
    %296 = vector.load %arg4[%c1_168, %c0_169, %c0_170] : memref<4x32x32xf32, #tpu.memory_space<vmem>>, vector<1x32x32xf32>
    %297 = vector.shape_cast %296 : vector<1x32x32xf32> to vector<32x32xf32>
    %cst_171 = arith.constant dense<0.000000e+00> : vector<2x32xf32>
    %298 = tpu.matmul %283, %297, %cst_171 {dimension_numbers = #tpu.dot_dimension_numbers<[1], [0], [0], [1], [0, 0, 1, 1], [], []>} : vector<2x32xf32>, vector<32x32xf32>, vector<2x32xf32> -> vector<2x32xf32>
    %299 = arith.addf %295, %298 : vector<2x32xf32>
    %300 = vector.extract_strided_slice %287 {offsets = [2, 0, 0], sizes = [1, 2, 32], strides = [1, 1, 1]} : vector<4x2x32xf32> to vector<1x2x32xf32>
    %301 = vector.shape_cast %300 : vector<1x2x32xf32> to vector<2x32xf32>
    %c2_172 = arith.constant 2 : index
    %c0_173 = arith.constant 0 : index
    %c0_174 = arith.constant 0 : index
    %302 = vector.load %arg4[%c2_172, %c0_173, %c0_174] : memref<4x32x32xf32, #tpu.memory_space<vmem>>, vector<1x32x32xf32>
    %303 = vector.shape_cast %302 : vector<1x32x32xf32> to vector<32x32xf32>
    %cst_175 = arith.constant dense<0.000000e+00> : vector<2x32xf32>
    %304 = tpu.matmul %283, %303, %cst_175 {dimension_numbers = #tpu.dot_dimension_numbers<[1], [0], [0], [1], [0, 0, 1, 1], [], []>} : vector<2x32xf32>, vector<32x32xf32>, vector<2x32xf32> -> vector<2x32xf32>
    %305 = arith.addf %301, %304 : vector<2x32xf32>
    %306 = vector.extract_strided_slice %287 {offsets = [3, 0, 0], sizes = [1, 2, 32], strides = [1, 1, 1]} : vector<4x2x32xf32> to vector<1x2x32xf32>
    %307 = vector.shape_cast %306 : vector<1x2x32xf32> to vector<2x32xf32>
    %c3_176 = arith.constant 3 : index
    %c0_177 = arith.constant 0 : index
    %c0_178 = arith.constant 0 : index
    %308 = vector.load %arg4[%c3_176, %c0_177, %c0_178] : memref<4x32x32xf32, #tpu.memory_space<vmem>>, vector<1x32x32xf32>
    %309 = vector.shape_cast %308 : vector<1x32x32xf32> to vector<32x32xf32>
    %cst_179 = arith.constant dense<0.000000e+00> : vector<2x32xf32>
    %310 = tpu.matmul %283, %309, %cst_179 {dimension_numbers = #tpu.dot_dimension_numbers<[1], [0], [0], [1], [0, 0, 1, 1], [], []>} : vector<2x32xf32>, vector<32x32xf32>, vector<2x32xf32> -> vector<2x32xf32>
    %311 = arith.addf %307, %310 : vector<2x32xf32>
    %312 = arith.negf %293 : vector<2x32xf32>
    %313 = math.exp %312 : vector<2x32xf32>
    %cst_180 = arith.constant 1.000000e+00 : f32
    %314 = vector.broadcast %cst_180 : f32 to vector<2x32xf32>
    %315 = arith.addf %314, %313 : vector<2x32xf32>
    %316 = arith.divf %314, %315 : vector<2x32xf32>
    %317 = arith.negf %299 : vector<2x32xf32>
    %318 = math.exp %317 : vector<2x32xf32>
    %cst_181 = arith.constant 1.000000e+00 : f32
    %319 = vector.broadcast %cst_181 : f32 to vector<2x32xf32>
    %320 = arith.addf %319, %318 : vector<2x32xf32>
    %321 = arith.divf %319, %320 : vector<2x32xf32>
    %322 = math.tanh %305 : vector<2x32xf32>
    %323 = arith.negf %311 : vector<2x32xf32>
    %324 = math.exp %323 : vector<2x32xf32>
    %cst_182 = arith.constant 1.000000e+00 : f32
    %325 = vector.broadcast %cst_182 : f32 to vector<2x32xf32>
    %326 = arith.addf %325, %324 : vector<2x32xf32>
    %327 = arith.divf %325, %326 : vector<2x32xf32>
    %328 = arith.mulf %321, %284 : vector<2x32xf32>
    %329 = arith.mulf %316, %322 : vector<2x32xf32>
    %330 = arith.addf %328, %329 : vector<2x32xf32>
    %331 = math.tanh %330 : vector<2x32xf32>
    %332 = arith.mulf %327, %331 : vector<2x32xf32>
    %c0_183 = arith.constant 0 : index
    %c0_184 = arith.constant 0 : index
    %333 = vector.load %arg8[%c0_183, %c0_184] : memref<2x32xf32, #tpu.memory_space<vmem>>, vector<2x32xf32>
    tpu.vector_store %arg8[%c0_183, %c0_184], %332 {strides = array<i32>} : memref<2x32xf32, #tpu.memory_space<vmem>>, vector<2x32xf32>,
    %c0_185 = arith.constant 0 : index
    %c0_186 = arith.constant 0 : index
    %334 = vector.load %arg9[%c0_185, %c0_186] : memref<2x32xf32, #tpu.memory_space<vmem>>, vector<2x32xf32>
    tpu.vector_store %arg9[%c0_185, %c0_186], %330 {strides = array<i32>} : memref<2x32xf32, #tpu.memory_space<vmem>>, vector<2x32xf32>,
    %335 = arith.index_cast %c5_i32 : i32 to index
    %c0_187 = arith.constant 0 : index
    %c0_188 = arith.constant 0 : index
    %336 = vector.load %arg5[%335, %c0_187, %c0_188] : memref<8x2x32xf32, #tpu.memory_space<vmem>>, vector<1x2x32xf32>
    %337 = vector.shape_cast %336 : vector<1x2x32xf32> to vector<2x32xf32>
    %338 = vector.shape_cast %332 : vector<2x32xf32> to vector<1x2x32xf32>
    tpu.vector_store %arg5[%335, %c0_187, %c0_188], %338 {strides = array<i32>} : memref<8x2x32xf32, #tpu.memory_space<vmem>>, vector<1x2x32xf32>,
    %c6_i32 = arith.constant 6 : i32
    %c0_189 = arith.constant 0 : index
    %c0_190 = arith.constant 0 : index
    %339 = vector.load %arg8[%c0_189, %c0_190] : memref<2x32xf32, #tpu.memory_space<vmem>>, vector<2x32xf32>
    %c0_191 = arith.constant 0 : index
    %c0_192 = arith.constant 0 : index
    %340 = vector.load %arg9[%c0_191, %c0_192] : memref<2x32xf32, #tpu.memory_space<vmem>>, vector<2x32xf32>
    %341 = arith.index_cast %c6_i32 : i32 to index
    %c0_193 = arith.constant 0 : index
    %c0_194 = arith.constant 0 : index
    %c0_195 = arith.constant 0 : index
    %342 = vector.load %arg1[%341, %c0_193, %c0_194, %c0_195] : memref<8x4x2x32xf32, #tpu.memory_space<vmem>>, vector<1x4x2x32xf32>
    %343 = vector.shape_cast %342 : vector<1x4x2x32xf32> to vector<4x2x32xf32>
    %344 = vector.extract_strided_slice %343 {offsets = [0, 0, 0], sizes = [1, 2, 32], strides = [1, 1, 1]} : vector<4x2x32xf32> to vector<1x2x32xf32>
    %345 = vector.shape_cast %344 : vector<1x2x32xf32> to vector<2x32xf32>
    %c0_196 = arith.constant 0 : index
    %c0_197 = arith.constant 0 : index
    %c0_198 = arith.constant 0 : index
    %346 = vector.load %arg4[%c0_196, %c0_197, %c0_198] : memref<4x32x32xf32, #tpu.memory_space<vmem>>, vector<1x32x32xf32>
    %347 = vector.shape_cast %346 : vector<1x32x32xf32> to vector<32x32xf32>
    %cst_199 = arith.constant dense<0.000000e+00> : vector<2x32xf32>
    %348 = tpu.matmul %339, %347, %cst_199 {dimension_numbers = #tpu.dot_dimension_numbers<[1], [0], [0], [1], [0, 0, 1, 1], [], []>} : vector<2x32xf32>, vector<32x32xf32>, vector<2x32xf32> -> vector<2x32xf32>
    %349 = arith.addf %345, %348 : vector<2x32xf32>
    %350 = vector.extract_strided_slice %343 {offsets = [1, 0, 0], sizes = [1, 2, 32], strides = [1, 1, 1]} : vector<4x2x32xf32> to vector<1x2x32xf32>
    %351 = vector.shape_cast %350 : vector<1x2x32xf32> to vector<2x32xf32>
    %c1_200 = arith.constant 1 : index
    %c0_201 = arith.constant 0 : index
    %c0_202 = arith.constant 0 : index
    %352 = vector.load %arg4[%c1_200, %c0_201, %c0_202] : memref<4x32x32xf32, #tpu.memory_space<vmem>>, vector<1x32x32xf32>
    %353 = vector.shape_cast %352 : vector<1x32x32xf32> to vector<32x32xf32>
    %cst_203 = arith.constant dense<0.000000e+00> : vector<2x32xf32>
    %354 = tpu.matmul %339, %353, %cst_203 {dimension_numbers = #tpu.dot_dimension_numbers<[1], [0], [0], [1], [0, 0, 1, 1], [], []>} : vector<2x32xf32>, vector<32x32xf32>, vector<2x32xf32> -> vector<2x32xf32>
    %355 = arith.addf %351, %354 : vector<2x32xf32>
    %356 = vector.extract_strided_slice %343 {offsets = [2, 0, 0], sizes = [1, 2, 32], strides = [1, 1, 1]} : vector<4x2x32xf32> to vector<1x2x32xf32>
    %357 = vector.shape_cast %356 : vector<1x2x32xf32> to vector<2x32xf32>
    %c2_204 = arith.constant 2 : index
    %c0_205 = arith.constant 0 : index
    %c0_206 = arith.constant 0 : index
    %358 = vector.load %arg4[%c2_204, %c0_205, %c0_206] : memref<4x32x32xf32, #tpu.memory_space<vmem>>, vector<1x32x32xf32>
    %359 = vector.shape_cast %358 : vector<1x32x32xf32> to vector<32x32xf32>
    %cst_207 = arith.constant dense<0.000000e+00> : vector<2x32xf32>
    %360 = tpu.matmul %339, %359, %cst_207 {dimension_numbers = #tpu.dot_dimension_numbers<[1], [0], [0], [1], [0, 0, 1, 1], [], []>} : vector<2x32xf32>, vector<32x32xf32>, vector<2x32xf32> -> vector<2x32xf32>
    %361 = arith.addf %357, %360 : vector<2x32xf32>
    %362 = vector.extract_strided_slice %343 {offsets = [3, 0, 0], sizes = [1, 2, 32], strides = [1, 1, 1]} : vector<4x2x32xf32> to vector<1x2x32xf32>
    %363 = vector.shape_cast %362 : vector<1x2x32xf32> to vector<2x32xf32>
    %c3_208 = arith.constant 3 : index
    %c0_209 = arith.constant 0 : index
    %c0_210 = arith.constant 0 : index
    %364 = vector.load %arg4[%c3_208, %c0_209, %c0_210] : memref<4x32x32xf32, #tpu.memory_space<vmem>>, vector<1x32x32xf32>
    %365 = vector.shape_cast %364 : vector<1x32x32xf32> to vector<32x32xf32>
    %cst_211 = arith.constant dense<0.000000e+00> : vector<2x32xf32>
    %366 = tpu.matmul %339, %365, %cst_211 {dimension_numbers = #tpu.dot_dimension_numbers<[1], [0], [0], [1], [0, 0, 1, 1], [], []>} : vector<2x32xf32>, vector<32x32xf32>, vector<2x32xf32> -> vector<2x32xf32>
    %367 = arith.addf %363, %366 : vector<2x32xf32>
    %368 = arith.negf %349 : vector<2x32xf32>
    %369 = math.exp %368 : vector<2x32xf32>
    %cst_212 = arith.constant 1.000000e+00 : f32
    %370 = vector.broadcast %cst_212 : f32 to vector<2x32xf32>
    %371 = arith.addf %370, %369 : vector<2x32xf32>
    %372 = arith.divf %370, %371 : vector<2x32xf32>
    %373 = arith.negf %355 : vector<2x32xf32>
    %374 = math.exp %373 : vector<2x32xf32>
    %cst_213 = arith.constant 1.000000e+00 : f32
    %375 = vector.broadcast %cst_213 : f32 to vector<2x32xf32>
    %376 = arith.addf %375, %374 : vector<2x32xf32>
    %377 = arith.divf %375, %376 : vector<2x32xf32>
    %378 = math.tanh %361 : vector<2x32xf32>
    %379 = arith.negf %367 : vector<2x32xf32>
    %380 = math.exp %379 : vector<2x32xf32>
    %cst_214 = arith.constant 1.000000e+00 : f32
    %381 = vector.broadcast %cst_214 : f32 to vector<2x32xf32>
    %382 = arith.addf %381, %380 : vector<2x32xf32>
    %383 = arith.divf %381, %382 : vector<2x32xf32>
    %384 = arith.mulf %377, %340 : vector<2x32xf32>
    %385 = arith.mulf %372, %378 : vector<2x32xf32>
    %386 = arith.addf %384, %385 : vector<2x32xf32>
    %387 = math.tanh %386 : vector<2x32xf32>
    %388 = arith.mulf %383, %387 : vector<2x32xf32>
    %c0_215 = arith.constant 0 : index
    %c0_216 = arith.constant 0 : index
    %389 = vector.load %arg8[%c0_215, %c0_216] : memref<2x32xf32, #tpu.memory_space<vmem>>, vector<2x32xf32>
    tpu.vector_store %arg8[%c0_215, %c0_216], %388 {strides = array<i32>} : memref<2x32xf32, #tpu.memory_space<vmem>>, vector<2x32xf32>,
    %c0_217 = arith.constant 0 : index
    %c0_218 = arith.constant 0 : index
    %390 = vector.load %arg9[%c0_217, %c0_218] : memref<2x32xf32, #tpu.memory_space<vmem>>, vector<2x32xf32>
    tpu.vector_store %arg9[%c0_217, %c0_218], %386 {strides = array<i32>} : memref<2x32xf32, #tpu.memory_space<vmem>>, vector<2x32xf32>,
    %391 = arith.index_cast %c6_i32 : i32 to index
    %c0_219 = arith.constant 0 : index
    %c0_220 = arith.constant 0 : index
    %392 = vector.load %arg5[%391, %c0_219, %c0_220] : memref<8x2x32xf32, #tpu.memory_space<vmem>>, vector<1x2x32xf32>
    %393 = vector.shape_cast %392 : vector<1x2x32xf32> to vector<2x32xf32>
    %394 = vector.shape_cast %388 : vector<2x32xf32> to vector<1x2x32xf32>
    tpu.vector_store %arg5[%391, %c0_219, %c0_220], %394 {strides = array<i32>} : memref<8x2x32xf32, #tpu.memory_space<vmem>>, vector<1x2x32xf32>,
    %c7_i32 = arith.constant 7 : i32
    %c0_221 = arith.constant 0 : index
    %c0_222 = arith.constant 0 : index
    %395 = vector.load %arg8[%c0_221, %c0_222] : memref<2x32xf32, #tpu.memory_space<vmem>>, vector<2x32xf32>
    %c0_223 = arith.constant 0 : index
    %c0_224 = arith.constant 0 : index
    %396 = vector.load %arg9[%c0_223, %c0_224] : memref<2x32xf32, #tpu.memory_space<vmem>>, vector<2x32xf32>
    %397 = arith.index_cast %c7_i32 : i32 to index
    %c0_225 = arith.constant 0 : index
    %c0_226 = arith.constant 0 : index
    %c0_227 = arith.constant 0 : index
    %398 = vector.load %arg1[%397, %c0_225, %c0_226, %c0_227] : memref<8x4x2x32xf32, #tpu.memory_space<vmem>>, vector<1x4x2x32xf32>
    %399 = vector.shape_cast %398 : vector<1x4x2x32xf32> to vector<4x2x32xf32>
    %400 = vector.extract_strided_slice %399 {offsets = [0, 0, 0], sizes = [1, 2, 32], strides = [1, 1, 1]} : vector<4x2x32xf32> to vector<1x2x32xf32>
    %401 = vector.shape_cast %400 : vector<1x2x32xf32> to vector<2x32xf32>
    %c0_228 = arith.constant 0 : index
    %c0_229 = arith.constant 0 : index
    %c0_230 = arith.constant 0 : index
    %402 = vector.load %arg4[%c0_228, %c0_229, %c0_230] : memref<4x32x32xf32, #tpu.memory_space<vmem>>, vector<1x32x32xf32>
    %403 = vector.shape_cast %402 : vector<1x32x32xf32> to vector<32x32xf32>
    %cst_231 = arith.constant dense<0.000000e+00> : vector<2x32xf32>
    %404 = tpu.matmul %395, %403, %cst_231 {dimension_numbers = #tpu.dot_dimension_numbers<[1], [0], [0], [1], [0, 0, 1, 1], [], []>} : vector<2x32xf32>, vector<32x32xf32>, vector<2x32xf32> -> vector<2x32xf32>
    %405 = arith.addf %401, %404 : vector<2x32xf32>
    %406 = vector.extract_strided_slice %399 {offsets = [1, 0, 0], sizes = [1, 2, 32], strides = [1, 1, 1]} : vector<4x2x32xf32> to vector<1x2x32xf32>
    %407 = vector.shape_cast %406 : vector<1x2x32xf32> to vector<2x32xf32>
    %c1_232 = arith.constant 1 : index
    %c0_233 = arith.constant 0 : index
    %c0_234 = arith.constant 0 : index
    %408 = vector.load %arg4[%c1_232, %c0_233, %c0_234] : memref<4x32x32xf32, #tpu.memory_space<vmem>>, vector<1x32x32xf32>
    %409 = vector.shape_cast %408 : vector<1x32x32xf32> to vector<32x32xf32>
    %cst_235 = arith.constant dense<0.000000e+00> : vector<2x32xf32>
    %410 = tpu.matmul %395, %409, %cst_235 {dimension_numbers = #tpu.dot_dimension_numbers<[1], [0], [0], [1], [0, 0, 1, 1], [], []>} : vector<2x32xf32>, vector<32x32xf32>, vector<2x32xf32> -> vector<2x32xf32>
    %411 = arith.addf %407, %410 : vector<2x32xf32>
    %412 = vector.extract_strided_slice %399 {offsets = [2, 0, 0], sizes = [1, 2, 32], strides = [1, 1, 1]} : vector<4x2x32xf32> to vector<1x2x32xf32>
    %413 = vector.shape_cast %412 : vector<1x2x32xf32> to vector<2x32xf32>
    %c2_236 = arith.constant 2 : index
    %c0_237 = arith.constant 0 : index
    %c0_238 = arith.constant 0 : index
    %414 = vector.load %arg4[%c2_236, %c0_237, %c0_238] : memref<4x32x32xf32, #tpu.memory_space<vmem>>, vector<1x32x32xf32>
    %415 = vector.shape_cast %414 : vector<1x32x32xf32> to vector<32x32xf32>
    %cst_239 = arith.constant dense<0.000000e+00> : vector<2x32xf32>
    %416 = tpu.matmul %395, %415, %cst_239 {dimension_numbers = #tpu.dot_dimension_numbers<[1], [0], [0], [1], [0, 0, 1, 1], [], []>} : vector<2x32xf32>, vector<32x32xf32>, vector<2x32xf32> -> vector<2x32xf32>
    %417 = arith.addf %413, %416 : vector<2x32xf32>
    %418 = vector.extract_strided_slice %399 {offsets = [3, 0, 0], sizes = [1, 2, 32], strides = [1, 1, 1]} : vector<4x2x32xf32> to vector<1x2x32xf32>
    %419 = vector.shape_cast %418 : vector<1x2x32xf32> to vector<2x32xf32>
    %c3_240 = arith.constant 3 : index
    %c0_241 = arith.constant 0 : index
    %c0_242 = arith.constant 0 : index
    %420 = vector.load %arg4[%c3_240, %c0_241, %c0_242] : memref<4x32x32xf32, #tpu.memory_space<vmem>>, vector<1x32x32xf32>
    %421 = vector.shape_cast %420 : vector<1x32x32xf32> to vector<32x32xf32>
    %cst_243 = arith.constant dense<0.000000e+00> : vector<2x32xf32>
    %422 = tpu.matmul %395, %421, %cst_243 {dimension_numbers = #tpu.dot_dimension_numbers<[1], [0], [0], [1], [0, 0, 1, 1], [], []>} : vector<2x32xf32>, vector<32x32xf32>, vector<2x32xf32> -> vector<2x32xf32>
    %423 = arith.addf %419, %422 : vector<2x32xf32>
    %424 = arith.negf %405 : vector<2x32xf32>
    %425 = math.exp %424 : vector<2x32xf32>
    %cst_244 = arith.constant 1.000000e+00 : f32
    %426 = vector.broadcast %cst_244 : f32 to vector<2x32xf32>
    %427 = arith.addf %426, %425 : vector<2x32xf32>
    %428 = arith.divf %426, %427 : vector<2x32xf32>
    %429 = arith.negf %411 : vector<2x32xf32>
    %430 = math.exp %429 : vector<2x32xf32>
    %cst_245 = arith.constant 1.000000e+00 : f32
    %431 = vector.broadcast %cst_245 : f32 to vector<2x32xf32>
    %432 = arith.addf %431, %430 : vector<2x32xf32>
    %433 = arith.divf %431, %432 : vector<2x32xf32>
    %434 = math.tanh %417 : vector<2x32xf32>
    %435 = arith.negf %423 : vector<2x32xf32>
    %436 = math.exp %435 : vector<2x32xf32>
    %cst_246 = arith.constant 1.000000e+00 : f32
    %437 = vector.broadcast %cst_246 : f32 to vector<2x32xf32>
    %438 = arith.addf %437, %436 : vector<2x32xf32>
    %439 = arith.divf %437, %438 : vector<2x32xf32>
    %440 = arith.mulf %433, %396 : vector<2x32xf32>
    %441 = arith.mulf %428, %434 : vector<2x32xf32>
    %442 = arith.addf %440, %441 : vector<2x32xf32>
    %443 = math.tanh %442 : vector<2x32xf32>
    %444 = arith.mulf %439, %443 : vector<2x32xf32>
    %c0_247 = arith.constant 0 : index
    %c0_248 = arith.constant 0 : index
    %445 = vector.load %arg8[%c0_247, %c0_248] : memref<2x32xf32, #tpu.memory_space<vmem>>, vector<2x32xf32>
    tpu.vector_store %arg8[%c0_247, %c0_248], %444 {strides = array<i32>} : memref<2x32xf32, #tpu.memory_space<vmem>>, vector<2x32xf32>,
    %c0_249 = arith.constant 0 : index
    %c0_250 = arith.constant 0 : index
    %446 = vector.load %arg9[%c0_249, %c0_250] : memref<2x32xf32, #tpu.memory_space<vmem>>, vector<2x32xf32>
    tpu.vector_store %arg9[%c0_249, %c0_250], %442 {strides = array<i32>} : memref<2x32xf32, #tpu.memory_space<vmem>>, vector<2x32xf32>,
    %447 = arith.index_cast %c7_i32 : i32 to index
    %c0_251 = arith.constant 0 : index
    %c0_252 = arith.constant 0 : index
    %448 = vector.load %arg5[%447, %c0_251, %c0_252] : memref<8x2x32xf32, #tpu.memory_space<vmem>>, vector<1x2x32xf32>
    %449 = vector.shape_cast %448 : vector<1x2x32xf32> to vector<2x32xf32>
    %450 = vector.shape_cast %444 : vector<2x32xf32> to vector<1x2x32xf32>
    tpu.vector_store %arg5[%447, %c0_251, %c0_252], %450 {strides = array<i32>} : memref<8x2x32xf32, #tpu.memory_space<vmem>>, vector<1x2x32xf32>,
    %c8_i32 = arith.constant 8 : i32
    %c0_253 = arith.constant 0 : index
    %c0_254 = arith.constant 0 : index
    %451 = vector.load %arg8[%c0_253, %c0_254] : memref<2x32xf32, #tpu.memory_space<vmem>>, vector<2x32xf32>
    %c0_255 = arith.constant 0 : index
    %c0_256 = arith.constant 0 : index
    %452 = vector.load %arg6[%c0_255, %c0_256] : memref<2x32xf32, #tpu.memory_space<vmem>>, vector<2x32xf32>
    tpu.vector_store %arg6[%c0_255, %c0_256], %451 {strides = array<i32>} : memref<2x32xf32, #tpu.memory_space<vmem>>, vector<2x32xf32>,
    %c0_257 = arith.constant 0 : index
    %c0_258 = arith.constant 0 : index
    %453 = vector.load %arg9[%c0_257, %c0_258] : memref<2x32xf32, #tpu.memory_space<vmem>>, vector<2x32xf32>
    %c0_259 = arith.constant 0 : index
    %c0_260 = arith.constant 0 : index
    %454 = vector.load %arg7[%c0_259, %c0_260] : memref<2x32xf32, #tpu.memory_space<vmem>>, vector<2x32xf32>
    tpu.vector_store %arg7[%c0_259, %c0_260], %453 {strides = array<i32>} : memref<2x32xf32, #tpu.memory_space<vmem>>, vector<2x32xf32>,
    return
  }
  func.func @transform_0(%arg0: i32) -> (i32, i32, i32, i32) {
    %c0_i32 = arith.constant 0 : i32
    %c0_i32_0 = arith.constant 0 : i32
    %c0_i32_1 = arith.constant 0 : i32
    %c0_i32_2 = arith.constant 0 : i32
    return %arg0, %c0_i32, %c0_i32_0, %c0_i32_1 : i32, i32, i32, i32
  }
  func.func @transform_1(%arg0: i32) -> (i32, i32) {
    %c0_i32 = arith.constant 0 : i32
    %c0_i32_0 = arith.constant 0 : i32
    %c0_i32_1 = arith.constant 0 : i32
    return %c0_i32, %c0_i32_0 : i32, i32
  }
  func.func @transform_2(%arg0: i32) -> (i32, i32) {
    %c0_i32 = arith.constant 0 : i32
    %c0_i32_0 = arith.constant 0 : i32
    %c0_i32_1 = arith.constant 0 : i32
    return %c0_i32, %c0_i32_0 : i32, i32
  }
  func.func @transform_3(%arg0: i32) -> (i32, i32, i32) {
    %c0_i32 = arith.constant 0 : i32
    %c0_i32_0 = arith.constant 0 : i32
    %c0_i32_1 = arith.constant 0 : i32
    %c0_i32_2 = arith.constant 0 : i32
    return %c0_i32, %c0_i32_0, %c0_i32_1 : i32, i32, i32
  }
  func.func @transform_4(%arg0: i32) -> (i32, i32, i32) {
    %c0_i32 = arith.constant 0 : i32
    %c0_i32_0 = arith.constant 0 : i32
    %c0_i32_1 = arith.constant 0 : i32
    return %arg0, %c0_i32, %c0_i32_0 : i32, i32, i32
  }
  func.func @transform_5(%arg0: i32) -> (i32, i32) {
    %c0_i32 = arith.constant 0 : i32
    %c0_i32_0 = arith.constant 0 : i32
    %c0_i32_1 = arith.constant 0 : i32
    return %c0_i32, %c0_i32_0 : i32, i32
  }
  func.func @transform_6(%arg0: i32) -> (i32, i32) {
    %c0_i32 = arith.constant 0 : i32
    %c0_i32_0 = arith.constant 0 : i32
    %c0_i32_1 = arith.constant 0 : i32
    return %c0_i32, %c0_i32_0 : i32, i32
  }
}

module attributes {stable_mosaic.version = 11 : i64} {
  func.func @_linear_bias_kernel(%arg0: i32, %arg1: i32, %arg2: memref<16x32xf32, #tpu.memory_space<vmem>>, %arg3: memref<32x128xf32, #tpu.memory_space<vmem>>, %arg4: memref<1x128xf32, #tpu.memory_space<vmem>>, %arg5: memref<16x128xf32, #tpu.memory_space<vmem>>) attributes {dimension_semantics = [#tpu.dimension_semantics<parallel>, #tpu.dimension_semantics<parallel>], iteration_bounds = array<i64: 1, 1>, scalar_prefetch = 0 : i64, scratch_operands = 0 : i64, tpu.core_type = #tpu.core_type<tc>, window_params = [{transform_indices = @transform_0, window_bounds = array<i64: 16, 32>}, {transform_indices = @transform_1, window_bounds = array<i64: 32, 128>}, {transform_indices = @transform_2, window_bounds = array<i64: 1, 128>}, {transform_indices = @transform_3, window_bounds = array<i64: 16, 128>}]} {
    %c0 = arith.constant 0 : index
    %c0_0 = arith.constant 0 : index
    %0 = vector.load %arg2[%c0, %c0_0] : memref<16x32xf32, #tpu.memory_space<vmem>>, vector<16x32xf32>
    %c0_1 = arith.constant 0 : index
    %c0_2 = arith.constant 0 : index
    %1 = vector.load %arg3[%c0_1, %c0_2] : memref<32x128xf32, #tpu.memory_space<vmem>>, vector<32x128xf32>
    %cst = arith.constant dense<0.000000e+00> : vector<16x128xf32>
    %2 = tpu.matmul %0, %1, %cst {dimension_numbers = #tpu.dot_dimension_numbers<[1], [0], [0], [1], [0, 0, 1, 1], [], []>} : vector<16x32xf32>, vector<32x128xf32>, vector<16x128xf32> -> vector<16x128xf32>
    %c0_3 = arith.constant 0 : index
    %c0_4 = arith.constant 0 : index
    %3 = vector.load %arg4[%c0_3, %c0_4] : memref<1x128xf32, #tpu.memory_space<vmem>>, vector<1x128xf32>
    %4 = vector.broadcast %3 : vector<1x128xf32> to vector<16x128xf32>
    %5 = arith.addf %2, %4 : vector<16x128xf32>
    %c0_5 = arith.constant 0 : index
    %c0_6 = arith.constant 0 : index
    %6 = vector.load %arg5[%c0_5, %c0_6] : memref<16x128xf32, #tpu.memory_space<vmem>>, vector<16x128xf32>
    tpu.vector_store %arg5[%c0_5, %c0_6], %5 {strides = array<i32>} : memref<16x128xf32, #tpu.memory_space<vmem>>, vector<16x128xf32>,
    return
  }
  func.func @transform_0(%arg0: i32, %arg1: i32) -> (i32, i32) {
    %c0_i32 = arith.constant 0 : i32
    %c0_i32_0 = arith.constant 0 : i32
    return %arg0, %c0_i32 : i32, i32
  }
  func.func @transform_1(%arg0: i32, %arg1: i32) -> (i32, i32) {
    %c0_i32 = arith.constant 0 : i32
    %c0_i32_0 = arith.constant 0 : i32
    return %c0_i32, %arg1 : i32, i32
  }
  func.func @transform_2(%arg0: i32, %arg1: i32) -> (i32, i32) {
    %c0_i32 = arith.constant 0 : i32
    %c0_i32_0 = arith.constant 0 : i32
    return %c0_i32, %arg1 : i32, i32
  }
  func.func @transform_3(%arg0: i32, %arg1: i32) -> (i32, i32) {
    %c0_i32 = arith.constant 0 : i32
    return %arg0, %arg1 : i32, i32
  }
}

module attributes {stable_mosaic.version = 11 : i64} {
  func.func @_linear_bias_kernel(%arg0: i32, %arg1: i32, %arg2: memref<16x32xf32, #tpu.memory_space<vmem>>, %arg3: memref<32x128xf32, #tpu.memory_space<vmem>>, %arg4: memref<1x128xf32, #tpu.memory_space<vmem>>, %arg5: memref<16x128xf32, #tpu.memory_space<vmem>>) attributes {dimension_semantics = [#tpu.dimension_semantics<parallel>, #tpu.dimension_semantics<parallel>], iteration_bounds = array<i64: 1, 1>, scalar_prefetch = 0 : i64, scratch_operands = 0 : i64, tpu.core_type = #tpu.core_type<tc>, window_params = [{transform_indices = @transform_0, window_bounds = array<i64: 16, 32>}, {transform_indices = @transform_1, window_bounds = array<i64: 32, 128>}, {transform_indices = @transform_2, window_bounds = array<i64: 1, 128>}, {transform_indices = @transform_3, window_bounds = array<i64: 16, 128>}]} {
    %c0 = arith.constant 0 : index
    %c0_0 = arith.constant 0 : index
    %0 = vector.load %arg2[%c0, %c0_0] : memref<16x32xf32, #tpu.memory_space<vmem>>, vector<16x32xf32>
    %c0_1 = arith.constant 0 : index
    %c0_2 = arith.constant 0 : index
    %1 = vector.load %arg3[%c0_1, %c0_2] : memref<32x128xf32, #tpu.memory_space<vmem>>, vector<32x128xf32>
    %cst = arith.constant dense<0.000000e+00> : vector<16x128xf32>
    %2 = tpu.matmul %0, %1, %cst {dimension_numbers = #tpu.dot_dimension_numbers<[1], [0], [0], [1], [0, 0, 1, 1], [], []>} : vector<16x32xf32>, vector<32x128xf32>, vector<16x128xf32> -> vector<16x128xf32>
    %c0_3 = arith.constant 0 : index
    %c0_4 = arith.constant 0 : index
    %3 = vector.load %arg4[%c0_3, %c0_4] : memref<1x128xf32, #tpu.memory_space<vmem>>, vector<1x128xf32>
    %4 = vector.broadcast %3 : vector<1x128xf32> to vector<16x128xf32>
    %5 = arith.addf %2, %4 : vector<16x128xf32>
    %c0_5 = arith.constant 0 : index
    %c0_6 = arith.constant 0 : index
    %6 = vector.load %arg5[%c0_5, %c0_6] : memref<16x128xf32, #tpu.memory_space<vmem>>, vector<16x128xf32>
    tpu.vector_store %arg5[%c0_5, %c0_6], %5 {strides = array<i32>} : memref<16x128xf32, #tpu.memory_space<vmem>>, vector<16x128xf32>,
    return
  }
  func.func @transform_0(%arg0: i32, %arg1: i32) -> (i32, i32) {
    %c0_i32 = arith.constant 0 : i32
    %c0_i32_0 = arith.constant 0 : i32
    return %arg0, %c0_i32 : i32, i32
  }
  func.func @transform_1(%arg0: i32, %arg1: i32) -> (i32, i32) {
    %c0_i32 = arith.constant 0 : i32
    %c0_i32_0 = arith.constant 0 : i32
    return %c0_i32, %arg1 : i32, i32
  }
  func.func @transform_2(%arg0: i32, %arg1: i32) -> (i32, i32) {
    %c0_i32 = arith.constant 0 : i32
    %c0_i32_0 = arith.constant 0 : i32
    return %c0_i32, %arg1 : i32, i32
  }
  func.func @transform_3(%arg0: i32, %arg1: i32) -> (i32, i32) {
    %c0_i32 = arith.constant 0 : i32
    return %arg0, %arg1 : i32, i32
  }
}

module attributes {stable_mosaic.version = 11 : i64} {
  func.func @_lstm_scan_kernel(%arg0: i32, %arg1: memref<8x4x2x32xf32, #tpu.memory_space<vmem>>, %arg2: memref<2x32xf32, #tpu.memory_space<vmem>>, %arg3: memref<2x32xf32, #tpu.memory_space<vmem>>, %arg4: memref<4x32x32xf32, #tpu.memory_space<vmem>>, %arg5: memref<8x2x32xf32, #tpu.memory_space<vmem>>, %arg6: memref<2x32xf32, #tpu.memory_space<vmem>>, %arg7: memref<2x32xf32, #tpu.memory_space<vmem>>, %arg8: memref<2x32xf32, #tpu.memory_space<vmem>>, %arg9: memref<2x32xf32, #tpu.memory_space<vmem>>) attributes {dimension_semantics = [#tpu.dimension_semantics<arbitrary>], iteration_bounds = array<i64: 1>, scalar_prefetch = 0 : i64, scratch_operands = 2 : i64, tpu.core_type = #tpu.core_type<tc>, window_params = [{transform_indices = @transform_0, window_bounds = array<i64: 8, 4, 2, 32>}, {pipeline_mode = #tpu.pipeline_mode<synchronous>, transform_indices = @transform_1, window_bounds = array<i64: 2, 32>}, {pipeline_mode = #tpu.pipeline_mode<synchronous>, transform_indices = @transform_2, window_bounds = array<i64: 2, 32>}, {pipeline_mode = #tpu.pipeline_mode<synchronous>, transform_indices = @transform_3, window_bounds = array<i64: 4, 32, 32>}, {transform_indices = @transform_4, window_bounds = array<i64: 8, 2, 32>}, {pipeline_mode = #tpu.pipeline_mode<synchronous>, transform_indices = @transform_5, window_bounds = array<i64: 2, 32>}, {pipeline_mode = #tpu.pipeline_mode<synchronous>, transform_indices = @transform_6, window_bounds = array<i64: 2, 32>}]} {
    %c0_i32 = arith.constant 0 : i32
    %0 = arith.cmpi eq, %arg0, %c0_i32 : i32
    %1 = arith.extui %0 : i1 to i32
    %c0_i32_0 = arith.constant 0 : i32
    %2 = arith.cmpi ne, %1, %c0_i32_0 : i32
    scf.if %2 {
      %c0_261 = arith.constant 0 : index
      %c0_262 = arith.constant 0 : index
      %455 = vector.load %arg2[%c0_261, %c0_262] : memref<2x32xf32, #tpu.memory_space<vmem>>, vector<2x32xf32>
      %c0_263 = arith.constant 0 : index
      %c0_264 = arith.constant 0 : index
      %456 = vector.load %arg8[%c0_263, %c0_264] : memref<2x32xf32, #tpu.memory_space<vmem>>, vector<2x32xf32>
      tpu.vector_store %arg8[%c0_263, %c0_264], %455 {strides = array<i32>} : memref<2x32xf32, #tpu.memory_space<vmem>>, vector<2x32xf32>,
      %c0_265 = arith.constant 0 : index
      %c0_266 = arith.constant 0 : index
      %457 = vector.load %arg3[%c0_265, %c0_266] : memref<2x32xf32, #tpu.memory_space<vmem>>, vector<2x32xf32>
      %c0_267 = arith.constant 0 : index
      %c0_268 = arith.constant 0 : index
      %458 = vector.load %arg9[%c0_267, %c0_268] : memref<2x32xf32, #tpu.memory_space<vmem>>, vector<2x32xf32>
      tpu.vector_store %arg9[%c0_267, %c0_268], %457 {strides = array<i32>} : memref<2x32xf32, #tpu.memory_space<vmem>>, vector<2x32xf32>,
    } else {
    }
    %c0_i32_1 = arith.constant 0 : i32
    %c0 = arith.constant 0 : index
    %c0_2 = arith.constant 0 : index
    %3 = vector.load %arg8[%c0, %c0_2] : memref<2x32xf32, #tpu.memory_space<vmem>>, vector<2x32xf32>
    %c0_3 = arith.constant 0 : index
    %c0_4 = arith.constant 0 : index
    %4 = vector.load %arg9[%c0_3, %c0_4] : memref<2x32xf32, #tpu.memory_space<vmem>>, vector<2x32xf32>
    %5 = arith.index_cast %c0_i32_1 : i32 to index
    %c0_5 = arith.constant 0 : index
    %c0_6 = arith.constant 0 : index
    %c0_7 = arith.constant 0 : index
    %6 = vector.load %arg1[%5, %c0_5, %c0_6, %c0_7] : memref<8x4x2x32xf32, #tpu.memory_space<vmem>>, vector<1x4x2x32xf32>
    %7 = vector.shape_cast %6 : vector<1x4x2x32xf32> to vector<4x2x32xf32>
    %8 = vector.extract_strided_slice %7 {offsets = [0, 0, 0], sizes = [1, 2, 32], strides = [1, 1, 1]} : vector<4x2x32xf32> to vector<1x2x32xf32>
    %9 = vector.shape_cast %8 : vector<1x2x32xf32> to vector<2x32xf32>
    %c0_8 = arith.constant 0 : index
    %c0_9 = arith.constant 0 : index
    %c0_10 = arith.constant 0 : index
    %10 = vector.load %arg4[%c0_8, %c0_9, %c0_10] : memref<4x32x32xf32, #tpu.memory_space<vmem>>, vector<1x32x32xf32>
    %11 = vector.shape_cast %10 : vector<1x32x32xf32> to vector<32x32xf32>
    %cst = arith.constant dense<0.000000e+00> : vector<2x32xf32>
    %12 = tpu.matmul %3, %11, %cst {dimension_numbers = #tpu.dot_dimension_numbers<[1], [0], [0], [1], [0, 0, 1, 1], [], []>} : vector<2x32xf32>, vector<32x32xf32>, vector<2x32xf32> -> vector<2x32xf32>
    %13 = arith.addf %9, %12 : vector<2x32xf32>
    %14 = vector.extract_strided_slice %7 {offsets = [1, 0, 0], sizes = [1, 2, 32], strides = [1, 1, 1]} : vector<4x2x32xf32> to vector<1x2x32xf32>
    %15 = vector.shape_cast %14 : vector<1x2x32xf32> to vector<2x32xf32>
    %c1 = arith.constant 1 : index
    %c0_11 = arith.constant 0 : index
    %c0_12 = arith.constant 0 : index
    %16 = vector.load %arg4[%c1, %c0_11, %c0_12] : memref<4x32x32xf32, #tpu.memory_space<vmem>>, vector<1x32x32xf32>
    %17 = vector.shape_cast %16 : vector<1x32x32xf32> to vector<32x32xf32>
    %cst_13 = arith.constant dense<0.000000e+00> : vector<2x32xf32>
    %18 = tpu.matmul %3, %17, %cst_13 {dimension_numbers = #tpu.dot_dimension_numbers<[1], [0], [0], [1], [0, 0, 1, 1], [], []>} : vector<2x32xf32>, vector<32x32xf32>, vector<2x32xf32> -> vector<2x32xf32>
    %19 = arith.addf %15, %18 : vector<2x32xf32>
    %20 = vector.extract_strided_slice %7 {offsets = [2, 0, 0], sizes = [1, 2, 32], strides = [1, 1, 1]} : vector<4x2x32xf32> to vector<1x2x32xf32>
    %21 = vector.shape_cast %20 : vector<1x2x32xf32> to vector<2x32xf32>
    %c2 = arith.constant 2 : index
    %c0_14 = arith.constant 0 : index
    %c0_15 = arith.constant 0 : index
    %22 = vector.load %arg4[%c2, %c0_14, %c0_15] : memref<4x32x32xf32, #tpu.memory_space<vmem>>, vector<1x32x32xf32>
    %23 = vector.shape_cast %22 : vector<1x32x32xf32> to vector<32x32xf32>
    %cst_16 = arith.constant dense<0.000000e+00> : vector<2x32xf32>
    %24 = tpu.matmul %3, %23, %cst_16 {dimension_numbers = #tpu.dot_dimension_numbers<[1], [0], [0], [1], [0, 0, 1, 1], [], []>} : vector<2x32xf32>, vector<32x32xf32>, vector<2x32xf32> -> vector<2x32xf32>
    %25 = arith.addf %21, %24 : vector<2x32xf32>
    %26 = vector.extract_strided_slice %7 {offsets = [3, 0, 0], sizes = [1, 2, 32], strides = [1, 1, 1]} : vector<4x2x32xf32> to vector<1x2x32xf32>
    %27 = vector.shape_cast %26 : vector<1x2x32xf32> to vector<2x32xf32>
    %c3 = arith.constant 3 : index
    %c0_17 = arith.constant 0 : index
    %c0_18 = arith.constant 0 : index
    %28 = vector.load %arg4[%c3, %c0_17, %c0_18] : memref<4x32x32xf32, #tpu.memory_space<vmem>>, vector<1x32x32xf32>
    %29 = vector.shape_cast %28 : vector<1x32x32xf32> to vector<32x32xf32>
    %cst_19 = arith.constant dense<0.000000e+00> : vector<2x32xf32>
    %30 = tpu.matmul %3, %29, %cst_19 {dimension_numbers = #tpu.dot_dimension_numbers<[1], [0], [0], [1], [0, 0, 1, 1], [], []>} : vector<2x32xf32>, vector<32x32xf32>, vector<2x32xf32> -> vector<2x32xf32>
    %31 = arith.addf %27, %30 : vector<2x32xf32>
    %32 = arith.negf %13 : vector<2x32xf32>
    %33 = math.exp %32 : vector<2x32xf32>
    %cst_20 = arith.constant 1.000000e+00 : f32
    %34 = vector.broadcast %cst_20 : f32 to vector<2x32xf32>
    %35 = arith.addf %34, %33 : vector<2x32xf32>
    %36 = arith.divf %34, %35 : vector<2x32xf32>
    %37 = arith.negf %19 : vector<2x32xf32>
    %38 = math.exp %37 : vector<2x32xf32>
    %cst_21 = arith.constant 1.000000e+00 : f32
    %39 = vector.broadcast %cst_21 : f32 to vector<2x32xf32>
    %40 = arith.addf %39, %38 : vector<2x32xf32>
    %41 = arith.divf %39, %40 : vector<2x32xf32>
    %42 = math.tanh %25 : vector<2x32xf32>
    %43 = arith.negf %31 : vector<2x32xf32>
    %44 = math.exp %43 : vector<2x32xf32>
    %cst_22 = arith.constant 1.000000e+00 : f32
    %45 = vector.broadcast %cst_22 : f32 to vector<2x32xf32>
    %46 = arith.addf %45, %44 : vector<2x32xf32>
    %47 = arith.divf %45, %46 : vector<2x32xf32>
    %48 = arith.mulf %41, %4 : vector<2x32xf32>
    %49 = arith.mulf %36, %42 : vector<2x32xf32>
    %50 = arith.addf %48, %49 : vector<2x32xf32>
    %51 = math.tanh %50 : vector<2x32xf32>
    %52 = arith.mulf %47, %51 : vector<2x32xf32>
    %c0_23 = arith.constant 0 : index
    %c0_24 = arith.constant 0 : index
    %53 = vector.load %arg8[%c0_23, %c0_24] : memref<2x32xf32, #tpu.memory_space<vmem>>, vector<2x32xf32>
    tpu.vector_store %arg8[%c0_23, %c0_24], %52 {strides = array<i32>} : memref<2x32xf32, #tpu.memory_space<vmem>>, vector<2x32xf32>,
    %c0_25 = arith.constant 0 : index
    %c0_26 = arith.constant 0 : index
    %54 = vector.load %arg9[%c0_25, %c0_26] : memref<2x32xf32, #tpu.memory_space<vmem>>, vector<2x32xf32>
    tpu.vector_store %arg9[%c0_25, %c0_26], %50 {strides = array<i32>} : memref<2x32xf32, #tpu.memory_space<vmem>>, vector<2x32xf32>,
    %55 = arith.index_cast %c0_i32_1 : i32 to index
    %c0_27 = arith.constant 0 : index
    %c0_28 = arith.constant 0 : index
    %56 = vector.load %arg5[%55, %c0_27, %c0_28] : memref<8x2x32xf32, #tpu.memory_space<vmem>>, vector<1x2x32xf32>
    %57 = vector.shape_cast %56 : vector<1x2x32xf32> to vector<2x32xf32>
    %58 = vector.shape_cast %52 : vector<2x32xf32> to vector<1x2x32xf32>
    tpu.vector_store %arg5[%55, %c0_27, %c0_28], %58 {strides = array<i32>} : memref<8x2x32xf32, #tpu.memory_space<vmem>>, vector<1x2x32xf32>,
    %c1_i32 = arith.constant 1 : i32
    %c0_29 = arith.constant 0 : index
    %c0_30 = arith.constant 0 : index
    %59 = vector.load %arg8[%c0_29, %c0_30] : memref<2x32xf32, #tpu.memory_space<vmem>>, vector<2x32xf32>
    %c0_31 = arith.constant 0 : index
    %c0_32 = arith.constant 0 : index
    %60 = vector.load %arg9[%c0_31, %c0_32] : memref<2x32xf32, #tpu.memory_space<vmem>>, vector<2x32xf32>
    %61 = arith.index_cast %c1_i32 : i32 to index
    %c0_33 = arith.constant 0 : index
    %c0_34 = arith.constant 0 : index
    %c0_35 = arith.constant 0 : index
    %62 = vector.load %arg1[%61, %c0_33, %c0_34, %c0_35] : memref<8x4x2x32xf32, #tpu.memory_space<vmem>>, vector<1x4x2x32xf32>
    %63 = vector.shape_cast %62 : vector<1x4x2x32xf32> to vector<4x2x32xf32>
    %64 = vector.extract_strided_slice %63 {offsets = [0, 0, 0], sizes = [1, 2, 32], strides = [1, 1, 1]} : vector<4x2x32xf32> to vector<1x2x32xf32>
    %65 = vector.shape_cast %64 : vector<1x2x32xf32> to vector<2x32xf32>
    %c0_36 = arith.constant 0 : index
    %c0_37 = arith.constant 0 : index
    %c0_38 = arith.constant 0 : index
    %66 = vector.load %arg4[%c0_36, %c0_37, %c0_38] : memref<4x32x32xf32, #tpu.memory_space<vmem>>, vector<1x32x32xf32>
    %67 = vector.shape_cast %66 : vector<1x32x32xf32> to vector<32x32xf32>
    %cst_39 = arith.constant dense<0.000000e+00> : vector<2x32xf32>
    %68 = tpu.matmul %59, %67, %cst_39 {dimension_numbers = #tpu.dot_dimension_numbers<[1], [0], [0], [1], [0, 0, 1, 1], [], []>} : vector<2x32xf32>, vector<32x32xf32>, vector<2x32xf32> -> vector<2x32xf32>
    %69 = arith.addf %65, %68 : vector<2x32xf32>
    %70 = vector.extract_strided_slice %63 {offsets = [1, 0, 0], sizes = [1, 2, 32], strides = [1, 1, 1]} : vector<4x2x32xf32> to vector<1x2x32xf32>
    %71 = vector.shape_cast %70 : vector<1x2x32xf32> to vector<2x32xf32>
    %c1_40 = arith.constant 1 : index
    %c0_41 = arith.constant 0 : index
    %c0_42 = arith.constant 0 : index
    %72 = vector.load %arg4[%c1_40, %c0_41, %c0_42] : memref<4x32x32xf32, #tpu.memory_space<vmem>>, vector<1x32x32xf32>
    %73 = vector.shape_cast %72 : vector<1x32x32xf32> to vector<32x32xf32>
    %cst_43 = arith.constant dense<0.000000e+00> : vector<2x32xf32>
    %74 = tpu.matmul %59, %73, %cst_43 {dimension_numbers = #tpu.dot_dimension_numbers<[1], [0], [0], [1], [0, 0, 1, 1], [], []>} : vector<2x32xf32>, vector<32x32xf32>, vector<2x32xf32> -> vector<2x32xf32>
    %75 = arith.addf %71, %74 : vector<2x32xf32>
    %76 = vector.extract_strided_slice %63 {offsets = [2, 0, 0], sizes = [1, 2, 32], strides = [1, 1, 1]} : vector<4x2x32xf32> to vector<1x2x32xf32>
    %77 = vector.shape_cast %76 : vector<1x2x32xf32> to vector<2x32xf32>
    %c2_44 = arith.constant 2 : index
    %c0_45 = arith.constant 0 : index
    %c0_46 = arith.constant 0 : index
    %78 = vector.load %arg4[%c2_44, %c0_45, %c0_46] : memref<4x32x32xf32, #tpu.memory_space<vmem>>, vector<1x32x32xf32>
    %79 = vector.shape_cast %78 : vector<1x32x32xf32> to vector<32x32xf32>
    %cst_47 = arith.constant dense<0.000000e+00> : vector<2x32xf32>
    %80 = tpu.matmul %59, %79, %cst_47 {dimension_numbers = #tpu.dot_dimension_numbers<[1], [0], [0], [1], [0, 0, 1, 1], [], []>} : vector<2x32xf32>, vector<32x32xf32>, vector<2x32xf32> -> vector<2x32xf32>
    %81 = arith.addf %77, %80 : vector<2x32xf32>
    %82 = vector.extract_strided_slice %63 {offsets = [3, 0, 0], sizes = [1, 2, 32], strides = [1, 1, 1]} : vector<4x2x32xf32> to vector<1x2x32xf32>
    %83 = vector.shape_cast %82 : vector<1x2x32xf32> to vector<2x32xf32>
    %c3_48 = arith.constant 3 : index
    %c0_49 = arith.constant 0 : index
    %c0_50 = arith.constant 0 : index
    %84 = vector.load %arg4[%c3_48, %c0_49, %c0_50] : memref<4x32x32xf32, #tpu.memory_space<vmem>>, vector<1x32x32xf32>
    %85 = vector.shape_cast %84 : vector<1x32x32xf32> to vector<32x32xf32>
    %cst_51 = arith.constant dense<0.000000e+00> : vector<2x32xf32>
    %86 = tpu.matmul %59, %85, %cst_51 {dimension_numbers = #tpu.dot_dimension_numbers<[1], [0], [0], [1], [0, 0, 1, 1], [], []>} : vector<2x32xf32>, vector<32x32xf32>, vector<2x32xf32> -> vector<2x32xf32>
    %87 = arith.addf %83, %86 : vector<2x32xf32>
    %88 = arith.negf %69 : vector<2x32xf32>
    %89 = math.exp %88 : vector<2x32xf32>
    %cst_52 = arith.constant 1.000000e+00 : f32
    %90 = vector.broadcast %cst_52 : f32 to vector<2x32xf32>
    %91 = arith.addf %90, %89 : vector<2x32xf32>
    %92 = arith.divf %90, %91 : vector<2x32xf32>
    %93 = arith.negf %75 : vector<2x32xf32>
    %94 = math.exp %93 : vector<2x32xf32>
    %cst_53 = arith.constant 1.000000e+00 : f32
    %95 = vector.broadcast %cst_53 : f32 to vector<2x32xf32>
    %96 = arith.addf %95, %94 : vector<2x32xf32>
    %97 = arith.divf %95, %96 : vector<2x32xf32>
    %98 = math.tanh %81 : vector<2x32xf32>
    %99 = arith.negf %87 : vector<2x32xf32>
    %100 = math.exp %99 : vector<2x32xf32>
    %cst_54 = arith.constant 1.000000e+00 : f32
    %101 = vector.broadcast %cst_54 : f32 to vector<2x32xf32>
    %102 = arith.addf %101, %100 : vector<2x32xf32>
    %103 = arith.divf %101, %102 : vector<2x32xf32>
    %104 = arith.mulf %97, %60 : vector<2x32xf32>
    %105 = arith.mulf %92, %98 : vector<2x32xf32>
    %106 = arith.addf %104, %105 : vector<2x32xf32>
    %107 = math.tanh %106 : vector<2x32xf32>
    %108 = arith.mulf %103, %107 : vector<2x32xf32>
    %c0_55 = arith.constant 0 : index
    %c0_56 = arith.constant 0 : index
    %109 = vector.load %arg8[%c0_55, %c0_56] : memref<2x32xf32, #tpu.memory_space<vmem>>, vector<2x32xf32>
    tpu.vector_store %arg8[%c0_55, %c0_56], %108 {strides = array<i32>} : memref<2x32xf32, #tpu.memory_space<vmem>>, vector<2x32xf32>,
    %c0_57 = arith.constant 0 : index
    %c0_58 = arith.constant 0 : index
    %110 = vector.load %arg9[%c0_57, %c0_58] : memref<2x32xf32, #tpu.memory_space<vmem>>, vector<2x32xf32>
    tpu.vector_store %arg9[%c0_57, %c0_58], %106 {strides = array<i32>} : memref<2x32xf32, #tpu.memory_space<vmem>>, vector<2x32xf32>,
    %111 = arith.index_cast %c1_i32 : i32 to index
    %c0_59 = arith.constant 0 : index
    %c0_60 = arith.constant 0 : index
    %112 = vector.load %arg5[%111, %c0_59, %c0_60] : memref<8x2x32xf32, #tpu.memory_space<vmem>>, vector<1x2x32xf32>
    %113 = vector.shape_cast %112 : vector<1x2x32xf32> to vector<2x32xf32>
    %114 = vector.shape_cast %108 : vector<2x32xf32> to vector<1x2x32xf32>
    tpu.vector_store %arg5[%111, %c0_59, %c0_60], %114 {strides = array<i32>} : memref<8x2x32xf32, #tpu.memory_space<vmem>>, vector<1x2x32xf32>,
    %c2_i32 = arith.constant 2 : i32
    %c0_61 = arith.constant 0 : index
    %c0_62 = arith.constant 0 : index
    %115 = vector.load %arg8[%c0_61, %c0_62] : memref<2x32xf32, #tpu.memory_space<vmem>>, vector<2x32xf32>
    %c0_63 = arith.constant 0 : index
    %c0_64 = arith.constant 0 : index
    %116 = vector.load %arg9[%c0_63, %c0_64] : memref<2x32xf32, #tpu.memory_space<vmem>>, vector<2x32xf32>
    %117 = arith.index_cast %c2_i32 : i32 to index
    %c0_65 = arith.constant 0 : index
    %c0_66 = arith.constant 0 : index
    %c0_67 = arith.constant 0 : index
    %118 = vector.load %arg1[%117, %c0_65, %c0_66, %c0_67] : memref<8x4x2x32xf32, #tpu.memory_space<vmem>>, vector<1x4x2x32xf32>
    %119 = vector.shape_cast %118 : vector<1x4x2x32xf32> to vector<4x2x32xf32>
    %120 = vector.extract_strided_slice %119 {offsets = [0, 0, 0], sizes = [1, 2, 32], strides = [1, 1, 1]} : vector<4x2x32xf32> to vector<1x2x32xf32>
    %121 = vector.shape_cast %120 : vector<1x2x32xf32> to vector<2x32xf32>
    %c0_68 = arith.constant 0 : index
    %c0_69 = arith.constant 0 : index
    %c0_70 = arith.constant 0 : index
    %122 = vector.load %arg4[%c0_68, %c0_69, %c0_70] : memref<4x32x32xf32, #tpu.memory_space<vmem>>, vector<1x32x32xf32>
    %123 = vector.shape_cast %122 : vector<1x32x32xf32> to vector<32x32xf32>
    %cst_71 = arith.constant dense<0.000000e+00> : vector<2x32xf32>
    %124 = tpu.matmul %115, %123, %cst_71 {dimension_numbers = #tpu.dot_dimension_numbers<[1], [0], [0], [1], [0, 0, 1, 1], [], []>} : vector<2x32xf32>, vector<32x32xf32>, vector<2x32xf32> -> vector<2x32xf32>
    %125 = arith.addf %121, %124 : vector<2x32xf32>
    %126 = vector.extract_strided_slice %119 {offsets = [1, 0, 0], sizes = [1, 2, 32], strides = [1, 1, 1]} : vector<4x2x32xf32> to vector<1x2x32xf32>
    %127 = vector.shape_cast %126 : vector<1x2x32xf32> to vector<2x32xf32>
    %c1_72 = arith.constant 1 : index
    %c0_73 = arith.constant 0 : index
    %c0_74 = arith.constant 0 : index
    %128 = vector.load %arg4[%c1_72, %c0_73, %c0_74] : memref<4x32x32xf32, #tpu.memory_space<vmem>>, vector<1x32x32xf32>
    %129 = vector.shape_cast %128 : vector<1x32x32xf32> to vector<32x32xf32>
    %cst_75 = arith.constant dense<0.000000e+00> : vector<2x32xf32>
    %130 = tpu.matmul %115, %129, %cst_75 {dimension_numbers = #tpu.dot_dimension_numbers<[1], [0], [0], [1], [0, 0, 1, 1], [], []>} : vector<2x32xf32>, vector<32x32xf32>, vector<2x32xf32> -> vector<2x32xf32>
    %131 = arith.addf %127, %130 : vector<2x32xf32>
    %132 = vector.extract_strided_slice %119 {offsets = [2, 0, 0], sizes = [1, 2, 32], strides = [1, 1, 1]} : vector<4x2x32xf32> to vector<1x2x32xf32>
    %133 = vector.shape_cast %132 : vector<1x2x32xf32> to vector<2x32xf32>
    %c2_76 = arith.constant 2 : index
    %c0_77 = arith.constant 0 : index
    %c0_78 = arith.constant 0 : index
    %134 = vector.load %arg4[%c2_76, %c0_77, %c0_78] : memref<4x32x32xf32, #tpu.memory_space<vmem>>, vector<1x32x32xf32>
    %135 = vector.shape_cast %134 : vector<1x32x32xf32> to vector<32x32xf32>
    %cst_79 = arith.constant dense<0.000000e+00> : vector<2x32xf32>
    %136 = tpu.matmul %115, %135, %cst_79 {dimension_numbers = #tpu.dot_dimension_numbers<[1], [0], [0], [1], [0, 0, 1, 1], [], []>} : vector<2x32xf32>, vector<32x32xf32>, vector<2x32xf32> -> vector<2x32xf32>
    %137 = arith.addf %133, %136 : vector<2x32xf32>
    %138 = vector.extract_strided_slice %119 {offsets = [3, 0, 0], sizes = [1, 2, 32], strides = [1, 1, 1]} : vector<4x2x32xf32> to vector<1x2x32xf32>
    %139 = vector.shape_cast %138 : vector<1x2x32xf32> to vector<2x32xf32>
    %c3_80 = arith.constant 3 : index
    %c0_81 = arith.constant 0 : index
    %c0_82 = arith.constant 0 : index
    %140 = vector.load %arg4[%c3_80, %c0_81, %c0_82] : memref<4x32x32xf32, #tpu.memory_space<vmem>>, vector<1x32x32xf32>
    %141 = vector.shape_cast %140 : vector<1x32x32xf32> to vector<32x32xf32>
    %cst_83 = arith.constant dense<0.000000e+00> : vector<2x32xf32>
    %142 = tpu.matmul %115, %141, %cst_83 {dimension_numbers = #tpu.dot_dimension_numbers<[1], [0], [0], [1], [0, 0, 1, 1], [], []>} : vector<2x32xf32>, vector<32x32xf32>, vector<2x32xf32> -> vector<2x32xf32>
    %143 = arith.addf %139, %142 : vector<2x32xf32>
    %144 = arith.negf %125 : vector<2x32xf32>
    %145 = math.exp %144 : vector<2x32xf32>
    %cst_84 = arith.constant 1.000000e+00 : f32
    %146 = vector.broadcast %cst_84 : f32 to vector<2x32xf32>
    %147 = arith.addf %146, %145 : vector<2x32xf32>
    %148 = arith.divf %146, %147 : vector<2x32xf32>
    %149 = arith.negf %131 : vector<2x32xf32>
    %150 = math.exp %149 : vector<2x32xf32>
    %cst_85 = arith.constant 1.000000e+00 : f32
    %151 = vector.broadcast %cst_85 : f32 to vector<2x32xf32>
    %152 = arith.addf %151, %150 : vector<2x32xf32>
    %153 = arith.divf %151, %152 : vector<2x32xf32>
    %154 = math.tanh %137 : vector<2x32xf32>
    %155 = arith.negf %143 : vector<2x32xf32>
    %156 = math.exp %155 : vector<2x32xf32>
    %cst_86 = arith.constant 1.000000e+00 : f32
    %157 = vector.broadcast %cst_86 : f32 to vector<2x32xf32>
    %158 = arith.addf %157, %156 : vector<2x32xf32>
    %159 = arith.divf %157, %158 : vector<2x32xf32>
    %160 = arith.mulf %153, %116 : vector<2x32xf32>
    %161 = arith.mulf %148, %154 : vector<2x32xf32>
    %162 = arith.addf %160, %161 : vector<2x32xf32>
    %163 = math.tanh %162 : vector<2x32xf32>
    %164 = arith.mulf %159, %163 : vector<2x32xf32>
    %c0_87 = arith.constant 0 : index
    %c0_88 = arith.constant 0 : index
    %165 = vector.load %arg8[%c0_87, %c0_88] : memref<2x32xf32, #tpu.memory_space<vmem>>, vector<2x32xf32>
    tpu.vector_store %arg8[%c0_87, %c0_88], %164 {strides = array<i32>} : memref<2x32xf32, #tpu.memory_space<vmem>>, vector<2x32xf32>,
    %c0_89 = arith.constant 0 : index
    %c0_90 = arith.constant 0 : index
    %166 = vector.load %arg9[%c0_89, %c0_90] : memref<2x32xf32, #tpu.memory_space<vmem>>, vector<2x32xf32>
    tpu.vector_store %arg9[%c0_89, %c0_90], %162 {strides = array<i32>} : memref<2x32xf32, #tpu.memory_space<vmem>>, vector<2x32xf32>,
    %167 = arith.index_cast %c2_i32 : i32 to index
    %c0_91 = arith.constant 0 : index
    %c0_92 = arith.constant 0 : index
    %168 = vector.load %arg5[%167, %c0_91, %c0_92] : memref<8x2x32xf32, #tpu.memory_space<vmem>>, vector<1x2x32xf32>
    %169 = vector.shape_cast %168 : vector<1x2x32xf32> to vector<2x32xf32>
    %170 = vector.shape_cast %164 : vector<2x32xf32> to vector<1x2x32xf32>
    tpu.vector_store %arg5[%167, %c0_91, %c0_92], %170 {strides = array<i32>} : memref<8x2x32xf32, #tpu.memory_space<vmem>>, vector<1x2x32xf32>,
    %c3_i32 = arith.constant 3 : i32
    %c0_93 = arith.constant 0 : index
    %c0_94 = arith.constant 0 : index
    %171 = vector.load %arg8[%c0_93, %c0_94] : memref<2x32xf32, #tpu.memory_space<vmem>>, vector<2x32xf32>
    %c0_95 = arith.constant 0 : index
    %c0_96 = arith.constant 0 : index
    %172 = vector.load %arg9[%c0_95, %c0_96] : memref<2x32xf32, #tpu.memory_space<vmem>>, vector<2x32xf32>
    %173 = arith.index_cast %c3_i32 : i32 to index
    %c0_97 = arith.constant 0 : index
    %c0_98 = arith.constant 0 : index
    %c0_99 = arith.constant 0 : index
    %174 = vector.load %arg1[%173, %c0_97, %c0_98, %c0_99] : memref<8x4x2x32xf32, #tpu.memory_space<vmem>>, vector<1x4x2x32xf32>
    %175 = vector.shape_cast %174 : vector<1x4x2x32xf32> to vector<4x2x32xf32>
    %176 = vector.extract_strided_slice %175 {offsets = [0, 0, 0], sizes = [1, 2, 32], strides = [1, 1, 1]} : vector<4x2x32xf32> to vector<1x2x32xf32>
    %177 = vector.shape_cast %176 : vector<1x2x32xf32> to vector<2x32xf32>
    %c0_100 = arith.constant 0 : index
    %c0_101 = arith.constant 0 : index
    %c0_102 = arith.constant 0 : index
    %178 = vector.load %arg4[%c0_100, %c0_101, %c0_102] : memref<4x32x32xf32, #tpu.memory_space<vmem>>, vector<1x32x32xf32>
    %179 = vector.shape_cast %178 : vector<1x32x32xf32> to vector<32x32xf32>
    %cst_103 = arith.constant dense<0.000000e+00> : vector<2x32xf32>
    %180 = tpu.matmul %171, %179, %cst_103 {dimension_numbers = #tpu.dot_dimension_numbers<[1], [0], [0], [1], [0, 0, 1, 1], [], []>} : vector<2x32xf32>, vector<32x32xf32>, vector<2x32xf32> -> vector<2x32xf32>
    %181 = arith.addf %177, %180 : vector<2x32xf32>
    %182 = vector.extract_strided_slice %175 {offsets = [1, 0, 0], sizes = [1, 2, 32], strides = [1, 1, 1]} : vector<4x2x32xf32> to vector<1x2x32xf32>
    %183 = vector.shape_cast %182 : vector<1x2x32xf32> to vector<2x32xf32>
    %c1_104 = arith.constant 1 : index
    %c0_105 = arith.constant 0 : index
    %c0_106 = arith.constant 0 : index
    %184 = vector.load %arg4[%c1_104, %c0_105, %c0_106] : memref<4x32x32xf32, #tpu.memory_space<vmem>>, vector<1x32x32xf32>
    %185 = vector.shape_cast %184 : vector<1x32x32xf32> to vector<32x32xf32>
    %cst_107 = arith.constant dense<0.000000e+00> : vector<2x32xf32>
    %186 = tpu.matmul %171, %185, %cst_107 {dimension_numbers = #tpu.dot_dimension_numbers<[1], [0], [0], [1], [0, 0, 1, 1], [], []>} : vector<2x32xf32>, vector<32x32xf32>, vector<2x32xf32> -> vector<2x32xf32>
    %187 = arith.addf %183, %186 : vector<2x32xf32>
    %188 = vector.extract_strided_slice %175 {offsets = [2, 0, 0], sizes = [1, 2, 32], strides = [1, 1, 1]} : vector<4x2x32xf32> to vector<1x2x32xf32>
    %189 = vector.shape_cast %188 : vector<1x2x32xf32> to vector<2x32xf32>
    %c2_108 = arith.constant 2 : index
    %c0_109 = arith.constant 0 : index
    %c0_110 = arith.constant 0 : index
    %190 = vector.load %arg4[%c2_108, %c0_109, %c0_110] : memref<4x32x32xf32, #tpu.memory_space<vmem>>, vector<1x32x32xf32>
    %191 = vector.shape_cast %190 : vector<1x32x32xf32> to vector<32x32xf32>
    %cst_111 = arith.constant dense<0.000000e+00> : vector<2x32xf32>
    %192 = tpu.matmul %171, %191, %cst_111 {dimension_numbers = #tpu.dot_dimension_numbers<[1], [0], [0], [1], [0, 0, 1, 1], [], []>} : vector<2x32xf32>, vector<32x32xf32>, vector<2x32xf32> -> vector<2x32xf32>
    %193 = arith.addf %189, %192 : vector<2x32xf32>
    %194 = vector.extract_strided_slice %175 {offsets = [3, 0, 0], sizes = [1, 2, 32], strides = [1, 1, 1]} : vector<4x2x32xf32> to vector<1x2x32xf32>
    %195 = vector.shape_cast %194 : vector<1x2x32xf32> to vector<2x32xf32>
    %c3_112 = arith.constant 3 : index
    %c0_113 = arith.constant 0 : index
    %c0_114 = arith.constant 0 : index
    %196 = vector.load %arg4[%c3_112, %c0_113, %c0_114] : memref<4x32x32xf32, #tpu.memory_space<vmem>>, vector<1x32x32xf32>
    %197 = vector.shape_cast %196 : vector<1x32x32xf32> to vector<32x32xf32>
    %cst_115 = arith.constant dense<0.000000e+00> : vector<2x32xf32>
    %198 = tpu.matmul %171, %197, %cst_115 {dimension_numbers = #tpu.dot_dimension_numbers<[1], [0], [0], [1], [0, 0, 1, 1], [], []>} : vector<2x32xf32>, vector<32x32xf32>, vector<2x32xf32> -> vector<2x32xf32>
    %199 = arith.addf %195, %198 : vector<2x32xf32>
    %200 = arith.negf %181 : vector<2x32xf32>
    %201 = math.exp %200 : vector<2x32xf32>
    %cst_116 = arith.constant 1.000000e+00 : f32
    %202 = vector.broadcast %cst_116 : f32 to vector<2x32xf32>
    %203 = arith.addf %202, %201 : vector<2x32xf32>
    %204 = arith.divf %202, %203 : vector<2x32xf32>
    %205 = arith.negf %187 : vector<2x32xf32>
    %206 = math.exp %205 : vector<2x32xf32>
    %cst_117 = arith.constant 1.000000e+00 : f32
    %207 = vector.broadcast %cst_117 : f32 to vector<2x32xf32>
    %208 = arith.addf %207, %206 : vector<2x32xf32>
    %209 = arith.divf %207, %208 : vector<2x32xf32>
    %210 = math.tanh %193 : vector<2x32xf32>
    %211 = arith.negf %199 : vector<2x32xf32>
    %212 = math.exp %211 : vector<2x32xf32>
    %cst_118 = arith.constant 1.000000e+00 : f32
    %213 = vector.broadcast %cst_118 : f32 to vector<2x32xf32>
    %214 = arith.addf %213, %212 : vector<2x32xf32>
    %215 = arith.divf %213, %214 : vector<2x32xf32>
    %216 = arith.mulf %209, %172 : vector<2x32xf32>
    %217 = arith.mulf %204, %210 : vector<2x32xf32>
    %218 = arith.addf %216, %217 : vector<2x32xf32>
    %219 = math.tanh %218 : vector<2x32xf32>
    %220 = arith.mulf %215, %219 : vector<2x32xf32>
    %c0_119 = arith.constant 0 : index
    %c0_120 = arith.constant 0 : index
    %221 = vector.load %arg8[%c0_119, %c0_120] : memref<2x32xf32, #tpu.memory_space<vmem>>, vector<2x32xf32>
    tpu.vector_store %arg8[%c0_119, %c0_120], %220 {strides = array<i32>} : memref<2x32xf32, #tpu.memory_space<vmem>>, vector<2x32xf32>,
    %c0_121 = arith.constant 0 : index
    %c0_122 = arith.constant 0 : index
    %222 = vector.load %arg9[%c0_121, %c0_122] : memref<2x32xf32, #tpu.memory_space<vmem>>, vector<2x32xf32>
    tpu.vector_store %arg9[%c0_121, %c0_122], %218 {strides = array<i32>} : memref<2x32xf32, #tpu.memory_space<vmem>>, vector<2x32xf32>,
    %223 = arith.index_cast %c3_i32 : i32 to index
    %c0_123 = arith.constant 0 : index
    %c0_124 = arith.constant 0 : index
    %224 = vector.load %arg5[%223, %c0_123, %c0_124] : memref<8x2x32xf32, #tpu.memory_space<vmem>>, vector<1x2x32xf32>
    %225 = vector.shape_cast %224 : vector<1x2x32xf32> to vector<2x32xf32>
    %226 = vector.shape_cast %220 : vector<2x32xf32> to vector<1x2x32xf32>
    tpu.vector_store %arg5[%223, %c0_123, %c0_124], %226 {strides = array<i32>} : memref<8x2x32xf32, #tpu.memory_space<vmem>>, vector<1x2x32xf32>,
    %c4_i32 = arith.constant 4 : i32
    %c0_125 = arith.constant 0 : index
    %c0_126 = arith.constant 0 : index
    %227 = vector.load %arg8[%c0_125, %c0_126] : memref<2x32xf32, #tpu.memory_space<vmem>>, vector<2x32xf32>
    %c0_127 = arith.constant 0 : index
    %c0_128 = arith.constant 0 : index
    %228 = vector.load %arg9[%c0_127, %c0_128] : memref<2x32xf32, #tpu.memory_space<vmem>>, vector<2x32xf32>
    %229 = arith.index_cast %c4_i32 : i32 to index
    %c0_129 = arith.constant 0 : index
    %c0_130 = arith.constant 0 : index
    %c0_131 = arith.constant 0 : index
    %230 = vector.load %arg1[%229, %c0_129, %c0_130, %c0_131] : memref<8x4x2x32xf32, #tpu.memory_space<vmem>>, vector<1x4x2x32xf32>
    %231 = vector.shape_cast %230 : vector<1x4x2x32xf32> to vector<4x2x32xf32>
    %232 = vector.extract_strided_slice %231 {offsets = [0, 0, 0], sizes = [1, 2, 32], strides = [1, 1, 1]} : vector<4x2x32xf32> to vector<1x2x32xf32>
    %233 = vector.shape_cast %232 : vector<1x2x32xf32> to vector<2x32xf32>
    %c0_132 = arith.constant 0 : index
    %c0_133 = arith.constant 0 : index
    %c0_134 = arith.constant 0 : index
    %234 = vector.load %arg4[%c0_132, %c0_133, %c0_134] : memref<4x32x32xf32, #tpu.memory_space<vmem>>, vector<1x32x32xf32>
    %235 = vector.shape_cast %234 : vector<1x32x32xf32> to vector<32x32xf32>
    %cst_135 = arith.constant dense<0.000000e+00> : vector<2x32xf32>
    %236 = tpu.matmul %227, %235, %cst_135 {dimension_numbers = #tpu.dot_dimension_numbers<[1], [0], [0], [1], [0, 0, 1, 1], [], []>} : vector<2x32xf32>, vector<32x32xf32>, vector<2x32xf32> -> vector<2x32xf32>
    %237 = arith.addf %233, %236 : vector<2x32xf32>
    %238 = vector.extract_strided_slice %231 {offsets = [1, 0, 0], sizes = [1, 2, 32], strides = [1, 1, 1]} : vector<4x2x32xf32> to vector<1x2x32xf32>
    %239 = vector.shape_cast %238 : vector<1x2x32xf32> to vector<2x32xf32>
    %c1_136 = arith.constant 1 : index
    %c0_137 = arith.constant 0 : index
    %c0_138 = arith.constant 0 : index
    %240 = vector.load %arg4[%c1_136, %c0_137, %c0_138] : memref<4x32x32xf32, #tpu.memory_space<vmem>>, vector<1x32x32xf32>
    %241 = vector.shape_cast %240 : vector<1x32x32xf32> to vector<32x32xf32>
    %cst_139 = arith.constant dense<0.000000e+00> : vector<2x32xf32>
    %242 = tpu.matmul %227, %241, %cst_139 {dimension_numbers = #tpu.dot_dimension_numbers<[1], [0], [0], [1], [0, 0, 1, 1], [], []>} : vector<2x32xf32>, vector<32x32xf32>, vector<2x32xf32> -> vector<2x32xf32>
    %243 = arith.addf %239, %242 : vector<2x32xf32>
    %244 = vector.extract_strided_slice %231 {offsets = [2, 0, 0], sizes = [1, 2, 32], strides = [1, 1, 1]} : vector<4x2x32xf32> to vector<1x2x32xf32>
    %245 = vector.shape_cast %244 : vector<1x2x32xf32> to vector<2x32xf32>
    %c2_140 = arith.constant 2 : index
    %c0_141 = arith.constant 0 : index
    %c0_142 = arith.constant 0 : index
    %246 = vector.load %arg4[%c2_140, %c0_141, %c0_142] : memref<4x32x32xf32, #tpu.memory_space<vmem>>, vector<1x32x32xf32>
    %247 = vector.shape_cast %246 : vector<1x32x32xf32> to vector<32x32xf32>
    %cst_143 = arith.constant dense<0.000000e+00> : vector<2x32xf32>
    %248 = tpu.matmul %227, %247, %cst_143 {dimension_numbers = #tpu.dot_dimension_numbers<[1], [0], [0], [1], [0, 0, 1, 1], [], []>} : vector<2x32xf32>, vector<32x32xf32>, vector<2x32xf32> -> vector<2x32xf32>
    %249 = arith.addf %245, %248 : vector<2x32xf32>
    %250 = vector.extract_strided_slice %231 {offsets = [3, 0, 0], sizes = [1, 2, 32], strides = [1, 1, 1]} : vector<4x2x32xf32> to vector<1x2x32xf32>
    %251 = vector.shape_cast %250 : vector<1x2x32xf32> to vector<2x32xf32>
    %c3_144 = arith.constant 3 : index
    %c0_145 = arith.constant 0 : index
    %c0_146 = arith.constant 0 : index
    %252 = vector.load %arg4[%c3_144, %c0_145, %c0_146] : memref<4x32x32xf32, #tpu.memory_space<vmem>>, vector<1x32x32xf32>
    %253 = vector.shape_cast %252 : vector<1x32x32xf32> to vector<32x32xf32>
    %cst_147 = arith.constant dense<0.000000e+00> : vector<2x32xf32>
    %254 = tpu.matmul %227, %253, %cst_147 {dimension_numbers = #tpu.dot_dimension_numbers<[1], [0], [0], [1], [0, 0, 1, 1], [], []>} : vector<2x32xf32>, vector<32x32xf32>, vector<2x32xf32> -> vector<2x32xf32>
    %255 = arith.addf %251, %254 : vector<2x32xf32>
    %256 = arith.negf %237 : vector<2x32xf32>
    %257 = math.exp %256 : vector<2x32xf32>
    %cst_148 = arith.constant 1.000000e+00 : f32
    %258 = vector.broadcast %cst_148 : f32 to vector<2x32xf32>
    %259 = arith.addf %258, %257 : vector<2x32xf32>
    %260 = arith.divf %258, %259 : vector<2x32xf32>
    %261 = arith.negf %243 : vector<2x32xf32>
    %262 = math.exp %261 : vector<2x32xf32>
    %cst_149 = arith.constant 1.000000e+00 : f32
    %263 = vector.broadcast %cst_149 : f32 to vector<2x32xf32>
    %264 = arith.addf %263, %262 : vector<2x32xf32>
    %265 = arith.divf %263, %264 : vector<2x32xf32>
    %266 = math.tanh %249 : vector<2x32xf32>
    %267 = arith.negf %255 : vector<2x32xf32>
    %268 = math.exp %267 : vector<2x32xf32>
    %cst_150 = arith.constant 1.000000e+00 : f32
    %269 = vector.broadcast %cst_150 : f32 to vector<2x32xf32>
    %270 = arith.addf %269, %268 : vector<2x32xf32>
    %271 = arith.divf %269, %270 : vector<2x32xf32>
    %272 = arith.mulf %265, %228 : vector<2x32xf32>
    %273 = arith.mulf %260, %266 : vector<2x32xf32>
    %274 = arith.addf %272, %273 : vector<2x32xf32>
    %275 = math.tanh %274 : vector<2x32xf32>
    %276 = arith.mulf %271, %275 : vector<2x32xf32>
    %c0_151 = arith.constant 0 : index
    %c0_152 = arith.constant 0 : index
    %277 = vector.load %arg8[%c0_151, %c0_152] : memref<2x32xf32, #tpu.memory_space<vmem>>, vector<2x32xf32>
    tpu.vector_store %arg8[%c0_151, %c0_152], %276 {strides = array<i32>} : memref<2x32xf32, #tpu.memory_space<vmem>>, vector<2x32xf32>,
    %c0_153 = arith.constant 0 : index
    %c0_154 = arith.constant 0 : index
    %278 = vector.load %arg9[%c0_153, %c0_154] : memref<2x32xf32, #tpu.memory_space<vmem>>, vector<2x32xf32>
    tpu.vector_store %arg9[%c0_153, %c0_154], %274 {strides = array<i32>} : memref<2x32xf32, #tpu.memory_space<vmem>>, vector<2x32xf32>,
    %279 = arith.index_cast %c4_i32 : i32 to index
    %c0_155 = arith.constant 0 : index
    %c0_156 = arith.constant 0 : index
    %280 = vector.load %arg5[%279, %c0_155, %c0_156] : memref<8x2x32xf32, #tpu.memory_space<vmem>>, vector<1x2x32xf32>
    %281 = vector.shape_cast %280 : vector<1x2x32xf32> to vector<2x32xf32>
    %282 = vector.shape_cast %276 : vector<2x32xf32> to vector<1x2x32xf32>
    tpu.vector_store %arg5[%279, %c0_155, %c0_156], %282 {strides = array<i32>} : memref<8x2x32xf32, #tpu.memory_space<vmem>>, vector<1x2x32xf32>,
    %c5_i32 = arith.constant 5 : i32
    %c0_157 = arith.constant 0 : index
    %c0_158 = arith.constant 0 : index
    %283 = vector.load %arg8[%c0_157, %c0_158] : memref<2x32xf32, #tpu.memory_space<vmem>>, vector<2x32xf32>
    %c0_159 = arith.constant 0 : index
    %c0_160 = arith.constant 0 : index
    %284 = vector.load %arg9[%c0_159, %c0_160] : memref<2x32xf32, #tpu.memory_space<vmem>>, vector<2x32xf32>
    %285 = arith.index_cast %c5_i32 : i32 to index
    %c0_161 = arith.constant 0 : index
    %c0_162 = arith.constant 0 : index
    %c0_163 = arith.constant 0 : index
    %286 = vector.load %arg1[%285, %c0_161, %c0_162, %c0_163] : memref<8x4x2x32xf32, #tpu.memory_space<vmem>>, vector<1x4x2x32xf32>
    %287 = vector.shape_cast %286 : vector<1x4x2x32xf32> to vector<4x2x32xf32>
    %288 = vector.extract_strided_slice %287 {offsets = [0, 0, 0], sizes = [1, 2, 32], strides = [1, 1, 1]} : vector<4x2x32xf32> to vector<1x2x32xf32>
    %289 = vector.shape_cast %288 : vector<1x2x32xf32> to vector<2x32xf32>
    %c0_164 = arith.constant 0 : index
    %c0_165 = arith.constant 0 : index
    %c0_166 = arith.constant 0 : index
    %290 = vector.load %arg4[%c0_164, %c0_165, %c0_166] : memref<4x32x32xf32, #tpu.memory_space<vmem>>, vector<1x32x32xf32>
    %291 = vector.shape_cast %290 : vector<1x32x32xf32> to vector<32x32xf32>
    %cst_167 = arith.constant dense<0.000000e+00> : vector<2x32xf32>
    %292 = tpu.matmul %283, %291, %cst_167 {dimension_numbers = #tpu.dot_dimension_numbers<[1], [0], [0], [1], [0, 0, 1, 1], [], []>} : vector<2x32xf32>, vector<32x32xf32>, vector<2x32xf32> -> vector<2x32xf32>
    %293 = arith.addf %289, %292 : vector<2x32xf32>
    %294 = vector.extract_strided_slice %287 {offsets = [1, 0, 0], sizes = [1, 2, 32], strides = [1, 1, 1]} : vector<4x2x32xf32> to vector<1x2x32xf32>
    %295 = vector.shape_cast %294 : vector<1x2x32xf32> to vector<2x32xf32>
    %c1_168 = arith.constant 1 : index
    %c0_169 = arith.constant 0 : index
    %c0_170 = arith.constant 0 : index
    %296 = vector.load %arg4[%c1_168, %c0_169, %c0_170] : memref<4x32x32xf32, #tpu.memory_space<vmem>>, vector<1x32x32xf32>
    %297 = vector.shape_cast %296 : vector<1x32x32xf32> to vector<32x32xf32>
    %cst_171 = arith.constant dense<0.000000e+00> : vector<2x32xf32>
    %298 = tpu.matmul %283, %297, %cst_171 {dimension_numbers = #tpu.dot_dimension_numbers<[1], [0], [0], [1], [0, 0, 1, 1], [], []>} : vector<2x32xf32>, vector<32x32xf32>, vector<2x32xf32> -> vector<2x32xf32>
    %299 = arith.addf %295, %298 : vector<2x32xf32>
    %300 = vector.extract_strided_slice %287 {offsets = [2, 0, 0], sizes = [1, 2, 32], strides = [1, 1, 1]} : vector<4x2x32xf32> to vector<1x2x32xf32>
    %301 = vector.shape_cast %300 : vector<1x2x32xf32> to vector<2x32xf32>
    %c2_172 = arith.constant 2 : index
    %c0_173 = arith.constant 0 : index
    %c0_174 = arith.constant 0 : index
    %302 = vector.load %arg4[%c2_172, %c0_173, %c0_174] : memref<4x32x32xf32, #tpu.memory_space<vmem>>, vector<1x32x32xf32>
    %303 = vector.shape_cast %302 : vector<1x32x32xf32> to vector<32x32xf32>
    %cst_175 = arith.constant dense<0.000000e+00> : vector<2x32xf32>
    %304 = tpu.matmul %283, %303, %cst_175 {dimension_numbers = #tpu.dot_dimension_numbers<[1], [0], [0], [1], [0, 0, 1, 1], [], []>} : vector<2x32xf32>, vector<32x32xf32>, vector<2x32xf32> -> vector<2x32xf32>
    %305 = arith.addf %301, %304 : vector<2x32xf32>
    %306 = vector.extract_strided_slice %287 {offsets = [3, 0, 0], sizes = [1, 2, 32], strides = [1, 1, 1]} : vector<4x2x32xf32> to vector<1x2x32xf32>
    %307 = vector.shape_cast %306 : vector<1x2x32xf32> to vector<2x32xf32>
    %c3_176 = arith.constant 3 : index
    %c0_177 = arith.constant 0 : index
    %c0_178 = arith.constant 0 : index
    %308 = vector.load %arg4[%c3_176, %c0_177, %c0_178] : memref<4x32x32xf32, #tpu.memory_space<vmem>>, vector<1x32x32xf32>
    %309 = vector.shape_cast %308 : vector<1x32x32xf32> to vector<32x32xf32>
    %cst_179 = arith.constant dense<0.000000e+00> : vector<2x32xf32>
    %310 = tpu.matmul %283, %309, %cst_179 {dimension_numbers = #tpu.dot_dimension_numbers<[1], [0], [0], [1], [0, 0, 1, 1], [], []>} : vector<2x32xf32>, vector<32x32xf32>, vector<2x32xf32> -> vector<2x32xf32>
    %311 = arith.addf %307, %310 : vector<2x32xf32>
    %312 = arith.negf %293 : vector<2x32xf32>
    %313 = math.exp %312 : vector<2x32xf32>
    %cst_180 = arith.constant 1.000000e+00 : f32
    %314 = vector.broadcast %cst_180 : f32 to vector<2x32xf32>
    %315 = arith.addf %314, %313 : vector<2x32xf32>
    %316 = arith.divf %314, %315 : vector<2x32xf32>
    %317 = arith.negf %299 : vector<2x32xf32>
    %318 = math.exp %317 : vector<2x32xf32>
    %cst_181 = arith.constant 1.000000e+00 : f32
    %319 = vector.broadcast %cst_181 : f32 to vector<2x32xf32>
    %320 = arith.addf %319, %318 : vector<2x32xf32>
    %321 = arith.divf %319, %320 : vector<2x32xf32>
    %322 = math.tanh %305 : vector<2x32xf32>
    %323 = arith.negf %311 : vector<2x32xf32>
    %324 = math.exp %323 : vector<2x32xf32>
    %cst_182 = arith.constant 1.000000e+00 : f32
    %325 = vector.broadcast %cst_182 : f32 to vector<2x32xf32>
    %326 = arith.addf %325, %324 : vector<2x32xf32>
    %327 = arith.divf %325, %326 : vector<2x32xf32>
    %328 = arith.mulf %321, %284 : vector<2x32xf32>
    %329 = arith.mulf %316, %322 : vector<2x32xf32>
    %330 = arith.addf %328, %329 : vector<2x32xf32>
    %331 = math.tanh %330 : vector<2x32xf32>
    %332 = arith.mulf %327, %331 : vector<2x32xf32>
    %c0_183 = arith.constant 0 : index
    %c0_184 = arith.constant 0 : index
    %333 = vector.load %arg8[%c0_183, %c0_184] : memref<2x32xf32, #tpu.memory_space<vmem>>, vector<2x32xf32>
    tpu.vector_store %arg8[%c0_183, %c0_184], %332 {strides = array<i32>} : memref<2x32xf32, #tpu.memory_space<vmem>>, vector<2x32xf32>,
    %c0_185 = arith.constant 0 : index
    %c0_186 = arith.constant 0 : index
    %334 = vector.load %arg9[%c0_185, %c0_186] : memref<2x32xf32, #tpu.memory_space<vmem>>, vector<2x32xf32>
    tpu.vector_store %arg9[%c0_185, %c0_186], %330 {strides = array<i32>} : memref<2x32xf32, #tpu.memory_space<vmem>>, vector<2x32xf32>,
    %335 = arith.index_cast %c5_i32 : i32 to index
    %c0_187 = arith.constant 0 : index
    %c0_188 = arith.constant 0 : index
    %336 = vector.load %arg5[%335, %c0_187, %c0_188] : memref<8x2x32xf32, #tpu.memory_space<vmem>>, vector<1x2x32xf32>
    %337 = vector.shape_cast %336 : vector<1x2x32xf32> to vector<2x32xf32>
    %338 = vector.shape_cast %332 : vector<2x32xf32> to vector<1x2x32xf32>
    tpu.vector_store %arg5[%335, %c0_187, %c0_188], %338 {strides = array<i32>} : memref<8x2x32xf32, #tpu.memory_space<vmem>>, vector<1x2x32xf32>,
    %c6_i32 = arith.constant 6 : i32
    %c0_189 = arith.constant 0 : index
    %c0_190 = arith.constant 0 : index
    %339 = vector.load %arg8[%c0_189, %c0_190] : memref<2x32xf32, #tpu.memory_space<vmem>>, vector<2x32xf32>
    %c0_191 = arith.constant 0 : index
    %c0_192 = arith.constant 0 : index
    %340 = vector.load %arg9[%c0_191, %c0_192] : memref<2x32xf32, #tpu.memory_space<vmem>>, vector<2x32xf32>
    %341 = arith.index_cast %c6_i32 : i32 to index
    %c0_193 = arith.constant 0 : index
    %c0_194 = arith.constant 0 : index
    %c0_195 = arith.constant 0 : index
    %342 = vector.load %arg1[%341, %c0_193, %c0_194, %c0_195] : memref<8x4x2x32xf32, #tpu.memory_space<vmem>>, vector<1x4x2x32xf32>
    %343 = vector.shape_cast %342 : vector<1x4x2x32xf32> to vector<4x2x32xf32>
    %344 = vector.extract_strided_slice %343 {offsets = [0, 0, 0], sizes = [1, 2, 32], strides = [1, 1, 1]} : vector<4x2x32xf32> to vector<1x2x32xf32>
    %345 = vector.shape_cast %344 : vector<1x2x32xf32> to vector<2x32xf32>
    %c0_196 = arith.constant 0 : index
    %c0_197 = arith.constant 0 : index
    %c0_198 = arith.constant 0 : index
    %346 = vector.load %arg4[%c0_196, %c0_197, %c0_198] : memref<4x32x32xf32, #tpu.memory_space<vmem>>, vector<1x32x32xf32>
    %347 = vector.shape_cast %346 : vector<1x32x32xf32> to vector<32x32xf32>
    %cst_199 = arith.constant dense<0.000000e+00> : vector<2x32xf32>
    %348 = tpu.matmul %339, %347, %cst_199 {dimension_numbers = #tpu.dot_dimension_numbers<[1], [0], [0], [1], [0, 0, 1, 1], [], []>} : vector<2x32xf32>, vector<32x32xf32>, vector<2x32xf32> -> vector<2x32xf32>
    %349 = arith.addf %345, %348 : vector<2x32xf32>
    %350 = vector.extract_strided_slice %343 {offsets = [1, 0, 0], sizes = [1, 2, 32], strides = [1, 1, 1]} : vector<4x2x32xf32> to vector<1x2x32xf32>
    %351 = vector.shape_cast %350 : vector<1x2x32xf32> to vector<2x32xf32>
    %c1_200 = arith.constant 1 : index
    %c0_201 = arith.constant 0 : index
    %c0_202 = arith.constant 0 : index
    %352 = vector.load %arg4[%c1_200, %c0_201, %c0_202] : memref<4x32x32xf32, #tpu.memory_space<vmem>>, vector<1x32x32xf32>
    %353 = vector.shape_cast %352 : vector<1x32x32xf32> to vector<32x32xf32>
    %cst_203 = arith.constant dense<0.000000e+00> : vector<2x32xf32>
    %354 = tpu.matmul %339, %353, %cst_203 {dimension_numbers = #tpu.dot_dimension_numbers<[1], [0], [0], [1], [0, 0, 1, 1], [], []>} : vector<2x32xf32>, vector<32x32xf32>, vector<2x32xf32> -> vector<2x32xf32>
    %355 = arith.addf %351, %354 : vector<2x32xf32>
    %356 = vector.extract_strided_slice %343 {offsets = [2, 0, 0], sizes = [1, 2, 32], strides = [1, 1, 1]} : vector<4x2x32xf32> to vector<1x2x32xf32>
    %357 = vector.shape_cast %356 : vector<1x2x32xf32> to vector<2x32xf32>
    %c2_204 = arith.constant 2 : index
    %c0_205 = arith.constant 0 : index
    %c0_206 = arith.constant 0 : index
    %358 = vector.load %arg4[%c2_204, %c0_205, %c0_206] : memref<4x32x32xf32, #tpu.memory_space<vmem>>, vector<1x32x32xf32>
    %359 = vector.shape_cast %358 : vector<1x32x32xf32> to vector<32x32xf32>
    %cst_207 = arith.constant dense<0.000000e+00> : vector<2x32xf32>
    %360 = tpu.matmul %339, %359, %cst_207 {dimension_numbers = #tpu.dot_dimension_numbers<[1], [0], [0], [1], [0, 0, 1, 1], [], []>} : vector<2x32xf32>, vector<32x32xf32>, vector<2x32xf32> -> vector<2x32xf32>
    %361 = arith.addf %357, %360 : vector<2x32xf32>
    %362 = vector.extract_strided_slice %343 {offsets = [3, 0, 0], sizes = [1, 2, 32], strides = [1, 1, 1]} : vector<4x2x32xf32> to vector<1x2x32xf32>
    %363 = vector.shape_cast %362 : vector<1x2x32xf32> to vector<2x32xf32>
    %c3_208 = arith.constant 3 : index
    %c0_209 = arith.constant 0 : index
    %c0_210 = arith.constant 0 : index
    %364 = vector.load %arg4[%c3_208, %c0_209, %c0_210] : memref<4x32x32xf32, #tpu.memory_space<vmem>>, vector<1x32x32xf32>
    %365 = vector.shape_cast %364 : vector<1x32x32xf32> to vector<32x32xf32>
    %cst_211 = arith.constant dense<0.000000e+00> : vector<2x32xf32>
    %366 = tpu.matmul %339, %365, %cst_211 {dimension_numbers = #tpu.dot_dimension_numbers<[1], [0], [0], [1], [0, 0, 1, 1], [], []>} : vector<2x32xf32>, vector<32x32xf32>, vector<2x32xf32> -> vector<2x32xf32>
    %367 = arith.addf %363, %366 : vector<2x32xf32>
    %368 = arith.negf %349 : vector<2x32xf32>
    %369 = math.exp %368 : vector<2x32xf32>
    %cst_212 = arith.constant 1.000000e+00 : f32
    %370 = vector.broadcast %cst_212 : f32 to vector<2x32xf32>
    %371 = arith.addf %370, %369 : vector<2x32xf32>
    %372 = arith.divf %370, %371 : vector<2x32xf32>
    %373 = arith.negf %355 : vector<2x32xf32>
    %374 = math.exp %373 : vector<2x32xf32>
    %cst_213 = arith.constant 1.000000e+00 : f32
    %375 = vector.broadcast %cst_213 : f32 to vector<2x32xf32>
    %376 = arith.addf %375, %374 : vector<2x32xf32>
    %377 = arith.divf %375, %376 : vector<2x32xf32>
    %378 = math.tanh %361 : vector<2x32xf32>
    %379 = arith.negf %367 : vector<2x32xf32>
    %380 = math.exp %379 : vector<2x32xf32>
    %cst_214 = arith.constant 1.000000e+00 : f32
    %381 = vector.broadcast %cst_214 : f32 to vector<2x32xf32>
    %382 = arith.addf %381, %380 : vector<2x32xf32>
    %383 = arith.divf %381, %382 : vector<2x32xf32>
    %384 = arith.mulf %377, %340 : vector<2x32xf32>
    %385 = arith.mulf %372, %378 : vector<2x32xf32>
    %386 = arith.addf %384, %385 : vector<2x32xf32>
    %387 = math.tanh %386 : vector<2x32xf32>
    %388 = arith.mulf %383, %387 : vector<2x32xf32>
    %c0_215 = arith.constant 0 : index
    %c0_216 = arith.constant 0 : index
    %389 = vector.load %arg8[%c0_215, %c0_216] : memref<2x32xf32, #tpu.memory_space<vmem>>, vector<2x32xf32>
    tpu.vector_store %arg8[%c0_215, %c0_216], %388 {strides = array<i32>} : memref<2x32xf32, #tpu.memory_space<vmem>>, vector<2x32xf32>,
    %c0_217 = arith.constant 0 : index
    %c0_218 = arith.constant 0 : index
    %390 = vector.load %arg9[%c0_217, %c0_218] : memref<2x32xf32, #tpu.memory_space<vmem>>, vector<2x32xf32>
    tpu.vector_store %arg9[%c0_217, %c0_218], %386 {strides = array<i32>} : memref<2x32xf32, #tpu.memory_space<vmem>>, vector<2x32xf32>,
    %391 = arith.index_cast %c6_i32 : i32 to index
    %c0_219 = arith.constant 0 : index
    %c0_220 = arith.constant 0 : index
    %392 = vector.load %arg5[%391, %c0_219, %c0_220] : memref<8x2x32xf32, #tpu.memory_space<vmem>>, vector<1x2x32xf32>
    %393 = vector.shape_cast %392 : vector<1x2x32xf32> to vector<2x32xf32>
    %394 = vector.shape_cast %388 : vector<2x32xf32> to vector<1x2x32xf32>
    tpu.vector_store %arg5[%391, %c0_219, %c0_220], %394 {strides = array<i32>} : memref<8x2x32xf32, #tpu.memory_space<vmem>>, vector<1x2x32xf32>,
    %c7_i32 = arith.constant 7 : i32
    %c0_221 = arith.constant 0 : index
    %c0_222 = arith.constant 0 : index
    %395 = vector.load %arg8[%c0_221, %c0_222] : memref<2x32xf32, #tpu.memory_space<vmem>>, vector<2x32xf32>
    %c0_223 = arith.constant 0 : index
    %c0_224 = arith.constant 0 : index
    %396 = vector.load %arg9[%c0_223, %c0_224] : memref<2x32xf32, #tpu.memory_space<vmem>>, vector<2x32xf32>
    %397 = arith.index_cast %c7_i32 : i32 to index
    %c0_225 = arith.constant 0 : index
    %c0_226 = arith.constant 0 : index
    %c0_227 = arith.constant 0 : index
    %398 = vector.load %arg1[%397, %c0_225, %c0_226, %c0_227] : memref<8x4x2x32xf32, #tpu.memory_space<vmem>>, vector<1x4x2x32xf32>
    %399 = vector.shape_cast %398 : vector<1x4x2x32xf32> to vector<4x2x32xf32>
    %400 = vector.extract_strided_slice %399 {offsets = [0, 0, 0], sizes = [1, 2, 32], strides = [1, 1, 1]} : vector<4x2x32xf32> to vector<1x2x32xf32>
    %401 = vector.shape_cast %400 : vector<1x2x32xf32> to vector<2x32xf32>
    %c0_228 = arith.constant 0 : index
    %c0_229 = arith.constant 0 : index
    %c0_230 = arith.constant 0 : index
    %402 = vector.load %arg4[%c0_228, %c0_229, %c0_230] : memref<4x32x32xf32, #tpu.memory_space<vmem>>, vector<1x32x32xf32>
    %403 = vector.shape_cast %402 : vector<1x32x32xf32> to vector<32x32xf32>
    %cst_231 = arith.constant dense<0.000000e+00> : vector<2x32xf32>
    %404 = tpu.matmul %395, %403, %cst_231 {dimension_numbers = #tpu.dot_dimension_numbers<[1], [0], [0], [1], [0, 0, 1, 1], [], []>} : vector<2x32xf32>, vector<32x32xf32>, vector<2x32xf32> -> vector<2x32xf32>
    %405 = arith.addf %401, %404 : vector<2x32xf32>
    %406 = vector.extract_strided_slice %399 {offsets = [1, 0, 0], sizes = [1, 2, 32], strides = [1, 1, 1]} : vector<4x2x32xf32> to vector<1x2x32xf32>
    %407 = vector.shape_cast %406 : vector<1x2x32xf32> to vector<2x32xf32>
    %c1_232 = arith.constant 1 : index
    %c0_233 = arith.constant 0 : index
    %c0_234 = arith.constant 0 : index
    %408 = vector.load %arg4[%c1_232, %c0_233, %c0_234] : memref<4x32x32xf32, #tpu.memory_space<vmem>>, vector<1x32x32xf32>
    %409 = vector.shape_cast %408 : vector<1x32x32xf32> to vector<32x32xf32>
    %cst_235 = arith.constant dense<0.000000e+00> : vector<2x32xf32>
    %410 = tpu.matmul %395, %409, %cst_235 {dimension_numbers = #tpu.dot_dimension_numbers<[1], [0], [0], [1], [0, 0, 1, 1], [], []>} : vector<2x32xf32>, vector<32x32xf32>, vector<2x32xf32> -> vector<2x32xf32>
    %411 = arith.addf %407, %410 : vector<2x32xf32>
    %412 = vector.extract_strided_slice %399 {offsets = [2, 0, 0], sizes = [1, 2, 32], strides = [1, 1, 1]} : vector<4x2x32xf32> to vector<1x2x32xf32>
    %413 = vector.shape_cast %412 : vector<1x2x32xf32> to vector<2x32xf32>
    %c2_236 = arith.constant 2 : index
    %c0_237 = arith.constant 0 : index
    %c0_238 = arith.constant 0 : index
    %414 = vector.load %arg4[%c2_236, %c0_237, %c0_238] : memref<4x32x32xf32, #tpu.memory_space<vmem>>, vector<1x32x32xf32>
    %415 = vector.shape_cast %414 : vector<1x32x32xf32> to vector<32x32xf32>
    %cst_239 = arith.constant dense<0.000000e+00> : vector<2x32xf32>
    %416 = tpu.matmul %395, %415, %cst_239 {dimension_numbers = #tpu.dot_dimension_numbers<[1], [0], [0], [1], [0, 0, 1, 1], [], []>} : vector<2x32xf32>, vector<32x32xf32>, vector<2x32xf32> -> vector<2x32xf32>
    %417 = arith.addf %413, %416 : vector<2x32xf32>
    %418 = vector.extract_strided_slice %399 {offsets = [3, 0, 0], sizes = [1, 2, 32], strides = [1, 1, 1]} : vector<4x2x32xf32> to vector<1x2x32xf32>
    %419 = vector.shape_cast %418 : vector<1x2x32xf32> to vector<2x32xf32>
    %c3_240 = arith.constant 3 : index
    %c0_241 = arith.constant 0 : index
    %c0_242 = arith.constant 0 : index
    %420 = vector.load %arg4[%c3_240, %c0_241, %c0_242] : memref<4x32x32xf32, #tpu.memory_space<vmem>>, vector<1x32x32xf32>
    %421 = vector.shape_cast %420 : vector<1x32x32xf32> to vector<32x32xf32>
    %cst_243 = arith.constant dense<0.000000e+00> : vector<2x32xf32>
    %422 = tpu.matmul %395, %421, %cst_243 {dimension_numbers = #tpu.dot_dimension_numbers<[1], [0], [0], [1], [0, 0, 1, 1], [], []>} : vector<2x32xf32>, vector<32x32xf32>, vector<2x32xf32> -> vector<2x32xf32>
    %423 = arith.addf %419, %422 : vector<2x32xf32>
    %424 = arith.negf %405 : vector<2x32xf32>
    %425 = math.exp %424 : vector<2x32xf32>
    %cst_244 = arith.constant 1.000000e+00 : f32
    %426 = vector.broadcast %cst_244 : f32 to vector<2x32xf32>
    %427 = arith.addf %426, %425 : vector<2x32xf32>
    %428 = arith.divf %426, %427 : vector<2x32xf32>
    %429 = arith.negf %411 : vector<2x32xf32>
    %430 = math.exp %429 : vector<2x32xf32>
    %cst_245 = arith.constant 1.000000e+00 : f32
    %431 = vector.broadcast %cst_245 : f32 to vector<2x32xf32>
    %432 = arith.addf %431, %430 : vector<2x32xf32>
    %433 = arith.divf %431, %432 : vector<2x32xf32>
    %434 = math.tanh %417 : vector<2x32xf32>
    %435 = arith.negf %423 : vector<2x32xf32>
    %436 = math.exp %435 : vector<2x32xf32>
    %cst_246 = arith.constant 1.000000e+00 : f32
    %437 = vector.broadcast %cst_246 : f32 to vector<2x32xf32>
    %438 = arith.addf %437, %436 : vector<2x32xf32>
    %439 = arith.divf %437, %438 : vector<2x32xf32>
    %440 = arith.mulf %433, %396 : vector<2x32xf32>
    %441 = arith.mulf %428, %434 : vector<2x32xf32>
    %442 = arith.addf %440, %441 : vector<2x32xf32>
    %443 = math.tanh %442 : vector<2x32xf32>
    %444 = arith.mulf %439, %443 : vector<2x32xf32>
    %c0_247 = arith.constant 0 : index
    %c0_248 = arith.constant 0 : index
    %445 = vector.load %arg8[%c0_247, %c0_248] : memref<2x32xf32, #tpu.memory_space<vmem>>, vector<2x32xf32>
    tpu.vector_store %arg8[%c0_247, %c0_248], %444 {strides = array<i32>} : memref<2x32xf32, #tpu.memory_space<vmem>>, vector<2x32xf32>,
    %c0_249 = arith.constant 0 : index
    %c0_250 = arith.constant 0 : index
    %446 = vector.load %arg9[%c0_249, %c0_250] : memref<2x32xf32, #tpu.memory_space<vmem>>, vector<2x32xf32>
    tpu.vector_store %arg9[%c0_249, %c0_250], %442 {strides = array<i32>} : memref<2x32xf32, #tpu.memory_space<vmem>>, vector<2x32xf32>,
    %447 = arith.index_cast %c7_i32 : i32 to index
    %c0_251 = arith.constant 0 : index
    %c0_252 = arith.constant 0 : index
    %448 = vector.load %arg5[%447, %c0_251, %c0_252] : memref<8x2x32xf32, #tpu.memory_space<vmem>>, vector<1x2x32xf32>
    %449 = vector.shape_cast %448 : vector<1x2x32xf32> to vector<2x32xf32>
    %450 = vector.shape_cast %444 : vector<2x32xf32> to vector<1x2x32xf32>
    tpu.vector_store %arg5[%447, %c0_251, %c0_252], %450 {strides = array<i32>} : memref<8x2x32xf32, #tpu.memory_space<vmem>>, vector<1x2x32xf32>,
    %c8_i32 = arith.constant 8 : i32
    %c0_253 = arith.constant 0 : index
    %c0_254 = arith.constant 0 : index
    %451 = vector.load %arg8[%c0_253, %c0_254] : memref<2x32xf32, #tpu.memory_space<vmem>>, vector<2x32xf32>
    %c0_255 = arith.constant 0 : index
    %c0_256 = arith.constant 0 : index
    %452 = vector.load %arg6[%c0_255, %c0_256] : memref<2x32xf32, #tpu.memory_space<vmem>>, vector<2x32xf32>
    tpu.vector_store %arg6[%c0_255, %c0_256], %451 {strides = array<i32>} : memref<2x32xf32, #tpu.memory_space<vmem>>, vector<2x32xf32>,
    %c0_257 = arith.constant 0 : index
    %c0_258 = arith.constant 0 : index
    %453 = vector.load %arg9[%c0_257, %c0_258] : memref<2x32xf32, #tpu.memory_space<vmem>>, vector<2x32xf32>
    %c0_259 = arith.constant 0 : index
    %c0_260 = arith.constant 0 : index
    %454 = vector.load %arg7[%c0_259, %c0_260] : memref<2x32xf32, #tpu.memory_space<vmem>>, vector<2x32xf32>
    tpu.vector_store %arg7[%c0_259, %c0_260], %453 {strides = array<i32>} : memref<2x32xf32, #tpu.memory_space<vmem>>, vector<2x32xf32>,
    return
  }
  func.func @transform_0(%arg0: i32) -> (i32, i32, i32, i32) {
    %c0_i32 = arith.constant 0 : i32
    %c0_i32_0 = arith.constant 0 : i32
    %c0_i32_1 = arith.constant 0 : i32
    %c0_i32_2 = arith.constant 0 : i32
    return %arg0, %c0_i32, %c0_i32_0, %c0_i32_1 : i32, i32, i32, i32
  }
  func.func @transform_1(%arg0: i32) -> (i32, i32) {
    %c0_i32 = arith.constant 0 : i32
    %c0_i32_0 = arith.constant 0 : i32
    %c0_i32_1 = arith.constant 0 : i32
    return %c0_i32, %c0_i32_0 : i32, i32
  }
  func.func @transform_2(%arg0: i32) -> (i32, i32) {
    %c0_i32 = arith.constant 0 : i32
    %c0_i32_0 = arith.constant 0 : i32
    %c0_i32_1 = arith.constant 0 : i32
    return %c0_i32, %c0_i32_0 : i32, i32
  }
  func.func @transform_3(%arg0: i32) -> (i32, i32, i32) {
    %c0_i32 = arith.constant 0 : i32
    %c0_i32_0 = arith.constant 0 : i32
    %c0_i32_1 = arith.constant 0 : i32
    %c0_i32_2 = arith.constant 0 : i32
    return %c0_i32, %c0_i32_0, %c0_i32_1 : i32, i32, i32
  }
  func.func @transform_4(%arg0: i32) -> (i32, i32, i32) {
    %c0_i32 = arith.constant 0 : i32
    %c0_i32_0 = arith.constant 0 : i32
    %c0_i32_1 = arith.constant 0 : i32
    return %arg0, %c0_i32, %c0_i32_0 : i32, i32, i32
  }
  func.func @transform_5(%arg0: i32) -> (i32, i32) {
    %c0_i32 = arith.constant 0 : i32
    %c0_i32_0 = arith.constant 0 : i32
    %c0_i32_1 = arith.constant 0 : i32
    return %c0_i32, %c0_i32_0 : i32, i32
  }
  func.func @transform_6(%arg0: i32) -> (i32, i32) {
    %c0_i32 = arith.constant 0 : i32
    %c0_i32_0 = arith.constant 0 : i32
    %c0_i32_1 = arith.constant 0 : i32
    return %c0_i32, %c0_i32_0 : i32, i32
  }
}

</mosaic_0001>

<llo_original>
// kernel: seq2seq_forward.9
$region0: #{seq2seq_forward.9}
  #allocation0 [shape = 'u32[]', space=smem, size = 0x4, offset = 0x4, fixed_abs, tag = 'smem constant byte address 0x4 - core index']
  #allocation1 [shape = 'u32[144,128]{1,0:T(1,128)}', space=vmem, size = 0x12000, scoped, tag = 'internal scratch']
  %s0 = inlined_call_operand.vmem [shape: f32[16,32], index: 0, kind: input, shape index: {}]
  %s1 = inlined_call_operand.vmem [shape: f32[32,128], index: 1, kind: input, shape index: {}]
  %s2 = inlined_call_operand.vmem [shape: f32[1,128], index: 2, kind: input, shape index: {}]
  %s3 = inlined_call_operand.hbm [shape: f32[16,128], index: 3, kind: output, shape index: {}]
  %s4 = sld [smem:[#allocation0]]
  $region22: #{seq2seq_forward.9} parent=0
    _
  %s6 = ssub.s32 1, %s4
  %s7 = scalar_select 0, %s6, %s4
  $region1: #{seq2seq_forward.9} parent=0
    #allocation2 [shape = 'u8[8192]{0}', space=vmem, size = 0x2000, scoped, tag = 'output window, operand 0, single buffered']
    #allocation3 [shape = 's32[1]{0}', space=sflag, size = 0x4, scoped, tag = 'scoped memory for seq2seq_forward.9']
    %8 = vsyncpa [#allocation3], 0
    // Predicated region
    $region2: #{seq2seq_forward.9} parent=1 // pred_check
      _
    $region3: #{seq2seq_forward.9} parent=1 // pred_check_branch
      %10 = sbr.rel (0) target = $region5
    $region4: #{seq2seq_forward.9} parent=1 // pred_region
      _
    $region5: #{seq2seq_forward.9} parent=1 // pred_fallthru
      _
    // Predicated region
    $region6: #{seq2seq_forward.9} parent=1 // pred_check
      _
    $region7: #{seq2seq_forward.9} parent=1 // pred_check_branch
      %12 = sbr.rel (0) target = $region9
    $region8: #{seq2seq_forward.9} parent=1 // pred_region
      _
    $region9: #{seq2seq_forward.9} parent=1 // pred_fallthru
      _
    // Predicated region
    $region10: #{seq2seq_forward.9} parent=1 // pred_check
      _
    $region11: #{seq2seq_forward.9} parent=1 // pred_check_branch
      %14 = sbr.rel (0) target = $region13
    $region12: #{seq2seq_forward.9} parent=1 // pred_region
      _
    $region13: #{seq2seq_forward.9} parent=1 // pred_fallthru
      _
    %v15 = vld [vmem:[%s0] sm:$0xff]
    %v16 = vld [vmem:[%s0 + $0x8] sm:$0xff]
    %v17 = vld [vmem:[%s1] sm:$0xff]
    %v18 = vld [vmem:[%s1 + $0x8] sm:$0xff]
    %v19 = vld [vmem:[%s1 + $0x10] sm:$0xff]
    %v20 = vld [vmem:[%s1 + $0x18] sm:$0xff]
    %v21 = vld [vmem:[%s2] sm:$0x1]
    %v23 = vlaneseq
    %v24 = vshrl.u32 %v23, 7
    %v25 = vsub.s32 0, %v24
    %v26 = vrot.slane %v21, %v25
    %vm28 = vcmask 261120
    %v30 = vsel %vm28, %v15, 0
    %v33 = vsel %vm28, %v16, 0
    %35 = vmatprep.subr.mxu0 0.0
    %36 = vmatpush1.msra.mxu0 0.0
    %37 = vmatprep.subr.mxu0 0.0
    %38 = vmatpush1.msra.mxu0 0.0
    %39 = vmatprep.subr.mxu0 0.0
    %40 = vmatpush1.msra.mxu0 0.0
    %41 = vmatprep.subr.mxu0 0.0
    %42 = vmatpush1.msra.mxu0 0.0
    %43 = vmatprep.subr.mxu0 0.0
    %44 = vmatpush1.msra.mxu0 0.0
    %45 = vmatprep.subr.mxu0 0.0
    %46 = vmatpush1.msra.mxu0 0.0
    %47 = vmatprep.subr.mxu0 0.0
    %48 = vmatpush1.msra.mxu0 0.0
    %49 = vmatprep.subr.mxu0 0.0
    %50 = vmatpush1.msra.mxu0 0.0
    %51 = vmatprep.subr.mxu0 0.0
    %52 = vmatpush1.msra.mxu0 0.0
    %53 = vmatprep.subr.mxu0 0.0
    %54 = vmatpush1.msra.mxu0 0.0
    %55 = vmatprep.subr.mxu0 0.0
    %56 = vmatpush1.msra.mxu0 0.0
    %57 = vmatprep.subr.mxu0 0.0
    %58 = vmatpush1.msra.mxu0 0.0
    %59 = vmatprep.subr.mxu0 0.0
    %60 = vmatpush1.msra.mxu0 %v20
    %61 = vmatprep.subr.mxu0 0.0
    %62 = vmatpush1.msra.mxu0 %v19
    %63 = vmatprep.subr.mxu0 0.0
    %64 = vmatpush1.msra.mxu0 %v18
    %65 = vmatprep.subr.mxu0 0.0
    %66 = vmatpush1.msra.mxu0 %v17
    %67 = vmatprep.subr.mxu0 0.0
    %68 = vmatpush2.msra.mxu0 0.0
    %69 = vmatprep.subr.mxu0 0.0
    %70 = vmatpush2.msra.mxu0 0.0
    %71 = vmatprep.subr.mxu0 0.0
    %72 = vmatpush2.msra.mxu0 0.0
    %73 = vmatprep.subr.mxu0 0.0
    %74 = vmatpush2.msra.mxu0 0.0
    %75 = vmatprep.subr.mxu0 0.0
    %76 = vmatpush2.msra.mxu0 0.0
    %77 = vmatprep.subr.mxu0 0.0
    %78 = vmatpush2.msra.mxu0 0.0
    %79 = vmatprep.subr.mxu0 0.0
    %80 = vmatpush2.msra.mxu0 0.0
    %81 = vmatprep.subr.mxu0 0.0
    %82 = vmatpush2.msra.mxu0 0.0
    %83 = vmatprep.subr.mxu0 0.0
    %84 = vmatpush2.msra.mxu0 0.0
    %85 = vmatprep.subr.mxu0 0.0
    %86 = vmatpush2.msra.mxu0 0.0
    %87 = vmatprep.subr.mxu0 0.0
    %88 = vmatpush2.msra.mxu0 0.0
    %89 = vmatprep.subr.mxu0 0.0
    %90 = vmatpush2.msra.mxu0 0.0
    %91 = vmatprep.subr.mxu0 0.0
    %92 = vmatpush2.msra.mxu0 0.0
    %93 = vmatprep.subr.mxu0 0.0
    %94 = vmatpush2.msra.mxu0 0.0
    %95 = vmatprep.subr.mxu0 0.0
    %96 = vmatpush2.msra.mxu0 0.0
    %97 = vmatprep.subr.mxu0 0.0
    %98 = vmatpush2.msra.mxu0 0.0
    %99 = vmatprep.mubr.f32.mxu0 0.0
    %100 = vmatmul.mubr.f32.gmra.mxu0 %v30
    %v101 = vpop.f32.mrf.mxu0
    %v102 = vadd.f32 %v26, %v101
    %v103 = vpop.f32.mrf.mxu0
    %104 = vmatprep.mubr.f32.mxu0 0.0
    %105 = vmatmul.mubr.f32.gmra.mxu0 %v33
    %v106 = vpop.f32.mrf.mxu0
    %v107 = vadd.f32 %v26, %v106
    %v108 = vpop.f32.mrf.mxu0
    %109 = vdwg.mxu0
    %110 = vst [vmem:[#allocation2] sm:$0xff] %v102
    %111 = vst [vmem:[#allocation2 + $0x8] sm:$0xff] %v107
    // Predicated region
    $region14: #{seq2seq_forward.9} parent=1 // pred_check
      _
    $region15: #{seq2seq_forward.9} parent=1 // pred_check_branch
      %113 = sbr.rel (0) target = $region17
    $region16: #{seq2seq_forward.9} parent=1 // pred_region
      %s115 = ssub.s32 256, 256
      %116 = vsyncadd [#allocation3], %s115
      %s117 = sshll.u32 [#allocation2], 4
      %s118 = int_to_ptr.vmem [resolvable:$true] %s117
      %123 = dma.vmem_to_hbm [thread:$0]  %s118, 256, %s3, [#allocation3], 128, 128, 8
    $region17: #{seq2seq_forward.9} parent=1 // pred_fallthru
      _
    // Predicated region
    $region18: #{seq2seq_forward.9} parent=1 // pred_check
      _
    $region19: #{seq2seq_forward.9} parent=1 // pred_check_branch
      %125 = sbr.rel (0) target = $region21
    $region20: #{seq2seq_forward.9} parent=1 // pred_region
      %126 = dma.done [#allocation3], 256
    $region21: #{seq2seq_forward.9} parent=1 // pred_fallthru
      _
    %127 = vsyncpa [#allocation3], 1

// kernel: seq2seq_forward.5
$region0: #{seq2seq_forward.5}
  #allocation0 [shape = 'u32[]', space=smem, size = 0x4, offset = 0x4, fixed_abs, tag = 'smem constant byte address 0x4 - core index']
  #allocation1 [shape = 'u32[144,128]{1,0:T(1,128)}', space=vmem, size = 0x12000, scoped, tag = 'internal scratch']
  %s0 = inlined_call_operand.vmem [shape: f32[16,32], index: 0, kind: input, shape index: {}]
  %s1 = inlined_call_operand.vmem [shape: f32[32,128], index: 1, kind: input, shape index: {}]
  %s2 = inlined_call_operand.vmem [shape: f32[1,128], index: 2, kind: input, shape index: {}]
  %s3 = inlined_call_operand.vmem [shape: f32[16,128], index: 3, kind: output, shape index: {}]
  %s4 = sld [smem:[#allocation0]]
  $region22: #{seq2seq_forward.5} parent=0
    _
  %s6 = ssub.s32 1, %s4
  %s7 = scalar_select 0, %s6, %s4
  // Predicated region
  $region2: #{seq2seq_forward.5} parent=0 // pred_check
    _
  $region3: #{seq2seq_forward.5} parent=0 // pred_check_branch
    %9 = sbr.rel (0) target = $region5
  $region4: #{seq2seq_forward.5} parent=0 // pred_region
    _
  $region5: #{seq2seq_forward.5} parent=0 // pred_fallthru
    _
  // Predicated region
  $region6: #{seq2seq_forward.5} parent=0 // pred_check
    _
  $region7: #{seq2seq_forward.5} parent=0 // pred_check_branch
    %11 = sbr.rel (0) target = $region9
  $region8: #{seq2seq_forward.5} parent=0 // pred_region
    _
  $region9: #{seq2seq_forward.5} parent=0 // pred_fallthru
    _
  // Predicated region
  $region10: #{seq2seq_forward.5} parent=0 // pred_check
    _
  $region11: #{seq2seq_forward.5} parent=0 // pred_check_branch
    %13 = sbr.rel (0) target = $region13
  $region12: #{seq2seq_forward.5} parent=0 // pred_region
    _
  $region13: #{seq2seq_forward.5} parent=0 // pred_fallthru
    _
  %v14 = vld [vmem:[%s0] sm:$0xff]
  %v15 = vld [vmem:[%s0 + $0x8] sm:$0xff]
  %v16 = vld [vmem:[%s1] sm:$0xff]
  %v17 = vld [vmem:[%s1 + $0x8] sm:$0xff]
  %v18 = vld [vmem:[%s1 + $0x10] sm:$0xff]
  %v19 = vld [vmem:[%s1 + $0x18] sm:$0xff]
  %v20 = vld [vmem:[%s2] sm:$0x1]
  %v22 = vlaneseq
  %v23 = vshrl.u32 %v22, 7
  %v24 = vsub.s32 0, %v23
  %v25 = vrot.slane %v20, %v24
  %vm27 = vcmask 261120
  %v29 = vsel %vm27, %v14, 0
  %v32 = vsel %vm27, %v15, 0
  %34 = vmatprep.subr.mxu0 0.0
  %35 = vmatpush1.msra.mxu0 0.0
  %36 = vmatprep.subr.mxu0 0.0
  %37 = vmatpush1.msra.mxu0 0.0
  %38 = vmatprep.subr.mxu0 0.0
  %39 = vmatpush1.msra.mxu0 0.0
  %40 = vmatprep.subr.mxu0 0.0
  %41 = vmatpush1.msra.mxu0 0.0
  %42 = vmatprep.subr.mxu0 0.0
  %43 = vmatpush1.msra.mxu0 0.0
  %44 = vmatprep.subr.mxu0 0.0
  %45 = vmatpush1.msra.mxu0 0.0
  %46 = vmatprep.subr.mxu0 0.0
  %47 = vmatpush1.msra.mxu0 0.0
  %48 = vmatprep.subr.mxu0 0.0
  %49 = vmatpush1.msra.mxu0 0.0
  %50 = vmatprep.subr.mxu0 0.0
  %51 = vmatpush1.msra.mxu0 0.0
  %52 = vmatprep.subr.mxu0 0.0
  %53 = vmatpush1.msra.mxu0 0.0
  %54 = vmatprep.subr.mxu0 0.0
  %55 = vmatpush1.msra.mxu0 0.0
  %56 = vmatprep.subr.mxu0 0.0
  %57 = vmatpush1.msra.mxu0 0.0
  %58 = vmatprep.subr.mxu0 0.0
  %59 = vmatpush1.msra.mxu0 %v19
  %60 = vmatprep.subr.mxu0 0.0
  %61 = vmatpush1.msra.mxu0 %v18
  %62 = vmatprep.subr.mxu0 0.0
  %63 = vmatpush1.msra.mxu0 %v17
  %64 = vmatprep.subr.mxu0 0.0
  %65 = vmatpush1.msra.mxu0 %v16
  %66 = vmatprep.subr.mxu0 0.0
  %67 = vmatpush2.msra.mxu0 0.0
  %68 = vmatprep.subr.mxu0 0.0
  %69 = vmatpush2.msra.mxu0 0.0
  %70 = vmatprep.subr.mxu0 0.0
  %71 = vmatpush2.msra.mxu0 0.0
  %72 = vmatprep.subr.mxu0 0.0
  %73 = vmatpush2.msra.mxu0 0.0
  %74 = vmatprep.subr.mxu0 0.0
  %75 = vmatpush2.msra.mxu0 0.0
  %76 = vmatprep.subr.mxu0 0.0
  %77 = vmatpush2.msra.mxu0 0.0
  %78 = vmatprep.subr.mxu0 0.0
  %79 = vmatpush2.msra.mxu0 0.0
  %80 = vmatprep.subr.mxu0 0.0
  %81 = vmatpush2.msra.mxu0 0.0
  %82 = vmatprep.subr.mxu0 0.0
  %83 = vmatpush2.msra.mxu0 0.0
  %84 = vmatprep.subr.mxu0 0.0
  %85 = vmatpush2.msra.mxu0 0.0
  %86 = vmatprep.subr.mxu0 0.0
  %87 = vmatpush2.msra.mxu0 0.0
  %88 = vmatprep.subr.mxu0 0.0
  %89 = vmatpush2.msra.mxu0 0.0
  %90 = vmatprep.subr.mxu0 0.0
  %91 = vmatpush2.msra.mxu0 0.0
  %92 = vmatprep.subr.mxu0 0.0
  %93 = vmatpush2.msra.mxu0 0.0
  %94 = vmatprep.subr.mxu0 0.0
  %95 = vmatpush2.msra.mxu0 0.0
  %96 = vmatprep.subr.mxu0 0.0
  %97 = vmatpush2.msra.mxu0 0.0
  %98 = vmatprep.mubr.f32.mxu0 0.0
  %99 = vmatmul.mubr.f32.gmra.mxu0 %v29
  %v100 = vpop.f32.mrf.mxu0
  %v101 = vadd.f32 %v25, %v100
  %v102 = vpop.f32.mrf.mxu0
  %103 = vmatprep.mubr.f32.mxu0 0.0
  %104 = vmatmul.mubr.f32.gmra.mxu0 %v32
  %v105 = vpop.f32.mrf.mxu0
  %v106 = vadd.f32 %v25, %v105
  %v107 = vpop.f32.mrf.mxu0
  %108 = vdwg.mxu0
  %109 = vst [vmem:[%s3] sm:$0xff] %v101
  %110 = vst [vmem:[%s3 + $0x8] sm:$0xff] %v106
  // Predicated region
  $region14: #{seq2seq_forward.5} parent=0 // pred_check
    _
  $region15: #{seq2seq_forward.5} parent=0 // pred_check_branch
    %112 = sbr.rel (0) target = $region17
  $region16: #{seq2seq_forward.5} parent=0 // pred_region
    _
  $region17: #{seq2seq_forward.5} parent=0 // pred_fallthru
    _
  // Predicated region
  $region18: #{seq2seq_forward.5} parent=0 // pred_check
    _
  $region19: #{seq2seq_forward.5} parent=0 // pred_check_branch
    %114 = sbr.rel (0) target = $region21
  $region20: #{seq2seq_forward.5} parent=0 // pred_region
    _
  $region21: #{seq2seq_forward.5} parent=0 // pred_fallthru
    _

// kernel: seq2seq_forward.6
$region0: #{seq2seq_forward.6}
  #allocation0 [shape = 'u32[]', space=smem, size = 0x4, offset = 0x4, fixed_abs, tag = 'smem constant byte address 0x4 - core index']
  #allocation1 [shape = 'u32[144,128]{1,0:T(1,128)}', space=vmem, size = 0x12000, scoped, tag = 'internal scratch']
  #allocation2 [shape = 'f32[2,32]{1,0:T(2,128)}', space=vmem, size = 0x400, scoped, tag = 'scratch operand']
  #allocation3 [shape = 'f32[2,32]{1,0:T(2,128)}', space=vmem, size = 0x400, scoped, tag = 'scratch operand']
  %s0 = inlined_call_operand.vmem [shape: f32[8,4,2,32], index: 0, kind: input, shape index: {}]
  %s1 = inlined_call_operand.vmem [shape: f32[2,32], index: 1, kind: input, shape index: {}, may-alias: {1,2}]
  %s2 = inlined_call_operand.vmem [shape: f32[2,32], index: 2, kind: input, shape index: {}, may-alias: {1,2}]
  %s3 = inlined_call_operand.vmem [shape: f32[4,32,32], index: 3, kind: input, shape index: {}]
  %s4 = inlined_call_operand.hbm [shape: f32[8,2,32], index: 4, kind: output, shape index: {0}]
  %s5 = inlined_call_operand.vmem [shape: f32[2,32], index: 5, kind: output, shape index: {1}]
  %s6 = inlined_call_operand.vmem [shape: f32[2,32], index: 6, kind: output, shape index: {2}]
  %7 = xla_tuple %s4, %s5, %s6
  %s8 = sld [smem:[#allocation0]]
  $region46: #{seq2seq_forward.6} parent=0
    _
  %s10 = ssub.s32 1, %s8
  %s11 = scalar_select 0, %s10, %s8
  $region1: #{seq2seq_forward.6} parent=0
    #allocation4 [shape = 'u8[8192]{0}', space=vmem, size = 0x2000, scoped, tag = 'output window, operand 0, single buffered']
    #allocation5 [shape = 's32[1]{0}', space=sflag, size = 0x4, scoped, tag = 'scoped memory for seq2seq_forward.6']
    %12 = vsyncpa [#allocation5], 0
    // Predicated region
    $region2: #{seq2seq_forward.6} parent=1 // pred_check
      _
    $region3: #{seq2seq_forward.6} parent=1 // pred_check_branch
      %14 = sbr.rel (0) target = $region5
    $region4: #{seq2seq_forward.6} parent=1 // pred_region
      _
    $region5: #{seq2seq_forward.6} parent=1 // pred_fallthru
      _
    // Predicated region
    $region6: #{seq2seq_forward.6} parent=1 // pred_check
      _
    $region7: #{seq2seq_forward.6} parent=1 // pred_check_branch
      %16 = sbr.rel (0) target = $region9
    $region8: #{seq2seq_forward.6} parent=1 // pred_region
      _
    $region9: #{seq2seq_forward.6} parent=1 // pred_fallthru
      _
    // Predicated region
    $region10: #{seq2seq_forward.6} parent=1 // pred_check
      _
    $region11: #{seq2seq_forward.6} parent=1 // pred_check_branch
      %18 = sbr.rel (0) target = $region13
    $region12: #{seq2seq_forward.6} parent=1 // pred_region
      _
    $region13: #{seq2seq_forward.6} parent=1 // pred_fallthru
      _
    // Predicated region
    $region14: #{seq2seq_forward.6} parent=1 // pred_check
      _
    $region15: #{seq2seq_forward.6} parent=1 // pred_check_branch
      %20 = sbr.rel (0) target = $region17
    $region16: #{seq2seq_forward.6} parent=1 // pred_region
      _
    $region17: #{seq2seq_forward.6} parent=1 // pred_fallthru
      _
    %p21 = scmp.eq.s32.totalorder 0, 0
    // Predicated region
    $region18: #{seq2seq_forward.6} parent=1 // pred_check
      %p22 = pneg %p21
    $region19: #{seq2seq_forward.6} parent=1 // pred_check_branch
      %24 = sbr.rel (%p22) target = $region21
    $region20: #{seq2seq_forward.6} parent=1 // pred_region
      %v25 = vld [vmem:[%s1] sm:$0x3]
      %vm26 = vcmask 254976
      %27 = vst.msk [vmem:[#allocation2] sm:$0x3] %vm26, %v25
      %v28 = vld [vmem:[%s2] sm:$0x3]
      %29 = vst.msk [vmem:[#allocation3] sm:$0x3] %vm26, %v28
    $region21: #{seq2seq_forward.6} parent=1 // pred_fallthru
      _
    %v30 = vld [vmem:[#allocation2] sm:$0x3]
    %v31 = vld [vmem:[#allocation3] sm:$0x3]
    %v32 = vld [vmem:[%s0] sm:$0x3]
    %v33 = vld [vmem:[%s0 + $0x2] sm:$0x3]
    %v34 = vld [vmem:[%s0 + $0x4] sm:$0x3]
    %v35 = vld [vmem:[%s0 + $0x6] sm:$0x3]
    %v36 = vld [vmem:[%s3] sm:$0xff]
    %v37 = vld [vmem:[%s3 + $0x8] sm:$0xff]
    %v38 = vld [vmem:[%s3 + $0x10] sm:$0xff]
    %v39 = vld [vmem:[%s3 + $0x18] sm:$0xff]
    %vm40 = vcmask 261120
    %v42 = vsel %vm40, %v30, 0
    %44 = vmatprep.subr.mxu0 0.0
    %45 = vmatpush1.msra.mxu0 0.0
    %46 = vmatprep.subr.mxu0 0.0
    %47 = vmatpush1.msra.mxu0 0.0
    %48 = vmatprep.subr.mxu0 0.0
    %49 = vmatpush1.msra.mxu0 0.0
    %50 = vmatprep.subr.mxu0 0.0
    %51 = vmatpush1.msra.mxu0 0.0
    %52 = vmatprep.subr.mxu0 0.0
    %53 = vmatpush1.msra.mxu0 0.0
    %54 = vmatprep.subr.mxu0 0.0
    %55 = vmatpush1.msra.mxu0 0.0
    %56 = vmatprep.subr.mxu0 0.0
    %57 = vmatpush1.msra.mxu0 0.0
    %58 = vmatprep.subr.mxu0 0.0
    %59 = vmatpush1.msra.mxu0 0.0
    %60 = vmatprep.subr.mxu0 0.0
    %61 = vmatpush1.msra.mxu0 0.0
    %62 = vmatprep.subr.mxu0 0.0
    %63 = vmatpush1.msra.mxu0 0.0
    %64 = vmatprep.subr.mxu0 0.0
    %65 = vmatpush1.msra.mxu0 0.0
    %66 = vmatprep.subr.mxu0 0.0
    %67 = vmatpush1.msra.mxu0 0.0
    %68 = vmatprep.subr.mxu0 0.0
    %69 = vmatpush1.msra.mxu0 %v39
    %70 = vmatprep.subr.mxu0 0.0
    %71 = vmatpush1.msra.mxu0 %v38
    %72 = vmatprep.subr.mxu0 0.0
    %73 = vmatpush1.msra.mxu0 %v37
    %74 = vmatprep.subr.mxu0 0.0
    %75 = vmatpush1.msra.mxu0 %v36
    %76 = vmatprep.subr.mxu0 0.0
    %77 = vmatpush2.msra.mxu0 0.0
    %78 = vmatprep.subr.mxu0 0.0
    %79 = vmatpush2.msra.mxu0 0.0
    %80 = vmatprep.subr.mxu0 0.0
    %81 = vmatpush2.msra.mxu0 0.0
    %82 = vmatprep.subr.mxu0 0.0
    %83 = vmatpush2.msra.mxu0 0.0
    %84 = vmatprep.subr.mxu0 0.0
    %85 = vmatpush2.msra.mxu0 0.0
    %86 = vmatprep.subr.mxu0 0.0
    %87 = vmatpush2.msra.mxu0 0.0
    %88 = vmatprep.subr.mxu0 0.0
    %89 = vmatpush2.msra.mxu0 0.0
    %90 = vmatprep.subr.mxu0 0.0
    %91 = vmatpush2.msra.mxu0 0.0
    %92 = vmatprep.subr.mxu0 0.0
    %93 = vmatpush2.msra.mxu0 0.0
    %94 = vmatprep.subr.mxu0 0.0
    %95 = vmatpush2.msra.mxu0 0.0
    %96 = vmatprep.subr.mxu0 0.0
    %97 = vmatpush2.msra.mxu0 0.0
    %98 = vmatprep.subr.mxu0 0.0
    %99 = vmatpush2.msra.mxu0 0.0
    %100 = vmatprep.subr.mxu0 0.0
    %101 = vmatpush2.msra.mxu0 0.0
    %102 = vmatprep.subr.mxu0 0.0
    %103 = vmatpush2.msra.mxu0 0.0
    %104 = vmatprep.subr.mxu0 0.0
    %105 = vmatpush2.msra.mxu0 0.0
    %106 = vmatprep.subr.mxu0 0.0
    %107 = vmatpush2.msra.mxu0 0.0
    %108 = vmatprep.mubr.f32.mxu0 0.0
    %109 = vmatmul.mubr.f32.gmra.mxu0 %v42
    %v110 = vpop.f32.mrf.mxu0
    %v111 = vadd.f32 0.0, %v110
    %v112 = vpop.f32.mrf.mxu0
    %113 = vdwg.mxu0
    %v114 = vadd.f32 %v32, %v111
    %s115 = scalar_lea.vmem %s3, 32
    %v116 = vld [vmem:[%s115] sm:$0xff]
    %v117 = vld [vmem:[%s115 + $0x8] sm:$0xff]
    %v118 = vld [vmem:[%s115 + $0x10] sm:$0xff]
    %v119 = vld [vmem:[%s115 + $0x18] sm:$0xff]
    %120 = vmatprep.subr.mxu0 0.0
    %121 = vmatpush1.msra.mxu0 0.0
    %122 = vmatprep.subr.mxu0 0.0
    %123 = vmatpush1.msra.mxu0 0.0
    %124 = vmatprep.subr.mxu0 0.0
    %125 = vmatpush1.msra.mxu0 0.0
    %126 = vmatprep.subr.mxu0 0.0
    %127 = vmatpush1.msra.mxu0 0.0
    %128 = vmatprep.subr.mxu0 0.0
    %129 = vmatpush1.msra.mxu0 0.0
    %130 = vmatprep.subr.mxu0 0.0
    %131 = vmatpush1.msra.mxu0 0.0
    %132 = vmatprep.subr.mxu0 0.0
    %133 = vmatpush1.msra.mxu0 0.0
    %134 = vmatprep.subr.mxu0 0.0
    %135 = vmatpush1.msra.mxu0 0.0
    %136 = vmatprep.subr.mxu0 0.0
    %137 = vmatpush1.msra.mxu0 0.0
    %138 = vmatprep.subr.mxu0 0.0
    %139 = vmatpush1.msra.mxu0 0.0
    %140 = vmatprep.subr.mxu0 0.0
    %141 = vmatpush1.msra.mxu0 0.0
    %142 = vmatprep.subr.mxu0 0.0
    %143 = vmatpush1.msra.mxu0 0.0
    %144 = vmatprep.subr.mxu0 0.0
    %145 = vmatpush1.msra.mxu0 %v119
    %146 = vmatprep.subr.mxu0 0.0
    %147 = vmatpush1.msra.mxu0 %v118
    %148 = vmatprep.subr.mxu0 0.0
    %149 = vmatpush1.msra.mxu0 %v117
    %150 = vmatprep.subr.mxu0 0.0
    %151 = vmatpush1.msra.mxu0 %v116
    %152 = vmatprep.subr.mxu0 0.0
    %153 = vmatpush2.msra.mxu0 0.0
    %154 = vmatprep.subr.mxu0 0.0
    %155 = vmatpush2.msra.mxu0 0.0
    %156 = vmatprep.subr.mxu0 0.0
    %157 = vmatpush2.msra.mxu0 0.0
    %158 = vmatprep.subr.mxu0 0.0
    %159 = vmatpush2.msra.mxu0 0.0
    %160 = vmatprep.subr.mxu0 0.0
    %161 = vmatpush2.msra.mxu0 0.0
    %162 = vmatprep.subr.mxu0 0.0
    %163 = vmatpush2.msra.mxu0 0.0
    %164 = vmatprep.subr.mxu0 0.0
    %165 = vmatpush2.msra.mxu0 0.0
    %166 = vmatprep.subr.mxu0 0.0
    %167 = vmatpush2.msra.mxu0 0.0
    %168 = vmatprep.subr.mxu0 0.0
    %169 = vmatpush2.msra.mxu0 0.0
    %170 = vmatprep.subr.mxu0 0.0
    %171 = vmatpush2.msra.mxu0 0.0
    %172 = vmatprep.subr.mxu0 0.0
    %173 = vmatpush2.msra.mxu0 0.0
    %174 = vmatprep.subr.mxu0 0.0
    %175 = vmatpush2.msra.mxu0 0.0
    %176 = vmatprep.subr.mxu0 0.0
    %177 = vmatpush2.msra.mxu0 0.0
    %178 = vmatprep.subr.mxu0 0.0
    %179 = vmatpush2.msra.mxu0 0.0
    %180 = vmatprep.subr.mxu0 0.0
    %181 = vmatpush2.msra.mxu0 0.0
    %182 = vmatprep.subr.mxu0 0.0
    %183 = vmatpush2.msra.mxu0 0.0
    %184 = vmatprep.mubr.f32.mxu0 0.0
    %185 = vmatmul.mubr.f32.gmra.mxu0 %v42
    %v186 = vpop.f32.mrf.mxu0
    %v187 = vadd.f32 0.0, %v186
    %v188 = vpop.f32.mrf.mxu0
    %189 = vdwg.mxu0
    %v190 = vadd.f32 %v33, %v187
    %s191 = scalar_lea.vmem %s3, 64
    %v192 = vld [vmem:[%s191] sm:$0xff]
    %v193 = vld [vmem:[%s191 + $0x8] sm:$0xff]
    %v194 = vld [vmem:[%s191 + $0x10] sm:$0xff]
    %v195 = vld [vmem:[%s191 + $0x18] sm:$0xff]
    %196 = vmatprep.subr.mxu0 0.0
    %197 = vmatpush1.msra.mxu0 0.0
    %198 = vmatprep.subr.mxu0 0.0
    %199 = vmatpush1.msra.mxu0 0.0
    %200 = vmatprep.subr.mxu0 0.0
    %201 = vmatpush1.msra.mxu0 0.0
    %202 = vmatprep.subr.mxu0 0.0
    %203 = vmatpush1.msra.mxu0 0.0
    %204 = vmatprep.subr.mxu0 0.0
    %205 = vmatpush1.msra.mxu0 0.0
    %206 = vmatprep.subr.mxu0 0.0
    %207 = vmatpush1.msra.mxu0 0.0
    %208 = vmatprep.subr.mxu0 0.0
    %209 = vmatpush1.msra.mxu0 0.0
    %210 = vmatprep.subr.mxu0 0.0
    %211 = vmatpush1.msra.mxu0 0.0
    %212 = vmatprep.subr.mxu0 0.0
    %213 = vmatpush1.msra.mxu0 0.0
    %214 = vmatprep.subr.mxu0 0.0
    %215 = vmatpush1.msra.mxu0 0.0
    %216 = vmatprep.subr.mxu0 0.0
    %217 = vmatpush1.msra.mxu0 0.0
    %218 = vmatprep.subr.mxu0 0.0
    %219 = vmatpush1.msra.mxu0 0.0
    %220 = vmatprep.subr.mxu0 0.0
    %221 = vmatpush1.msra.mxu0 %v195
    %222 = vmatprep.subr.mxu0 0.0
    %223 = vmatpush1.msra.mxu0 %v194
    %224 = vmatprep.subr.mxu0 0.0
    %225 = vmatpush1.msra.mxu0 %v193
    %226 = vmatprep.subr.mxu0 0.0
    %227 = vmatpush1.msra.mxu0 %v192
    %228 = vmatprep.subr.mxu0 0.0
    %229 = vmatpush2.msra.mxu0 0.0
    %230 = vmatprep.subr.mxu0 0.0
    %231 = vmatpush2.msra.mxu0 0.0
    %232 = vmatprep.subr.mxu0 0.0
    %233 = vmatpush2.msra.mxu0 0.0
    %234 = vmatprep.subr.mxu0 0.0
    %235 = vmatpush2.msra.mxu0 0.0
    %236 = vmatprep.subr.mxu0 0.0
    %237 = vmatpush2.msra.mxu0 0.0
    %238 = vmatprep.subr.mxu0 0.0
    %239 = vmatpush2.msra.mxu0 0.0
    %240 = vmatprep.subr.mxu0 0.0
    %241 = vmatpush2.msra.mxu0 0.0
    %242 = vmatprep.subr.mxu0 0.0
    %243 = vmatpush2.msra.mxu0 0.0
    %244 = vmatprep.subr.mxu0 0.0
    %245 = vmatpush2.msra.mxu0 0.0
    %246 = vmatprep.subr.mxu0 0.0
    %247 = vmatpush2.msra.mxu0 0.0
    %248 = vmatprep.subr.mxu0 0.0
    %249 = vmatpush2.msra.mxu0 0.0
    %250 = vmatprep.subr.mxu0 0.0
    %251 = vmatpush2.msra.mxu0 0.0
    %252 = vmatprep.subr.mxu0 0.0
    %253 = vmatpush2.msra.mxu0 0.0
    %254 = vmatprep.subr.mxu0 0.0
    %255 = vmatpush2.msra.mxu0 0.0
    %256 = vmatprep.subr.mxu0 0.0
    %257 = vmatpush2.msra.mxu0 0.0
    %258 = vmatprep.subr.mxu0 0.0
    %259 = vmatpush2.msra.mxu0 0.0
    %260 = vmatprep.mubr.f32.mxu0 0.0
    %261 = vmatmul.mubr.f32.gmra.mxu0 %v42
    %v262 = vpop.f32.mrf.mxu0
    %v263 = vadd.f32 0.0, %v262
    %v264 = vpop.f32.mrf.mxu0
    %265 = vdwg.mxu0
    %v266 = vadd.f32 %v34, %v263
    %s267 = scalar_lea.vmem %s3, 96
    %v268 = vld [vmem:[%s267] sm:$0xff]
    %v269 = vld [vmem:[%s267 + $0x8] sm:$0xff]
    %v270 = vld [vmem:[%s267 + $0x10] sm:$0xff]
    %v271 = vld [vmem:[%s267 + $0x18] sm:$0xff]
    %272 = vmatprep.subr.mxu0 0.0
    %273 = vmatpush1.msra.mxu0 0.0
    %274 = vmatprep.subr.mxu0 0.0
    %275 = vmatpush1.msra.mxu0 0.0
    %276 = vmatprep.subr.mxu0 0.0
    %277 = vmatpush1.msra.mxu0 0.0
    %278 = vmatprep.subr.mxu0 0.0
    %279 = vmatpush1.msra.mxu0 0.0
    %280 = vmatprep.subr.mxu0 0.0
    %281 = vmatpush1.msra.mxu0 0.0
    %282 = vmatprep.subr.mxu0 0.0
    %283 = vmatpush1.msra.mxu0 0.0
    %284 = vmatprep.subr.mxu0 0.0
    %285 = vmatpush1.msra.mxu0 0.0
    %286 = vmatprep.subr.mxu0 0.0
    %287 = vmatpush1.msra.mxu0 0.0
    %288 = vmatprep.subr.mxu0 0.0
    %289 = vmatpush1.msra.mxu0 0.0
    %290 = vmatprep.subr.mxu0 0.0
    %291 = vmatpush1.msra.mxu0 0.0
    %292 = vmatprep.subr.mxu0 0.0
    %293 = vmatpush1.msra.mxu0 0.0
    %294 = vmatprep.subr.mxu0 0.0
    %295 = vmatpush1.msra.mxu0 0.0
    %296 = vmatprep.subr.mxu0 0.0
    %297 = vmatpush1.msra.mxu0 %v271
    %298 = vmatprep.subr.mxu0 0.0
    %299 = vmatpush1.msra.mxu0 %v270
    %300 = vmatprep.subr.mxu0 0.0
    %301 = vmatpush1.msra.mxu0 %v269
    %302 = vmatprep.subr.mxu0 0.0
    %303 = vmatpush1.msra.mxu0 %v268
    %304 = vmatprep.subr.mxu0 0.0
    %305 = vmatpush2.msra.mxu0 0.0
    %306 = vmatprep.subr.mxu0 0.0
    %307 = vmatpush2.msra.mxu0 0.0
    %308 = vmatprep.subr.mxu0 0.0
    %309 = vmatpush2.msra.mxu0 0.0
    %310 = vmatprep.subr.mxu0 0.0
    %311 = vmatpush2.msra.mxu0 0.0
    %312 = vmatprep.subr.mxu0 0.0
    %313 = vmatpush2.msra.mxu0 0.0
    %314 = vmatprep.subr.mxu0 0.0
    %315 = vmatpush2.msra.mxu0 0.0
    %316 = vmatprep.subr.mxu0 0.0
    %317 = vmatpush2.msra.mxu0 0.0
    %318 = vmatprep.subr.mxu0 0.0
    %319 = vmatpush2.msra.mxu0 0.0
    %320 = vmatprep.subr.mxu0 0.0
    %321 = vmatpush2.msra.mxu0 0.0
    %322 = vmatprep.subr.mxu0 0.0
    %323 = vmatpush2.msra.mxu0 0.0
    %324 = vmatprep.subr.mxu0 0.0
    %325 = vmatpush2.msra.mxu0 0.0
    %326 = vmatprep.subr.mxu0 0.0
    %327 = vmatpush2.msra.mxu0 0.0
    %328 = vmatprep.subr.mxu0 0.0
    %329 = vmatpush2.msra.mxu0 0.0
    %330 = vmatprep.subr.mxu0 0.0
    %331 = vmatpush2.msra.mxu0 0.0
    %332 = vmatprep.subr.mxu0 0.0
    %333 = vmatpush2.msra.mxu0 0.0
    %334 = vmatprep.subr.mxu0 0.0
    %335 = vmatpush2.msra.mxu0 0.0
    %336 = vmatprep.mubr.f32.mxu0 0.0
    %337 = vmatmul.mubr.f32.gmra.mxu0 %v42
    %v338 = vpop.f32.mrf.mxu0
    %v339 = vadd.f32 0.0, %v338
    %v340 = vpop.f32.mrf.mxu0
    %341 = vdwg.mxu0
    %v342 = vadd.f32 %v35, %v339
    %v343 = vxor.u32 %v114, 2147483648
    %v344 = vmul.f32 %v343, 1.442695
    %v345 = vpow.pop %v344
    %v346 = vadd.f32 %v345, 1.0
    %v347 = vrcp.pop %v346
    %v348 = vmul.f32 1.0, %v347
    %v349 = vxor.u32 %v190, 2147483648
    %v350 = vmul.f32 %v349, 1.442695
    %v351 = vpow.pop %v350
    %v352 = vadd.f32 %v351, 1.0
    %v353 = vrcp.pop %v352
    %v354 = vmul.f32 1.0, %v353
    %v355 = vtanh.pop %v266
    %v356 = vxor.u32 %v342, 2147483648
    %v357 = vmul.f32 %v356, 1.442695
    %v358 = vpow.pop %v357
    %v359 = vadd.f32 %v358, 1.0
    %v360 = vrcp.pop %v359
    %v361 = vmul.f32 1.0, %v360
    %v362 = vmul.f32 %v354, %v31
    %v363 = vmul.f32 %v348, %v355
    %v364 = vadd.f32 %v362, %v363
    %v365 = vtanh.pop %v364
    %v366 = vmul.f32 %v361, %v365
    %vm367 = vcmask 254976
    %368 = vst.msk [vmem:[#allocation2] sm:$0x3] %vm367, %v366
    %369 = vst.msk [vmem:[#allocation3] sm:$0x3] %vm367, %v364
    %370 = vst.msk [vmem:[#allocation4] sm:$0x3] %vm367, %v366
    %v371 = vld [vmem:[#allocation2] sm:$0x3]
    %v372 = vld [vmem:[#allocation3] sm:$0x3]
    %s373 = scalar_lea.vmem %s0, 8
    %v374 = vld [vmem:[%s373] sm:$0x3]
    %v375 = vld [vmem:[%s373 + $0x2] sm:$0x3]
    %v376 = vld [vmem:[%s373 + $0x4] sm:$0x3]
    %v377 = vld [vmem:[%s373 + $0x6] sm:$0x3]
    %v378 = vld [vmem:[%s3] sm:$0xff]
    %v379 = vld [vmem:[%s3 + $0x8] sm:$0xff]
    %v380 = vld [vmem:[%s3 + $0x10] sm:$0xff]
    %v381 = vld [vmem:[%s3 + $0x18] sm:$0xff]
    %v383 = vsel %vm40, %v371, 0
    %385 = vmatprep.subr.mxu0 0.0
    %386 = vmatpush1.msra.mxu0 0.0
    %387 = vmatprep.subr.mxu0 0.0
    %388 = vmatpush1.msra.mxu0 0.0
    %389 = vmatprep.subr.mxu0 0.0
    %390 = vmatpush1.msra.mxu0 0.0
    %391 = vmatprep.subr.mxu0 0.0
    %392 = vmatpush1.msra.mxu0 0.0
    %393 = vmatprep.subr.mxu0 0.0
    %394 = vmatpush1.msra.mxu0 0.0
    %395 = vmatprep.subr.mxu0 0.0
    %396 = vmatpush1.msra.mxu0 0.0
    %397 = vmatprep.subr.mxu0 0.0
    %398 = vmatpush1.msra.mxu0 0.0
    %399 = vmatprep.subr.mxu0 0.0
    %400 = vmatpush1.msra.mxu0 0.0
    %401 = vmatprep.subr.mxu0 0.0
    %402 = vmatpush1.msra.mxu0 0.0
    %403 = vmatprep.subr.mxu0 0.0
    %404 = vmatpush1.msra.mxu0 0.0
    %405 = vmatprep.subr.mxu0 0.0
    %406 = vmatpush1.msra.mxu0 0.0
    %407 = vmatprep.subr.mxu0 0.0
    %408 = vmatpush1.msra.mxu0 0.0
    %409 = vmatprep.subr.mxu0 0.0
    %410 = vmatpush1.msra.mxu0 %v381
    %411 = vmatprep.subr.mxu0 0.0
    %412 = vmatpush1.msra.mxu0 %v380
    %413 = vmatprep.subr.mxu0 0.0
    %414 = vmatpush1.msra.mxu0 %v379
    %415 = vmatprep.subr.mxu0 0.0
    %416 = vmatpush1.msra.mxu0 %v378
    %417 = vmatprep.subr.mxu0 0.0
    %418 = vmatpush2.msra.mxu0 0.0
    %419 = vmatprep.subr.mxu0 0.0
    %420 = vmatpush2.msra.mxu0 0.0
    %421 = vmatprep.subr.mxu0 0.0
    %422 = vmatpush2.msra.mxu0 0.0
    %423 = vmatprep.subr.mxu0 0.0
    %424 = vmatpush2.msra.mxu0 0.0
    %425 = vmatprep.subr.mxu0 0.0
    %426 = vmatpush2.msra.mxu0 0.0
    %427 = vmatprep.subr.mxu0 0.0
    %428 = vmatpush2.msra.mxu0 0.0
    %429 = vmatprep.subr.mxu0 0.0
    %430 = vmatpush2.msra.mxu0 0.0
    %431 = vmatprep.subr.mxu0 0.0
    %432 = vmatpush2.msra.mxu0 0.0
    %433 = vmatprep.subr.mxu0 0.0
    %434 = vmatpush2.msra.mxu0 0.0
    %435 = vmatprep.subr.mxu0 0.0
    %436 = vmatpush2.msra.mxu0 0.0
    %437 = vmatprep.subr.mxu0 0.0
    %438 = vmatpush2.msra.mxu0 0.0
    %439 = vmatprep.subr.mxu0 0.0
    %440 = vmatpush2.msra.mxu0 0.0
    %441 = vmatprep.subr.mxu0 0.0
    %442 = vmatpush2.msra.mxu0 0.0
    %443 = vmatprep.subr.mxu0 0.0
    %444 = vmatpush2.msra.mxu0 0.0
    %445 = vmatprep.subr.mxu0 0.0
    %446 = vmatpush2.msra.mxu0 0.0
    %447 = vmatprep.subr.mxu0 0.0
    %448 = vmatpush2.msra.mxu0 0.0
    %449 = vmatprep.mubr.f32.mxu0 0.0
    %450 = vmatmul.mubr.f32.gmra.mxu0 %v383
    %v451 = vpop.f32.mrf.mxu0
    %v452 = vadd.f32 0.0, %v451
    %v453 = vpop.f32.mrf.mxu0
    %454 = vdwg.mxu0
    %v455 = vadd.f32 %v374, %v452
    %v456 = vld [vmem:[%s115] sm:$0xff]
    %v457 = vld [vmem:[%s115 + $0x8] sm:$0xff]
    %v458 = vld [vmem:[%s115 + $0x10] sm:$0xff]
    %v459 = vld [vmem:[%s115 + $0x18] sm:$0xff]
    %460 = vmatprep.subr.mxu0 0.0
    %461 = vmatpush1.msra.mxu0 0.0
    %462 = vmatprep.subr.mxu0 0.0
    %463 = vmatpush1.msra.mxu0 0.0
    %464 = vmatprep.subr.mxu0 0.0
    %465 = vmatpush1.msra.mxu0 0.0
    %466 = vmatprep.subr.mxu0 0.0
    %467 = vmatpush1.msra.mxu0 0.0
    %468 = vmatprep.subr.mxu0 0.0
    %469 = vmatpush1.msra.mxu0 0.0
    %470 = vmatprep.subr.mxu0 0.0
    %471 = vmatpush1.msra.mxu0 0.0
    %472 = vmatprep.subr.mxu0 0.0
    %473 = vmatpush1.msra.mxu0 0.0
    %474 = vmatprep.subr.mxu0 0.0
    %475 = vmatpush1.msra.mxu0 0.0
    %476 = vmatprep.subr.mxu0 0.0
    %477 = vmatpush1.msra.mxu0 0.0
    %478 = vmatprep.subr.mxu0 0.0
    %479 = vmatpush1.msra.mxu0 0.0
    %480 = vmatprep.subr.mxu0 0.0
    %481 = vmatpush1.msra.mxu0 0.0
    %482 = vmatprep.subr.mxu0 0.0
    %483 = vmatpush1.msra.mxu0 0.0
    %484 = vmatprep.subr.mxu0 0.0
    %485 = vmatpush1.msra.mxu0 %v459
    %486 = vmatprep.subr.mxu0 0.0
    %487 = vmatpush1.msra.mxu0 %v458
    %488 = vmatprep.subr.mxu0 0.0
    %489 = vmatpush1.msra.mxu0 %v457
    %490 = vmatprep.subr.mxu0 0.0
    %491 = vmatpush1.msra.mxu0 %v456
    %492 = vmatprep.subr.mxu0 0.0
    %493 = vmatpush2.msra.mxu0 0.0
    %494 = vmatprep.subr.mxu0 0.0
    %495 = vmatpush2.msra.mxu0 0.0
    %496 = vmatprep.subr.mxu0 0.0
    %497 = vmatpush2.msra.mxu0 0.0
    %498 = vmatprep.subr.mxu0 0.0
    %499 = vmatpush2.msra.mxu0 0.0
    %500 = vmatprep.subr.mxu0 0.0
    %501 = vmatpush2.msra.mxu0 0.0
    %502 = vmatprep.subr.mxu0 0.0
    %503 = vmatpush2.msra.mxu0 0.0
    %504 = vmatprep.subr.mxu0 0.0
    %505 = vmatpush2.msra.mxu0 0.0
    %506 = vmatprep.subr.mxu0 0.0
    %507 = vmatpush2.msra.mxu0 0.0
    %508 = vmatprep.subr.mxu0 0.0
    %509 = vmatpush2.msra.mxu0 0.0
    %510 = vmatprep.subr.mxu0 0.0
    %511 = vmatpush2.msra.mxu0 0.0
    %512 = vmatprep.subr.mxu0 0.0
    %513 = vmatpush2.msra.mxu0 0.0
    %514 = vmatprep.subr.mxu0 0.0
    %515 = vmatpush2.msra.mxu0 0.0
    %516 = vmatprep.subr.mxu0 0.0
    %517 = vmatpush2.msra.mxu0 0.0
    %518 = vmatprep.subr.mxu0 0.0
    %519 = vmatpush2.msra.mxu0 0.0
    %520 = vmatprep.subr.mxu0 0.0
    %521 = vmatpush2.msra.mxu0 0.0
    %522 = vmatprep.subr.mxu0 0.0
    %523 = vmatpush2.msra.mxu0 0.0
    %524 = vmatprep.mubr.f32.mxu0 0.0
    %525 = vmatmul.mubr.f32.gmra.mxu0 %v383
    %v526 = vpop.f32.mrf.mxu0
    %v527 = vadd.f32 0.0, %v526
    %v528 = vpop.f32.mrf.mxu0
    %529 = vdwg.mxu0
    %v530 = vadd.f32 %v375, %v527
    %v531 = vld [vmem:[%s191] sm:$0xff]
    %v532 = vld [vmem:[%s191 + $0x8] sm:$0xff]
    %v533 = vld [vmem:[%s191 + $0x10] sm:$0xff]
    %v534 = vld [vmem:[%s191 + $0x18] sm:$0xff]
    %535 = vmatprep.subr.mxu0 0.0
    %536 = vmatpush1.msra.mxu0 0.0
    %537 = vmatprep.subr.mxu0 0.0
    %538 = vmatpush1.msra.mxu0 0.0
    %539 = vmatprep.subr.mxu0 0.0
    %540 = vmatpush1.msra.mxu0 0.0
    %541 = vmatprep.subr.mxu0 0.0
    %542 = vmatpush1.msra.mxu0 0.0
    %543 = vmatprep.subr.mxu0 0.0
    %544 = vmatpush1.msra.mxu0 0.0
    %545 = vmatprep.subr.mxu0 0.0
    %546 = vmatpush1.msra.mxu0 0.0
    %547 = vmatprep.subr.mxu0 0.0
    %548 = vmatpush1.msra.mxu0 0.0
    %549 = vmatprep.subr.mxu0 0.0
    %550 = vmatpush1.msra.mxu0 0.0
    %551 = vmatprep.subr.mxu0 0.0
    %552 = vmatpush1.msra.mxu0 0.0
    %553 = vmatprep.subr.mxu0 0.0
    %554 = vmatpush1.msra.mxu0 0.0
    %555 = vmatprep.subr.mxu0 0.0
    %556 = vmatpush1.msra.mxu0 0.0
    %557 = vmatprep.subr.mxu0 0.0
    %558 = vmatpush1.msra.mxu0 0.0
    %559 = vmatprep.subr.mxu0 0.0
    %560 = vmatpush1.msra.mxu0 %v534
    %561 = vmatprep.subr.mxu0 0.0
    %562 = vmatpush1.msra.mxu0 %v533
    %563 = vmatprep.subr.mxu0 0.0
    %564 = vmatpush1.msra.mxu0 %v532
    %565 = vmatprep.subr.mxu0 0.0
    %566 = vmatpush1.msra.mxu0 %v531
    %567 = vmatprep.subr.mxu0 0.0
    %568 = vmatpush2.msra.mxu0 0.0
    %569 = vmatprep.subr.mxu0 0.0
    %570 = vmatpush2.msra.mxu0 0.0
    %571 = vmatprep.subr.mxu0 0.0
    %572 = vmatpush2.msra.mxu0 0.0
    %573 = vmatprep.subr.mxu0 0.0
    %574 = vmatpush2.msra.mxu0 0.0
    %575 = vmatprep.subr.mxu0 0.0
    %576 = vmatpush2.msra.mxu0 0.0
    %577 = vmatprep.subr.mxu0 0.0
    %578 = vmatpush2.msra.mxu0 0.0
    %579 = vmatprep.subr.mxu0 0.0
    %580 = vmatpush2.msra.mxu0 0.0
    %581 = vmatprep.subr.mxu0 0.0
    %582 = vmatpush2.msra.mxu0 0.0
    %583 = vmatprep.subr.mxu0 0.0
    %584 = vmatpush2.msra.mxu0 0.0
    %585 = vmatprep.subr.mxu0 0.0
    %586 = vmatpush2.msra.mxu0 0.0
    %587 = vmatprep.subr.mxu0 0.0
    %588 = vmatpush2.msra.mxu0 0.0
    %589 = vmatprep.subr.mxu0 0.0
    %590 = vmatpush2.msra.mxu0 0.0
    %591 = vmatprep.subr.mxu0 0.0
    %592 = vmatpush2.msra.mxu0 0.0
    %593 = vmatprep.subr.mxu0 0.0
    %594 = vmatpush2.msra.mxu0 0.0
    %595 = vmatprep.subr.mxu0 0.0
    %596 = vmatpush2.msra.mxu0 0.0
    %597 = vmatprep.subr.mxu0 0.0
    %598 = vmatpush2.msra.mxu0 0.0
    %599 = vmatprep.mubr.f32.mxu0 0.0
    %600 = vmatmul.mubr.f32.gmra.mxu0 %v383
    %v601 = vpop.f32.mrf.mxu0
    %v602 = vadd.f32 0.0, %v601
    %v603 = vpop.f32.mrf.mxu0
    %604 = vdwg.mxu0
    %v605 = vadd.f32 %v376, %v602
    %v606 = vld [vmem:[%s267] sm:$0xff]
    %v607 = vld [vmem:[%s267 + $0x8] sm:$0xff]
    %v608 = vld [vmem:[%s267 + $0x10] sm:$0xff]
    %v609 = vld [vmem:[%s267 + $0x18] sm:$0xff]
    %610 = vmatprep.subr.mxu0 0.0
    %611 = vmatpush1.msra.mxu0 0.0
    %612 = vmatprep.subr.mxu0 0.0
    %613 = vmatpush1.msra.mxu0 0.0
    %614 = vmatprep.subr.mxu0 0.0
    %615 = vmatpush1.msra.mxu0 0.0
    %616 = vmatprep.subr.mxu0 0.0
    %617 = vmatpush1.msra.mxu0 0.0
    %618 = vmatprep.subr.mxu0 0.0
    %619 = vmatpush1.msra.mxu0 0.0
    %620 = vmatprep.subr.mxu0 0.0
    %621 = vmatpush1.msra.mxu0 0.0
    %622 = vmatprep.subr.mxu0 0.0
    %623 = vmatpush1.msra.mxu0 0.0
    %624 = vmatprep.subr.mxu0 0.0
    %625 = vmatpush1.msra.mxu0 0.0
    %626 = vmatprep.subr.mxu0 0.0
    %627 = vmatpush1.msra.mxu0 0.0
    %628 = vmatprep.subr.mxu0 0.0
    %629 = vmatpush1.msra.mxu0 0.0
    %630 = vmatprep.subr.mxu0 0.0
    %631 = vmatpush1.msra.mxu0 0.0
    %632 = vmatprep.subr.mxu0 0.0
    %633 = vmatpush1.msra.mxu0 0.0
    %634 = vmatprep.subr.mxu0 0.0
    %635 = vmatpush1.msra.mxu0 %v609
    %636 = vmatprep.subr.mxu0 0.0
    %637 = vmatpush1.msra.mxu0 %v608
    %638 = vmatprep.subr.mxu0 0.0
    %639 = vmatpush1.msra.mxu0 %v607
    %640 = vmatprep.subr.mxu0 0.0
    %641 = vmatpush1.msra.mxu0 %v606
    %642 = vmatprep.subr.mxu0 0.0
    %643 = vmatpush2.msra.mxu0 0.0
    %644 = vmatprep.subr.mxu0 0.0
    %645 = vmatpush2.msra.mxu0 0.0
    %646 = vmatprep.subr.mxu0 0.0
    %647 = vmatpush2.msra.mxu0 0.0
    %648 = vmatprep.subr.mxu0 0.0
    %649 = vmatpush2.msra.mxu0 0.0
    %650 = vmatprep.subr.mxu0 0.0
    %651 = vmatpush2.msra.mxu0 0.0
    %652 = vmatprep.subr.mxu0 0.0
    %653 = vmatpush2.msra.mxu0 0.0
    %654 = vmatprep.subr.mxu0 0.0
    %655 = vmatpush2.msra.mxu0 0.0
    %656 = vmatprep.subr.mxu0 0.0
    %657 = vmatpush2.msra.mxu0 0.0
    %658 = vmatprep.subr.mxu0 0.0
    %659 = vmatpush2.msra.mxu0 0.0
    %660 = vmatprep.subr.mxu0 0.0
    %661 = vmatpush2.msra.mxu0 0.0
    %662 = vmatprep.subr.mxu0 0.0
    %663 = vmatpush2.msra.mxu0 0.0
    %664 = vmatprep.subr.mxu0 0.0
    %665 = vmatpush2.msra.mxu0 0.0
    %666 = vmatprep.subr.mxu0 0.0
    %667 = vmatpush2.msra.mxu0 0.0
    %668 = vmatprep.subr.mxu0 0.0
    %669 = vmatpush2.msra.mxu0 0.0
    %670 = vmatprep.subr.mxu0 0.0
    %671 = vmatpush2.msra.mxu0 0.0
    %672 = vmatprep.subr.mxu0 0.0
    %673 = vmatpush2.msra.mxu0 0.0
    %674 = vmatprep.mubr.f32.mxu0 0.0
    %675 = vmatmul.mubr.f32.gmra.mxu0 %v383
    %v676 = vpop.f32.mrf.mxu0
    %v677 = vadd.f32 0.0, %v676
    %v678 = vpop.f32.mrf.mxu0
    %679 = vdwg.mxu0
    %v680 = vadd.f32 %v377, %v677
    %v681 = vxor.u32 %v455, 2147483648
    %v682 = vmul.f32 %v681, 1.442695
    %v683 = vpow.pop %v682
    %v684 = vadd.f32 %v683, 1.0
    %v685 = vrcp.pop %v684
    %v686 = vmul.f32 1.0, %v685
    %v687 = vxor.u32 %v530, 2147483648
    %v688 = vmul.f32 %v687, 1.442695
    %v689 = vpow.pop %v688
    %v690 = vadd.f32 %v689, 1.0
    %v691 = vrcp.pop %v690
    %v692 = vmul.f32 1.0, %v691
    %v693 = vtanh.pop %v605
    %v694 = vxor.u32 %v680, 2147483648
    %v695 = vmul.f32 %v694, 1.442695
    %v696 = vpow.pop %v695
    %v697 = vadd.f32 %v696, 1.0
    %v698 = vrcp.pop %v697
    %v699 = vmul.f32 1.0, %v698
    %v700 = vmul.f32 %v692, %v372
    %v701 = vmul.f32 %v686, %v693
    %v702 = vadd.f32 %v700, %v701
    %v703 = vtanh.pop %v702
    %v704 = vmul.f32 %v699, %v703
    %705 = vst.msk [vmem:[#allocation2] sm:$0x3] %vm367, %v704
    %706 = vst.msk [vmem:[#allocation3] sm:$0x3] %vm367, %v702
    %s707 = scalar_lea.vmem [#allocation4], 2
    %708 = vst.msk [vmem:[%s707] sm:$0x3] %vm367, %v704
    %v709 = vld [vmem:[#allocation2] sm:$0x3]
    %v710 = vld [vmem:[#allocation3] sm:$0x3]
    %s711 = scalar_lea.vmem %s0, 16
    %v712 = vld [vmem:[%s711] sm:$0x3]
    %v713 = vld [vmem:[%s711 + $0x2] sm:$0x3]
    %v714 = vld [vmem:[%s711 + $0x4] sm:$0x3]
    %v715 = vld [vmem:[%s711 + $0x6] sm:$0x3]
    %v716 = vld [vmem:[%s3] sm:$0xff]
    %v717 = vld [vmem:[%s3 + $0x8] sm:$0xff]
    %v718 = vld [vmem:[%s3 + $0x10] sm:$0xff]
    %v719 = vld [vmem:[%s3 + $0x18] sm:$0xff]
    %v721 = vsel %vm40, %v709, 0
    %723 = vmatprep.subr.mxu0 0.0
    %724 = vmatpush1.msra.mxu0 0.0
    %725 = vmatprep.subr.mxu0 0.0
    %726 = vmatpush1.msra.mxu0 0.0
    %727 = vmatprep.subr.mxu0 0.0
    %728 = vmatpush1.msra.mxu0 0.0
    %729 = vmatprep.subr.mxu0 0.0
    %730 = vmatpush1.msra.mxu0 0.0
    %731 = vmatprep.subr.mxu0 0.0
    %732 = vmatpush1.msra.mxu0 0.0
    %733 = vmatprep.subr.mxu0 0.0
    %734 = vmatpush1.msra.mxu0 0.0
    %735 = vmatprep.subr.mxu0 0.0
    %736 = vmatpush1.msra.mxu0 0.0
    %737 = vmatprep.subr.mxu0 0.0
    %738 = vmatpush1.msra.mxu0 0.0
    %739 = vmatprep.subr.mxu0 0.0
    %740 = vmatpush1.msra.mxu0 0.0
    %741 = vmatprep.subr.mxu0 0.0
    %742 = vmatpush1.msra.mxu0 0.0
    %743 = vmatprep.subr.mxu0 0.0
    %744 = vmatpush1.msra.mxu0 0.0
    %745 = vmatprep.subr.mxu0 0.0
    %746 = vmatpush1.msra.mxu0 0.0
    %747 = vmatprep.subr.mxu0 0.0
    %748 = vmatpush1.msra.mxu0 %v719
    %749 = vmatprep.subr.mxu0 0.0
    %750 = vmatpush1.msra.mxu0 %v718
    %751 = vmatprep.subr.mxu0 0.0
    %752 = vmatpush1.msra.mxu0 %v717
    %753 = vmatprep.subr.mxu0 0.0
    %754 = vmatpush1.msra.mxu0 %v716
    %755 = vmatprep.subr.mxu0 0.0
    %756 = vmatpush2.msra.mxu0 0.0
    %757 = vmatprep.subr.mxu0 0.0
    %758 = vmatpush2.msra.mxu0 0.0
    %759 = vmatprep.subr.mxu0 0.0
    %760 = vmatpush2.msra.mxu0 0.0
    %761 = vmatprep.subr.mxu0 0.0
    %762 = vmatpush2.msra.mxu0 0.0
    %763 = vmatprep.subr.mxu0 0.0
    %764 = vmatpush2.msra.mxu0 0.0
    %765 = vmatprep.subr.mxu0 0.0
    %766 = vmatpush2.msra.mxu0 0.0
    %767 = vmatprep.subr.mxu0 0.0
    %768 = vmatpush2.msra.mxu0 0.0
    %769 = vmatprep.subr.mxu0 0.0
    %770 = vmatpush2.msra.mxu0 0.0
    %771 = vmatprep.subr.mxu0 0.0
    %772 = vmatpush2.msra.mxu0 0.0
    %773 = vmatprep.subr.mxu0 0.0
    %774 = vmatpush2.msra.mxu0 0.0
    %775 = vmatprep.subr.mxu0 0.0
    %776 = vmatpush2.msra.mxu0 0.0
    %777 = vmatprep.subr.mxu0 0.0
    %778 = vmatpush2.msra.mxu0 0.0
    %779 = vmatprep.subr.mxu0 0.0
    %780 = vmatpush2.msra.mxu0 0.0
    %781 = vmatprep.subr.mxu0 0.0
    %782 = vmatpush2.msra.mxu0 0.0
    %783 = vmatprep.subr.mxu0 0.0
    %784 = vmatpush2.msra.mxu0 0.0
    %785 = vmatprep.subr.mxu0 0.0
    %786 = vmatpush2.msra.mxu0 0.0
    %787 = vmatprep.mubr.f32.mxu0 0.0
    %788 = vmatmul.mubr.f32.gmra.mxu0 %v721
    %v789 = vpop.f32.mrf.mxu0
    %v790 = vadd.f32 0.0, %v789
    %v791 = vpop.f32.mrf.mxu0
    %792 = vdwg.mxu0
    %v793 = vadd.f32 %v712, %v790
    %v794 = vld [vmem:[%s115] sm:$0xff]
    %v795 = vld [vmem:[%s115 + $0x8] sm:$0xff]
    %v796 = vld [vmem:[%s115 + $0x10] sm:$0xff]
    %v797 = vld [vmem:[%s115 + $0x18] sm:$0xff]
    %798 = vmatprep.subr.mxu0 0.0
    %799 = vmatpush1.msra.mxu0 0.0
    %800 = vmatprep.subr.mxu0 0.0
    %801 = vmatpush1.msra.mxu0 0.0
    %802 = vmatprep.subr.mxu0 0.0
    %803 = vmatpush1.msra.mxu0 0.0
    %804 = vmatprep.subr.mxu0 0.0
    %805 = vmatpush1.msra.mxu0 0.0
    %806 = vmatprep.subr.mxu0 0.0
    %807 = vmatpush1.msra.mxu0 0.0
    %808 = vmatprep.subr.mxu0 0.0
    %809 = vmatpush1.msra.mxu0 0.0
    %810 = vmatprep.subr.mxu0 0.0
    %811 = vmatpush1.msra.mxu0 0.0
    %812 = vmatprep.subr.mxu0 0.0
    %813 = vmatpush1.msra.mxu0 0.0
    %814 = vmatprep.subr.mxu0 0.0
    %815 = vmatpush1.msra.mxu0 0.0
    %816 = vmatprep.subr.mxu0 0.0
    %817 = vmatpush1.msra.mxu0 0.0
    %818 = vmatprep.subr.mxu0 0.0
    %819 = vmatpush1.msra.mxu0 0.0
    %820 = vmatprep.subr.mxu0 0.0
    %821 = vmatpush1.msra.mxu0 0.0
    %822 = vmatprep.subr.mxu0 0.0
    %823 = vmatpush1.msra.mxu0 %v797
    %824 = vmatprep.subr.mxu0 0.0
    %825 = vmatpush1.msra.mxu0 %v796
    %826 = vmatprep.subr.mxu0 0.0
    %827 = vmatpush1.msra.mxu0 %v795
    %828 = vmatprep.subr.mxu0 0.0
    %829 = vmatpush1.msra.mxu0 %v794
    %830 = vmatprep.subr.mxu0 0.0
    %831 = vmatpush2.msra.mxu0 0.0
    %832 = vmatprep.subr.mxu0 0.0
    %833 = vmatpush2.msra.mxu0 0.0
    %834 = vmatprep.subr.mxu0 0.0
    %835 = vmatpush2.msra.mxu0 0.0
    %836 = vmatprep.subr.mxu0 0.0
    %837 = vmatpush2.msra.mxu0 0.0
    %838 = vmatprep.subr.mxu0 0.0
    %839 = vmatpush2.msra.mxu0 0.0
    %840 = vmatprep.subr.mxu0 0.0
    %841 = vmatpush2.msra.mxu0 0.0
    %842 = vmatprep.subr.mxu0 0.0
    %843 = vmatpush2.msra.mxu0 0.0
    %844 = vmatprep.subr.mxu0 0.0
    %845 = vmatpush2.msra.mxu0 0.0
    %846 = vmatprep.subr.mxu0 0.0
    %847 = vmatpush2.msra.mxu0 0.0
    %848 = vmatprep.subr.mxu0 0.0
    %849 = vmatpush2.msra.mxu0 0.0
    %850 = vmatprep.subr.mxu0 0.0
    %851 = vmatpush2.msra.mxu0 0.0
    %852 = vmatprep.subr.mxu0 0.0
    %853 = vmatpush2.msra.mxu0 0.0
    %854 = vmatprep.subr.mxu0 0.0
    %855 = vmatpush2.msra.mxu0 0.0
    %856 = vmatprep.subr.mxu0 0.0
    %857 = vmatpush2.msra.mxu0 0.0
    %858 = vmatprep.subr.mxu0 0.0
    %859 = vmatpush2.msra.mxu0 0.0
    %860 = vmatprep.subr.mxu0 0.0
    %861 = vmatpush2.msra.mxu0 0.0
    %862 = vmatprep.mubr.f32.mxu0 0.0
    %863 = vmatmul.mubr.f32.gmra.mxu0 %v721
    %v864 = vpop.f32.mrf.mxu0
    %v865 = vadd.f32 0.0, %v864
    %v866 = vpop.f32.mrf.mxu0
    %867 = vdwg.mxu0
    %v868 = vadd.f32 %v713, %v865
    %v869 = vld [vmem:[%s191] sm:$0xff]
    %v870 = vld [vmem:[%s191 + $0x8] sm:$0xff]
    %v871 = vld [vmem:[%s191 + $0x10] sm:$0xff]
    %v872 = vld [vmem:[%s191 + $0x18] sm:$0xff]
    %873 = vmatprep.subr.mxu0 0.0
    %874 = vmatpush1.msra.mxu0 0.0
    %875 = vmatprep.subr.mxu0 0.0
    %876 = vmatpush1.msra.mxu0 0.0
    %877 = vmatprep.subr.mxu0 0.0
    %878 = vmatpush1.msra.mxu0 0.0
    %879 = vmatprep.subr.mxu0 0.0
    %880 = vmatpush1.msra.mxu0 0.0
    %881 = vmatprep.subr.mxu0 0.0
    %882 = vmatpush1.msra.mxu0 0.0
    %883 = vmatprep.subr.mxu0 0.0
    %884 = vmatpush1.msra.mxu0 0.0
    %885 = vmatprep.subr.mxu0 0.0
    %886 = vmatpush1.msra.mxu0 0.0
    %887 = vmatprep.subr.mxu0 0.0
    %888 = vmatpush1.msra.mxu0 0.0
    %889 = vmatprep.subr.mxu0 0.0
    %890 = vmatpush1.msra.mxu0 0.0
    %891 = vmatprep.subr.mxu0 0.0
    %892 = vmatpush1.msra.mxu0 0.0
    %893 = vmatprep.subr.mxu0 0.0
    %894 = vmatpush1.msra.mxu0 0.0
    %895 = vmatprep.subr.mxu0 0.0
    %896 = vmatpush1.msra.mxu0 0.0
    %897 = vmatprep.subr.mxu0 0.0
    %898 = vmatpush1.msra.mxu0 %v872
    %899 = vmatprep.subr.mxu0 0.0
    %900 = vmatpush1.msra.mxu0 %v871
    %901 = vmatprep.subr.mxu0 0.0
    %902 = vmatpush1.msra.mxu0 %v870
    %903 = vmatprep.subr.mxu0 0.0
    %904 = vmatpush1.msra.mxu0 %v869
    %905 = vmatprep.subr.mxu0 0.0
    %906 = vmatpush2.msra.mxu0 0.0
    %907 = vmatprep.subr.mxu0 0.0
    %908 = vmatpush2.msra.mxu0 0.0
    %909 = vmatprep.subr.mxu0 0.0
    %910 = vmatpush2.msra.mxu0 0.0
    %911 = vmatprep.subr.mxu0 0.0
    %912 = vmatpush2.msra.mxu0 0.0
    %913 = vmatprep.subr.mxu0 0.0
    %914 = vmatpush2.msra.mxu0 0.0
    %915 = vmatprep.subr.mxu0 0.0
    %916 = vmatpush2.msra.mxu0 0.0
    %917 = vmatprep.subr.mxu0 0.0
    %918 = vmatpush2.msra.mxu0 0.0
    %919 = vmatprep.subr.mxu0 0.0
    %920 = vmatpush2.msra.mxu0 0.0
    %921 = vmatprep.subr.mxu0 0.0
    %922 = vmatpush2.msra.mxu0 0.0
    %923 = vmatprep.subr.mxu0 0.0
    %924 = vmatpush2.msra.mxu0 0.0
    %925 = vmatprep.subr.mxu0 0.0
    %926 = vmatpush2.msra.mxu0 0.0
    %927 = vmatprep.subr.mxu0 0.0
    %928 = vmatpush2.msra.mxu0 0.0
    %929 = vmatprep.subr.mxu0 0.0
    %930 = vmatpush2.msra.mxu0 0.0
    %931 = vmatprep.subr.mxu0 0.0
    %932 = vmatpush2.msra.mxu0 0.0
    %933 = vmatprep.subr.mxu0 0.0
    %934 = vmatpush2.msra.mxu0 0.0
    %935 = vmatprep.subr.mxu0 0.0
    %936 = vmatpush2.msra.mxu0 0.0
    %937 = vmatprep.mubr.f32.mxu0 0.0
    %938 = vmatmul.mubr.f32.gmra.mxu0 %v721
    %v939 = vpop.f32.mrf.mxu0
    %v940 = vadd.f32 0.0, %v939
    %v941 = vpop.f32.mrf.mxu0
    %942 = vdwg.mxu0
    %v943 = vadd.f32 %v714, %v940
    %v944 = vld [vmem:[%s267] sm:$0xff]
    %v945 = vld [vmem:[%s267 + $0x8] sm:$0xff]
    %v946 = vld [vmem:[%s267 + $0x10] sm:$0xff]
    %v947 = vld [vmem:[%s267 + $0x18] sm:$0xff]
    %948 = vmatprep.subr.mxu0 0.0
    %949 = vmatpush1.msra.mxu0 0.0
    %950 = vmatprep.subr.mxu0 0.0
    %951 = vmatpush1.msra.mxu0 0.0
    %952 = vmatprep.subr.mxu0 0.0
    %953 = vmatpush1.msra.mxu0 0.0
    %954 = vmatprep.subr.mxu0 0.0
    %955 = vmatpush1.msra.mxu0 0.0
    %956 = vmatprep.subr.mxu0 0.0
    %957 = vmatpush1.msra.mxu0 0.0
    %958 = vmatprep.subr.mxu0 0.0
    %959 = vmatpush1.msra.mxu0 0.0
    %960 = vmatprep.subr.mxu0 0.0
    %961 = vmatpush1.msra.mxu0 0.0
    %962 = vmatprep.subr.mxu0 0.0
    %963 = vmatpush1.msra.mxu0 0.0
    %964 = vmatprep.subr.mxu0 0.0
    %965 = vmatpush1.msra.mxu0 0.0
    %966 = vmatprep.subr.mxu0 0.0
    %967 = vmatpush1.msra.mxu0 0.0
    %968 = vmatprep.subr.mxu0 0.0
    %969 = vmatpush1.msra.mxu0 0.0
    %970 = vmatprep.subr.mxu0 0.0
    %971 = vmatpush1.msra.mxu0 0.0
    %972 = vmatprep.subr.mxu0 0.0
    %973 = vmatpush1.msra.mxu0 %v947
    %974 = vmatprep.subr.mxu0 0.0
    %975 = vmatpush1.msra.mxu0 %v946
    %976 = vmatprep.subr.mxu0 0.0
    %977 = vmatpush1.msra.mxu0 %v945
    %978 = vmatprep.subr.mxu0 0.0
    %979 = vmatpush1.msra.mxu0 %v944
    %980 = vmatprep.subr.mxu0 0.0
    %981 = vmatpush2.msra.mxu0 0.0
    %982 = vmatprep.subr.mxu0 0.0
    %983 = vmatpush2.msra.mxu0 0.0
    %984 = vmatprep.subr.mxu0 0.0
    %985 = vmatpush2.msra.mxu0 0.0
    %986 = vmatprep.subr.mxu0 0.0
    %987 = vmatpush2.msra.mxu0 0.0
    %988 = vmatprep.subr.mxu0 0.0
    %989 = vmatpush2.msra.mxu0 0.0
    %990 = vmatprep.subr.mxu0 0.0
    %991 = vmatpush2.msra.mxu0 0.0
    %992 = vmatprep.subr.mxu0 0.0
    %993 = vmatpush2.msra.mxu0 0.0
    %994 = vmatprep.subr.mxu0 0.0
    %995 = vmatpush2.msra.mxu0 0.0
    %996 = vmatprep.subr.mxu0 0.0
    %997 = vmatpush2.msra.mxu0 0.0
    %998 = vmatprep.subr.mxu0 0.0
    %999 = vmatpush2.msra.mxu0 0.0
    %1000 = vmatprep.subr.mxu0 0.0
    %1001 = vmatpush2.msra.mxu0 0.0
    %1002 = vmatprep.subr.mxu0 0.0
    %1003 = vmatpush2.msra.mxu0 0.0
    %1004 = vmatprep.subr.mxu0 0.0
    %1005 = vmatpush2.msra.mxu0 0.0
    %1006 = vmatprep.subr.mxu0 0.0
    %1007 = vmatpush2.msra.mxu0 0.0
    %1008 = vmatprep.subr.mxu0 0.0
    %1009 = vmatpush2.msra.mxu0 0.0
    %1010 = vmatprep.subr.mxu0 0.0
    %1011 = vmatpush2.msra.mxu0 0.0
    %1012 = vmatprep.mubr.f32.mxu0 0.0
    %1013 = vmatmul.mubr.f32.gmra.mxu0 %v721
    %v1014 = vpop.f32.mrf.mxu0
    %v1015 = vadd.f32 0.0, %v1014
    %v1016 = vpop.f32.mrf.mxu0
    %1017 = vdwg.mxu0
    %v1018 = vadd.f32 %v715, %v1015
    %v1019 = vxor.u32 %v793, 2147483648
    %v1020 = vmul.f32 %v1019, 1.442695
    %v1021 = vpow.pop %v1020
    %v1022 = vadd.f32 %v1021, 1.0
    %v1023 = vrcp.pop %v1022
    %v1024 = vmul.f32 1.0, %v1023
    %v1025 = vxor.u32 %v868, 2147483648
    %v1026 = vmul.f32 %v1025, 1.442695
    %v1027 = vpow.pop %v1026
    %v1028 = vadd.f32 %v1027, 1.0
    %v1029 = vrcp.pop %v1028
    %v1030 = vmul.f32 1.0, %v1029
    %v1031 = vtanh.pop %v943
    %v1032 = vxor.u32 %v1018, 2147483648
    %v1033 = vmul.f32 %v1032, 1.442695
    %v1034 = vpow.pop %v1033
    %v1035 = vadd.f32 %v1034, 1.0
    %v1036 = vrcp.pop %v1035
    %v1037 = vmul.f32 1.0, %v1036
    %v1038 = vmul.f32 %v1030, %v710
    %v1039 = vmul.f32 %v1024, %v1031
    %v1040 = vadd.f32 %v1038, %v1039
    %v1041 = vtanh.pop %v1040
    %v1042 = vmul.f32 %v1037, %v1041
    %1043 = vst.msk [vmem:[#allocation2] sm:$0x3] %vm367, %v1042
    %1044 = vst.msk [vmem:[#allocation3] sm:$0x3] %vm367, %v1040
    %s1045 = scalar_lea.vmem [#allocation4], 4
    %1046 = vst.msk [vmem:[%s1045] sm:$0x3] %vm367, %v1042
    %v1047 = vld [vmem:[#allocation2] sm:$0x3]
    %v1048 = vld [vmem:[#allocation3] sm:$0x3]
    %s1049 = scalar_lea.vmem %s0, 24
    %v1050 = vld [vmem:[%s1049] sm:$0x3]
    %v1051 = vld [vmem:[%s1049 + $0x2] sm:$0x3]
    %v1052 = vld [vmem:[%s1049 + $0x4] sm:$0x3]
    %v1053 = vld [vmem:[%s1049 + $0x6] sm:$0x3]
    %v1054 = vld [vmem:[%s3] sm:$0xff]
    %v1055 = vld [vmem:[%s3 + $0x8] sm:$0xff]
    %v1056 = vld [vmem:[%s3 + $0x10] sm:$0xff]
    %v1057 = vld [vmem:[%s3 + $0x18] sm:$0xff]
    %v1059 = vsel %vm40, %v1047, 0
    %1061 = vmatprep.subr.mxu0 0.0
    %1062 = vmatpush1.msra.mxu0 0.0
    %1063 = vmatprep.subr.mxu0 0.0
    %1064 = vmatpush1.msra.mxu0 0.0
    %1065 = vmatprep.subr.mxu0 0.0
    %1066 = vmatpush1.msra.mxu0 0.0
    %1067 = vmatprep.subr.mxu0 0.0
    %1068 = vmatpush1.msra.mxu0 0.0
    %1069 = vmatprep.subr.mxu0 0.0
    %1070 = vmatpush1.msra.mxu0 0.0
    %1071 = vmatprep.subr.mxu0 0.0
    %1072 = vmatpush1.msra.mxu0 0.0
    %1073 = vmatprep.subr.mxu0 0.0
    %1074 = vmatpush1.msra.mxu0 0.0
    %1075 = vmatprep.subr.mxu0 0.0
    %1076 = vmatpush1.msra.mxu0 0.0
    %1077 = vmatprep.subr.mxu0 0.0
    %1078 = vmatpush1.msra.mxu0 0.0
    %1079 = vmatprep.subr.mxu0 0.0
    %1080 = vmatpush1.msra.mxu0 0.0
    %1081 = vmatprep.subr.mxu0 0.0
    %1082 = vmatpush1.msra.mxu0 0.0
    %1083 = vmatprep.subr.mxu0 0.0
    %1084 = vmatpush1.msra.mxu0 0.0
    %1085 = vmatprep.subr.mxu0 0.0
    %1086 = vmatpush1.msra.mxu0 %v1057
    %1087 = vmatprep.subr.mxu0 0.0
    %1088 = vmatpush1.msra.mxu0 %v1056
    %1089 = vmatprep.subr.mxu0 0.0
    %1090 = vmatpush1.msra.mxu0 %v1055
    %1091 = vmatprep.subr.mxu0 0.0
    %1092 = vmatpush1.msra.mxu0 %v1054
    %1093 = vmatprep.subr.mxu0 0.0
    %1094 = vmatpush2.msra.mxu0 0.0
    %1095 = vmatprep.subr.mxu0 0.0
    %1096 = vmatpush2.msra.mxu0 0.0
    %1097 = vmatprep.subr.mxu0 0.0
    %1098 = vmatpush2.msra.mxu0 0.0
    %1099 = vmatprep.subr.mxu0 0.0
    %1100 = vmatpush2.msra.mxu0 0.0
    %1101 = vmatprep.subr.mxu0 0.0
    %1102 = vmatpush2.msra.mxu0 0.0
    %1103 = vmatprep.subr.mxu0 0.0
    %1104 = vmatpush2.msra.mxu0 0.0
    %1105 = vmatprep.subr.mxu0 0.0
    %1106 = vmatpush2.msra.mxu0 0.0
    %1107 = vmatprep.subr.mxu0 0.0
    %1108 = vmatpush2.msra.mxu0 0.0
    %1109 = vmatprep.subr.mxu0 0.0
    %1110 = vmatpush2.msra.mxu0 0.0
    %1111 = vmatprep.subr.mxu0 0.0
    %1112 = vmatpush2.msra.mxu0 0.0
    %1113 = vmatprep.subr.mxu0 0.0
    %1114 = vmatpush2.msra.mxu0 0.0
    %1115 = vmatprep.subr.mxu0 0.0
    %1116 = vmatpush2.msra.mxu0 0.0
    %1117 = vmatprep.subr.mxu0 0.0
    %1118 = vmatpush2.msra.mxu0 0.0
    %1119 = vmatprep.subr.mxu0 0.0
    %1120 = vmatpush2.msra.mxu0 0.0
    %1121 = vmatprep.subr.mxu0 0.0
    %1122 = vmatpush2.msra.mxu0 0.0
    %1123 = vmatprep.subr.mxu0 0.0
    %1124 = vmatpush2.msra.mxu0 0.0
    %1125 = vmatprep.mubr.f32.mxu0 0.0
    %1126 = vmatmul.mubr.f32.gmra.mxu0 %v1059
    %v1127 = vpop.f32.mrf.mxu0
    %v1128 = vadd.f32 0.0, %v1127
    %v1129 = vpop.f32.mrf.mxu0
    %1130 = vdwg.mxu0
    %v1131 = vadd.f32 %v1050, %v1128
    %v1132 = vld [vmem:[%s115] sm:$0xff]
    %v1133 = vld [vmem:[%s115 + $0x8] sm:$0xff]
    %v1134 = vld [vmem:[%s115 + $0x10] sm:$0xff]
    %v1135 = vld [vmem:[%s115 + $0x18] sm:$0xff]
    %1136 = vmatprep.subr.mxu0 0.0
    %1137 = vmatpush1.msra.mxu0 0.0
    %1138 = vmatprep.subr.mxu0 0.0
    %1139 = vmatpush1.msra.mxu0 0.0
    %1140 = vmatprep.subr.mxu0 0.0
    %1141 = vmatpush1.msra.mxu0 0.0
    %1142 = vmatprep.subr.mxu0 0.0
    %1143 = vmatpush1.msra.mxu0 0.0
    %1144 = vmatprep.subr.mxu0 0.0
    %1145 = vmatpush1.msra.mxu0 0.0
    %1146 = vmatprep.subr.mxu0 0.0
    %1147 = vmatpush1.msra.mxu0 0.0
    %1148 = vmatprep.subr.mxu0 0.0
    %1149 = vmatpush1.msra.mxu0 0.0
    %1150 = vmatprep.subr.mxu0 0.0
    %1151 = vmatpush1.msra.mxu0 0.0
    %1152 = vmatprep.subr.mxu0 0.0
    %1153 = vmatpush1.msra.mxu0 0.0
    %1154 = vmatprep.subr.mxu0 0.0
    %1155 = vmatpush1.msra.mxu0 0.0
    %1156 = vmatprep.subr.mxu0 0.0
    %1157 = vmatpush1.msra.mxu0 0.0
    %1158 = vmatprep.subr.mxu0 0.0
    %1159 = vmatpush1.msra.mxu0 0.0
    %1160 = vmatprep.subr.mxu0 0.0
    %1161 = vmatpush1.msra.mxu0 %v1135
    %1162 = vmatprep.subr.mxu0 0.0
    %1163 = vmatpush1.msra.mxu0 %v1134
    %1164 = vmatprep.subr.mxu0 0.0
    %1165 = vmatpush1.msra.mxu0 %v1133
    %1166 = vmatprep.subr.mxu0 0.0
    %1167 = vmatpush1.msra.mxu0 %v1132
    %1168 = vmatprep.subr.mxu0 0.0
    %1169 = vmatpush2.msra.mxu0 0.0
    %1170 = vmatprep.subr.mxu0 0.0
    %1171 = vmatpush2.msra.mxu0 0.0
    %1172 = vmatprep.subr.mxu0 0.0
    %1173 = vmatpush2.msra.mxu0 0.0
    %1174 = vmatprep.subr.mxu0 0.0
    %1175 = vmatpush2.msra.mxu0 0.0
    %1176 = vmatprep.subr.mxu0 0.0
    %1177 = vmatpush2.msra.mxu0 0.0
    %1178 = vmatprep.subr.mxu0 0.0
    %1179 = vmatpush2.msra.mxu0 0.0
    %1180 = vmatprep.subr.mxu0 0.0
    %1181 = vmatpush2.msra.mxu0 0.0
    %1182 = vmatprep.subr.mxu0 0.0
    %1183 = vmatpush2.msra.mxu0 0.0
    %1184 = vmatprep.subr.mxu0 0.0
    %1185 = vmatpush2.msra.mxu0 0.0
    %1186 = vmatprep.subr.mxu0 0.0
    %1187 = vmatpush2.msra.mxu0 0.0
    %1188 = vmatprep.subr.mxu0 0.0
    %1189 = vmatpush2.msra.mxu0 0.0
    %1190 = vmatprep.subr.mxu0 0.0
    %1191 = vmatpush2.msra.mxu0 0.0
    %1192 = vmatprep.subr.mxu0 0.0
    %1193 = vmatpush2.msra.mxu0 0.0
    %1194 = vmatprep.subr.mxu0 0.0
    %1195 = vmatpush2.msra.mxu0 0.0
    %1196 = vmatprep.subr.mxu0 0.0
    %1197 = vmatpush2.msra.mxu0 0.0
    %1198 = vmatprep.subr.mxu0 0.0
    %1199 = vmatpush2.msra.mxu0 0.0
    %1200 = vmatprep.mubr.f32.mxu0 0.0
    %1201 = vmatmul.mubr.f32.gmra.mxu0 %v1059
    %v1202 = vpop.f32.mrf.mxu0
    %v1203 = vadd.f32 0.0, %v1202
    %v1204 = vpop.f32.mrf.mxu0
    %1205 = vdwg.mxu0
    %v1206 = vadd.f32 %v1051, %v1203
    %v1207 = vld [vmem:[%s191] sm:$0xff]
    %v1208 = vld [vmem:[%s191 + $0x8] sm:$0xff]
    %v1209 = vld [vmem:[%s191 + $0x10] sm:$0xff]
    %v1210 = vld [vmem:[%s191 + $0x18] sm:$0xff]
    %1211 = vmatprep.subr.mxu0 0.0
    %1212 = vmatpush1.msra.mxu0 0.0
    %1213 = vmatprep.subr.mxu0 0.0
    %1214 = vmatpush1.msra.mxu0 0.0
    %1215 = vmatprep.subr.mxu0 0.0
    %1216 = vmatpush1.msra.mxu0 0.0
    %1217 = vmatprep.subr.mxu0 0.0
    %1218 = vmatpush1.msra.mxu0 0.0
    %1219 = vmatprep.subr.mxu0 0.0
    %1220 = vmatpush1.msra.mxu0 0.0
    %1221 = vmatprep.subr.mxu0 0.0
    %1222 = vmatpush1.msra.mxu0 0.0
    %1223 = vmatprep.subr.mxu0 0.0
    %1224 = vmatpush1.msra.mxu0 0.0
    %1225 = vmatprep.subr.mxu0 0.0
    %1226 = vmatpush1.msra.mxu0 0.0
    %1227 = vmatprep.subr.mxu0 0.0
    %1228 = vmatpush1.msra.mxu0 0.0
    %1229 = vmatprep.subr.mxu0 0.0
    %1230 = vmatpush1.msra.mxu0 0.0
    %1231 = vmatprep.subr.mxu0 0.0
    %1232 = vmatpush1.msra.mxu0 0.0
    %1233 = vmatprep.subr.mxu0 0.0
    %1234 = vmatpush1.msra.mxu0 0.0
    %1235 = vmatprep.subr.mxu0 0.0
    %1236 = vmatpush1.msra.mxu0 %v1210
    %1237 = vmatprep.subr.mxu0 0.0
    %1238 = vmatpush1.msra.mxu0 %v1209
    %1239 = vmatprep.subr.mxu0 0.0
    %1240 = vmatpush1.msra.mxu0 %v1208
    %1241 = vmatprep.subr.mxu0 0.0
    %1242 = vmatpush1.msra.mxu0 %v1207
    %1243 = vmatprep.subr.mxu0 0.0
    %1244 = vmatpush2.msra.mxu0 0.0
    %1245 = vmatprep.subr.mxu0 0.0
    %1246 = vmatpush2.msra.mxu0 0.0
    %1247 = vmatprep.subr.mxu0 0.0
    %1248 = vmatpush2.msra.mxu0 0.0
    %1249 = vmatprep.subr.mxu0 0.0
    %1250 = vmatpush2.msra.mxu0 0.0
    %1251 = vmatprep.subr.mxu0 0.0
    %1252 = vmatpush2.msra.mxu0 0.0
    %1253 = vmatprep.subr.mxu0 0.0
    %1254 = vmatpush2.msra.mxu0 0.0
    %1255 = vmatprep.subr.mxu0 0.0
    %1256 = vmatpush2.msra.mxu0 0.0
    %1257 = vmatprep.subr.mxu0 0.0
    %1258 = vmatpush2.msra.mxu0 0.0
    %1259 = vmatprep.subr.mxu0 0.0
    %1260 = vmatpush2.msra.mxu0 0.0
    %1261 = vmatprep.subr.mxu0 0.0
    %1262 = vmatpush2.msra.mxu0 0.0
    %1263 = vmatprep.subr.mxu0 0.0
    %1264 = vmatpush2.msra.mxu0 0.0
    %1265 = vmatprep.subr.mxu0 0.0
    %1266 = vmatpush2.msra.mxu0 0.0
    %1267 = vmatprep.subr.mxu0 0.0
    %1268 = vmatpush2.msra.mxu0 0.0
    %1269 = vmatprep.subr.mxu0 0.0
    %1270 = vmatpush2.msra.mxu0 0.0
    %1271 = vmatprep.subr.mxu0 0.0
    %1272 = vmatpush2.msra.mxu0 0.0
    %1273 = vmatprep.subr.mxu0 0.0
    %1274 = vmatpush2.msra.mxu0 0.0
    %1275 = vmatprep.mubr.f32.mxu0 0.0
    %1276 = vmatmul.mubr.f32.gmra.mxu0 %v1059
    %v1277 = vpop.f32.mrf.mxu0
    %v1278 = vadd.f32 0.0, %v1277
    %v1279 = vpop.f32.mrf.mxu0
    %1280 = vdwg.mxu0
    %v1281 = vadd.f32 %v1052, %v1278
    %v1282 = vld [vmem:[%s267] sm:$0xff]
    %v1283 = vld [vmem:[%s267 + $0x8] sm:$0xff]
    %v1284 = vld [vmem:[%s267 + $0x10] sm:$0xff]
    %v1285 = vld [vmem:[%s267 + $0x18] sm:$0xff]
    %1286 = vmatprep.subr.mxu0 0.0
    %1287 = vmatpush1.msra.mxu0 0.0
    %1288 = vmatprep.subr.mxu0 0.0
    %1289 = vmatpush1.msra.mxu0 0.0
    %1290 = vmatprep.subr.mxu0 0.0
    %1291 = vmatpush1.msra.mxu0 0.0
    %1292 = vmatprep.subr.mxu0 0.0
    %1293 = vmatpush1.msra.mxu0 0.0
    %1294 = vmatprep.subr.mxu0 0.0
    %1295 = vmatpush1.msra.mxu0 0.0
    %1296 = vmatprep.subr.mxu0 0.0
    %1297 = vmatpush1.msra.mxu0 0.0
    %1298 = vmatprep.subr.mxu0 0.0
    %1299 = vmatpush1.msra.mxu0 0.0
    %1300 = vmatprep.subr.mxu0 0.0
    %1301 = vmatpush1.msra.mxu0 0.0
    %1302 = vmatprep.subr.mxu0 0.0
    %1303 = vmatpush1.msra.mxu0 0.0
    %1304 = vmatprep.subr.mxu0 0.0
    %1305 = vmatpush1.msra.mxu0 0.0
    %1306 = vmatprep.subr.mxu0 0.0
    %1307 = vmatpush1.msra.mxu0 0.0
    %1308 = vmatprep.subr.mxu0 0.0
    %1309 = vmatpush1.msra.mxu0 0.0
    %1310 = vmatprep.subr.mxu0 0.0
    %1311 = vmatpush1.msra.mxu0 %v1285
    %1312 = vmatprep.subr.mxu0 0.0
    %1313 = vmatpush1.msra.mxu0 %v1284
    %1314 = vmatprep.subr.mxu0 0.0
    %1315 = vmatpush1.msra.mxu0 %v1283
    %1316 = vmatprep.subr.mxu0 0.0
    %1317 = vmatpush1.msra.mxu0 %v1282
    %1318 = vmatprep.subr.mxu0 0.0
    %1319 = vmatpush2.msra.mxu0 0.0
    %1320 = vmatprep.subr.mxu0 0.0
    %1321 = vmatpush2.msra.mxu0 0.0
    %1322 = vmatprep.subr.mxu0 0.0
    %1323 = vmatpush2.msra.mxu0 0.0
    %1324 = vmatprep.subr.mxu0 0.0
    %1325 = vmatpush2.msra.mxu0 0.0
    %1326 = vmatprep.subr.mxu0 0.0
    %1327 = vmatpush2.msra.mxu0 0.0
    %1328 = vmatprep.subr.mxu0 0.0
    %1329 = vmatpush2.msra.mxu0 0.0
    %1330 = vmatprep.subr.mxu0 0.0
    %1331 = vmatpush2.msra.mxu0 0.0
    %1332 = vmatprep.subr.mxu0 0.0
    %1333 = vmatpush2.msra.mxu0 0.0
    %1334 = vmatprep.subr.mxu0 0.0
    %1335 = vmatpush2.msra.mxu0 0.0
    %1336 = vmatprep.subr.mxu0 0.0
    %1337 = vmatpush2.msra.mxu0 0.0
    %1338 = vmatprep.subr.mxu0 0.0
    %1339 = vmatpush2.msra.mxu0 0.0
    %1340 = vmatprep.subr.mxu0 0.0
    %1341 = vmatpush2.msra.mxu0 0.0
    %1342 = vmatprep.subr.mxu0 0.0
    %1343 = vmatpush2.msra.mxu0 0.0
    %1344 = vmatprep.subr.mxu0 0.0
    %1345 = vmatpush2.msra.mxu0 0.0
    %1346 = vmatprep.subr.mxu0 0.0
    %1347 = vmatpush2.msra.mxu0 0.0
    %1348 = vmatprep.subr.mxu0 0.0
    %1349 = vmatpush2.msra.mxu0 0.0
    %1350 = vmatprep.mubr.f32.mxu0 0.0
    %1351 = vmatmul.mubr.f32.gmra.mxu0 %v1059
    %v1352 = vpop.f32.mrf.mxu0
    %v1353 = vadd.f32 0.0, %v1352
    %v1354 = vpop.f32.mrf.mxu0
    %1355 = vdwg.mxu0
    %v1356 = vadd.f32 %v1053, %v1353
    %v1357 = vxor.u32 %v1131, 2147483648
    %v1358 = vmul.f32 %v1357, 1.442695
    %v1359 = vpow.pop %v1358
    %v1360 = vadd.f32 %v1359, 1.0
    %v1361 = vrcp.pop %v1360
    %v1362 = vmul.f32 1.0, %v1361
    %v1363 = vxor.u32 %v1206, 2147483648
    %v1364 = vmul.f32 %v1363, 1.442695
    %v1365 = vpow.pop %v1364
    %v1366 = vadd.f32 %v1365, 1.0
    %v1367 = vrcp.pop %v1366
    %v1368 = vmul.f32 1.0, %v1367
    %v1369 = vtanh.pop %v1281
    %v1370 = vxor.u32 %v1356, 2147483648
    %v1371 = vmul.f32 %v1370, 1.442695
    %v1372 = vpow.pop %v1371
    %v1373 = vadd.f32 %v1372, 1.0
    %v1374 = vrcp.pop %v1373
    %v1375 = vmul.f32 1.0, %v1374
    %v1376 = vmul.f32 %v1368, %v1048
    %v1377 = vmul.f32 %v1362, %v1369
    %v1378 = vadd.f32 %v1376, %v1377
    %v1379 = vtanh.pop %v1378
    %v1380 = vmul.f32 %v1375, %v1379
    %1381 = vst.msk [vmem:[#allocation2] sm:$0x3] %vm367, %v1380
    %1382 = vst.msk [vmem:[#allocation3] sm:$0x3] %vm367, %v1378
    %s1383 = scalar_lea.vmem [#allocation4], 6
    %1384 = vst.msk [vmem:[%s1383] sm:$0x3] %vm367, %v1380
    %v1385 = vld [vmem:[#allocation2] sm:$0x3]
    %v1386 = vld [vmem:[#allocation3] sm:$0x3]
    %s1387 = scalar_lea.vmem %s0, 32
    %v1388 = vld [vmem:[%s1387] sm:$0x3]
    %v1389 = vld [vmem:[%s1387 + $0x2] sm:$0x3]
    %v1390 = vld [vmem:[%s1387 + $0x4] sm:$0x3]
    %v1391 = vld [vmem:[%s1387 + $0x6] sm:$0x3]
    %v1392 = vld [vmem:[%s3] sm:$0xff]
    %v1393 = vld [vmem:[%s3 + $0x8] sm:$0xff]
    %v1394 = vld [vmem:[%s3 + $0x10] sm:$0xff]
    %v1395 = vld [vmem:[%s3 + $0x18] sm:$0xff]
    %v1397 = vsel %vm40, %v1385, 0
    %1399 = vmatprep.subr.mxu0 0.0
    %1400 = vmatpush1.msra.mxu0 0.0
    %1401 = vmatprep.subr.mxu0 0.0
    %1402 = vmatpush1.msra.mxu0 0.0
    %1403 = vmatprep.subr.mxu0 0.0
    %1404 = vmatpush1.msra.mxu0 0.0
    %1405 = vmatprep.subr.mxu0 0.0
    %1406 = vmatpush1.msra.mxu0 0.0
    %1407 = vmatprep.subr.mxu0 0.0
    %1408 = vmatpush1.msra.mxu0 0.0
    %1409 = vmatprep.subr.mxu0 0.0
    %1410 = vmatpush1.msra.mxu0 0.0
    %1411 = vmatprep.subr.mxu0 0.0
    %1412 = vmatpush1.msra.mxu0 0.0
    %1413 = vmatprep.subr.mxu0 0.0
    %1414 = vmatpush1.msra.mxu0 0.0
    %1415 = vmatprep.subr.mxu0 0.0
    %1416 = vmatpush1.msra.mxu0 0.0
    %1417 = vmatprep.subr.mxu0 0.0
    %1418 = vmatpush1.msra.mxu0 0.0
    %1419 = vmatprep.subr.mxu0 0.0
    %1420 = vmatpush1.msra.mxu0 0.0
    %1421 = vmatprep.subr.mxu0 0.0
    %1422 = vmatpush1.msra.mxu0 0.0
    %1423 = vmatprep.subr.mxu0 0.0
    %1424 = vmatpush1.msra.mxu0 %v1395
    %1425 = vmatprep.subr.mxu0 0.0
    %1426 = vmatpush1.msra.mxu0 %v1394
    %1427 = vmatprep.subr.mxu0 0.0
    %1428 = vmatpush1.msra.mxu0 %v1393
    %1429 = vmatprep.subr.mxu0 0.0
    %1430 = vmatpush1.msra.mxu0 %v1392
    %1431 = vmatprep.subr.mxu0 0.0
    %1432 = vmatpush2.msra.mxu0 0.0
    %1433 = vmatprep.subr.mxu0 0.0
    %1434 = vmatpush2.msra.mxu0 0.0
    %1435 = vmatprep.subr.mxu0 0.0
    %1436 = vmatpush2.msra.mxu0 0.0
    %1437 = vmatprep.subr.mxu0 0.0
    %1438 = vmatpush2.msra.mxu0 0.0
    %1439 = vmatprep.subr.mxu0 0.0
    %1440 = vmatpush2.msra.mxu0 0.0
    %1441 = vmatprep.subr.mxu0 0.0
    %1442 = vmatpush2.msra.mxu0 0.0
    %1443 = vmatprep.subr.mxu0 0.0
    %1444 = vmatpush2.msra.mxu0 0.0
    %1445 = vmatprep.subr.mxu0 0.0
    %1446 = vmatpush2.msra.mxu0 0.0
    %1447 = vmatprep.subr.mxu0 0.0
    %1448 = vmatpush2.msra.mxu0 0.0
    %1449 = vmatprep.subr.mxu0 0.0
    %1450 = vmatpush2.msra.mxu0 0.0
    %1451 = vmatprep.subr.mxu0 0.0
    %1452 = vmatpush2.msra.mxu0 0.0
    %1453 = vmatprep.subr.mxu0 0.0
    %1454 = vmatpush2.msra.mxu0 0.0
    %1455 = vmatprep.subr.mxu0 0.0
    %1456 = vmatpush2.msra.mxu0 0.0
    %1457 = vmatprep.subr.mxu0 0.0
    %1458 = vmatpush2.msra.mxu0 0.0
    %1459 = vmatprep.subr.mxu0 0.0
    %1460 = vmatpush2.msra.mxu0 0.0
    %1461 = vmatprep.subr.mxu0 0.0
    %1462 = vmatpush2.msra.mxu0 0.0
    %1463 = vmatprep.mubr.f32.mxu0 0.0
    %1464 = vmatmul.mubr.f32.gmra.mxu0 %v1397
    %v1465 = vpop.f32.mrf.mxu0
    %v1466 = vadd.f32 0.0, %v1465
    %v1467 = vpop.f32.mrf.mxu0
    %1468 = vdwg.mxu0
    %v1469 = vadd.f32 %v1388, %v1466
    %v1470 = vld [vmem:[%s115] sm:$0xff]
    %v1471 = vld [vmem:[%s115 + $0x8] sm:$0xff]
    %v1472 = vld [vmem:[%s115 + $0x10] sm:$0xff]
    %v1473 = vld [vmem:[%s115 + $0x18] sm:$0xff]
    %1474 = vmatprep.subr.mxu0 0.0
    %1475 = vmatpush1.msra.mxu0 0.0
    %1476 = vmatprep.subr.mxu0 0.0
    %1477 = vmatpush1.msra.mxu0 0.0
    %1478 = vmatprep.subr.mxu0 0.0
    %1479 = vmatpush1.msra.mxu0 0.0
    %1480 = vmatprep.subr.mxu0 0.0
    %1481 = vmatpush1.msra.mxu0 0.0
    %1482 = vmatprep.subr.mxu0 0.0
    %1483 = vmatpush1.msra.mxu0 0.0
    %1484 = vmatprep.subr.mxu0 0.0
    %1485 = vmatpush1.msra.mxu0 0.0
    %1486 = vmatprep.subr.mxu0 0.0
    %1487 = vmatpush1.msra.mxu0 0.0
    %1488 = vmatprep.subr.mxu0 0.0
    %1489 = vmatpush1.msra.mxu0 0.0
    %1490 = vmatprep.subr.mxu0 0.0
    %1491 = vmatpush1.msra.mxu0 0.0
    %1492 = vmatprep.subr.mxu0 0.0
    %1493 = vmatpush1.msra.mxu0 0.0
    %1494 = vmatprep.subr.mxu0 0.0
    %1495 = vmatpush1.msra.mxu0 0.0
    %1496 = vmatprep.subr.mxu0 0.0
    %1497 = vmatpush1.msra.mxu0 0.0
    %1498 = vmatprep.subr.mxu0 0.0
    %1499 = vmatpush1.msra.mxu0 %v1473
    %1500 = vmatprep.subr.mxu0 0.0
    %1501 = vmatpush1.msra.mxu0 %v1472
    %1502 = vmatprep.subr.mxu0 0.0
    %1503 = vmatpush1.msra.mxu0 %v1471
    %1504 = vmatprep.subr.mxu0 0.0
    %1505 = vmatpush1.msra.mxu0 %v1470
    %1506 = vmatprep.subr.mxu0 0.0
    %1507 = vmatpush2.msra.mxu0 0.0
    %1508 = vmatprep.subr.mxu0 0.0
    %1509 = vmatpush2.msra.mxu0 0.0
    %1510 = vmatprep.subr.mxu0 0.0
    %1511 = vmatpush2.msra.mxu0 0.0
    %1512 = vmatprep.subr.mxu0 0.0
    %1513 = vmatpush2.msra.mxu0 0.0
    %1514 = vmatprep.subr.mxu0 0.0
    %1515 = vmatpush2.msra.mxu0 0.0
    %1516 = vmatprep.subr.mxu0 0.0
    %1517 = vmatpush2.msra.mxu0 0.0
    %1518 = vmatprep.subr.mxu0 0.0
    %1519 = vmatpush2.msra.mxu0 0.0
    %1520 = vmatprep.subr.mxu0 0.0
    %1521 = vmatpush2.msra.mxu0 0.0
    %1522 = vmatprep.subr.mxu0 0.0
    %1523 = vmatpush2.msra.mxu0 0.0
    %1524 = vmatprep.subr.mxu0 0.0
    %1525 = vmatpush2.msra.mxu0 0.0
    %1526 = vmatprep.subr.mxu0 0.0
    %1527 = vmatpush2.msra.mxu0 0.0
    %1528 = vmatprep.subr.mxu0 0.0
    %1529 = vmatpush2.msra.mxu0 0.0
    %1530 = vmatprep.subr.mxu0 0.0
    %1531 = vmatpush2.msra.mxu0 0.0
    %1532 = vmatprep.subr.mxu0 0.0
    %1533 = vmatpush2.msra.mxu0 0.0
    %1534 = vmatprep.subr.mxu0 0.0
    %1535 = vmatpush2.msra.mxu0 0.0
    %1536 = vmatprep.subr.mxu0 0.0
    %1537 = vmatpush2.msra.mxu0 0.0
    %1538 = vmatprep.mubr.f32.mxu0 0.0
    %1539 = vmatmul.mubr.f32.gmra.mxu0 %v1397
    %v1540 = vpop.f32.mrf.mxu0
    %v1541 = vadd.f32 0.0, %v1540
    %v1542 = vpop.f32.mrf.mxu0
    %1543 = vdwg.mxu0
    %v1544 = vadd.f32 %v1389, %v1541
    %v1545 = vld [vmem:[%s191] sm:$0xff]
    %v1546 = vld [vmem:[%s191 + $0x8] sm:$0xff]
    %v1547 = vld [vmem:[%s191 + $0x10] sm:$0xff]
    %v1548 = vld [vmem:[%s191 + $0x18] sm:$0xff]
    %1549 = vmatprep.subr.mxu0 0.0
    %1550 = vmatpush1.msra.mxu0 0.0
    %1551 = vmatprep.subr.mxu0 0.0
    %1552 = vmatpush1.msra.mxu0 0.0
    %1553 = vmatprep.subr.mxu0 0.0
    %1554 = vmatpush1.msra.mxu0 0.0
    %1555 = vmatprep.subr.mxu0 0.0
    %1556 = vmatpush1.msra.mxu0 0.0
    %1557 = vmatprep.subr.mxu0 0.0
    %1558 = vmatpush1.msra.mxu0 0.0
    %1559 = vmatprep.subr.mxu0 0.0
    %1560 = vmatpush1.msra.mxu0 0.0
    %1561 = vmatprep.subr.mxu0 0.0
    %1562 = vmatpush1.msra.mxu0 0.0
    %1563 = vmatprep.subr.mxu0 0.0
    %1564 = vmatpush1.msra.mxu0 0.0
    %1565 = vmatprep.subr.mxu0 0.0
    %1566 = vmatpush1.msra.mxu0 0.0
    %1567 = vmatprep.subr.mxu0 0.0
    %1568 = vmatpush1.msra.mxu0 0.0
    %1569 = vmatprep.subr.mxu0 0.0
    %1570 = vmatpush1.msra.mxu0 0.0
    %1571 = vmatprep.subr.mxu0 0.0
    %1572 = vmatpush1.msra.mxu0 0.0
    %1573 = vmatprep.subr.mxu0 0.0
    %1574 = vmatpush1.msra.mxu0 %v1548
    %1575 = vmatprep.subr.mxu0 0.0
    %1576 = vmatpush1.msra.mxu0 %v1547
    %1577 = vmatprep.subr.mxu0 0.0
    %1578 = vmatpush1.msra.mxu0 %v1546
    %1579 = vmatprep.subr.mxu0 0.0
    %1580 = vmatpush1.msra.mxu0 %v1545
    %1581 = vmatprep.subr.mxu0 0.0
    %1582 = vmatpush2.msra.mxu0 0.0
    %1583 = vmatprep.subr.mxu0 0.0
    %1584 = vmatpush2.msra.mxu0 0.0
    %1585 = vmatprep.subr.mxu0 0.0
    %1586 = vmatpush2.msra.mxu0 0.0
    %1587 = vmatprep.subr.mxu0 0.0
    %1588 = vmatpush2.msra.mxu0 0.0
    %1589 = vmatprep.subr.mxu0 0.0
    %1590 = vmatpush2.msra.mxu0 0.0
    %1591 = vmatprep.subr.mxu0 0.0
    %1592 = vmatpush2.msra.mxu0 0.0
    %1593 = vmatprep.subr.mxu0 0.0
    %1594 = vmatpush2.msra.mxu0 0.0
    %1595 = vmatprep.subr.mxu0 0.0
    %1596 = vmatpush2.msra.mxu0 0.0
    %1597 = vmatprep.subr.mxu0 0.0
    %1598 = vmatpush2.msra.mxu0 0.0
    %1599 = vmatprep.subr.mxu0 0.0
    %1600 = vmatpush2.msra.mxu0 0.0
    %1601 = vmatprep.subr.mxu0 0.0
    %1602 = vmatpush2.msra.mxu0 0.0
    %1603 = vmatprep.subr.mxu0 0.0
    %1604 = vmatpush2.msra.mxu0 0.0
    %1605 = vmatprep.subr.mxu0 0.0
    %1606 = vmatpush2.msra.mxu0 0.0
    %1607 = vmatprep.subr.mxu0 0.0
    %1608 = vmatpush2.msra.mxu0 0.0
    %1609 = vmatprep.subr.mxu0 0.0
    %1610 = vmatpush2.msra.mxu0 0.0
    %1611 = vmatprep.subr.mxu0 0.0
    %1612 = vmatpush2.msra.mxu0 0.0
    %1613 = vmatprep.mubr.f32.mxu0 0.0
    %1614 = vmatmul.mubr.f32.gmra.mxu0 %v1397
    %v1615 = vpop.f32.mrf.mxu0
    %v1616 = vadd.f32 0.0, %v1615
    %v1617 = vpop.f32.mrf.mxu0
    %1618 = vdwg.mxu0
    %v1619 = vadd.f32 %v1390, %v1616
    %v1620 = vld [vmem:[%s267] sm:$0xff]
    %v1621 = vld [vmem:[%s267 + $0x8] sm:$0xff]
    %v1622 = vld [vmem:[%s267 + $0x10] sm:$0xff]
    %v1623 = vld [vmem:[%s267 + $0x18] sm:$0xff]
    %1624 = vmatprep.subr.mxu0 0.0
    %1625 = vmatpush1.msra.mxu0 0.0
    %1626 = vmatprep.subr.mxu0 0.0
    %1627 = vmatpush1.msra.mxu0 0.0
    %1628 = vmatprep.subr.mxu0 0.0
    %1629 = vmatpush1.msra.mxu0 0.0
    %1630 = vmatprep.subr.mxu0 0.0
    %1631 = vmatpush1.msra.mxu0 0.0
    %1632 = vmatprep.subr.mxu0 0.0
    %1633 = vmatpush1.msra.mxu0 0.0
    %1634 = vmatprep.subr.mxu0 0.0
    %1635 = vmatpush1.msra.mxu0 0.0
    %1636 = vmatprep.subr.mxu0 0.0
    %1637 = vmatpush1.msra.mxu0 0.0
    %1638 = vmatprep.subr.mxu0 0.0
    %1639 = vmatpush1.msra.mxu0 0.0
    %1640 = vmatprep.subr.mxu0 0.0
    %1641 = vmatpush1.msra.mxu0 0.0
    %1642 = vmatprep.subr.mxu0 0.0
    %1643 = vmatpush1.msra.mxu0 0.0
    %1644 = vmatprep.subr.mxu0 0.0
    %1645 = vmatpush1.msra.mxu0 0.0
    %1646 = vmatprep.subr.mxu0 0.0
    %1647 = vmatpush1.msra.mxu0 0.0
    %1648 = vmatprep.subr.mxu0 0.0
    %1649 = vmatpush1.msra.mxu0 %v1623
    %1650 = vmatprep.subr.mxu0 0.0
    %1651 = vmatpush1.msra.mxu0 %v1622
    %1652 = vmatprep.subr.mxu0 0.0
    %1653 = vmatpush1.msra.mxu0 %v1621
    %1654 = vmatprep.subr.mxu0 0.0
    %1655 = vmatpush1.msra.mxu0 %v1620
    %1656 = vmatprep.subr.mxu0 0.0
    %1657 = vmatpush2.msra.mxu0 0.0
    %1658 = vmatprep.subr.mxu0 0.0
    %1659 = vmatpush2.msra.mxu0 0.0
    %1660 = vmatprep.subr.mxu0 0.0
    %1661 = vmatpush2.msra.mxu0 0.0
    %1662 = vmatprep.subr.mxu0 0.0
    %1663 = vmatpush2.msra.mxu0 0.0
    %1664 = vmatprep.subr.mxu0 0.0
    %1665 = vmatpush2.msra.mxu0 0.0
    %1666 = vmatprep.subr.mxu0 0.0
    %1667 = vmatpush2.msra.mxu0 0.0
    %1668 = vmatprep.subr.mxu0 0.0
    %1669 = vmatpush2.msra.mxu0 0.0
    %1670 = vmatprep.subr.mxu0 0.0
    %1671 = vmatpush2.msra.mxu0 0.0
    %1672 = vmatprep.subr.mxu0 0.0
    %1673 = vmatpush2.msra.mxu0 0.0
    %1674 = vmatprep.subr.mxu0 0.0
    %1675 = vmatpush2.msra.mxu0 0.0
    %1676 = vmatprep.subr.mxu0 0.0
    %1677 = vmatpush2.msra.mxu0 0.0
    %1678 = vmatprep.subr.mxu0 0.0
    %1679 = vmatpush2.msra.mxu0 0.0
    %1680 = vmatprep.subr.mxu0 0.0
    %1681 = vmatpush2.msra.mxu0 0.0
    %1682 = vmatprep.subr.mxu0 0.0
    %1683 = vmatpush2.msra.mxu0 0.0
    %1684 = vmatprep.subr.mxu0 0.0
    %1685 = vmatpush2.msra.mxu0 0.0
    %1686 = vmatprep.subr.mxu0 0.0
    %1687 = vmatpush2.msra.mxu0 0.0
    %1688 = vmatprep.mubr.f32.mxu0 0.0
    %1689 = vmatmul.mubr.f32.gmra.mxu0 %v1397
    %v1690 = vpop.f32.mrf.mxu0
    %v1691 = vadd.f32 0.0, %v1690
    %v1692 = vpop.f32.mrf.mxu0
    %1693 = vdwg.mxu0
    %v1694 = vadd.f32 %v1391, %v1691
    %v1695 = vxor.u32 %v1469, 2147483648
    %v1696 = vmul.f32 %v1695, 1.442695
    %v1697 = vpow.pop %v1696
    %v1698 = vadd.f32 %v1697, 1.0
    %v1699 = vrcp.pop %v1698
    %v1700 = vmul.f32 1.0, %v1699
    %v1701 = vxor.u32 %v1544, 2147483648
    %v1702 = vmul.f32 %v1701, 1.442695
    %v1703 = vpow.pop %v1702
    %v1704 = vadd.f32 %v1703, 1.0
    %v1705 = vrcp.pop %v1704
    %v1706 = vmul.f32 1.0, %v1705
    %v1707 = vtanh.pop %v1619
    %v1708 = vxor.u32 %v1694, 2147483648
    %v1709 = vmul.f32 %v1708, 1.442695
    %v1710 = vpow.pop %v1709
    %v1711 = vadd.f32 %v1710, 1.0
    %v1712 = vrcp.pop %v1711
    %v1713 = vmul.f32 1.0, %v1712
    %v1714 = vmul.f32 %v1706, %v1386
    %v1715 = vmul.f32 %v1700, %v1707
    %v1716 = vadd.f32 %v1714, %v1715
    %v1717 = vtanh.pop %v1716
    %v1718 = vmul.f32 %v1713, %v1717
    %1719 = vst.msk [vmem:[#allocation2] sm:$0x3] %vm367, %v1718
    %1720 = vst.msk [vmem:[#allocation3] sm:$0x3] %vm367, %v1716
    %s1721 = scalar_lea.vmem [#allocation4], 8
    %1722 = vst.msk [vmem:[%s1721] sm:$0x3] %vm367, %v1718
    %v1723 = vld [vmem:[#allocation2] sm:$0x3]
    %v1724 = vld [vmem:[#allocation3] sm:$0x3]
    %s1725 = scalar_lea.vmem %s0, 40
    %v1726 = vld [vmem:[%s1725] sm:$0x3]
    %v1727 = vld [vmem:[%s1725 + $0x2] sm:$0x3]
    %v1728 = vld [vmem:[%s1725 + $0x4] sm:$0x3]
    %v1729 = vld [vmem:[%s1725 + $0x6] sm:$0x3]
    %v1730 = vld [vmem:[%s3] sm:$0xff]
    %v1731 = vld [vmem:[%s3 + $0x8] sm:$0xff]
    %v1732 = vld [vmem:[%s3 + $0x10] sm:$0xff]
    %v1733 = vld [vmem:[%s3 + $0x18] sm:$0xff]
    %v1735 = vsel %vm40, %v1723, 0
    %1737 = vmatprep.subr.mxu0 0.0
    %1738 = vmatpush1.msra.mxu0 0.0
    %1739 = vmatprep.subr.mxu0 0.0
    %1740 = vmatpush1.msra.mxu0 0.0
    %1741 = vmatprep.subr.mxu0 0.0
    %1742 = vmatpush1.msra.mxu0 0.0
    %1743 = vmatprep.subr.mxu0 0.0
    %1744 = vmatpush1.msra.mxu0 0.0
    %1745 = vmatprep.subr.mxu0 0.0
    %1746 = vmatpush1.msra.mxu0 0.0
    %1747 = vmatprep.subr.mxu0 0.0
    %1748 = vmatpush1.msra.mxu0 0.0
    %1749 = vmatprep.subr.mxu0 0.0
    %1750 = vmatpush1.msra.mxu0 0.0
    %1751 = vmatprep.subr.mxu0 0.0
    %1752 = vmatpush1.msra.mxu0 0.0
    %1753 = vmatprep.subr.mxu0 0.0
    %1754 = vmatpush1.msra.mxu0 0.0
    %1755 = vmatprep.subr.mxu0 0.0
    %1756 = vmatpush1.msra.mxu0 0.0
    %1757 = vmatprep.subr.mxu0 0.0
    %1758 = vmatpush1.msra.mxu0 0.0
    %1759 = vmatprep.subr.mxu0 0.0
    %1760 = vmatpush1.msra.mxu0 0.0
    %1761 = vmatprep.subr.mxu0 0.0
    %1762 = vmatpush1.msra.mxu0 %v1733
    %1763 = vmatprep.subr.mxu0 0.0
    %1764 = vmatpush1.msra.mxu0 %v1732
    %1765 = vmatprep.subr.mxu0 0.0
    %1766 = vmatpush1.msra.mxu0 %v1731
    %1767 = vmatprep.subr.mxu0 0.0
    %1768 = vmatpush1.msra.mxu0 %v1730
    %1769 = vmatprep.subr.mxu0 0.0
    %1770 = vmatpush2.msra.mxu0 0.0
    %1771 = vmatprep.subr.mxu0 0.0
    %1772 = vmatpush2.msra.mxu0 0.0
    %1773 = vmatprep.subr.mxu0 0.0
    %1774 = vmatpush2.msra.mxu0 0.0
    %1775 = vmatprep.subr.mxu0 0.0
    %1776 = vmatpush2.msra.mxu0 0.0
    %1777 = vmatprep.subr.mxu0 0.0
    %1778 = vmatpush2.msra.mxu0 0.0
    %1779 = vmatprep.subr.mxu0 0.0
    %1780 = vmatpush2.msra.mxu0 0.0
    %1781 = vmatprep.subr.mxu0 0.0
    %1782 = vmatpush2.msra.mxu0 0.0
    %1783 = vmatprep.subr.mxu0 0.0
    %1784 = vmatpush2.msra.mxu0 0.0
    %1785 = vmatprep.subr.mxu0 0.0
    %1786 = vmatpush2.msra.mxu0 0.0
    %1787 = vmatprep.subr.mxu0 0.0
    %1788 = vmatpush2.msra.mxu0 0.0
    %1789 = vmatprep.subr.mxu0 0.0
    %1790 = vmatpush2.msra.mxu0 0.0
    %1791 = vmatprep.subr.mxu0 0.0
    %1792 = vmatpush2.msra.mxu0 0.0
    %1793 = vmatprep.subr.mxu0 0.0
    %1794 = vmatpush2.msra.mxu0 0.0
    %1795 = vmatprep.subr.mxu0 0.0
    %1796 = vmatpush2.msra.mxu0 0.0
    %1797 = vmatprep.subr.mxu0 0.0
    %1798 = vmatpush2.msra.mxu0 0.0
    %1799 = vmatprep.subr.mxu0 0.0
    %1800 = vmatpush2.msra.mxu0 0.0
    %1801 = vmatprep.mubr.f32.mxu0 0.0
    %1802 = vmatmul.mubr.f32.gmra.mxu0 %v1735
    %v1803 = vpop.f32.mrf.mxu0
    %v1804 = vadd.f32 0.0, %v1803
    %v1805 = vpop.f32.mrf.mxu0
    %1806 = vdwg.mxu0
    %v1807 = vadd.f32 %v1726, %v1804
    %v1808 = vld [vmem:[%s115] sm:$0xff]
    %v1809 = vld [vmem:[%s115 + $0x8] sm:$0xff]
    %v1810 = vld [vmem:[%s115 + $0x10] sm:$0xff]
    %v1811 = vld [vmem:[%s115 + $0x18] sm:$0xff]
    %1812 = vmatprep.subr.mxu0 0.0
    %1813 = vmatpush1.msra.mxu0 0.0
    %1814 = vmatprep.subr.mxu0 0.0
    %1815 = vmatpush1.msra.mxu0 0.0
    %1816 = vmatprep.subr.mxu0 0.0
    %1817 = vmatpush1.msra.mxu0 0.0
    %1818 = vmatprep.subr.mxu0 0.0
    %1819 = vmatpush1.msra.mxu0 0.0
    %1820 = vmatprep.subr.mxu0 0.0
    %1821 = vmatpush1.msra.mxu0 0.0
    %1822 = vmatprep.subr.mxu0 0.0
    %1823 = vmatpush1.msra.mxu0 0.0
    %1824 = vmatprep.subr.mxu0 0.0
    %1825 = vmatpush1.msra.mxu0 0.0
    %1826 = vmatprep.subr.mxu0 0.0
    %1827 = vmatpush1.msra.mxu0 0.0
    %1828 = vmatprep.subr.mxu0 0.0
    %1829 = vmatpush1.msra.mxu0 0.0
    %1830 = vmatprep.subr.mxu0 0.0
    %1831 = vmatpush1.msra.mxu0 0.0
    %1832 = vmatprep.subr.mxu0 0.0
    %1833 = vmatpush1.msra.mxu0 0.0
    %1834 = vmatprep.subr.mxu0 0.0
    %1835 = vmatpush1.msra.mxu0 0.0
    %1836 = vmatprep.subr.mxu0 0.0
    %1837 = vmatpush1.msra.mxu0 %v1811
    %1838 = vmatprep.subr.mxu0 0.0
    %1839 = vmatpush1.msra.mxu0 %v1810
    %1840 = vmatprep.subr.mxu0 0.0
    %1841 = vmatpush1.msra.mxu0 %v1809
    %1842 = vmatprep.subr.mxu0 0.0
    %1843 = vmatpush1.msra.mxu0 %v1808
    %1844 = vmatprep.subr.mxu0 0.0
    %1845 = vmatpush2.msra.mxu0 0.0
    %1846 = vmatprep.subr.mxu0 0.0
    %1847 = vmatpush2.msra.mxu0 0.0
    %1848 = vmatprep.subr.mxu0 0.0
    %1849 = vmatpush2.msra.mxu0 0.0
    %1850 = vmatprep.subr.mxu0 0.0
    %1851 = vmatpush2.msra.mxu0 0.0
    %1852 = vmatprep.subr.mxu0 0.0
    %1853 = vmatpush2.msra.mxu0 0.0
    %1854 = vmatprep.subr.mxu0 0.0
    %1855 = vmatpush2.msra.mxu0 0.0
    %1856 = vmatprep.subr.mxu0 0.0
    %1857 = vmatpush2.msra.mxu0 0.0
    %1858 = vmatprep.subr.mxu0 0.0
    %1859 = vmatpush2.msra.mxu0 0.0
    %1860 = vmatprep.subr.mxu0 0.0
    %1861 = vmatpush2.msra.mxu0 0.0
    %1862 = vmatprep.subr.mxu0 0.0
    %1863 = vmatpush2.msra.mxu0 0.0
    %1864 = vmatprep.subr.mxu0 0.0
    %1865 = vmatpush2.msra.mxu0 0.0
    %1866 = vmatprep.subr.mxu0 0.0
    %1867 = vmatpush2.msra.mxu0 0.0
    %1868 = vmatprep.subr.mxu0 0.0
    %1869 = vmatpush2.msra.mxu0 0.0
    %1870 = vmatprep.subr.mxu0 0.0
    %1871 = vmatpush2.msra.mxu0 0.0
    %1872 = vmatprep.subr.mxu0 0.0
    %1873 = vmatpush2.msra.mxu0 0.0
    %1874 = vmatprep.subr.mxu0 0.0
    %1875 = vmatpush2.msra.mxu0 0.0
    %1876 = vmatprep.mubr.f32.mxu0 0.0
    %1877 = vmatmul.mubr.f32.gmra.mxu0 %v1735
    %v1878 = vpop.f32.mrf.mxu0
    %v1879 = vadd.f32 0.0, %v1878
    %v1880 = vpop.f32.mrf.mxu0
    %1881 = vdwg.mxu0
    %v1882 = vadd.f32 %v1727, %v1879
    %v1883 = vld [vmem:[%s191] sm:$0xff]
    %v1884 = vld [vmem:[%s191 + $0x8] sm:$0xff]
    %v1885 = vld [vmem:[%s191 + $0x10] sm:$0xff]
    %v1886 = vld [vmem:[%s191 + $0x18] sm:$0xff]
    %1887 = vmatprep.subr.mxu0 0.0
    %1888 = vmatpush1.msra.mxu0 0.0
    %1889 = vmatprep.subr.mxu0 0.0
    %1890 = vmatpush1.msra.mxu0 0.0
    %1891 = vmatprep.subr.mxu0 0.0
    %1892 = vmatpush1.msra.mxu0 0.0
    %1893 = vmatprep.subr.mxu0 0.0
    %1894 = vmatpush1.msra.mxu0 0.0
    %1895 = vmatprep.subr.mxu0 0.0
    %1896 = vmatpush1.msra.mxu0 0.0
    %1897 = vmatprep.subr.mxu0 0.0
    %1898 = vmatpush1.msra.mxu0 0.0
    %1899 = vmatprep.subr.mxu0 0.0
    %1900 = vmatpush1.msra.mxu0 0.0
    %1901 = vmatprep.subr.mxu0 0.0
    %1902 = vmatpush1.msra.mxu0 0.0
    %1903 = vmatprep.subr.mxu0 0.0
    %1904 = vmatpush1.msra.mxu0 0.0
    %1905 = vmatprep.subr.mxu0 0.0
    %1906 = vmatpush1.msra.mxu0 0.0
    %1907 = vmatprep.subr.mxu0 0.0
    %1908 = vmatpush1.msra.mxu0 0.0
    %1909 = vmatprep.subr.mxu0 0.0
    %1910 = vmatpush1.msra.mxu0 0.0
    %1911 = vmatprep.subr.mxu0 0.0
    %1912 = vmatpush1.msra.mxu0 %v1886
    %1913 = vmatprep.subr.mxu0 0.0
    %1914 = vmatpush1.msra.mxu0 %v1885
    %1915 = vmatprep.subr.mxu0 0.0
    %1916 = vmatpush1.msra.mxu0 %v1884
    %1917 = vmatprep.subr.mxu0 0.0
    %1918 = vmatpush1.msra.mxu0 %v1883
    %1919 = vmatprep.subr.mxu0 0.0
    %1920 = vmatpush2.msra.mxu0 0.0
    %1921 = vmatprep.subr.mxu0 0.0
    %1922 = vmatpush2.msra.mxu0 0.0
    %1923 = vmatprep.subr.mxu0 0.0
    %1924 = vmatpush2.msra.mxu0 0.0
    %1925 = vmatprep.subr.mxu0 0.0
    %1926 = vmatpush2.msra.mxu0 0.0
    %1927 = vmatprep.subr.mxu0 0.0
    %1928 = vmatpush2.msra.mxu0 0.0
    %1929 = vmatprep.subr.mxu0 0.0
    %1930 = vmatpush2.msra.mxu0 0.0
    %1931 = vmatprep.subr.mxu0 0.0
    %1932 = vmatpush2.msra.mxu0 0.0
    %1933 = vmatprep.subr.mxu0 0.0
    %1934 = vmatpush2.msra.mxu0 0.0
    %1935 = vmatprep.subr.mxu0 0.0
    %1936 = vmatpush2.msra.mxu0 0.0
    %1937 = vmatprep.subr.mxu0 0.0
    %1938 = vmatpush2.msra.mxu0 0.0
    %1939 = vmatprep.subr.mxu0 0.0
    %1940 = vmatpush2.msra.mxu0 0.0
    %1941 = vmatprep.subr.mxu0 0.0
    %1942 = vmatpush2.msra.mxu0 0.0
    %1943 = vmatprep.subr.mxu0 0.0
    %1944 = vmatpush2.msra.mxu0 0.0
    %1945 = vmatprep.subr.mxu0 0.0
    %1946 = vmatpush2.msra.mxu0 0.0
    %1947 = vmatprep.subr.mxu0 0.0
    %1948 = vmatpush2.msra.mxu0 0.0
    %1949 = vmatprep.subr.mxu0 0.0
    %1950 = vmatpush2.msra.mxu0 0.0
    %1951 = vmatprep.mubr.f32.mxu0 0.0
    %1952 = vmatmul.mubr.f32.gmra.mxu0 %v1735
    %v1953 = vpop.f32.mrf.mxu0
    %v1954 = vadd.f32 0.0, %v1953
    %v1955 = vpop.f32.mrf.mxu0
    %1956 = vdwg.mxu0
    %v1957 = vadd.f32 %v1728, %v1954
    %v1958 = vld [vmem:[%s267] sm:$0xff]
    %v1959 = vld [vmem:[%s267 + $0x8] sm:$0xff]
    %v1960 = vld [vmem:[%s267 + $0x10] sm:$0xff]
    %v1961 = vld [vmem:[%s267 + $0x18] sm:$0xff]
    %1962 = vmatprep.subr.mxu0 0.0
    %1963 = vmatpush1.msra.mxu0 0.0
    %1964 = vmatprep.subr.mxu0 0.0
    %1965 = vmatpush1.msra.mxu0 0.0
    %1966 = vmatprep.subr.mxu0 0.0
    %1967 = vmatpush1.msra.mxu0 0.0
    %1968 = vmatprep.subr.mxu0 0.0
    %1969 = vmatpush1.msra.mxu0 0.0
    %1970 = vmatprep.subr.mxu0 0.0
    %1971 = vmatpush1.msra.mxu0 0.0
    %1972 = vmatprep.subr.mxu0 0.0
    %1973 = vmatpush1.msra.mxu0 0.0
    %1974 = vmatprep.subr.mxu0 0.0
    %1975 = vmatpush1.msra.mxu0 0.0
    %1976 = vmatprep.subr.mxu0 0.0
    %1977 = vmatpush1.msra.mxu0 0.0
    %1978 = vmatprep.subr.mxu0 0.0
    %1979 = vmatpush1.msra.mxu0 0.0
    %1980 = vmatprep.subr.mxu0 0.0
    %1981 = vmatpush1.msra.mxu0 0.0
    %1982 = vmatprep.subr.mxu0 0.0
    %1983 = vmatpush1.msra.mxu0 0.0
    %1984 = vmatprep.subr.mxu0 0.0
    %1985 = vmatpush1.msra.mxu0 0.0
    %1986 = vmatprep.subr.mxu0 0.0
    %1987 = vmatpush1.msra.mxu0 %v1961
    %1988 = vmatprep.subr.mxu0 0.0
    %1989 = vmatpush1.msra.mxu0 %v1960
    %1990 = vmatprep.subr.mxu0 0.0
    %1991 = vmatpush1.msra.mxu0 %v1959
    %1992 = vmatprep.subr.mxu0 0.0
    %1993 = vmatpush1.msra.mxu0 %v1958
    %1994 = vmatprep.subr.mxu0 0.0
    %1995 = vmatpush2.msra.mxu0 0.0
    %1996 = vmatprep.subr.mxu0 0.0
    %1997 = vmatpush2.msra.mxu0 0.0
    %1998 = vmatprep.subr.mxu0 0.0
    %1999 = vmatpush2.msra.mxu0 0.0
    %2000 = vmatprep.subr.mxu0 0.0
    %2001 = vmatpush2.msra.mxu0 0.0
    %2002 = vmatprep.subr.mxu0 0.0
    %2003 = vmatpush2.msra.mxu0 0.0
    %2004 = vmatprep.subr.mxu0 0.0
    %2005 = vmatpush2.msra.mxu0 0.0
    %2006 = vmatprep.subr.mxu0 0.0
    %2007 = vmatpush2.msra.mxu0 0.0
    %2008 = vmatprep.subr.mxu0 0.0
    %2009 = vmatpush2.msra.mxu0 0.0
    %2010 = vmatprep.subr.mxu0 0.0
    %2011 = vmatpush2.msra.mxu0 0.0
    %2012 = vmatprep.subr.mxu0 0.0
    %2013 = vmatpush2.msra.mxu0 0.0
    %2014 = vmatprep.subr.mxu0 0.0
    %2015 = vmatpush2.msra.mxu0 0.0
    %2016 = vmatprep.subr.mxu0 0.0
    %2017 = vmatpush2.msra.mxu0 0.0
    %2018 = vmatprep.subr.mxu0 0.0
    %2019 = vmatpush2.msra.mxu0 0.0
    %2020 = vmatprep.subr.mxu0 0.0
    %2021 = vmatpush2.msra.mxu0 0.0
    %2022 = vmatprep.subr.mxu0 0.0
    %2023 = vmatpush2.msra.mxu0 0.0
    %2024 = vmatprep.subr.mxu0 0.0
    %2025 = vmatpush2.msra.mxu0 0.0
    %2026 = vmatprep.mubr.f32.mxu0 0.0
    %2027 = vmatmul.mubr.f32.gmra.mxu0 %v1735
    %v2028 = vpop.f32.mrf.mxu0
    %v2029 = vadd.f32 0.0, %v2028
    %v2030 = vpop.f32.mrf.mxu0
    %2031 = vdwg.mxu0
    %v2032 = vadd.f32 %v1729, %v2029
    %v2033 = vxor.u32 %v1807, 2147483648
    %v2034 = vmul.f32 %v2033, 1.442695
    %v2035 = vpow.pop %v2034
    %v2036 = vadd.f32 %v2035, 1.0
    %v2037 = vrcp.pop %v2036
    %v2038 = vmul.f32 1.0, %v2037
    %v2039 = vxor.u32 %v1882, 2147483648
    %v2040 = vmul.f32 %v2039, 1.442695
    %v2041 = vpow.pop %v2040
    %v2042 = vadd.f32 %v2041, 1.0
    %v2043 = vrcp.pop %v2042
    %v2044 = vmul.f32 1.0, %v2043
    %v2045 = vtanh.pop %v1957
    %v2046 = vxor.u32 %v2032, 2147483648
    %v2047 = vmul.f32 %v2046, 1.442695
    %v2048 = vpow.pop %v2047
    %v2049 = vadd.f32 %v2048, 1.0
    %v2050 = vrcp.pop %v2049
    %v2051 = vmul.f32 1.0, %v2050
    %v2052 = vmul.f32 %v2044, %v1724
    %v2053 = vmul.f32 %v2038, %v2045
    %v2054 = vadd.f32 %v2052, %v2053
    %v2055 = vtanh.pop %v2054
    %v2056 = vmul.f32 %v2051, %v2055
    %2057 = vst.msk [vmem:[#allocation2] sm:$0x3] %vm367, %v2056
    %2058 = vst.msk [vmem:[#allocation3] sm:$0x3] %vm367, %v2054
    %s2059 = scalar_lea.vmem [#allocation4], 10
    %2060 = vst.msk [vmem:[%s2059] sm:$0x3] %vm367, %v2056
    %v2061 = vld [vmem:[#allocation2] sm:$0x3]
    %v2062 = vld [vmem:[#allocation3] sm:$0x3]
    %s2063 = scalar_lea.vmem %s0, 48
    %v2064 = vld [vmem:[%s2063] sm:$0x3]
    %v2065 = vld [vmem:[%s2063 + $0x2] sm:$0x3]
    %v2066 = vld [vmem:[%s2063 + $0x4] sm:$0x3]
    %v2067 = vld [vmem:[%s2063 + $0x6] sm:$0x3]
    %v2068 = vld [vmem:[%s3] sm:$0xff]
    %v2069 = vld [vmem:[%s3 + $0x8] sm:$0xff]
    %v2070 = vld [vmem:[%s3 + $0x10] sm:$0xff]
    %v2071 = vld [vmem:[%s3 + $0x18] sm:$0xff]
    %v2073 = vsel %vm40, %v2061, 0
    %2075 = vmatprep.subr.mxu0 0.0
    %2076 = vmatpush1.msra.mxu0 0.0
    %2077 = vmatprep.subr.mxu0 0.0
    %2078 = vmatpush1.msra.mxu0 0.0
    %2079 = vmatprep.subr.mxu0 0.0
    %2080 = vmatpush1.msra.mxu0 0.0
    %2081 = vmatprep.subr.mxu0 0.0
    %2082 = vmatpush1.msra.mxu0 0.0
    %2083 = vmatprep.subr.mxu0 0.0
    %2084 = vmatpush1.msra.mxu0 0.0
    %2085 = vmatprep.subr.mxu0 0.0
    %2086 = vmatpush1.msra.mxu0 0.0
    %2087 = vmatprep.subr.mxu0 0.0
    %2088 = vmatpush1.msra.mxu0 0.0
    %2089 = vmatprep.subr.mxu0 0.0
    %2090 = vmatpush1.msra.mxu0 0.0
    %2091 = vmatprep.subr.mxu0 0.0
    %2092 = vmatpush1.msra.mxu0 0.0
    %2093 = vmatprep.subr.mxu0 0.0
    %2094 = vmatpush1.msra.mxu0 0.0
    %2095 = vmatprep.subr.mxu0 0.0
    %2096 = vmatpush1.msra.mxu0 0.0
    %2097 = vmatprep.subr.mxu0 0.0
    %2098 = vmatpush1.msra.mxu0 0.0
    %2099 = vmatprep.subr.mxu0 0.0
    %2100 = vmatpush1.msra.mxu0 %v2071
    %2101 = vmatprep.subr.mxu0 0.0
    %2102 = vmatpush1.msra.mxu0 %v2070
    %2103 = vmatprep.subr.mxu0 0.0
    %2104 = vmatpush1.msra.mxu0 %v2069
    %2105 = vmatprep.subr.mxu0 0.0
    %2106 = vmatpush1.msra.mxu0 %v2068
    %2107 = vmatprep.subr.mxu0 0.0
    %2108 = vmatpush2.msra.mxu0 0.0
    %2109 = vmatprep.subr.mxu0 0.0
    %2110 = vmatpush2.msra.mxu0 0.0
    %2111 = vmatprep.subr.mxu0 0.0
    %2112 = vmatpush2.msra.mxu0 0.0
    %2113 = vmatprep.subr.mxu0 0.0
    %2114 = vmatpush2.msra.mxu0 0.0
    %2115 = vmatprep.subr.mxu0 0.0
    %2116 = vmatpush2.msra.mxu0 0.0
    %2117 = vmatprep.subr.mxu0 0.0
    %2118 = vmatpush2.msra.mxu0 0.0
    %2119 = vmatprep.subr.mxu0 0.0
    %2120 = vmatpush2.msra.mxu0 0.0
    %2121 = vmatprep.subr.mxu0 0.0
    %2122 = vmatpush2.msra.mxu0 0.0
    %2123 = vmatprep.subr.mxu0 0.0
    %2124 = vmatpush2.msra.mxu0 0.0
    %2125 = vmatprep.subr.mxu0 0.0
    %2126 = vmatpush2.msra.mxu0 0.0
    %2127 = vmatprep.subr.mxu0 0.0
    %2128 = vmatpush2.msra.mxu0 0.0
    %2129 = vmatprep.subr.mxu0 0.0
    %2130 = vmatpush2.msra.mxu0 0.0
    %2131 = vmatprep.subr.mxu0 0.0
    %2132 = vmatpush2.msra.mxu0 0.0
    %2133 = vmatprep.subr.mxu0 0.0
    %2134 = vmatpush2.msra.mxu0 0.0
    %2135 = vmatprep.subr.mxu0 0.0
    %2136 = vmatpush2.msra.mxu0 0.0
    %2137 = vmatprep.subr.mxu0 0.0
    %2138 = vmatpush2.msra.mxu0 0.0
    %2139 = vmatprep.mubr.f32.mxu0 0.0
    %2140 = vmatmul.mubr.f32.gmra.mxu0 %v2073
    %v2141 = vpop.f32.mrf.mxu0
    %v2142 = vadd.f32 0.0, %v2141
    %v2143 = vpop.f32.mrf.mxu0
    %2144 = vdwg.mxu0
    %v2145 = vadd.f32 %v2064, %v2142
    %v2146 = vld [vmem:[%s115] sm:$0xff]
    %v2147 = vld [vmem:[%s115 + $0x8] sm:$0xff]
    %v2148 = vld [vmem:[%s115 + $0x10] sm:$0xff]
    %v2149 = vld [vmem:[%s115 + $0x18] sm:$0xff]
    %2150 = vmatprep.subr.mxu0 0.0
    %2151 = vmatpush1.msra.mxu0 0.0
    %2152 = vmatprep.subr.mxu0 0.0
    %2153 = vmatpush1.msra.mxu0 0.0
    %2154 = vmatprep.subr.mxu0 0.0
    %2155 = vmatpush1.msra.mxu0 0.0
    %2156 = vmatprep.subr.mxu0 0.0
    %2157 = vmatpush1.msra.mxu0 0.0
    %2158 = vmatprep.subr.mxu0 0.0
    %2159 = vmatpush1.msra.mxu0 0.0
    %2160 = vmatprep.subr.mxu0 0.0
    %2161 = vmatpush1.msra.mxu0 0.0
    %2162 = vmatprep.subr.mxu0 0.0
    %2163 = vmatpush1.msra.mxu0 0.0
    %2164 = vmatprep.subr.mxu0 0.0
    %2165 = vmatpush1.msra.mxu0 0.0
    %2166 = vmatprep.subr.mxu0 0.0
    %2167 = vmatpush1.msra.mxu0 0.0
    %2168 = vmatprep.subr.mxu0 0.0
    %2169 = vmatpush1.msra.mxu0 0.0
    %2170 = vmatprep.subr.mxu0 0.0
    %2171 = vmatpush1.msra.mxu0 0.0
    %2172 = vmatprep.subr.mxu0 0.0
    %2173 = vmatpush1.msra.mxu0 0.0
    %2174 = vmatprep.subr.mxu0 0.0
    %2175 = vmatpush1.msra.mxu0 %v2149
    %2176 = vmatprep.subr.mxu0 0.0
    %2177 = vmatpush1.msra.mxu0 %v2148
    %2178 = vmatprep.subr.mxu0 0.0
    %2179 = vmatpush1.msra.mxu0 %v2147
    %2180 = vmatprep.subr.mxu0 0.0
    %2181 = vmatpush1.msra.mxu0 %v2146
    %2182 = vmatprep.subr.mxu0 0.0
    %2183 = vmatpush2.msra.mxu0 0.0
    %2184 = vmatprep.subr.mxu0 0.0
    %2185 = vmatpush2.msra.mxu0 0.0
    %2186 = vmatprep.subr.mxu0 0.0
    %2187 = vmatpush2.msra.mxu0 0.0
    %2188 = vmatprep.subr.mxu0 0.0
    %2189 = vmatpush2.msra.mxu0 0.0
    %2190 = vmatprep.subr.mxu0 0.0
    %2191 = vmatpush2.msra.mxu0 0.0
    %2192 = vmatprep.subr.mxu0 0.0
    %2193 = vmatpush2.msra.mxu0 0.0
    %2194 = vmatprep.subr.mxu0 0.0
    %2195 = vmatpush2.msra.mxu0 0.0
    %2196 = vmatprep.subr.mxu0 0.0
    %2197 = vmatpush2.msra.mxu0 0.0
    %2198 = vmatprep.subr.mxu0 0.0
    %2199 = vmatpush2.msra.mxu0 0.0
    %2200 = vmatprep.subr.mxu0 0.0
    %2201 = vmatpush2.msra.mxu0 0.0
    %2202 = vmatprep.subr.mxu0 0.0
    %2203 = vmatpush2.msra.mxu0 0.0
    %2204 = vmatprep.subr.mxu0 0.0
    %2205 = vmatpush2.msra.mxu0 0.0
    %2206 = vmatprep.subr.mxu0 0.0
    %2207 = vmatpush2.msra.mxu0 0.0
    %2208 = vmatprep.subr.mxu0 0.0
    %2209 = vmatpush2.msra.mxu0 0.0
    %2210 = vmatprep.subr.mxu0 0.0
    %2211 = vmatpush2.msra.mxu0 0.0
    %2212 = vmatprep.subr.mxu0 0.0
    %2213 = vmatpush2.msra.mxu0 0.0
    %2214 = vmatprep.mubr.f32.mxu0 0.0
    %2215 = vmatmul.mubr.f32.gmra.mxu0 %v2073
    %v2216 = vpop.f32.mrf.mxu0
    %v2217 = vadd.f32 0.0, %v2216
    %v2218 = vpop.f32.mrf.mxu0
    %2219 = vdwg.mxu0
    %v2220 = vadd.f32 %v2065, %v2217
    %v2221 = vld [vmem:[%s191] sm:$0xff]
    %v2222 = vld [vmem:[%s191 + $0x8] sm:$0xff]
    %v2223 = vld [vmem:[%s191 + $0x10] sm:$0xff]
    %v2224 = vld [vmem:[%s191 + $0x18] sm:$0xff]
    %2225 = vmatprep.subr.mxu0 0.0
    %2226 = vmatpush1.msra.mxu0 0.0
    %2227 = vmatprep.subr.mxu0 0.0
    %2228 = vmatpush1.msra.mxu0 0.0
    %2229 = vmatprep.subr.mxu0 0.0
    %2230 = vmatpush1.msra.mxu0 0.0
    %2231 = vmatprep.subr.mxu0 0.0
    %2232 = vmatpush1.msra.mxu0 0.0
    %2233 = vmatprep.subr.mxu0 0.0
    %2234 = vmatpush1.msra.mxu0 0.0
    %2235 = vmatprep.subr.mxu0 0.0
    %2236 = vmatpush1.msra.mxu0 0.0
    %2237 = vmatprep.subr.mxu0 0.0
    %2238 = vmatpush1.msra.mxu0 0.0
    %2239 = vmatprep.subr.mxu0 0.0
    %2240 = vmatpush1.msra.mxu0 0.0
    %2241 = vmatprep.subr.mxu0 0.0
    %2242 = vmatpush1.msra.mxu0 0.0
    %2243 = vmatprep.subr.mxu0 0.0
    %2244 = vmatpush1.msra.mxu0 0.0
    %2245 = vmatprep.subr.mxu0 0.0
    %2246 = vmatpush1.msra.mxu0 0.0
    %2247 = vmatprep.subr.mxu0 0.0
    %2248 = vmatpush1.msra.mxu0 0.0
    %2249 = vmatprep.subr.mxu0 0.0
    %2250 = vmatpush1.msra.mxu0 %v2224
    %2251 = vmatprep.subr.mxu0 0.0
    %2252 = vmatpush1.msra.mxu0 %v2223
    %2253 = vmatprep.subr.mxu0 0.0
    %2254 = vmatpush1.msra.mxu0 %v2222
    %2255 = vmatprep.subr.mxu0 0.0
    %2256 = vmatpush1.msra.mxu0 %v2221
    %2257 = vmatprep.subr.mxu0 0.0
    %2258 = vmatpush2.msra.mxu0 0.0
    %2259 = vmatprep.subr.mxu0 0.0
    %2260 = vmatpush2.msra.mxu0 0.0
    %2261 = vmatprep.subr.mxu0 0.0
    %2262 = vmatpush2.msra.mxu0 0.0
    %2263 = vmatprep.subr.mxu0 0.0
    %2264 = vmatpush2.msra.mxu0 0.0
    %2265 = vmatprep.subr.mxu0 0.0
    %2266 = vmatpush2.msra.mxu0 0.0
    %2267 = vmatprep.subr.mxu0 0.0
    %2268 = vmatpush2.msra.mxu0 0.0
    %2269 = vmatprep.subr.mxu0 0.0
    %2270 = vmatpush2.msra.mxu0 0.0
    %2271 = vmatprep.subr.mxu0 0.0
    %2272 = vmatpush2.msra.mxu0 0.0
    %2273 = vmatprep.subr.mxu0 0.0
    %2274 = vmatpush2.msra.mxu0 0.0
    %2275 = vmatprep.subr.mxu0 0.0
    %2276 = vmatpush2.msra.mxu0 0.0
    %2277 = vmatprep.subr.mxu0 0.0
    %2278 = vmatpush2.msra.mxu0 0.0
    %2279 = vmatprep.subr.mxu0 0.0
    %2280 = vmatpush2.msra.mxu0 0.0
    %2281 = vmatprep.subr.mxu0 0.0
    %2282 = vmatpush2.msra.mxu0 0.0
    %2283 = vmatprep.subr.mxu0 0.0
    %2284 = vmatpush2.msra.mxu0 0.0
    %2285 = vmatprep.subr.mxu0 0.0
    %2286 = vmatpush2.msra.mxu0 0.0
    %2287 = vmatprep.subr.mxu0 0.0
    %2288 = vmatpush2.msra.mxu0 0.0
    %2289 = vmatprep.mubr.f32.mxu0 0.0
    %2290 = vmatmul.mubr.f32.gmra.mxu0 %v2073
    %v2291 = vpop.f32.mrf.mxu0
    %v2292 = vadd.f32 0.0, %v2291
    %v2293 = vpop.f32.mrf.mxu0
    %2294 = vdwg.mxu0
    %v2295 = vadd.f32 %v2066, %v2292
    %v2296 = vld [vmem:[%s267] sm:$0xff]
    %v2297 = vld [vmem:[%s267 + $0x8] sm:$0xff]
    %v2298 = vld [vmem:[%s267 + $0x10] sm:$0xff]
    %v2299 = vld [vmem:[%s267 + $0x18] sm:$0xff]
    %2300 = vmatprep.subr.mxu0 0.0
    %2301 = vmatpush1.msra.mxu0 0.0
    %2302 = vmatprep.subr.mxu0 0.0
    %2303 = vmatpush1.msra.mxu0 0.0
    %2304 = vmatprep.subr.mxu0 0.0
    %2305 = vmatpush1.msra.mxu0 0.0
    %2306 = vmatprep.subr.mxu0 0.0
    %2307 = vmatpush1.msra.mxu0 0.0
    %2308 = vmatprep.subr.mxu0 0.0
    %2309 = vmatpush1.msra.mxu0 0.0
    %2310 = vmatprep.subr.mxu0 0.0
    %2311 = vmatpush1.msra.mxu0 0.0
    %2312 = vmatprep.subr.mxu0 0.0
    %2313 = vmatpush1.msra.mxu0 0.0
    %2314 = vmatprep.subr.mxu0 0.0
    %2315 = vmatpush1.msra.mxu0 0.0
    %2316 = vmatprep.subr.mxu0 0.0
    %2317 = vmatpush1.msra.mxu0 0.0
    %2318 = vmatprep.subr.mxu0 0.0
    %2319 = vmatpush1.msra.mxu0 0.0
    %2320 = vmatprep.subr.mxu0 0.0
    %2321 = vmatpush1.msra.mxu0 0.0
    %2322 = vmatprep.subr.mxu0 0.0
    %2323 = vmatpush1.msra.mxu0 0.0
    %2324 = vmatprep.subr.mxu0 0.0
    %2325 = vmatpush1.msra.mxu0 %v2299
    %2326 = vmatprep.subr.mxu0 0.0
    %2327 = vmatpush1.msra.mxu0 %v2298
    %2328 = vmatprep.subr.mxu0 0.0
    %2329 = vmatpush1.msra.mxu0 %v2297
    %2330 = vmatprep.subr.mxu0 0.0
    %2331 = vmatpush1.msra.mxu0 %v2296
    %2332 = vmatprep.subr.mxu0 0.0
    %2333 = vmatpush2.msra.mxu0 0.0
    %2334 = vmatprep.subr.mxu0 0.0
    %2335 = vmatpush2.msra.mxu0 0.0
    %2336 = vmatprep.subr.mxu0 0.0
    %2337 = vmatpush2.msra.mxu0 0.0
    %2338 = vmatprep.subr.mxu0 0.0
    %2339 = vmatpush2.msra.mxu0 0.0
    %2340 = vmatprep.subr.mxu0 0.0
    %2341 = vmatpush2.msra.mxu0 0.0
    %2342 = vmatprep.subr.mxu0 0.0
    %2343 = vmatpush2.msra.mxu0 0.0
    %2344 = vmatprep.subr.mxu0 0.0
    %2345 = vmatpush2.msra.mxu0 0.0
    %2346 = vmatprep.subr.mxu0 0.0
    %2347 = vmatpush2.msra.mxu0 0.0
    %2348 = vmatprep.subr.mxu0 0.0
    %2349 = vmatpush2.msra.mxu0 0.0
    %2350 = vmatprep.subr.mxu0 0.0
    %2351 = vmatpush2.msra.mxu0 0.0
    %2352 = vmatprep.subr.mxu0 0.0
    %2353 = vmatpush2.msra.mxu0 0.0
    %2354 = vmatprep.subr.mxu0 0.0
    %2355 = vmatpush2.msra.mxu0 0.0
    %2356 = vmatprep.subr.mxu0 0.0
    %2357 = vmatpush2.msra.mxu0 0.0
    %2358 = vmatprep.subr.mxu0 0.0
    %2359 = vmatpush2.msra.mxu0 0.0
    %2360 = vmatprep.subr.mxu0 0.0
    %2361 = vmatpush2.msra.mxu0 0.0
    %2362 = vmatprep.subr.mxu0 0.0
    %2363 = vmatpush2.msra.mxu0 0.0
    %2364 = vmatprep.mubr.f32.mxu0 0.0
    %2365 = vmatmul.mubr.f32.gmra.mxu0 %v2073
    %v2366 = vpop.f32.mrf.mxu0
    %v2367 = vadd.f32 0.0, %v2366
    %v2368 = vpop.f32.mrf.mxu0
    %2369 = vdwg.mxu0
    %v2370 = vadd.f32 %v2067, %v2367
    %v2371 = vxor.u32 %v2145, 2147483648
    %v2372 = vmul.f32 %v2371, 1.442695
    %v2373 = vpow.pop %v2372
    %v2374 = vadd.f32 %v2373, 1.0
    %v2375 = vrcp.pop %v2374
    %v2376 = vmul.f32 1.0, %v2375
    %v2377 = vxor.u32 %v2220, 2147483648
    %v2378 = vmul.f32 %v2377, 1.442695
    %v2379 = vpow.pop %v2378
    %v2380 = vadd.f32 %v2379, 1.0
    %v2381 = vrcp.pop %v2380
    %v2382 = vmul.f32 1.0, %v2381
    %v2383 = vtanh.pop %v2295
    %v2384 = vxor.u32 %v2370, 2147483648
    %v2385 = vmul.f32 %v2384, 1.442695
    %v2386 = vpow.pop %v2385
    %v2387 = vadd.f32 %v2386, 1.0
    %v2388 = vrcp.pop %v2387
    %v2389 = vmul.f32 1.0, %v2388
    %v2390 = vmul.f32 %v2382, %v2062
    %v2391 = vmul.f32 %v2376, %v2383
    %v2392 = vadd.f32 %v2390, %v2391
    %v2393 = vtanh.pop %v2392
    %v2394 = vmul.f32 %v2389, %v2393
    %2395 = vst.msk [vmem:[#allocation2] sm:$0x3] %vm367, %v2394
    %2396 = vst.msk [vmem:[#allocation3] sm:$0x3] %vm367, %v2392
    %s2397 = scalar_lea.vmem [#allocation4], 12
    %2398 = vst.msk [vmem:[%s2397] sm:$0x3] %vm367, %v2394
    %v2399 = vld [vmem:[#allocation2] sm:$0x3]
    %v2400 = vld [vmem:[#allocation3] sm:$0x3]
    %s2401 = scalar_lea.vmem %s0, 56
    %v2402 = vld [vmem:[%s2401] sm:$0x3]
    %v2403 = vld [vmem:[%s2401 + $0x2] sm:$0x3]
    %v2404 = vld [vmem:[%s2401 + $0x4] sm:$0x3]
    %v2405 = vld [vmem:[%s2401 + $0x6] sm:$0x3]
    %v2406 = vld [vmem:[%s3] sm:$0xff]
    %v2407 = vld [vmem:[%s3 + $0x8] sm:$0xff]
    %v2408 = vld [vmem:[%s3 + $0x10] sm:$0xff]
    %v2409 = vld [vmem:[%s3 + $0x18] sm:$0xff]
    %v2411 = vsel %vm40, %v2399, 0
    %2413 = vmatprep.subr.mxu0 0.0
    %2414 = vmatpush1.msra.mxu0 0.0
    %2415 = vmatprep.subr.mxu0 0.0
    %2416 = vmatpush1.msra.mxu0 0.0
    %2417 = vmatprep.subr.mxu0 0.0
    %2418 = vmatpush1.msra.mxu0 0.0
    %2419 = vmatprep.subr.mxu0 0.0
    %2420 = vmatpush1.msra.mxu0 0.0
    %2421 = vmatprep.subr.mxu0 0.0
    %2422 = vmatpush1.msra.mxu0 0.0
    %2423 = vmatprep.subr.mxu0 0.0
    %2424 = vmatpush1.msra.mxu0 0.0
    %2425 = vmatprep.subr.mxu0 0.0
    %2426 = vmatpush1.msra.mxu0 0.0
    %2427 = vmatprep.subr.mxu0 0.0
    %2428 = vmatpush1.msra.mxu0 0.0
    %2429 = vmatprep.subr.mxu0 0.0
    %2430 = vmatpush1.msra.mxu0 0.0
    %2431 = vmatprep.subr.mxu0 0.0
    %2432 = vmatpush1.msra.mxu0 0.0
    %2433 = vmatprep.subr.mxu0 0.0
    %2434 = vmatpush1.msra.mxu0 0.0
    %2435 = vmatprep.subr.mxu0 0.0
    %2436 = vmatpush1.msra.mxu0 0.0
    %2437 = vmatprep.subr.mxu0 0.0
    %2438 = vmatpush1.msra.mxu0 %v2409
    %2439 = vmatprep.subr.mxu0 0.0
    %2440 = vmatpush1.msra.mxu0 %v2408
    %2441 = vmatprep.subr.mxu0 0.0
    %2442 = vmatpush1.msra.mxu0 %v2407
    %2443 = vmatprep.subr.mxu0 0.0
    %2444 = vmatpush1.msra.mxu0 %v2406
    %2445 = vmatprep.subr.mxu0 0.0
    %2446 = vmatpush2.msra.mxu0 0.0
    %2447 = vmatprep.subr.mxu0 0.0
    %2448 = vmatpush2.msra.mxu0 0.0
    %2449 = vmatprep.subr.mxu0 0.0
    %2450 = vmatpush2.msra.mxu0 0.0
    %2451 = vmatprep.subr.mxu0 0.0
    %2452 = vmatpush2.msra.mxu0 0.0
    %2453 = vmatprep.subr.mxu0 0.0
    %2454 = vmatpush2.msra.mxu0 0.0
    %2455 = vmatprep.subr.mxu0 0.0
    %2456 = vmatpush2.msra.mxu0 0.0
    %2457 = vmatprep.subr.mxu0 0.0
    %2458 = vmatpush2.msra.mxu0 0.0
    %2459 = vmatprep.subr.mxu0 0.0
    %2460 = vmatpush2.msra.mxu0 0.0
    %2461 = vmatprep.subr.mxu0 0.0
    %2462 = vmatpush2.msra.mxu0 0.0
    %2463 = vmatprep.subr.mxu0 0.0
    %2464 = vmatpush2.msra.mxu0 0.0
    %2465 = vmatprep.subr.mxu0 0.0
    %2466 = vmatpush2.msra.mxu0 0.0
    %2467 = vmatprep.subr.mxu0 0.0
    %2468 = vmatpush2.msra.mxu0 0.0
    %2469 = vmatprep.subr.mxu0 0.0
    %2470 = vmatpush2.msra.mxu0 0.0
    %2471 = vmatprep.subr.mxu0 0.0
    %2472 = vmatpush2.msra.mxu0 0.0
    %2473 = vmatprep.subr.mxu0 0.0
    %2474 = vmatpush2.msra.mxu0 0.0
    %2475 = vmatprep.subr.mxu0 0.0
    %2476 = vmatpush2.msra.mxu0 0.0
    %2477 = vmatprep.mubr.f32.mxu0 0.0
    %2478 = vmatmul.mubr.f32.gmra.mxu0 %v2411
    %v2479 = vpop.f32.mrf.mxu0
    %v2480 = vadd.f32 0.0, %v2479
    %v2481 = vpop.f32.mrf.mxu0
    %2482 = vdwg.mxu0
    %v2483 = vadd.f32 %v2402, %v2480
    %v2484 = vld [vmem:[%s115] sm:$0xff]
    %v2485 = vld [vmem:[%s115 + $0x8] sm:$0xff]
    %v2486 = vld [vmem:[%s115 + $0x10] sm:$0xff]
    %v2487 = vld [vmem:[%s115 + $0x18] sm:$0xff]
    %2488 = vmatprep.subr.mxu0 0.0
    %2489 = vmatpush1.msra.mxu0 0.0
    %2490 = vmatprep.subr.mxu0 0.0
    %2491 = vmatpush1.msra.mxu0 0.0
    %2492 = vmatprep.subr.mxu0 0.0
    %2493 = vmatpush1.msra.mxu0 0.0
    %2494 = vmatprep.subr.mxu0 0.0
    %2495 = vmatpush1.msra.mxu0 0.0
    %2496 = vmatprep.subr.mxu0 0.0
    %2497 = vmatpush1.msra.mxu0 0.0
    %2498 = vmatprep.subr.mxu0 0.0
    %2499 = vmatpush1.msra.mxu0 0.0
    %2500 = vmatprep.subr.mxu0 0.0
    %2501 = vmatpush1.msra.mxu0 0.0
    %2502 = vmatprep.subr.mxu0 0.0
    %2503 = vmatpush1.msra.mxu0 0.0
    %2504 = vmatprep.subr.mxu0 0.0
    %2505 = vmatpush1.msra.mxu0 0.0
    %2506 = vmatprep.subr.mxu0 0.0
    %2507 = vmatpush1.msra.mxu0 0.0
    %2508 = vmatprep.subr.mxu0 0.0
    %2509 = vmatpush1.msra.mxu0 0.0
    %2510 = vmatprep.subr.mxu0 0.0
    %2511 = vmatpush1.msra.mxu0 0.0
    %2512 = vmatprep.subr.mxu0 0.0
    %2513 = vmatpush1.msra.mxu0 %v2487
    %2514 = vmatprep.subr.mxu0 0.0
    %2515 = vmatpush1.msra.mxu0 %v2486
    %2516 = vmatprep.subr.mxu0 0.0
    %2517 = vmatpush1.msra.mxu0 %v2485
    %2518 = vmatprep.subr.mxu0 0.0
    %2519 = vmatpush1.msra.mxu0 %v2484
    %2520 = vmatprep.subr.mxu0 0.0
    %2521 = vmatpush2.msra.mxu0 0.0
    %2522 = vmatprep.subr.mxu0 0.0
    %2523 = vmatpush2.msra.mxu0 0.0
    %2524 = vmatprep.subr.mxu0 0.0
    %2525 = vmatpush2.msra.mxu0 0.0
    %2526 = vmatprep.subr.mxu0 0.0
    %2527 = vmatpush2.msra.mxu0 0.0
    %2528 = vmatprep.subr.mxu0 0.0
    %2529 = vmatpush2.msra.mxu0 0.0
    %2530 = vmatprep.subr.mxu0 0.0
    %2531 = vmatpush2.msra.mxu0 0.0
    %2532 = vmatprep.subr.mxu0 0.0
    %2533 = vmatpush2.msra.mxu0 0.0
    %2534 = vmatprep.subr.mxu0 0.0
    %2535 = vmatpush2.msra.mxu0 0.0
    %2536 = vmatprep.subr.mxu0 0.0
    %2537 = vmatpush2.msra.mxu0 0.0
    %2538 = vmatprep.subr.mxu0 0.0
    %2539 = vmatpush2.msra.mxu0 0.0
    %2540 = vmatprep.subr.mxu0 0.0
    %2541 = vmatpush2.msra.mxu0 0.0
    %2542 = vmatprep.subr.mxu0 0.0
    %2543 = vmatpush2.msra.mxu0 0.0
    %2544 = vmatprep.subr.mxu0 0.0
    %2545 = vmatpush2.msra.mxu0 0.0
    %2546 = vmatprep.subr.mxu0 0.0
    %2547 = vmatpush2.msra.mxu0 0.0
    %2548 = vmatprep.subr.mxu0 0.0
    %2549 = vmatpush2.msra.mxu0 0.0
    %2550 = vmatprep.subr.mxu0 0.0
    %2551 = vmatpush2.msra.mxu0 0.0
    %2552 = vmatprep.mubr.f32.mxu0 0.0
    %2553 = vmatmul.mubr.f32.gmra.mxu0 %v2411
    %v2554 = vpop.f32.mrf.mxu0
    %v2555 = vadd.f32 0.0, %v2554
    %v2556 = vpop.f32.mrf.mxu0
    %2557 = vdwg.mxu0
    %v2558 = vadd.f32 %v2403, %v2555
    %v2559 = vld [vmem:[%s191] sm:$0xff]
    %v2560 = vld [vmem:[%s191 + $0x8] sm:$0xff]
    %v2561 = vld [vmem:[%s191 + $0x10] sm:$0xff]
    %v2562 = vld [vmem:[%s191 + $0x18] sm:$0xff]
    %2563 = vmatprep.subr.mxu0 0.0
    %2564 = vmatpush1.msra.mxu0 0.0
    %2565 = vmatprep.subr.mxu0 0.0
    %2566 = vmatpush1.msra.mxu0 0.0
    %2567 = vmatprep.subr.mxu0 0.0
    %2568 = vmatpush1.msra.mxu0 0.0
    %2569 = vmatprep.subr.mxu0 0.0
    %2570 = vmatpush1.msra.mxu0 0.0
    %2571 = vmatprep.subr.mxu0 0.0
    %2572 = vmatpush1.msra.mxu0 0.0
    %2573 = vmatprep.subr.mxu0 0.0
    %2574 = vmatpush1.msra.mxu0 0.0
    %2575 = vmatprep.subr.mxu0 0.0
    %2576 = vmatpush1.msra.mxu0 0.0
    %2577 = vmatprep.subr.mxu0 0.0
    %2578 = vmatpush1.msra.mxu0 0.0
    %2579 = vmatprep.subr.mxu0 0.0
    %2580 = vmatpush1.msra.mxu0 0.0
    %2581 = vmatprep.subr.mxu0 0.0
    %2582 = vmatpush1.msra.mxu0 0.0
    %2583 = vmatprep.subr.mxu0 0.0
    %2584 = vmatpush1.msra.mxu0 0.0
    %2585 = vmatprep.subr.mxu0 0.0
    %2586 = vmatpush1.msra.mxu0 0.0
    %2587 = vmatprep.subr.mxu0 0.0
    %2588 = vmatpush1.msra.mxu0 %v2562
    %2589 = vmatprep.subr.mxu0 0.0
    %2590 = vmatpush1.msra.mxu0 %v2561
    %2591 = vmatprep.subr.mxu0 0.0
    %2592 = vmatpush1.msra.mxu0 %v2560
    %2593 = vmatprep.subr.mxu0 0.0
    %2594 = vmatpush1.msra.mxu0 %v2559
    %2595 = vmatprep.subr.mxu0 0.0
    %2596 = vmatpush2.msra.mxu0 0.0
    %2597 = vmatprep.subr.mxu0 0.0
    %2598 = vmatpush2.msra.mxu0 0.0
    %2599 = vmatprep.subr.mxu0 0.0
    %2600 = vmatpush2.msra.mxu0 0.0
    %2601 = vmatprep.subr.mxu0 0.0
    %2602 = vmatpush2.msra.mxu0 0.0
    %2603 = vmatprep.subr.mxu0 0.0
    %2604 = vmatpush2.msra.mxu0 0.0
    %2605 = vmatprep.subr.mxu0 0.0
    %2606 = vmatpush2.msra.mxu0 0.0
    %2607 = vmatprep.subr.mxu0 0.0
    %2608 = vmatpush2.msra.mxu0 0.0
    %2609 = vmatprep.subr.mxu0 0.0
    %2610 = vmatpush2.msra.mxu0 0.0
    %2611 = vmatprep.subr.mxu0 0.0
    %2612 = vmatpush2.msra.mxu0 0.0
    %2613 = vmatprep.subr.mxu0 0.0
    %2614 = vmatpush2.msra.mxu0 0.0
    %2615 = vmatprep.subr.mxu0 0.0
    %2616 = vmatpush2.msra.mxu0 0.0
    %2617 = vmatprep.subr.mxu0 0.0
    %2618 = vmatpush2.msra.mxu0 0.0
    %2619 = vmatprep.subr.mxu0 0.0
    %2620 = vmatpush2.msra.mxu0 0.0
    %2621 = vmatprep.subr.mxu0 0.0
    %2622 = vmatpush2.msra.mxu0 0.0
    %2623 = vmatprep.subr.mxu0 0.0
    %2624 = vmatpush2.msra.mxu0 0.0
    %2625 = vmatprep.subr.mxu0 0.0
    %2626 = vmatpush2.msra.mxu0 0.0
    %2627 = vmatprep.mubr.f32.mxu0 0.0
    %2628 = vmatmul.mubr.f32.gmra.mxu0 %v2411
    %v2629 = vpop.f32.mrf.mxu0
    %v2630 = vadd.f32 0.0, %v2629
    %v2631 = vpop.f32.mrf.mxu0
    %2632 = vdwg.mxu0
    %v2633 = vadd.f32 %v2404, %v2630
    %v2634 = vld [vmem:[%s267] sm:$0xff]
    %v2635 = vld [vmem:[%s267 + $0x8] sm:$0xff]
    %v2636 = vld [vmem:[%s267 + $0x10] sm:$0xff]
    %v2637 = vld [vmem:[%s267 + $0x18] sm:$0xff]
    %2638 = vmatprep.subr.mxu0 0.0
    %2639 = vmatpush1.msra.mxu0 0.0
    %2640 = vmatprep.subr.mxu0 0.0
    %2641 = vmatpush1.msra.mxu0 0.0
    %2642 = vmatprep.subr.mxu0 0.0
    %2643 = vmatpush1.msra.mxu0 0.0
    %2644 = vmatprep.subr.mxu0 0.0
    %2645 = vmatpush1.msra.mxu0 0.0
    %2646 = vmatprep.subr.mxu0 0.0
    %2647 = vmatpush1.msra.mxu0 0.0
    %2648 = vmatprep.subr.mxu0 0.0
    %2649 = vmatpush1.msra.mxu0 0.0
    %2650 = vmatprep.subr.mxu0 0.0
    %2651 = vmatpush1.msra.mxu0 0.0
    %2652 = vmatprep.subr.mxu0 0.0
    %2653 = vmatpush1.msra.mxu0 0.0
    %2654 = vmatprep.subr.mxu0 0.0
    %2655 = vmatpush1.msra.mxu0 0.0
    %2656 = vmatprep.subr.mxu0 0.0
    %2657 = vmatpush1.msra.mxu0 0.0
    %2658 = vmatprep.subr.mxu0 0.0
    %2659 = vmatpush1.msra.mxu0 0.0
    %2660 = vmatprep.subr.mxu0 0.0
    %2661 = vmatpush1.msra.mxu0 0.0
    %2662 = vmatprep.subr.mxu0 0.0
    %2663 = vmatpush1.msra.mxu0 %v2637
    %2664 = vmatprep.subr.mxu0 0.0
    %2665 = vmatpush1.msra.mxu0 %v2636
    %2666 = vmatprep.subr.mxu0 0.0
    %2667 = vmatpush1.msra.mxu0 %v2635
    %2668 = vmatprep.subr.mxu0 0.0
    %2669 = vmatpush1.msra.mxu0 %v2634
    %2670 = vmatprep.subr.mxu0 0.0
    %2671 = vmatpush2.msra.mxu0 0.0
    %2672 = vmatprep.subr.mxu0 0.0
    %2673 = vmatpush2.msra.mxu0 0.0
    %2674 = vmatprep.subr.mxu0 0.0
    %2675 = vmatpush2.msra.mxu0 0.0
    %2676 = vmatprep.subr.mxu0 0.0
    %2677 = vmatpush2.msra.mxu0 0.0
    %2678 = vmatprep.subr.mxu0 0.0
    %2679 = vmatpush2.msra.mxu0 0.0
    %2680 = vmatprep.subr.mxu0 0.0
    %2681 = vmatpush2.msra.mxu0 0.0
    %2682 = vmatprep.subr.mxu0 0.0
    %2683 = vmatpush2.msra.mxu0 0.0
    %2684 = vmatprep.subr.mxu0 0.0
    %2685 = vmatpush2.msra.mxu0 0.0
    %2686 = vmatprep.subr.mxu0 0.0
    %2687 = vmatpush2.msra.mxu0 0.0
    %2688 = vmatprep.subr.mxu0 0.0
    %2689 = vmatpush2.msra.mxu0 0.0
    %2690 = vmatprep.subr.mxu0 0.0
    %2691 = vmatpush2.msra.mxu0 0.0
    %2692 = vmatprep.subr.mxu0 0.0
    %2693 = vmatpush2.msra.mxu0 0.0
    %2694 = vmatprep.subr.mxu0 0.0
    %2695 = vmatpush2.msra.mxu0 0.0
    %2696 = vmatprep.subr.mxu0 0.0
    %2697 = vmatpush2.msra.mxu0 0.0
    %2698 = vmatprep.subr.mxu0 0.0
    %2699 = vmatpush2.msra.mxu0 0.0
    %2700 = vmatprep.subr.mxu0 0.0
    %2701 = vmatpush2.msra.mxu0 0.0
    %2702 = vmatprep.mubr.f32.mxu0 0.0
    %2703 = vmatmul.mubr.f32.gmra.mxu0 %v2411
    %v2704 = vpop.f32.mrf.mxu0
    %v2705 = vadd.f32 0.0, %v2704
    %v2706 = vpop.f32.mrf.mxu0
    %2707 = vdwg.mxu0
    %v2708 = vadd.f32 %v2405, %v2705
    %v2709 = vxor.u32 %v2483, 2147483648
    %v2710 = vmul.f32 %v2709, 1.442695
    %v2711 = vpow.pop %v2710
    %v2712 = vadd.f32 %v2711, 1.0
    %v2713 = vrcp.pop %v2712
    %v2714 = vmul.f32 1.0, %v2713
    %v2715 = vxor.u32 %v2558, 2147483648
    %v2716 = vmul.f32 %v2715, 1.442695
    %v2717 = vpow.pop %v2716
    %v2718 = vadd.f32 %v2717, 1.0
    %v2719 = vrcp.pop %v2718
    %v2720 = vmul.f32 1.0, %v2719
    %v2721 = vtanh.pop %v2633
    %v2722 = vxor.u32 %v2708, 2147483648
    %v2723 = vmul.f32 %v2722, 1.442695
    %v2724 = vpow.pop %v2723
    %v2725 = vadd.f32 %v2724, 1.0
    %v2726 = vrcp.pop %v2725
    %v2727 = vmul.f32 1.0, %v2726
    %v2728 = vmul.f32 %v2720, %v2400
    %v2729 = vmul.f32 %v2714, %v2721
    %v2730 = vadd.f32 %v2728, %v2729
    %v2731 = vtanh.pop %v2730
    %v2732 = vmul.f32 %v2727, %v2731
    %2733 = vst.msk [vmem:[#allocation2] sm:$0x3] %vm367, %v2732
    %2734 = vst.msk [vmem:[#allocation3] sm:$0x3] %vm367, %v2730
    %s2735 = scalar_lea.vmem [#allocation4], 14
    %2736 = vst.msk [vmem:[%s2735] sm:$0x3] %vm367, %v2732
    %v2737 = vld [vmem:[#allocation2] sm:$0x3]
    %2738 = vst.msk [vmem:[%s5] sm:$0x3] %vm367, %v2737
    %v2739 = vld [vmem:[#allocation3] sm:$0x3]
    %2740 = vst.msk [vmem:[%s6] sm:$0x3] %vm367, %v2739
    // Predicated region
    $region22: #{seq2seq_forward.6} parent=1 // pred_check
      _
    $region23: #{seq2seq_forward.6} parent=1 // pred_check_branch
      %2742 = sbr.rel (0) target = $region25
    $region24: #{seq2seq_forward.6} parent=1 // pred_region
      %s2744 = ssub.s32 256, 256
      %2745 = vsyncadd [#allocation5], %s2744
      %s2746 = sshll.u32 [#allocation4], 4
      %s2747 = int_to_ptr.vmem [resolvable:$true] %s2746
      %2752 = dma.vmem_to_hbm [thread:$0]  %s2747, 256, %s4, [#allocation5], 32, 32, 2
    $region25: #{seq2seq_forward.6} parent=1 // pred_fallthru
      _
    // Predicated region
    $region26: #{seq2seq_forward.6} parent=1 // pred_check
      _
    $region27: #{seq2seq_forward.6} parent=1 // pred_check_branch
      %2754 = sbr.rel (0) target = $region29
    $region28: #{seq2seq_forward.6} parent=1 // pred_region
      _
    $region29: #{seq2seq_forward.6} parent=1 // pred_fallthru
      _
    // Predicated region
    $region30: #{seq2seq_forward.6} parent=1 // pred_check
      _
    $region31: #{seq2seq_forward.6} parent=1 // pred_check_branch
      %2756 = sbr.rel (0) target = $region33
    $region32: #{seq2seq_forward.6} parent=1 // pred_region
      _
    $region33: #{seq2seq_forward.6} parent=1 // pred_fallthru
      _
    // Predicated region
    $region34: #{seq2seq_forward.6} parent=1 // pred_check
      _
    $region35: #{seq2seq_forward.6} parent=1 // pred_check_branch
      %2758 = sbr.rel (0) target = $region37
    $region36: #{seq2seq_forward.6} parent=1 // pred_region
      %2759 = dma.done [#allocation5], 256
    $region37: #{seq2seq_forward.6} parent=1 // pred_fallthru
      _
    // Predicated region
    $region38: #{seq2seq_forward.6} parent=1 // pred_check
      _
    $region39: #{seq2seq_forward.6} parent=1 // pred_check_branch
      %2761 = sbr.rel (0) target = $region41
    $region40: #{seq2seq_forward.6} parent=1 // pred_region
      _
    $region41: #{seq2seq_forward.6} parent=1 // pred_fallthru
      _
    // Predicated region
    $region42: #{seq2seq_forward.6} parent=1 // pred_check
      _
    $region43: #{seq2seq_forward.6} parent=1 // pred_check_branch
      %2763 = sbr.rel (0) target = $region45
    $region44: #{seq2seq_forward.6} parent=1 // pred_region
      _
    $region45: #{seq2seq_forward.6} parent=1 // pred_fallthru
      _
    %2764 = vsyncpa [#allocation5], 1

// kernel: seq2seq_forward.8
$region0: #{seq2seq_forward.8}
  #allocation0 [shape = 'u32[]', space=smem, size = 0x4, offset = 0x4, fixed_abs, tag = 'smem constant byte address 0x4 - core index']
  #allocation1 [shape = 'u32[144,128]{1,0:T(1,128)}', space=vmem, size = 0x12000, scoped, tag = 'internal scratch']
  #allocation2 [shape = 'f32[2,32]{1,0:T(2,128)}', space=vmem, size = 0x400, scoped, tag = 'scratch operand']
  #allocation3 [shape = 'f32[2,32]{1,0:T(2,128)}', space=vmem, size = 0x400, scoped, tag = 'scratch operand']
  %s0 = inlined_call_operand.vmem [shape: f32[8,4,2,32], index: 0, kind: input, shape index: {}]
  %s1 = inlined_call_operand.vmem [shape: f32[2,32], index: 1, kind: input, shape index: {}]
  %s2 = inlined_call_operand.vmem [shape: f32[2,32], index: 2, kind: input, shape index: {}]
  %s3 = inlined_call_operand.vmem [shape: f32[4,32,32], index: 3, kind: input, shape index: {}]
  %s4 = inlined_call_operand.vmem [shape: f32[8,2,32], index: 4, kind: output, shape index: {0}]
  %s5 = inlined_call_operand.hbm [shape: f32[2,32], index: 5, kind: output, shape index: {1}]
  %s6 = inlined_call_operand.hbm [shape: f32[2,32], index: 6, kind: output, shape index: {2}]
  %7 = xla_tuple %s4, %s5, %s6
  %s8 = sld [smem:[#allocation0]]
  $region46: #{seq2seq_forward.8} parent=0
    _
  %s10 = ssub.s32 1, %s8
  %s11 = scalar_select 0, %s10, %s8
  $region1: #{seq2seq_forward.8} parent=0
    #allocation4 [shape = 'u8[1024]{0}', space=vmem, size = 0x400, scoped, tag = 'output window, operand 1, single buffered']
    #allocation5 [shape = 's32[1]{0}', space=sflag, size = 0x4, scoped, tag = 'scoped memory for seq2seq_forward.8']
    #allocation6 [shape = 'u8[1024]{0}', space=vmem, size = 0x400, scoped, tag = 'output window, operand 2, single buffered']
    #allocation7 [shape = 's32[1]{0}', space=sflag, size = 0x4, scoped, tag = 'scoped memory for seq2seq_forward.8']
    %12 = vsyncpa [#allocation5], 0
    %13 = vsyncpa [#allocation7], 0
    // Predicated region
    $region2: #{seq2seq_forward.8} parent=1 // pred_check
      _
    $region3: #{seq2seq_forward.8} parent=1 // pred_check_branch
      %15 = sbr.rel (0) target = $region5
    $region4: #{seq2seq_forward.8} parent=1 // pred_region
      _
    $region5: #{seq2seq_forward.8} parent=1 // pred_fallthru
      _
    // Predicated region
    $region6: #{seq2seq_forward.8} parent=1 // pred_check
      _
    $region7: #{seq2seq_forward.8} parent=1 // pred_check_branch
      %17 = sbr.rel (0) target = $region9
    $region8: #{seq2seq_forward.8} parent=1 // pred_region
      _
    $region9: #{seq2seq_forward.8} parent=1 // pred_fallthru
      _
    // Predicated region
    $region10: #{seq2seq_forward.8} parent=1 // pred_check
      _
    $region11: #{seq2seq_forward.8} parent=1 // pred_check_branch
      %19 = sbr.rel (0) target = $region13
    $region12: #{seq2seq_forward.8} parent=1 // pred_region
      _
    $region13: #{seq2seq_forward.8} parent=1 // pred_fallthru
      _
    // Predicated region
    $region14: #{seq2seq_forward.8} parent=1 // pred_check
      _
    $region15: #{seq2seq_forward.8} parent=1 // pred_check_branch
      %21 = sbr.rel (0) target = $region17
    $region16: #{seq2seq_forward.8} parent=1 // pred_region
      _
    $region17: #{seq2seq_forward.8} parent=1 // pred_fallthru
      _
    %p22 = scmp.eq.s32.totalorder 0, 0
    // Predicated region
    $region18: #{seq2seq_forward.8} parent=1 // pred_check
      %p23 = pneg %p22
    $region19: #{seq2seq_forward.8} parent=1 // pred_check_branch
      %25 = sbr.rel (%p23) target = $region21
    $region20: #{seq2seq_forward.8} parent=1 // pred_region
      %v26 = vld [vmem:[%s1] sm:$0x3]
      %vm27 = vcmask 254976
      %28 = vst.msk [vmem:[#allocation2] sm:$0x3] %vm27, %v26
      %v29 = vld [vmem:[%s2] sm:$0x3]
      %30 = vst.msk [vmem:[#allocation3] sm:$0x3] %vm27, %v29
    $region21: #{seq2seq_forward.8} parent=1 // pred_fallthru
      _
    %v31 = vld [vmem:[#allocation2] sm:$0x3]
    %v32 = vld [vmem:[#allocation3] sm:$0x3]
    %v33 = vld [vmem:[%s0] sm:$0x3]
    %v34 = vld [vmem:[%s0 + $0x2] sm:$0x3]
    %v35 = vld [vmem:[%s0 + $0x4] sm:$0x3]
    %v36 = vld [vmem:[%s0 + $0x6] sm:$0x3]
    %v37 = vld [vmem:[%s3] sm:$0xff]
    %v38 = vld [vmem:[%s3 + $0x8] sm:$0xff]
    %v39 = vld [vmem:[%s3 + $0x10] sm:$0xff]
    %v40 = vld [vmem:[%s3 + $0x18] sm:$0xff]
    %vm41 = vcmask 261120
    %v43 = vsel %vm41, %v31, 0
    %45 = vmatprep.subr.mxu0 0.0
    %46 = vmatpush1.msra.mxu0 0.0
    %47 = vmatprep.subr.mxu0 0.0
    %48 = vmatpush1.msra.mxu0 0.0
    %49 = vmatprep.subr.mxu0 0.0
    %50 = vmatpush1.msra.mxu0 0.0
    %51 = vmatprep.subr.mxu0 0.0
    %52 = vmatpush1.msra.mxu0 0.0
    %53 = vmatprep.subr.mxu0 0.0
    %54 = vmatpush1.msra.mxu0 0.0
    %55 = vmatprep.subr.mxu0 0.0
    %56 = vmatpush1.msra.mxu0 0.0
    %57 = vmatprep.subr.mxu0 0.0
    %58 = vmatpush1.msra.mxu0 0.0
    %59 = vmatprep.subr.mxu0 0.0
    %60 = vmatpush1.msra.mxu0 0.0
    %61 = vmatprep.subr.mxu0 0.0
    %62 = vmatpush1.msra.mxu0 0.0
    %63 = vmatprep.subr.mxu0 0.0
    %64 = vmatpush1.msra.mxu0 0.0
    %65 = vmatprep.subr.mxu0 0.0
    %66 = vmatpush1.msra.mxu0 0.0
    %67 = vmatprep.subr.mxu0 0.0
    %68 = vmatpush1.msra.mxu0 0.0
    %69 = vmatprep.subr.mxu0 0.0
    %70 = vmatpush1.msra.mxu0 %v40
    %71 = vmatprep.subr.mxu0 0.0
    %72 = vmatpush1.msra.mxu0 %v39
    %73 = vmatprep.subr.mxu0 0.0
    %74 = vmatpush1.msra.mxu0 %v38
    %75 = vmatprep.subr.mxu0 0.0
    %76 = vmatpush1.msra.mxu0 %v37
    %77 = vmatprep.subr.mxu0 0.0
    %78 = vmatpush2.msra.mxu0 0.0
    %79 = vmatprep.subr.mxu0 0.0
    %80 = vmatpush2.msra.mxu0 0.0
    %81 = vmatprep.subr.mxu0 0.0
    %82 = vmatpush2.msra.mxu0 0.0
    %83 = vmatprep.subr.mxu0 0.0
    %84 = vmatpush2.msra.mxu0 0.0
    %85 = vmatprep.subr.mxu0 0.0
    %86 = vmatpush2.msra.mxu0 0.0
    %87 = vmatprep.subr.mxu0 0.0
    %88 = vmatpush2.msra.mxu0 0.0
    %89 = vmatprep.subr.mxu0 0.0
    %90 = vmatpush2.msra.mxu0 0.0
    %91 = vmatprep.subr.mxu0 0.0
    %92 = vmatpush2.msra.mxu0 0.0
    %93 = vmatprep.subr.mxu0 0.0
    %94 = vmatpush2.msra.mxu0 0.0
    %95 = vmatprep.subr.mxu0 0.0
    %96 = vmatpush2.msra.mxu0 0.0
    %97 = vmatprep.subr.mxu0 0.0
    %98 = vmatpush2.msra.mxu0 0.0
    %99 = vmatprep.subr.mxu0 0.0
    %100 = vmatpush2.msra.mxu0 0.0
    %101 = vmatprep.subr.mxu0 0.0
    %102 = vmatpush2.msra.mxu0 0.0
    %103 = vmatprep.subr.mxu0 0.0
    %104 = vmatpush2.msra.mxu0 0.0
    %105 = vmatprep.subr.mxu0 0.0
    %106 = vmatpush2.msra.mxu0 0.0
    %107 = vmatprep.subr.mxu0 0.0
    %108 = vmatpush2.msra.mxu0 0.0
    %109 = vmatprep.mubr.f32.mxu0 0.0
    %110 = vmatmul.mubr.f32.gmra.mxu0 %v43
    %v111 = vpop.f32.mrf.mxu0
    %v112 = vadd.f32 0.0, %v111
    %v113 = vpop.f32.mrf.mxu0
    %114 = vdwg.mxu0
    %v115 = vadd.f32 %v33, %v112
    %s116 = scalar_lea.vmem %s3, 32
    %v117 = vld [vmem:[%s116] sm:$0xff]
    %v118 = vld [vmem:[%s116 + $0x8] sm:$0xff]
    %v119 = vld [vmem:[%s116 + $0x10] sm:$0xff]
    %v120 = vld [vmem:[%s116 + $0x18] sm:$0xff]
    %121 = vmatprep.subr.mxu0 0.0
    %122 = vmatpush1.msra.mxu0 0.0
    %123 = vmatprep.subr.mxu0 0.0
    %124 = vmatpush1.msra.mxu0 0.0
    %125 = vmatprep.subr.mxu0 0.0
    %126 = vmatpush1.msra.mxu0 0.0
    %127 = vmatprep.subr.mxu0 0.0
    %128 = vmatpush1.msra.mxu0 0.0
    %129 = vmatprep.subr.mxu0 0.0
    %130 = vmatpush1.msra.mxu0 0.0
    %131 = vmatprep.subr.mxu0 0.0
    %132 = vmatpush1.msra.mxu0 0.0
    %133 = vmatprep.subr.mxu0 0.0
    %134 = vmatpush1.msra.mxu0 0.0
    %135 = vmatprep.subr.mxu0 0.0
    %136 = vmatpush1.msra.mxu0 0.0
    %137 = vmatprep.subr.mxu0 0.0
    %138 = vmatpush1.msra.mxu0 0.0
    %139 = vmatprep.subr.mxu0 0.0
    %140 = vmatpush1.msra.mxu0 0.0
    %141 = vmatprep.subr.mxu0 0.0
    %142 = vmatpush1.msra.mxu0 0.0
    %143 = vmatprep.subr.mxu0 0.0
    %144 = vmatpush1.msra.mxu0 0.0
    %145 = vmatprep.subr.mxu0 0.0
    %146 = vmatpush1.msra.mxu0 %v120
    %147 = vmatprep.subr.mxu0 0.0
    %148 = vmatpush1.msra.mxu0 %v119
    %149 = vmatprep.subr.mxu0 0.0
    %150 = vmatpush1.msra.mxu0 %v118
    %151 = vmatprep.subr.mxu0 0.0
    %152 = vmatpush1.msra.mxu0 %v117
    %153 = vmatprep.subr.mxu0 0.0
    %154 = vmatpush2.msra.mxu0 0.0
    %155 = vmatprep.subr.mxu0 0.0
    %156 = vmatpush2.msra.mxu0 0.0
    %157 = vmatprep.subr.mxu0 0.0
    %158 = vmatpush2.msra.mxu0 0.0
    %159 = vmatprep.subr.mxu0 0.0
    %160 = vmatpush2.msra.mxu0 0.0
    %161 = vmatprep.subr.mxu0 0.0
    %162 = vmatpush2.msra.mxu0 0.0
    %163 = vmatprep.subr.mxu0 0.0
    %164 = vmatpush2.msra.mxu0 0.0
    %165 = vmatprep.subr.mxu0 0.0
    %166 = vmatpush2.msra.mxu0 0.0
    %167 = vmatprep.subr.mxu0 0.0
    %168 = vmatpush2.msra.mxu0 0.0
    %169 = vmatprep.subr.mxu0 0.0
    %170 = vmatpush2.msra.mxu0 0.0
    %171 = vmatprep.subr.mxu0 0.0
    %172 = vmatpush2.msra.mxu0 0.0
    %173 = vmatprep.subr.mxu0 0.0
    %174 = vmatpush2.msra.mxu0 0.0
    %175 = vmatprep.subr.mxu0 0.0
    %176 = vmatpush2.msra.mxu0 0.0
    %177 = vmatprep.subr.mxu0 0.0
    %178 = vmatpush2.msra.mxu0 0.0
    %179 = vmatprep.subr.mxu0 0.0
    %180 = vmatpush2.msra.mxu0 0.0
    %181 = vmatprep.subr.mxu0 0.0
    %182 = vmatpush2.msra.mxu0 0.0
    %183 = vmatprep.subr.mxu0 0.0
    %184 = vmatpush2.msra.mxu0 0.0
    %185 = vmatprep.mubr.f32.mxu0 0.0
    %186 = vmatmul.mubr.f32.gmra.mxu0 %v43
    %v187 = vpop.f32.mrf.mxu0
    %v188 = vadd.f32 0.0, %v187
    %v189 = vpop.f32.mrf.mxu0
    %190 = vdwg.mxu0
    %v191 = vadd.f32 %v34, %v188
    %s192 = scalar_lea.vmem %s3, 64
    %v193 = vld [vmem:[%s192] sm:$0xff]
    %v194 = vld [vmem:[%s192 + $0x8] sm:$0xff]
    %v195 = vld [vmem:[%s192 + $0x10] sm:$0xff]
    %v196 = vld [vmem:[%s192 + $0x18] sm:$0xff]
    %197 = vmatprep.subr.mxu0 0.0
    %198 = vmatpush1.msra.mxu0 0.0
    %199 = vmatprep.subr.mxu0 0.0
    %200 = vmatpush1.msra.mxu0 0.0
    %201 = vmatprep.subr.mxu0 0.0
    %202 = vmatpush1.msra.mxu0 0.0
    %203 = vmatprep.subr.mxu0 0.0
    %204 = vmatpush1.msra.mxu0 0.0
    %205 = vmatprep.subr.mxu0 0.0
    %206 = vmatpush1.msra.mxu0 0.0
    %207 = vmatprep.subr.mxu0 0.0
    %208 = vmatpush1.msra.mxu0 0.0
    %209 = vmatprep.subr.mxu0 0.0
    %210 = vmatpush1.msra.mxu0 0.0
    %211 = vmatprep.subr.mxu0 0.0
    %212 = vmatpush1.msra.mxu0 0.0
    %213 = vmatprep.subr.mxu0 0.0
    %214 = vmatpush1.msra.mxu0 0.0
    %215 = vmatprep.subr.mxu0 0.0
    %216 = vmatpush1.msra.mxu0 0.0
    %217 = vmatprep.subr.mxu0 0.0
    %218 = vmatpush1.msra.mxu0 0.0
    %219 = vmatprep.subr.mxu0 0.0
    %220 = vmatpush1.msra.mxu0 0.0
    %221 = vmatprep.subr.mxu0 0.0
    %222 = vmatpush1.msra.mxu0 %v196
    %223 = vmatprep.subr.mxu0 0.0
    %224 = vmatpush1.msra.mxu0 %v195
    %225 = vmatprep.subr.mxu0 0.0
    %226 = vmatpush1.msra.mxu0 %v194
    %227 = vmatprep.subr.mxu0 0.0
    %228 = vmatpush1.msra.mxu0 %v193
    %229 = vmatprep.subr.mxu0 0.0
    %230 = vmatpush2.msra.mxu0 0.0
    %231 = vmatprep.subr.mxu0 0.0
    %232 = vmatpush2.msra.mxu0 0.0
    %233 = vmatprep.subr.mxu0 0.0
    %234 = vmatpush2.msra.mxu0 0.0
    %235 = vmatprep.subr.mxu0 0.0
    %236 = vmatpush2.msra.mxu0 0.0
    %237 = vmatprep.subr.mxu0 0.0
    %238 = vmatpush2.msra.mxu0 0.0
    %239 = vmatprep.subr.mxu0 0.0
    %240 = vmatpush2.msra.mxu0 0.0
    %241 = vmatprep.subr.mxu0 0.0
    %242 = vmatpush2.msra.mxu0 0.0
    %243 = vmatprep.subr.mxu0 0.0
    %244 = vmatpush2.msra.mxu0 0.0
    %245 = vmatprep.subr.mxu0 0.0
    %246 = vmatpush2.msra.mxu0 0.0
    %247 = vmatprep.subr.mxu0 0.0
    %248 = vmatpush2.msra.mxu0 0.0
    %249 = vmatprep.subr.mxu0 0.0
    %250 = vmatpush2.msra.mxu0 0.0
    %251 = vmatprep.subr.mxu0 0.0
    %252 = vmatpush2.msra.mxu0 0.0
    %253 = vmatprep.subr.mxu0 0.0
    %254 = vmatpush2.msra.mxu0 0.0
    %255 = vmatprep.subr.mxu0 0.0
    %256 = vmatpush2.msra.mxu0 0.0
    %257 = vmatprep.subr.mxu0 0.0
    %258 = vmatpush2.msra.mxu0 0.0
    %259 = vmatprep.subr.mxu0 0.0
    %260 = vmatpush2.msra.mxu0 0.0
    %261 = vmatprep.mubr.f32.mxu0 0.0
    %262 = vmatmul.mubr.f32.gmra.mxu0 %v43
    %v263 = vpop.f32.mrf.mxu0
    %v264 = vadd.f32 0.0, %v263
    %v265 = vpop.f32.mrf.mxu0
    %266 = vdwg.mxu0
    %v267 = vadd.f32 %v35, %v264
    %s268 = scalar_lea.vmem %s3, 96
    %v269 = vld [vmem:[%s268] sm:$0xff]
    %v270 = vld [vmem:[%s268 + $0x8] sm:$0xff]
    %v271 = vld [vmem:[%s268 + $0x10] sm:$0xff]
    %v272 = vld [vmem:[%s268 + $0x18] sm:$0xff]
    %273 = vmatprep.subr.mxu0 0.0
    %274 = vmatpush1.msra.mxu0 0.0
    %275 = vmatprep.subr.mxu0 0.0
    %276 = vmatpush1.msra.mxu0 0.0
    %277 = vmatprep.subr.mxu0 0.0
    %278 = vmatpush1.msra.mxu0 0.0
    %279 = vmatprep.subr.mxu0 0.0
    %280 = vmatpush1.msra.mxu0 0.0
    %281 = vmatprep.subr.mxu0 0.0
    %282 = vmatpush1.msra.mxu0 0.0
    %283 = vmatprep.subr.mxu0 0.0
    %284 = vmatpush1.msra.mxu0 0.0
    %285 = vmatprep.subr.mxu0 0.0
    %286 = vmatpush1.msra.mxu0 0.0
    %287 = vmatprep.subr.mxu0 0.0
    %288 = vmatpush1.msra.mxu0 0.0
    %289 = vmatprep.subr.mxu0 0.0
    %290 = vmatpush1.msra.mxu0 0.0
    %291 = vmatprep.subr.mxu0 0.0
    %292 = vmatpush1.msra.mxu0 0.0
    %293 = vmatprep.subr.mxu0 0.0
    %294 = vmatpush1.msra.mxu0 0.0
    %295 = vmatprep.subr.mxu0 0.0
    %296 = vmatpush1.msra.mxu0 0.0
    %297 = vmatprep.subr.mxu0 0.0
    %298 = vmatpush1.msra.mxu0 %v272
    %299 = vmatprep.subr.mxu0 0.0
    %300 = vmatpush1.msra.mxu0 %v271
    %301 = vmatprep.subr.mxu0 0.0
    %302 = vmatpush1.msra.mxu0 %v270
    %303 = vmatprep.subr.mxu0 0.0
    %304 = vmatpush1.msra.mxu0 %v269
    %305 = vmatprep.subr.mxu0 0.0
    %306 = vmatpush2.msra.mxu0 0.0
    %307 = vmatprep.subr.mxu0 0.0
    %308 = vmatpush2.msra.mxu0 0.0
    %309 = vmatprep.subr.mxu0 0.0
    %310 = vmatpush2.msra.mxu0 0.0
    %311 = vmatprep.subr.mxu0 0.0
    %312 = vmatpush2.msra.mxu0 0.0
    %313 = vmatprep.subr.mxu0 0.0
    %314 = vmatpush2.msra.mxu0 0.0
    %315 = vmatprep.subr.mxu0 0.0
    %316 = vmatpush2.msra.mxu0 0.0
    %317 = vmatprep.subr.mxu0 0.0
    %318 = vmatpush2.msra.mxu0 0.0
    %319 = vmatprep.subr.mxu0 0.0
    %320 = vmatpush2.msra.mxu0 0.0
    %321 = vmatprep.subr.mxu0 0.0
    %322 = vmatpush2.msra.mxu0 0.0
    %323 = vmatprep.subr.mxu0 0.0
    %324 = vmatpush2.msra.mxu0 0.0
    %325 = vmatprep.subr.mxu0 0.0
    %326 = vmatpush2.msra.mxu0 0.0
    %327 = vmatprep.subr.mxu0 0.0
    %328 = vmatpush2.msra.mxu0 0.0
    %329 = vmatprep.subr.mxu0 0.0
    %330 = vmatpush2.msra.mxu0 0.0
    %331 = vmatprep.subr.mxu0 0.0
    %332 = vmatpush2.msra.mxu0 0.0
    %333 = vmatprep.subr.mxu0 0.0
    %334 = vmatpush2.msra.mxu0 0.0
    %335 = vmatprep.subr.mxu0 0.0
    %336 = vmatpush2.msra.mxu0 0.0
    %337 = vmatprep.mubr.f32.mxu0 0.0
    %338 = vmatmul.mubr.f32.gmra.mxu0 %v43
    %v339 = vpop.f32.mrf.mxu0
    %v340 = vadd.f32 0.0, %v339
    %v341 = vpop.f32.mrf.mxu0
    %342 = vdwg.mxu0
    %v343 = vadd.f32 %v36, %v340
    %v344 = vxor.u32 %v115, 2147483648
    %v345 = vmul.f32 %v344, 1.442695
    %v346 = vpow.pop %v345
    %v347 = vadd.f32 %v346, 1.0
    %v348 = vrcp.pop %v347
    %v349 = vmul.f32 1.0, %v348
    %v350 = vxor.u32 %v191, 2147483648
    %v351 = vmul.f32 %v350, 1.442695
    %v352 = vpow.pop %v351
    %v353 = vadd.f32 %v352, 1.0
    %v354 = vrcp.pop %v353
    %v355 = vmul.f32 1.0, %v354
    %v356 = vtanh.pop %v267
    %v357 = vxor.u32 %v343, 2147483648
    %v358 = vmul.f32 %v357, 1.442695
    %v359 = vpow.pop %v358
    %v360 = vadd.f32 %v359, 1.0
    %v361 = vrcp.pop %v360
    %v362 = vmul.f32 1.0, %v361
    %v363 = vmul.f32 %v355, %v32
    %v364 = vmul.f32 %v349, %v356
    %v365 = vadd.f32 %v363, %v364
    %v366 = vtanh.pop %v365
    %v367 = vmul.f32 %v362, %v366
    %vm368 = vcmask 254976
    %369 = vst.msk [vmem:[#allocation2] sm:$0x3] %vm368, %v367
    %370 = vst.msk [vmem:[#allocation3] sm:$0x3] %vm368, %v365
    %371 = vst.msk [vmem:[%s4] sm:$0x3] %vm368, %v367
    %v372 = vld [vmem:[#allocation2] sm:$0x3]
    %v373 = vld [vmem:[#allocation3] sm:$0x3]
    %s374 = scalar_lea.vmem %s0, 8
    %v375 = vld [vmem:[%s374] sm:$0x3]
    %v376 = vld [vmem:[%s374 + $0x2] sm:$0x3]
    %v377 = vld [vmem:[%s374 + $0x4] sm:$0x3]
    %v378 = vld [vmem:[%s374 + $0x6] sm:$0x3]
    %v379 = vld [vmem:[%s3] sm:$0xff]
    %v380 = vld [vmem:[%s3 + $0x8] sm:$0xff]
    %v381 = vld [vmem:[%s3 + $0x10] sm:$0xff]
    %v382 = vld [vmem:[%s3 + $0x18] sm:$0xff]
    %v384 = vsel %vm41, %v372, 0
    %386 = vmatprep.subr.mxu0 0.0
    %387 = vmatpush1.msra.mxu0 0.0
    %388 = vmatprep.subr.mxu0 0.0
    %389 = vmatpush1.msra.mxu0 0.0
    %390 = vmatprep.subr.mxu0 0.0
    %391 = vmatpush1.msra.mxu0 0.0
    %392 = vmatprep.subr.mxu0 0.0
    %393 = vmatpush1.msra.mxu0 0.0
    %394 = vmatprep.subr.mxu0 0.0
    %395 = vmatpush1.msra.mxu0 0.0
    %396 = vmatprep.subr.mxu0 0.0
    %397 = vmatpush1.msra.mxu0 0.0
    %398 = vmatprep.subr.mxu0 0.0
    %399 = vmatpush1.msra.mxu0 0.0
    %400 = vmatprep.subr.mxu0 0.0
    %401 = vmatpush1.msra.mxu0 0.0
    %402 = vmatprep.subr.mxu0 0.0
    %403 = vmatpush1.msra.mxu0 0.0
    %404 = vmatprep.subr.mxu0 0.0
    %405 = vmatpush1.msra.mxu0 0.0
    %406 = vmatprep.subr.mxu0 0.0
    %407 = vmatpush1.msra.mxu0 0.0
    %408 = vmatprep.subr.mxu0 0.0
    %409 = vmatpush1.msra.mxu0 0.0
    %410 = vmatprep.subr.mxu0 0.0
    %411 = vmatpush1.msra.mxu0 %v382
    %412 = vmatprep.subr.mxu0 0.0
    %413 = vmatpush1.msra.mxu0 %v381
    %414 = vmatprep.subr.mxu0 0.0
    %415 = vmatpush1.msra.mxu0 %v380
    %416 = vmatprep.subr.mxu0 0.0
    %417 = vmatpush1.msra.mxu0 %v379
    %418 = vmatprep.subr.mxu0 0.0
    %419 = vmatpush2.msra.mxu0 0.0
    %420 = vmatprep.subr.mxu0 0.0
    %421 = vmatpush2.msra.mxu0 0.0
    %422 = vmatprep.subr.mxu0 0.0
    %423 = vmatpush2.msra.mxu0 0.0
    %424 = vmatprep.subr.mxu0 0.0
    %425 = vmatpush2.msra.mxu0 0.0
    %426 = vmatprep.subr.mxu0 0.0
    %427 = vmatpush2.msra.mxu0 0.0
    %428 = vmatprep.subr.mxu0 0.0
    %429 = vmatpush2.msra.mxu0 0.0
    %430 = vmatprep.subr.mxu0 0.0
    %431 = vmatpush2.msra.mxu0 0.0
    %432 = vmatprep.subr.mxu0 0.0
    %433 = vmatpush2.msra.mxu0 0.0
    %434 = vmatprep.subr.mxu0 0.0
    %435 = vmatpush2.msra.mxu0 0.0
    %436 = vmatprep.subr.mxu0 0.0
    %437 = vmatpush2.msra.mxu0 0.0
    %438 = vmatprep.subr.mxu0 0.0
    %439 = vmatpush2.msra.mxu0 0.0
    %440 = vmatprep.subr.mxu0 0.0
    %441 = vmatpush2.msra.mxu0 0.0
    %442 = vmatprep.subr.mxu0 0.0
    %443 = vmatpush2.msra.mxu0 0.0
    %444 = vmatprep.subr.mxu0 0.0
    %445 = vmatpush2.msra.mxu0 0.0
    %446 = vmatprep.subr.mxu0 0.0
    %447 = vmatpush2.msra.mxu0 0.0
    %448 = vmatprep.subr.mxu0 0.0
    %449 = vmatpush2.msra.mxu0 0.0
    %450 = vmatprep.mubr.f32.mxu0 0.0
    %451 = vmatmul.mubr.f32.gmra.mxu0 %v384
    %v452 = vpop.f32.mrf.mxu0
    %v453 = vadd.f32 0.0, %v452
    %v454 = vpop.f32.mrf.mxu0
    %455 = vdwg.mxu0
    %v456 = vadd.f32 %v375, %v453
    %v457 = vld [vmem:[%s116] sm:$0xff]
    %v458 = vld [vmem:[%s116 + $0x8] sm:$0xff]
    %v459 = vld [vmem:[%s116 + $0x10] sm:$0xff]
    %v460 = vld [vmem:[%s116 + $0x18] sm:$0xff]
    %461 = vmatprep.subr.mxu0 0.0
    %462 = vmatpush1.msra.mxu0 0.0
    %463 = vmatprep.subr.mxu0 0.0
    %464 = vmatpush1.msra.mxu0 0.0
    %465 = vmatprep.subr.mxu0 0.0
    %466 = vmatpush1.msra.mxu0 0.0
    %467 = vmatprep.subr.mxu0 0.0
    %468 = vmatpush1.msra.mxu0 0.0
    %469 = vmatprep.subr.mxu0 0.0
    %470 = vmatpush1.msra.mxu0 0.0
    %471 = vmatprep.subr.mxu0 0.0
    %472 = vmatpush1.msra.mxu0 0.0
    %473 = vmatprep.subr.mxu0 0.0
    %474 = vmatpush1.msra.mxu0 0.0
    %475 = vmatprep.subr.mxu0 0.0
    %476 = vmatpush1.msra.mxu0 0.0
    %477 = vmatprep.subr.mxu0 0.0
    %478 = vmatpush1.msra.mxu0 0.0
    %479 = vmatprep.subr.mxu0 0.0
    %480 = vmatpush1.msra.mxu0 0.0
    %481 = vmatprep.subr.mxu0 0.0
    %482 = vmatpush1.msra.mxu0 0.0
    %483 = vmatprep.subr.mxu0 0.0
    %484 = vmatpush1.msra.mxu0 0.0
    %485 = vmatprep.subr.mxu0 0.0
    %486 = vmatpush1.msra.mxu0 %v460
    %487 = vmatprep.subr.mxu0 0.0
    %488 = vmatpush1.msra.mxu0 %v459
    %489 = vmatprep.subr.mxu0 0.0
    %490 = vmatpush1.msra.mxu0 %v458
    %491 = vmatprep.subr.mxu0 0.0
    %492 = vmatpush1.msra.mxu0 %v457
    %493 = vmatprep.subr.mxu0 0.0
    %494 = vmatpush2.msra.mxu0 0.0
    %495 = vmatprep.subr.mxu0 0.0
    %496 = vmatpush2.msra.mxu0 0.0
    %497 = vmatprep.subr.mxu0 0.0
    %498 = vmatpush2.msra.mxu0 0.0
    %499 = vmatprep.subr.mxu0 0.0
    %500 = vmatpush2.msra.mxu0 0.0
    %501 = vmatprep.subr.mxu0 0.0
    %502 = vmatpush2.msra.mxu0 0.0
    %503 = vmatprep.subr.mxu0 0.0
    %504 = vmatpush2.msra.mxu0 0.0
    %505 = vmatprep.subr.mxu0 0.0
    %506 = vmatpush2.msra.mxu0 0.0
    %507 = vmatprep.subr.mxu0 0.0
    %508 = vmatpush2.msra.mxu0 0.0
    %509 = vmatprep.subr.mxu0 0.0
    %510 = vmatpush2.msra.mxu0 0.0
    %511 = vmatprep.subr.mxu0 0.0
    %512 = vmatpush2.msra.mxu0 0.0
    %513 = vmatprep.subr.mxu0 0.0
    %514 = vmatpush2.msra.mxu0 0.0
    %515 = vmatprep.subr.mxu0 0.0
    %516 = vmatpush2.msra.mxu0 0.0
    %517 = vmatprep.subr.mxu0 0.0
    %518 = vmatpush2.msra.mxu0 0.0
    %519 = vmatprep.subr.mxu0 0.0
    %520 = vmatpush2.msra.mxu0 0.0
    %521 = vmatprep.subr.mxu0 0.0
    %522 = vmatpush2.msra.mxu0 0.0
    %523 = vmatprep.subr.mxu0 0.0
    %524 = vmatpush2.msra.mxu0 0.0
    %525 = vmatprep.mubr.f32.mxu0 0.0
    %526 = vmatmul.mubr.f32.gmra.mxu0 %v384
    %v527 = vpop.f32.mrf.mxu0
    %v528 = vadd.f32 0.0, %v527
    %v529 = vpop.f32.mrf.mxu0
    %530 = vdwg.mxu0
    %v531 = vadd.f32 %v376, %v528
    %v532 = vld [vmem:[%s192] sm:$0xff]
    %v533 = vld [vmem:[%s192 + $0x8] sm:$0xff]
    %v534 = vld [vmem:[%s192 + $0x10] sm:$0xff]
    %v535 = vld [vmem:[%s192 + $0x18] sm:$0xff]
    %536 = vmatprep.subr.mxu0 0.0
    %537 = vmatpush1.msra.mxu0 0.0
    %538 = vmatprep.subr.mxu0 0.0
    %539 = vmatpush1.msra.mxu0 0.0
    %540 = vmatprep.subr.mxu0 0.0
    %541 = vmatpush1.msra.mxu0 0.0
    %542 = vmatprep.subr.mxu0 0.0
    %543 = vmatpush1.msra.mxu0 0.0
    %544 = vmatprep.subr.mxu0 0.0
    %545 = vmatpush1.msra.mxu0 0.0
    %546 = vmatprep.subr.mxu0 0.0
    %547 = vmatpush1.msra.mxu0 0.0
    %548 = vmatprep.subr.mxu0 0.0
    %549 = vmatpush1.msra.mxu0 0.0
    %550 = vmatprep.subr.mxu0 0.0
    %551 = vmatpush1.msra.mxu0 0.0
    %552 = vmatprep.subr.mxu0 0.0
    %553 = vmatpush1.msra.mxu0 0.0
    %554 = vmatprep.subr.mxu0 0.0
    %555 = vmatpush1.msra.mxu0 0.0
    %556 = vmatprep.subr.mxu0 0.0
    %557 = vmatpush1.msra.mxu0 0.0
    %558 = vmatprep.subr.mxu0 0.0
    %559 = vmatpush1.msra.mxu0 0.0
    %560 = vmatprep.subr.mxu0 0.0
    %561 = vmatpush1.msra.mxu0 %v535
    %562 = vmatprep.subr.mxu0 0.0
    %563 = vmatpush1.msra.mxu0 %v534
    %564 = vmatprep.subr.mxu0 0.0
    %565 = vmatpush1.msra.mxu0 %v533
    %566 = vmatprep.subr.mxu0 0.0
    %567 = vmatpush1.msra.mxu0 %v532
    %568 = vmatprep.subr.mxu0 0.0
    %569 = vmatpush2.msra.mxu0 0.0
    %570 = vmatprep.subr.mxu0 0.0
    %571 = vmatpush2.msra.mxu0 0.0
    %572 = vmatprep.subr.mxu0 0.0
    %573 = vmatpush2.msra.mxu0 0.0
    %574 = vmatprep.subr.mxu0 0.0
    %575 = vmatpush2.msra.mxu0 0.0
    %576 = vmatprep.subr.mxu0 0.0
    %577 = vmatpush2.msra.mxu0 0.0
    %578 = vmatprep.subr.mxu0 0.0
    %579 = vmatpush2.msra.mxu0 0.0
    %580 = vmatprep.subr.mxu0 0.0
    %581 = vmatpush2.msra.mxu0 0.0
    %582 = vmatprep.subr.mxu0 0.0
    %583 = vmatpush2.msra.mxu0 0.0
    %584 = vmatprep.subr.mxu0 0.0
    %585 = vmatpush2.msra.mxu0 0.0
    %586 = vmatprep.subr.mxu0 0.0
    %587 = vmatpush2.msra.mxu0 0.0
    %588 = vmatprep.subr.mxu0 0.0
    %589 = vmatpush2.msra.mxu0 0.0
    %590 = vmatprep.subr.mxu0 0.0
    %591 = vmatpush2.msra.mxu0 0.0
    %592 = vmatprep.subr.mxu0 0.0
    %593 = vmatpush2.msra.mxu0 0.0
    %594 = vmatprep.subr.mxu0 0.0
    %595 = vmatpush2.msra.mxu0 0.0
    %596 = vmatprep.subr.mxu0 0.0
    %597 = vmatpush2.msra.mxu0 0.0
    %598 = vmatprep.subr.mxu0 0.0
    %599 = vmatpush2.msra.mxu0 0.0
    %600 = vmatprep.mubr.f32.mxu0 0.0
    %601 = vmatmul.mubr.f32.gmra.mxu0 %v384
    %v602 = vpop.f32.mrf.mxu0
    %v603 = vadd.f32 0.0, %v602
    %v604 = vpop.f32.mrf.mxu0
    %605 = vdwg.mxu0
    %v606 = vadd.f32 %v377, %v603
    %v607 = vld [vmem:[%s268] sm:$0xff]
    %v608 = vld [vmem:[%s268 + $0x8] sm:$0xff]
    %v609 = vld [vmem:[%s268 + $0x10] sm:$0xff]
    %v610 = vld [vmem:[%s268 + $0x18] sm:$0xff]
    %611 = vmatprep.subr.mxu0 0.0
    %612 = vmatpush1.msra.mxu0 0.0
    %613 = vmatprep.subr.mxu0 0.0
    %614 = vmatpush1.msra.mxu0 0.0
    %615 = vmatprep.subr.mxu0 0.0
    %616 = vmatpush1.msra.mxu0 0.0
    %617 = vmatprep.subr.mxu0 0.0
    %618 = vmatpush1.msra.mxu0 0.0
    %619 = vmatprep.subr.mxu0 0.0
    %620 = vmatpush1.msra.mxu0 0.0
    %621 = vmatprep.subr.mxu0 0.0
    %622 = vmatpush1.msra.mxu0 0.0
    %623 = vmatprep.subr.mxu0 0.0
    %624 = vmatpush1.msra.mxu0 0.0
    %625 = vmatprep.subr.mxu0 0.0
    %626 = vmatpush1.msra.mxu0 0.0
    %627 = vmatprep.subr.mxu0 0.0
    %628 = vmatpush1.msra.mxu0 0.0
    %629 = vmatprep.subr.mxu0 0.0
    %630 = vmatpush1.msra.mxu0 0.0
    %631 = vmatprep.subr.mxu0 0.0
    %632 = vmatpush1.msra.mxu0 0.0
    %633 = vmatprep.subr.mxu0 0.0
    %634 = vmatpush1.msra.mxu0 0.0
    %635 = vmatprep.subr.mxu0 0.0
    %636 = vmatpush1.msra.mxu0 %v610
    %637 = vmatprep.subr.mxu0 0.0
    %638 = vmatpush1.msra.mxu0 %v609
    %639 = vmatprep.subr.mxu0 0.0
    %640 = vmatpush1.msra.mxu0 %v608
    %641 = vmatprep.subr.mxu0 0.0
    %642 = vmatpush1.msra.mxu0 %v607
    %643 = vmatprep.subr.mxu0 0.0
    %644 = vmatpush2.msra.mxu0 0.0
    %645 = vmatprep.subr.mxu0 0.0
    %646 = vmatpush2.msra.mxu0 0.0
    %647 = vmatprep.subr.mxu0 0.0
    %648 = vmatpush2.msra.mxu0 0.0
    %649 = vmatprep.subr.mxu0 0.0
    %650 = vmatpush2.msra.mxu0 0.0
    %651 = vmatprep.subr.mxu0 0.0
    %652 = vmatpush2.msra.mxu0 0.0
    %653 = vmatprep.subr.mxu0 0.0
    %654 = vmatpush2.msra.mxu0 0.0
    %655 = vmatprep.subr.mxu0 0.0
    %656 = vmatpush2.msra.mxu0 0.0
    %657 = vmatprep.subr.mxu0 0.0
    %658 = vmatpush2.msra.mxu0 0.0
    %659 = vmatprep.subr.mxu0 0.0
    %660 = vmatpush2.msra.mxu0 0.0
    %661 = vmatprep.subr.mxu0 0.0
    %662 = vmatpush2.msra.mxu0 0.0
    %663 = vmatprep.subr.mxu0 0.0
    %664 = vmatpush2.msra.mxu0 0.0
    %665 = vmatprep.subr.mxu0 0.0
    %666 = vmatpush2.msra.mxu0 0.0
    %667 = vmatprep.subr.mxu0 0.0
    %668 = vmatpush2.msra.mxu0 0.0
    %669 = vmatprep.subr.mxu0 0.0
    %670 = vmatpush2.msra.mxu0 0.0
    %671 = vmatprep.subr.mxu0 0.0
    %672 = vmatpush2.msra.mxu0 0.0
    %673 = vmatprep.subr.mxu0 0.0
    %674 = vmatpush2.msra.mxu0 0.0
    %675 = vmatprep.mubr.f32.mxu0 0.0
    %676 = vmatmul.mubr.f32.gmra.mxu0 %v384
    %v677 = vpop.f32.mrf.mxu0
    %v678 = vadd.f32 0.0, %v677
    %v679 = vpop.f32.mrf.mxu0
    %680 = vdwg.mxu0
    %v681 = vadd.f32 %v378, %v678
    %v682 = vxor.u32 %v456, 2147483648
    %v683 = vmul.f32 %v682, 1.442695
    %v684 = vpow.pop %v683
    %v685 = vadd.f32 %v684, 1.0
    %v686 = vrcp.pop %v685
    %v687 = vmul.f32 1.0, %v686
    %v688 = vxor.u32 %v531, 2147483648
    %v689 = vmul.f32 %v688, 1.442695
    %v690 = vpow.pop %v689
    %v691 = vadd.f32 %v690, 1.0
    %v692 = vrcp.pop %v691
    %v693 = vmul.f32 1.0, %v692
    %v694 = vtanh.pop %v606
    %v695 = vxor.u32 %v681, 2147483648
    %v696 = vmul.f32 %v695, 1.442695
    %v697 = vpow.pop %v696
    %v698 = vadd.f32 %v697, 1.0
    %v699 = vrcp.pop %v698
    %v700 = vmul.f32 1.0, %v699
    %v701 = vmul.f32 %v693, %v373
    %v702 = vmul.f32 %v687, %v694
    %v703 = vadd.f32 %v701, %v702
    %v704 = vtanh.pop %v703
    %v705 = vmul.f32 %v700, %v704
    %706 = vst.msk [vmem:[#allocation2] sm:$0x3] %vm368, %v705
    %707 = vst.msk [vmem:[#allocation3] sm:$0x3] %vm368, %v703
    %s708 = scalar_lea.vmem %s4, 2
    %709 = vst.msk [vmem:[%s708] sm:$0x3] %vm368, %v705
    %v710 = vld [vmem:[#allocation2] sm:$0x3]
    %v711 = vld [vmem:[#allocation3] sm:$0x3]
    %s712 = scalar_lea.vmem %s0, 16
    %v713 = vld [vmem:[%s712] sm:$0x3]
    %v714 = vld [vmem:[%s712 + $0x2] sm:$0x3]
    %v715 = vld [vmem:[%s712 + $0x4] sm:$0x3]
    %v716 = vld [vmem:[%s712 + $0x6] sm:$0x3]
    %v717 = vld [vmem:[%s3] sm:$0xff]
    %v718 = vld [vmem:[%s3 + $0x8] sm:$0xff]
    %v719 = vld [vmem:[%s3 + $0x10] sm:$0xff]
    %v720 = vld [vmem:[%s3 + $0x18] sm:$0xff]
    %v722 = vsel %vm41, %v710, 0
    %724 = vmatprep.subr.mxu0 0.0
    %725 = vmatpush1.msra.mxu0 0.0
    %726 = vmatprep.subr.mxu0 0.0
    %727 = vmatpush1.msra.mxu0 0.0
    %728 = vmatprep.subr.mxu0 0.0
    %729 = vmatpush1.msra.mxu0 0.0
    %730 = vmatprep.subr.mxu0 0.0
    %731 = vmatpush1.msra.mxu0 0.0
    %732 = vmatprep.subr.mxu0 0.0
    %733 = vmatpush1.msra.mxu0 0.0
    %734 = vmatprep.subr.mxu0 0.0
    %735 = vmatpush1.msra.mxu0 0.0
    %736 = vmatprep.subr.mxu0 0.0
    %737 = vmatpush1.msra.mxu0 0.0
    %738 = vmatprep.subr.mxu0 0.0
    %739 = vmatpush1.msra.mxu0 0.0
    %740 = vmatprep.subr.mxu0 0.0
    %741 = vmatpush1.msra.mxu0 0.0
    %742 = vmatprep.subr.mxu0 0.0
    %743 = vmatpush1.msra.mxu0 0.0
    %744 = vmatprep.subr.mxu0 0.0
    %745 = vmatpush1.msra.mxu0 0.0
    %746 = vmatprep.subr.mxu0 0.0
    %747 = vmatpush1.msra.mxu0 0.0
    %748 = vmatprep.subr.mxu0 0.0
    %749 = vmatpush1.msra.mxu0 %v720
    %750 = vmatprep.subr.mxu0 0.0
    %751 = vmatpush1.msra.mxu0 %v719
    %752 = vmatprep.subr.mxu0 0.0
    %753 = vmatpush1.msra.mxu0 %v718
    %754 = vmatprep.subr.mxu0 0.0
    %755 = vmatpush1.msra.mxu0 %v717
    %756 = vmatprep.subr.mxu0 0.0
    %757 = vmatpush2.msra.mxu0 0.0
    %758 = vmatprep.subr.mxu0 0.0
    %759 = vmatpush2.msra.mxu0 0.0
    %760 = vmatprep.subr.mxu0 0.0
    %761 = vmatpush2.msra.mxu0 0.0
    %762 = vmatprep.subr.mxu0 0.0
    %763 = vmatpush2.msra.mxu0 0.0
    %764 = vmatprep.subr.mxu0 0.0
    %765 = vmatpush2.msra.mxu0 0.0
    %766 = vmatprep.subr.mxu0 0.0
    %767 = vmatpush2.msra.mxu0 0.0
    %768 = vmatprep.subr.mxu0 0.0
    %769 = vmatpush2.msra.mxu0 0.0
    %770 = vmatprep.subr.mxu0 0.0
    %771 = vmatpush2.msra.mxu0 0.0
    %772 = vmatprep.subr.mxu0 0.0
    %773 = vmatpush2.msra.mxu0 0.0
    %774 = vmatprep.subr.mxu0 0.0
    %775 = vmatpush2.msra.mxu0 0.0
    %776 = vmatprep.subr.mxu0 0.0
    %777 = vmatpush2.msra.mxu0 0.0
    %778 = vmatprep.subr.mxu0 0.0
    %779 = vmatpush2.msra.mxu0 0.0
    %780 = vmatprep.subr.mxu0 0.0
    %781 = vmatpush2.msra.mxu0 0.0
    %782 = vmatprep.subr.mxu0 0.0
    %783 = vmatpush2.msra.mxu0 0.0
    %784 = vmatprep.subr.mxu0 0.0
    %785 = vmatpush2.msra.mxu0 0.0
    %786 = vmatprep.subr.mxu0 0.0
    %787 = vmatpush2.msra.mxu0 0.0
    %788 = vmatprep.mubr.f32.mxu0 0.0
    %789 = vmatmul.mubr.f32.gmra.mxu0 %v722
    %v790 = vpop.f32.mrf.mxu0
    %v791 = vadd.f32 0.0, %v790
    %v792 = vpop.f32.mrf.mxu0
    %793 = vdwg.mxu0
    %v794 = vadd.f32 %v713, %v791
    %v795 = vld [vmem:[%s116] sm:$0xff]
    %v796 = vld [vmem:[%s116 + $0x8] sm:$0xff]
    %v797 = vld [vmem:[%s116 + $0x10] sm:$0xff]
    %v798 = vld [vmem:[%s116 + $0x18] sm:$0xff]
    %799 = vmatprep.subr.mxu0 0.0
    %800 = vmatpush1.msra.mxu0 0.0
    %801 = vmatprep.subr.mxu0 0.0
    %802 = vmatpush1.msra.mxu0 0.0
    %803 = vmatprep.subr.mxu0 0.0
    %804 = vmatpush1.msra.mxu0 0.0
    %805 = vmatprep.subr.mxu0 0.0
    %806 = vmatpush1.msra.mxu0 0.0
    %807 = vmatprep.subr.mxu0 0.0
    %808 = vmatpush1.msra.mxu0 0.0
    %809 = vmatprep.subr.mxu0 0.0
    %810 = vmatpush1.msra.mxu0 0.0
    %811 = vmatprep.subr.mxu0 0.0
    %812 = vmatpush1.msra.mxu0 0.0
    %813 = vmatprep.subr.mxu0 0.0
    %814 = vmatpush1.msra.mxu0 0.0
    %815 = vmatprep.subr.mxu0 0.0
    %816 = vmatpush1.msra.mxu0 0.0
    %817 = vmatprep.subr.mxu0 0.0
    %818 = vmatpush1.msra.mxu0 0.0
    %819 = vmatprep.subr.mxu0 0.0
    %820 = vmatpush1.msra.mxu0 0.0
    %821 = vmatprep.subr.mxu0 0.0
    %822 = vmatpush1.msra.mxu0 0.0
    %823 = vmatprep.subr.mxu0 0.0
    %824 = vmatpush1.msra.mxu0 %v798
    %825 = vmatprep.subr.mxu0 0.0
    %826 = vmatpush1.msra.mxu0 %v797
    %827 = vmatprep.subr.mxu0 0.0
    %828 = vmatpush1.msra.mxu0 %v796
    %829 = vmatprep.subr.mxu0 0.0
    %830 = vmatpush1.msra.mxu0 %v795
    %831 = vmatprep.subr.mxu0 0.0
    %832 = vmatpush2.msra.mxu0 0.0
    %833 = vmatprep.subr.mxu0 0.0
    %834 = vmatpush2.msra.mxu0 0.0
    %835 = vmatprep.subr.mxu0 0.0
    %836 = vmatpush2.msra.mxu0 0.0
    %837 = vmatprep.subr.mxu0 0.0
    %838 = vmatpush2.msra.mxu0 0.0
    %839 = vmatprep.subr.mxu0 0.0
    %840 = vmatpush2.msra.mxu0 0.0
    %841 = vmatprep.subr.mxu0 0.0
    %842 = vmatpush2.msra.mxu0 0.0
    %843 = vmatprep.subr.mxu0 0.0
    %844 = vmatpush2.msra.mxu0 0.0
    %845 = vmatprep.subr.mxu0 0.0
    %846 = vmatpush2.msra.mxu0 0.0
    %847 = vmatprep.subr.mxu0 0.0
    %848 = vmatpush2.msra.mxu0 0.0
    %849 = vmatprep.subr.mxu0 0.0
    %850 = vmatpush2.msra.mxu0 0.0
    %851 = vmatprep.subr.mxu0 0.0
    %852 = vmatpush2.msra.mxu0 0.0
    %853 = vmatprep.subr.mxu0 0.0
    %854 = vmatpush2.msra.mxu0 0.0
    %855 = vmatprep.subr.mxu0 0.0
    %856 = vmatpush2.msra.mxu0 0.0
    %857 = vmatprep.subr.mxu0 0.0
    %858 = vmatpush2.msra.mxu0 0.0
    %859 = vmatprep.subr.mxu0 0.0
    %860 = vmatpush2.msra.mxu0 0.0
    %861 = vmatprep.subr.mxu0 0.0
    %862 = vmatpush2.msra.mxu0 0.0
    %863 = vmatprep.mubr.f32.mxu0 0.0
    %864 = vmatmul.mubr.f32.gmra.mxu0 %v722
    %v865 = vpop.f32.mrf.mxu0
    %v866 = vadd.f32 0.0, %v865
    %v867 = vpop.f32.mrf.mxu0
    %868 = vdwg.mxu0
    %v869 = vadd.f32 %v714, %v866
    %v870 = vld [vmem:[%s192] sm:$0xff]
    %v871 = vld [vmem:[%s192 + $0x8] sm:$0xff]
    %v872 = vld [vmem:[%s192 + $0x10] sm:$0xff]
    %v873 = vld [vmem:[%s192 + $0x18] sm:$0xff]
    %874 = vmatprep.subr.mxu0 0.0
    %875 = vmatpush1.msra.mxu0 0.0
    %876 = vmatprep.subr.mxu0 0.0
    %877 = vmatpush1.msra.mxu0 0.0
    %878 = vmatprep.subr.mxu0 0.0
    %879 = vmatpush1.msra.mxu0 0.0
    %880 = vmatprep.subr.mxu0 0.0
    %881 = vmatpush1.msra.mxu0 0.0
    %882 = vmatprep.subr.mxu0 0.0
    %883 = vmatpush1.msra.mxu0 0.0
    %884 = vmatprep.subr.mxu0 0.0
    %885 = vmatpush1.msra.mxu0 0.0
    %886 = vmatprep.subr.mxu0 0.0
    %887 = vmatpush1.msra.mxu0 0.0
    %888 = vmatprep.subr.mxu0 0.0
    %889 = vmatpush1.msra.mxu0 0.0
    %890 = vmatprep.subr.mxu0 0.0
    %891 = vmatpush1.msra.mxu0 0.0
    %892 = vmatprep.subr.mxu0 0.0
    %893 = vmatpush1.msra.mxu0 0.0
    %894 = vmatprep.subr.mxu0 0.0
    %895 = vmatpush1.msra.mxu0 0.0
    %896 = vmatprep.subr.mxu0 0.0
    %897 = vmatpush1.msra.mxu0 0.0
    %898 = vmatprep.subr.mxu0 0.0
    %899 = vmatpush1.msra.mxu0 %v873
    %900 = vmatprep.subr.mxu0 0.0
    %901 = vmatpush1.msra.mxu0 %v872
    %902 = vmatprep.subr.mxu0 0.0
    %903 = vmatpush1.msra.mxu0 %v871
    %904 = vmatprep.subr.mxu0 0.0
    %905 = vmatpush1.msra.mxu0 %v870
    %906 = vmatprep.subr.mxu0 0.0
    %907 = vmatpush2.msra.mxu0 0.0
    %908 = vmatprep.subr.mxu0 0.0
    %909 = vmatpush2.msra.mxu0 0.0
    %910 = vmatprep.subr.mxu0 0.0
    %911 = vmatpush2.msra.mxu0 0.0
    %912 = vmatprep.subr.mxu0 0.0
    %913 = vmatpush2.msra.mxu0 0.0
    %914 = vmatprep.subr.mxu0 0.0
    %915 = vmatpush2.msra.mxu0 0.0
    %916 = vmatprep.subr.mxu0 0.0
    %917 = vmatpush2.msra.mxu0 0.0
    %918 = vmatprep.subr.mxu0 0.0
    %919 = vmatpush2.msra.mxu0 0.0
    %920 = vmatprep.subr.mxu0 0.0
    %921 = vmatpush2.msra.mxu0 0.0
    %922 = vmatprep.subr.mxu0 0.0
    %923 = vmatpush2.msra.mxu0 0.0
    %924 = vmatprep.subr.mxu0 0.0
    %925 = vmatpush2.msra.mxu0 0.0
    %926 = vmatprep.subr.mxu0 0.0
    %927 = vmatpush2.msra.mxu0 0.0
    %928 = vmatprep.subr.mxu0 0.0
    %929 = vmatpush2.msra.mxu0 0.0
    %930 = vmatprep.subr.mxu0 0.0
    %931 = vmatpush2.msra.mxu0 0.0
    %932 = vmatprep.subr.mxu0 0.0
    %933 = vmatpush2.msra.mxu0 0.0
    %934 = vmatprep.subr.mxu0 0.0
    %935 = vmatpush2.msra.mxu0 0.0
    %936 = vmatprep.subr.mxu0 0.0
    %937 = vmatpush2.msra.mxu0 0.0
    %938 = vmatprep.mubr.f32.mxu0 0.0
    %939 = vmatmul.mubr.f32.gmra.mxu0 %v722
    %v940 = vpop.f32.mrf.mxu0
    %v941 = vadd.f32 0.0, %v940
    %v942 = vpop.f32.mrf.mxu0
    %943 = vdwg.mxu0
    %v944 = vadd.f32 %v715, %v941
    %v945 = vld [vmem:[%s268] sm:$0xff]
    %v946 = vld [vmem:[%s268 + $0x8] sm:$0xff]
    %v947 = vld [vmem:[%s268 + $0x10] sm:$0xff]
    %v948 = vld [vmem:[%s268 + $0x18] sm:$0xff]
    %949 = vmatprep.subr.mxu0 0.0
    %950 = vmatpush1.msra.mxu0 0.0
    %951 = vmatprep.subr.mxu0 0.0
    %952 = vmatpush1.msra.mxu0 0.0
    %953 = vmatprep.subr.mxu0 0.0
    %954 = vmatpush1.msra.mxu0 0.0
    %955 = vmatprep.subr.mxu0 0.0
    %956 = vmatpush1.msra.mxu0 0.0
    %957 = vmatprep.subr.mxu0 0.0
    %958 = vmatpush1.msra.mxu0 0.0
    %959 = vmatprep.subr.mxu0 0.0
    %960 = vmatpush1.msra.mxu0 0.0
    %961 = vmatprep.subr.mxu0 0.0
    %962 = vmatpush1.msra.mxu0 0.0
    %963 = vmatprep.subr.mxu0 0.0
    %964 = vmatpush1.msra.mxu0 0.0
    %965 = vmatprep.subr.mxu0 0.0
    %966 = vmatpush1.msra.mxu0 0.0
    %967 = vmatprep.subr.mxu0 0.0
    %968 = vmatpush1.msra.mxu0 0.0
    %969 = vmatprep.subr.mxu0 0.0
    %970 = vmatpush1.msra.mxu0 0.0
    %971 = vmatprep.subr.mxu0 0.0
    %972 = vmatpush1.msra.mxu0 0.0
    %973 = vmatprep.subr.mxu0 0.0
    %974 = vmatpush1.msra.mxu0 %v948
    %975 = vmatprep.subr.mxu0 0.0
    %976 = vmatpush1.msra.mxu0 %v947
    %977 = vmatprep.subr.mxu0 0.0
    %978 = vmatpush1.msra.mxu0 %v946
    %979 = vmatprep.subr.mxu0 0.0
    %980 = vmatpush1.msra.mxu0 %v945
    %981 = vmatprep.subr.mxu0 0.0
    %982 = vmatpush2.msra.mxu0 0.0
    %983 = vmatprep.subr.mxu0 0.0
    %984 = vmatpush2.msra.mxu0 0.0
    %985 = vmatprep.subr.mxu0 0.0
    %986 = vmatpush2.msra.mxu0 0.0
    %987 = vmatprep.subr.mxu0 0.0
    %988 = vmatpush2.msra.mxu0 0.0
    %989 = vmatprep.subr.mxu0 0.0
    %990 = vmatpush2.msra.mxu0 0.0
    %991 = vmatprep.subr.mxu0 0.0
    %992 = vmatpush2.msra.mxu0 0.0
    %993 = vmatprep.subr.mxu0 0.0
    %994 = vmatpush2.msra.mxu0 0.0
    %995 = vmatprep.subr.mxu0 0.0
    %996 = vmatpush2.msra.mxu0 0.0
    %997 = vmatprep.subr.mxu0 0.0
    %998 = vmatpush2.msra.mxu0 0.0
    %999 = vmatprep.subr.mxu0 0.0
    %1000 = vmatpush2.msra.mxu0 0.0
    %1001 = vmatprep.subr.mxu0 0.0
    %1002 = vmatpush2.msra.mxu0 0.0
    %1003 = vmatprep.subr.mxu0 0.0
    %1004 = vmatpush2.msra.mxu0 0.0
    %1005 = vmatprep.subr.mxu0 0.0
    %1006 = vmatpush2.msra.mxu0 0.0
    %1007 = vmatprep.subr.mxu0 0.0
    %1008 = vmatpush2.msra.mxu0 0.0
    %1009 = vmatprep.subr.mxu0 0.0
    %1010 = vmatpush2.msra.mxu0 0.0
    %1011 = vmatprep.subr.mxu0 0.0
    %1012 = vmatpush2.msra.mxu0 0.0
    %1013 = vmatprep.mubr.f32.mxu0 0.0
    %1014 = vmatmul.mubr.f32.gmra.mxu0 %v722
    %v1015 = vpop.f32.mrf.mxu0
    %v1016 = vadd.f32 0.0, %v1015
    %v1017 = vpop.f32.mrf.mxu0
    %1018 = vdwg.mxu0
    %v1019 = vadd.f32 %v716, %v1016
    %v1020 = vxor.u32 %v794, 2147483648
    %v1021 = vmul.f32 %v1020, 1.442695
    %v1022 = vpow.pop %v1021
    %v1023 = vadd.f32 %v1022, 1.0
    %v1024 = vrcp.pop %v1023
    %v1025 = vmul.f32 1.0, %v1024
    %v1026 = vxor.u32 %v869, 2147483648
    %v1027 = vmul.f32 %v1026, 1.442695
    %v1028 = vpow.pop %v1027
    %v1029 = vadd.f32 %v1028, 1.0
    %v1030 = vrcp.pop %v1029
    %v1031 = vmul.f32 1.0, %v1030
    %v1032 = vtanh.pop %v944
    %v1033 = vxor.u32 %v1019, 2147483648
    %v1034 = vmul.f32 %v1033, 1.442695
    %v1035 = vpow.pop %v1034
    %v1036 = vadd.f32 %v1035, 1.0
    %v1037 = vrcp.pop %v1036
    %v1038 = vmul.f32 1.0, %v1037
    %v1039 = vmul.f32 %v1031, %v711
    %v1040 = vmul.f32 %v1025, %v1032
    %v1041 = vadd.f32 %v1039, %v1040
    %v1042 = vtanh.pop %v1041
    %v1043 = vmul.f32 %v1038, %v1042
    %1044 = vst.msk [vmem:[#allocation2] sm:$0x3] %vm368, %v1043
    %1045 = vst.msk [vmem:[#allocation3] sm:$0x3] %vm368, %v1041
    %s1046 = scalar_lea.vmem %s4, 4
    %1047 = vst.msk [vmem:[%s1046] sm:$0x3] %vm368, %v1043
    %v1048 = vld [vmem:[#allocation2] sm:$0x3]
    %v1049 = vld [vmem:[#allocation3] sm:$0x3]
    %s1050 = scalar_lea.vmem %s0, 24
    %v1051 = vld [vmem:[%s1050] sm:$0x3]
    %v1052 = vld [vmem:[%s1050 + $0x2] sm:$0x3]
    %v1053 = vld [vmem:[%s1050 + $0x4] sm:$0x3]
    %v1054 = vld [vmem:[%s1050 + $0x6] sm:$0x3]
    %v1055 = vld [vmem:[%s3] sm:$0xff]
    %v1056 = vld [vmem:[%s3 + $0x8] sm:$0xff]
    %v1057 = vld [vmem:[%s3 + $0x10] sm:$0xff]
    %v1058 = vld [vmem:[%s3 + $0x18] sm:$0xff]
    %v1060 = vsel %vm41, %v1048, 0
    %1062 = vmatprep.subr.mxu0 0.0
    %1063 = vmatpush1.msra.mxu0 0.0
    %1064 = vmatprep.subr.mxu0 0.0
    %1065 = vmatpush1.msra.mxu0 0.0
    %1066 = vmatprep.subr.mxu0 0.0
    %1067 = vmatpush1.msra.mxu0 0.0
    %1068 = vmatprep.subr.mxu0 0.0
    %1069 = vmatpush1.msra.mxu0 0.0
    %1070 = vmatprep.subr.mxu0 0.0
    %1071 = vmatpush1.msra.mxu0 0.0
    %1072 = vmatprep.subr.mxu0 0.0
    %1073 = vmatpush1.msra.mxu0 0.0
    %1074 = vmatprep.subr.mxu0 0.0
    %1075 = vmatpush1.msra.mxu0 0.0
    %1076 = vmatprep.subr.mxu0 0.0
    %1077 = vmatpush1.msra.mxu0 0.0
    %1078 = vmatprep.subr.mxu0 0.0
    %1079 = vmatpush1.msra.mxu0 0.0
    %1080 = vmatprep.subr.mxu0 0.0
    %1081 = vmatpush1.msra.mxu0 0.0
    %1082 = vmatprep.subr.mxu0 0.0
    %1083 = vmatpush1.msra.mxu0 0.0
    %1084 = vmatprep.subr.mxu0 0.0
    %1085 = vmatpush1.msra.mxu0 0.0
    %1086 = vmatprep.subr.mxu0 0.0
    %1087 = vmatpush1.msra.mxu0 %v1058
    %1088 = vmatprep.subr.mxu0 0.0
    %1089 = vmatpush1.msra.mxu0 %v1057
    %1090 = vmatprep.subr.mxu0 0.0
    %1091 = vmatpush1.msra.mxu0 %v1056
    %1092 = vmatprep.subr.mxu0 0.0
    %1093 = vmatpush1.msra.mxu0 %v1055
    %1094 = vmatprep.subr.mxu0 0.0
    %1095 = vmatpush2.msra.mxu0 0.0
    %1096 = vmatprep.subr.mxu0 0.0
    %1097 = vmatpush2.msra.mxu0 0.0
    %1098 = vmatprep.subr.mxu0 0.0
    %1099 = vmatpush2.msra.mxu0 0.0
    %1100 = vmatprep.subr.mxu0 0.0
    %1101 = vmatpush2.msra.mxu0 0.0
    %1102 = vmatprep.subr.mxu0 0.0
    %1103 = vmatpush2.msra.mxu0 0.0
    %1104 = vmatprep.subr.mxu0 0.0
    %1105 = vmatpush2.msra.mxu0 0.0
    %1106 = vmatprep.subr.mxu0 0.0
    %1107 = vmatpush2.msra.mxu0 0.0
    %1108 = vmatprep.subr.mxu0 0.0
    %1109 = vmatpush2.msra.mxu0 0.0
    %1110 = vmatprep.subr.mxu0 0.0
    %1111 = vmatpush2.msra.mxu0 0.0
    %1112 = vmatprep.subr.mxu0 0.0
    %1113 = vmatpush2.msra.mxu0 0.0
    %1114 = vmatprep.subr.mxu0 0.0
    %1115 = vmatpush2.msra.mxu0 0.0
    %1116 = vmatprep.subr.mxu0 0.0
    %1117 = vmatpush2.msra.mxu0 0.0
    %1118 = vmatprep.subr.mxu0 0.0
    %1119 = vmatpush2.msra.mxu0 0.0
    %1120 = vmatprep.subr.mxu0 0.0
    %1121 = vmatpush2.msra.mxu0 0.0
    %1122 = vmatprep.subr.mxu0 0.0
    %1123 = vmatpush2.msra.mxu0 0.0
    %1124 = vmatprep.subr.mxu0 0.0
    %1125 = vmatpush2.msra.mxu0 0.0
    %1126 = vmatprep.mubr.f32.mxu0 0.0
    %1127 = vmatmul.mubr.f32.gmra.mxu0 %v1060
    %v1128 = vpop.f32.mrf.mxu0
    %v1129 = vadd.f32 0.0, %v1128
    %v1130 = vpop.f32.mrf.mxu0
    %1131 = vdwg.mxu0
    %v1132 = vadd.f32 %v1051, %v1129
    %v1133 = vld [vmem:[%s116] sm:$0xff]
    %v1134 = vld [vmem:[%s116 + $0x8] sm:$0xff]
    %v1135 = vld [vmem:[%s116 + $0x10] sm:$0xff]
    %v1136 = vld [vmem:[%s116 + $0x18] sm:$0xff]
    %1137 = vmatprep.subr.mxu0 0.0
    %1138 = vmatpush1.msra.mxu0 0.0
    %1139 = vmatprep.subr.mxu0 0.0
    %1140 = vmatpush1.msra.mxu0 0.0
    %1141 = vmatprep.subr.mxu0 0.0
    %1142 = vmatpush1.msra.mxu0 0.0
    %1143 = vmatprep.subr.mxu0 0.0
    %1144 = vmatpush1.msra.mxu0 0.0
    %1145 = vmatprep.subr.mxu0 0.0
    %1146 = vmatpush1.msra.mxu0 0.0
    %1147 = vmatprep.subr.mxu0 0.0
    %1148 = vmatpush1.msra.mxu0 0.0
    %1149 = vmatprep.subr.mxu0 0.0
    %1150 = vmatpush1.msra.mxu0 0.0
    %1151 = vmatprep.subr.mxu0 0.0
    %1152 = vmatpush1.msra.mxu0 0.0
    %1153 = vmatprep.subr.mxu0 0.0
    %1154 = vmatpush1.msra.mxu0 0.0
    %1155 = vmatprep.subr.mxu0 0.0
    %1156 = vmatpush1.msra.mxu0 0.0
    %1157 = vmatprep.subr.mxu0 0.0
    %1158 = vmatpush1.msra.mxu0 0.0
    %1159 = vmatprep.subr.mxu0 0.0
    %1160 = vmatpush1.msra.mxu0 0.0
    %1161 = vmatprep.subr.mxu0 0.0
    %1162 = vmatpush1.msra.mxu0 %v1136
    %1163 = vmatprep.subr.mxu0 0.0
    %1164 = vmatpush1.msra.mxu0 %v1135
    %1165 = vmatprep.subr.mxu0 0.0
    %1166 = vmatpush1.msra.mxu0 %v1134
    %1167 = vmatprep.subr.mxu0 0.0
    %1168 = vmatpush1.msra.mxu0 %v1133
    %1169 = vmatprep.subr.mxu0 0.0
    %1170 = vmatpush2.msra.mxu0 0.0
    %1171 = vmatprep.subr.mxu0 0.0
    %1172 = vmatpush2.msra.mxu0 0.0
    %1173 = vmatprep.subr.mxu0 0.0
    %1174 = vmatpush2.msra.mxu0 0.0
    %1175 = vmatprep.subr.mxu0 0.0
    %1176 = vmatpush2.msra.mxu0 0.0
    %1177 = vmatprep.subr.mxu0 0.0
    %1178 = vmatpush2.msra.mxu0 0.0
    %1179 = vmatprep.subr.mxu0 0.0
    %1180 = vmatpush2.msra.mxu0 0.0
    %1181 = vmatprep.subr.mxu0 0.0
    %1182 = vmatpush2.msra.mxu0 0.0
    %1183 = vmatprep.subr.mxu0 0.0
    %1184 = vmatpush2.msra.mxu0 0.0
    %1185 = vmatprep.subr.mxu0 0.0
    %1186 = vmatpush2.msra.mxu0 0.0
    %1187 = vmatprep.subr.mxu0 0.0
    %1188 = vmatpush2.msra.mxu0 0.0
    %1189 = vmatprep.subr.mxu0 0.0
    %1190 = vmatpush2.msra.mxu0 0.0
    %1191 = vmatprep.subr.mxu0 0.0
    %1192 = vmatpush2.msra.mxu0 0.0
    %1193 = vmatprep.subr.mxu0 0.0
    %1194 = vmatpush2.msra.mxu0 0.0
    %1195 = vmatprep.subr.mxu0 0.0
    %1196 = vmatpush2.msra.mxu0 0.0
    %1197 = vmatprep.subr.mxu0 0.0
    %1198 = vmatpush2.msra.mxu0 0.0
    %1199 = vmatprep.subr.mxu0 0.0
    %1200 = vmatpush2.msra.mxu0 0.0
    %1201 = vmatprep.mubr.f32.mxu0 0.0
    %1202 = vmatmul.mubr.f32.gmra.mxu0 %v1060
    %v1203 = vpop.f32.mrf.mxu0
    %v1204 = vadd.f32 0.0, %v1203
    %v1205 = vpop.f32.mrf.mxu0
    %1206 = vdwg.mxu0
    %v1207 = vadd.f32 %v1052, %v1204
    %v1208 = vld [vmem:[%s192] sm:$0xff]
    %v1209 = vld [vmem:[%s192 + $0x8] sm:$0xff]
    %v1210 = vld [vmem:[%s192 + $0x10] sm:$0xff]
    %v1211 = vld [vmem:[%s192 + $0x18] sm:$0xff]
    %1212 = vmatprep.subr.mxu0 0.0
    %1213 = vmatpush1.msra.mxu0 0.0
    %1214 = vmatprep.subr.mxu0 0.0
    %1215 = vmatpush1.msra.mxu0 0.0
    %1216 = vmatprep.subr.mxu0 0.0
    %1217 = vmatpush1.msra.mxu0 0.0
    %1218 = vmatprep.subr.mxu0 0.0
    %1219 = vmatpush1.msra.mxu0 0.0
    %1220 = vmatprep.subr.mxu0 0.0
    %1221 = vmatpush1.msra.mxu0 0.0
    %1222 = vmatprep.subr.mxu0 0.0
    %1223 = vmatpush1.msra.mxu0 0.0
    %1224 = vmatprep.subr.mxu0 0.0
    %1225 = vmatpush1.msra.mxu0 0.0
    %1226 = vmatprep.subr.mxu0 0.0
    %1227 = vmatpush1.msra.mxu0 0.0
    %1228 = vmatprep.subr.mxu0 0.0
    %1229 = vmatpush1.msra.mxu0 0.0
    %1230 = vmatprep.subr.mxu0 0.0
    %1231 = vmatpush1.msra.mxu0 0.0
    %1232 = vmatprep.subr.mxu0 0.0
    %1233 = vmatpush1.msra.mxu0 0.0
    %1234 = vmatprep.subr.mxu0 0.0
    %1235 = vmatpush1.msra.mxu0 0.0
    %1236 = vmatprep.subr.mxu0 0.0
    %1237 = vmatpush1.msra.mxu0 %v1211
    %1238 = vmatprep.subr.mxu0 0.0
    %1239 = vmatpush1.msra.mxu0 %v1210
    %1240 = vmatprep.subr.mxu0 0.0
    %1241 = vmatpush1.msra.mxu0 %v1209
    %1242 = vmatprep.subr.mxu0 0.0
    %1243 = vmatpush1.msra.mxu0 %v1208
    %1244 = vmatprep.subr.mxu0 0.0
    %1245 = vmatpush2.msra.mxu0 0.0
    %1246 = vmatprep.subr.mxu0 0.0
    %1247 = vmatpush2.msra.mxu0 0.0
    %1248 = vmatprep.subr.mxu0 0.0
    %1249 = vmatpush2.msra.mxu0 0.0
    %1250 = vmatprep.subr.mxu0 0.0
    %1251 = vmatpush2.msra.mxu0 0.0
    %1252 = vmatprep.subr.mxu0 0.0
    %1253 = vmatpush2.msra.mxu0 0.0
    %1254 = vmatprep.subr.mxu0 0.0
    %1255 = vmatpush2.msra.mxu0 0.0
    %1256 = vmatprep.subr.mxu0 0.0
    %1257 = vmatpush2.msra.mxu0 0.0
    %1258 = vmatprep.subr.mxu0 0.0
    %1259 = vmatpush2.msra.mxu0 0.0
    %1260 = vmatprep.subr.mxu0 0.0
    %1261 = vmatpush2.msra.mxu0 0.0
    %1262 = vmatprep.subr.mxu0 0.0
    %1263 = vmatpush2.msra.mxu0 0.0
    %1264 = vmatprep.subr.mxu0 0.0
    %1265 = vmatpush2.msra.mxu0 0.0
    %1266 = vmatprep.subr.mxu0 0.0
    %1267 = vmatpush2.msra.mxu0 0.0
    %1268 = vmatprep.subr.mxu0 0.0
    %1269 = vmatpush2.msra.mxu0 0.0
    %1270 = vmatprep.subr.mxu0 0.0
    %1271 = vmatpush2.msra.mxu0 0.0
    %1272 = vmatprep.subr.mxu0 0.0
    %1273 = vmatpush2.msra.mxu0 0.0
    %1274 = vmatprep.subr.mxu0 0.0
    %1275 = vmatpush2.msra.mxu0 0.0
    %1276 = vmatprep.mubr.f32.mxu0 0.0
    %1277 = vmatmul.mubr.f32.gmra.mxu0 %v1060
    %v1278 = vpop.f32.mrf.mxu0
    %v1279 = vadd.f32 0.0, %v1278
    %v1280 = vpop.f32.mrf.mxu0
    %1281 = vdwg.mxu0
    %v1282 = vadd.f32 %v1053, %v1279
    %v1283 = vld [vmem:[%s268] sm:$0xff]
    %v1284 = vld [vmem:[%s268 + $0x8] sm:$0xff]
    %v1285 = vld [vmem:[%s268 + $0x10] sm:$0xff]
    %v1286 = vld [vmem:[%s268 + $0x18] sm:$0xff]
    %1287 = vmatprep.subr.mxu0 0.0
    %1288 = vmatpush1.msra.mxu0 0.0
    %1289 = vmatprep.subr.mxu0 0.0
    %1290 = vmatpush1.msra.mxu0 0.0
    %1291 = vmatprep.subr.mxu0 0.0
    %1292 = vmatpush1.msra.mxu0 0.0
    %1293 = vmatprep.subr.mxu0 0.0
    %1294 = vmatpush1.msra.mxu0 0.0
    %1295 = vmatprep.subr.mxu0 0.0
    %1296 = vmatpush1.msra.mxu0 0.0
    %1297 = vmatprep.subr.mxu0 0.0
    %1298 = vmatpush1.msra.mxu0 0.0
    %1299 = vmatprep.subr.mxu0 0.0
    %1300 = vmatpush1.msra.mxu0 0.0
    %1301 = vmatprep.subr.mxu0 0.0
    %1302 = vmatpush1.msra.mxu0 0.0
    %1303 = vmatprep.subr.mxu0 0.0
    %1304 = vmatpush1.msra.mxu0 0.0
    %1305 = vmatprep.subr.mxu0 0.0
    %1306 = vmatpush1.msra.mxu0 0.0
    %1307 = vmatprep.subr.mxu0 0.0
    %1308 = vmatpush1.msra.mxu0 0.0
    %1309 = vmatprep.subr.mxu0 0.0
    %1310 = vmatpush1.msra.mxu0 0.0
    %1311 = vmatprep.subr.mxu0 0.0
    %1312 = vmatpush1.msra.mxu0 %v1286
    %1313 = vmatprep.subr.mxu0 0.0
    %1314 = vmatpush1.msra.mxu0 %v1285
    %1315 = vmatprep.subr.mxu0 0.0
    %1316 = vmatpush1.msra.mxu0 %v1284
    %1317 = vmatprep.subr.mxu0 0.0
    %1318 = vmatpush1.msra.mxu0 %v1283
    %1319 = vmatprep.subr.mxu0 0.0
    %1320 = vmatpush2.msra.mxu0 0.0
    %1321 = vmatprep.subr.mxu0 0.0
    %1322 = vmatpush2.msra.mxu0 0.0
    %1323 = vmatprep.subr.mxu0 0.0
    %1324 = vmatpush2.msra.mxu0 0.0
    %1325 = vmatprep.subr.mxu0 0.0
    %1326 = vmatpush2.msra.mxu0 0.0
    %1327 = vmatprep.subr.mxu0 0.0
    %1328 = vmatpush2.msra.mxu0 0.0
    %1329 = vmatprep.subr.mxu0 0.0
    %1330 = vmatpush2.msra.mxu0 0.0
    %1331 = vmatprep.subr.mxu0 0.0
    %1332 = vmatpush2.msra.mxu0 0.0
    %1333 = vmatprep.subr.mxu0 0.0
    %1334 = vmatpush2.msra.mxu0 0.0
    %1335 = vmatprep.subr.mxu0 0.0
    %1336 = vmatpush2.msra.mxu0 0.0
    %1337 = vmatprep.subr.mxu0 0.0
    %1338 = vmatpush2.msra.mxu0 0.0
    %1339 = vmatprep.subr.mxu0 0.0
    %1340 = vmatpush2.msra.mxu0 0.0
    %1341 = vmatprep.subr.mxu0 0.0
    %1342 = vmatpush2.msra.mxu0 0.0
    %1343 = vmatprep.subr.mxu0 0.0
    %1344 = vmatpush2.msra.mxu0 0.0
    %1345 = vmatprep.subr.mxu0 0.0
    %1346 = vmatpush2.msra.mxu0 0.0
    %1347 = vmatprep.subr.mxu0 0.0
    %1348 = vmatpush2.msra.mxu0 0.0
    %1349 = vmatprep.subr.mxu0 0.0
    %1350 = vmatpush2.msra.mxu0 0.0
    %1351 = vmatprep.mubr.f32.mxu0 0.0
    %1352 = vmatmul.mubr.f32.gmra.mxu0 %v1060
    %v1353 = vpop.f32.mrf.mxu0
    %v1354 = vadd.f32 0.0, %v1353
    %v1355 = vpop.f32.mrf.mxu0
    %1356 = vdwg.mxu0
    %v1357 = vadd.f32 %v1054, %v1354
    %v1358 = vxor.u32 %v1132, 2147483648
    %v1359 = vmul.f32 %v1358, 1.442695
    %v1360 = vpow.pop %v1359
    %v1361 = vadd.f32 %v1360, 1.0
    %v1362 = vrcp.pop %v1361
    %v1363 = vmul.f32 1.0, %v1362
    %v1364 = vxor.u32 %v1207, 2147483648
    %v1365 = vmul.f32 %v1364, 1.442695
    %v1366 = vpow.pop %v1365
    %v1367 = vadd.f32 %v1366, 1.0
    %v1368 = vrcp.pop %v1367
    %v1369 = vmul.f32 1.0, %v1368
    %v1370 = vtanh.pop %v1282
    %v1371 = vxor.u32 %v1357, 2147483648
    %v1372 = vmul.f32 %v1371, 1.442695
    %v1373 = vpow.pop %v1372
    %v1374 = vadd.f32 %v1373, 1.0
    %v1375 = vrcp.pop %v1374
    %v1376 = vmul.f32 1.0, %v1375
    %v1377 = vmul.f32 %v1369, %v1049
    %v1378 = vmul.f32 %v1363, %v1370
    %v1379 = vadd.f32 %v1377, %v1378
    %v1380 = vtanh.pop %v1379
    %v1381 = vmul.f32 %v1376, %v1380
    %1382 = vst.msk [vmem:[#allocation2] sm:$0x3] %vm368, %v1381
    %1383 = vst.msk [vmem:[#allocation3] sm:$0x3] %vm368, %v1379
    %s1384 = scalar_lea.vmem %s4, 6
    %1385 = vst.msk [vmem:[%s1384] sm:$0x3] %vm368, %v1381
    %v1386 = vld [vmem:[#allocation2] sm:$0x3]
    %v1387 = vld [vmem:[#allocation3] sm:$0x3]
    %s1388 = scalar_lea.vmem %s0, 32
    %v1389 = vld [vmem:[%s1388] sm:$0x3]
    %v1390 = vld [vmem:[%s1388 + $0x2] sm:$0x3]
    %v1391 = vld [vmem:[%s1388 + $0x4] sm:$0x3]
    %v1392 = vld [vmem:[%s1388 + $0x6] sm:$0x3]
    %v1393 = vld [vmem:[%s3] sm:$0xff]
    %v1394 = vld [vmem:[%s3 + $0x8] sm:$0xff]
    %v1395 = vld [vmem:[%s3 + $0x10] sm:$0xff]
    %v1396 = vld [vmem:[%s3 + $0x18] sm:$0xff]
    %v1398 = vsel %vm41, %v1386, 0
    %1400 = vmatprep.subr.mxu0 0.0
    %1401 = vmatpush1.msra.mxu0 0.0
    %1402 = vmatprep.subr.mxu0 0.0
    %1403 = vmatpush1.msra.mxu0 0.0
    %1404 = vmatprep.subr.mxu0 0.0
    %1405 = vmatpush1.msra.mxu0 0.0
    %1406 = vmatprep.subr.mxu0 0.0
    %1407 = vmatpush1.msra.mxu0 0.0
    %1408 = vmatprep.subr.mxu0 0.0
    %1409 = vmatpush1.msra.mxu0 0.0
    %1410 = vmatprep.subr.mxu0 0.0
    %1411 = vmatpush1.msra.mxu0 0.0
    %1412 = vmatprep.subr.mxu0 0.0
    %1413 = vmatpush1.msra.mxu0 0.0
    %1414 = vmatprep.subr.mxu0 0.0
    %1415 = vmatpush1.msra.mxu0 0.0
    %1416 = vmatprep.subr.mxu0 0.0
    %1417 = vmatpush1.msra.mxu0 0.0
    %1418 = vmatprep.subr.mxu0 0.0
    %1419 = vmatpush1.msra.mxu0 0.0
    %1420 = vmatprep.subr.mxu0 0.0
    %1421 = vmatpush1.msra.mxu0 0.0
    %1422 = vmatprep.subr.mxu0 0.0
    %1423 = vmatpush1.msra.mxu0 0.0
    %1424 = vmatprep.subr.mxu0 0.0
    %1425 = vmatpush1.msra.mxu0 %v1396
    %1426 = vmatprep.subr.mxu0 0.0
    %1427 = vmatpush1.msra.mxu0 %v1395
    %1428 = vmatprep.subr.mxu0 0.0
    %1429 = vmatpush1.msra.mxu0 %v1394
    %1430 = vmatprep.subr.mxu0 0.0
    %1431 = vmatpush1.msra.mxu0 %v1393
    %1432 = vmatprep.subr.mxu0 0.0
    %1433 = vmatpush2.msra.mxu0 0.0
    %1434 = vmatprep.subr.mxu0 0.0
    %1435 = vmatpush2.msra.mxu0 0.0
    %1436 = vmatprep.subr.mxu0 0.0
    %1437 = vmatpush2.msra.mxu0 0.0
    %1438 = vmatprep.subr.mxu0 0.0
    %1439 = vmatpush2.msra.mxu0 0.0
    %1440 = vmatprep.subr.mxu0 0.0
    %1441 = vmatpush2.msra.mxu0 0.0
    %1442 = vmatprep.subr.mxu0 0.0
    %1443 = vmatpush2.msra.mxu0 0.0
    %1444 = vmatprep.subr.mxu0 0.0
    %1445 = vmatpush2.msra.mxu0 0.0
    %1446 = vmatprep.subr.mxu0 0.0
    %1447 = vmatpush2.msra.mxu0 0.0
    %1448 = vmatprep.subr.mxu0 0.0
    %1449 = vmatpush2.msra.mxu0 0.0
    %1450 = vmatprep.subr.mxu0 0.0
    %1451 = vmatpush2.msra.mxu0 0.0
    %1452 = vmatprep.subr.mxu0 0.0
    %1453 = vmatpush2.msra.mxu0 0.0
    %1454 = vmatprep.subr.mxu0 0.0
    %1455 = vmatpush2.msra.mxu0 0.0
    %1456 = vmatprep.subr.mxu0 0.0
    %1457 = vmatpush2.msra.mxu0 0.0
    %1458 = vmatprep.subr.mxu0 0.0
    %1459 = vmatpush2.msra.mxu0 0.0
    %1460 = vmatprep.subr.mxu0 0.0
    %1461 = vmatpush2.msra.mxu0 0.0
    %1462 = vmatprep.subr.mxu0 0.0
    %1463 = vmatpush2.msra.mxu0 0.0
    %1464 = vmatprep.mubr.f32.mxu0 0.0
    %1465 = vmatmul.mubr.f32.gmra.mxu0 %v1398
    %v1466 = vpop.f32.mrf.mxu0
    %v1467 = vadd.f32 0.0, %v1466
    %v1468 = vpop.f32.mrf.mxu0
    %1469 = vdwg.mxu0
    %v1470 = vadd.f32 %v1389, %v1467
    %v1471 = vld [vmem:[%s116] sm:$0xff]
    %v1472 = vld [vmem:[%s116 + $0x8] sm:$0xff]
    %v1473 = vld [vmem:[%s116 + $0x10] sm:$0xff]
    %v1474 = vld [vmem:[%s116 + $0x18] sm:$0xff]
    %1475 = vmatprep.subr.mxu0 0.0
    %1476 = vmatpush1.msra.mxu0 0.0
    %1477 = vmatprep.subr.mxu0 0.0
    %1478 = vmatpush1.msra.mxu0 0.0
    %1479 = vmatprep.subr.mxu0 0.0
    %1480 = vmatpush1.msra.mxu0 0.0
    %1481 = vmatprep.subr.mxu0 0.0
    %1482 = vmatpush1.msra.mxu0 0.0
    %1483 = vmatprep.subr.mxu0 0.0
    %1484 = vmatpush1.msra.mxu0 0.0
    %1485 = vmatprep.subr.mxu0 0.0
    %1486 = vmatpush1.msra.mxu0 0.0
    %1487 = vmatprep.subr.mxu0 0.0
    %1488 = vmatpush1.msra.mxu0 0.0
    %1489 = vmatprep.subr.mxu0 0.0
    %1490 = vmatpush1.msra.mxu0 0.0
    %1491 = vmatprep.subr.mxu0 0.0
    %1492 = vmatpush1.msra.mxu0 0.0
    %1493 = vmatprep.subr.mxu0 0.0
    %1494 = vmatpush1.msra.mxu0 0.0
    %1495 = vmatprep.subr.mxu0 0.0
    %1496 = vmatpush1.msra.mxu0 0.0
    %1497 = vmatprep.subr.mxu0 0.0
    %1498 = vmatpush1.msra.mxu0 0.0
    %1499 = vmatprep.subr.mxu0 0.0
    %1500 = vmatpush1.msra.mxu0 %v1474
    %1501 = vmatprep.subr.mxu0 0.0
    %1502 = vmatpush1.msra.mxu0 %v1473
    %1503 = vmatprep.subr.mxu0 0.0
    %1504 = vmatpush1.msra.mxu0 %v1472
    %1505 = vmatprep.subr.mxu0 0.0
    %1506 = vmatpush1.msra.mxu0 %v1471
    %1507 = vmatprep.subr.mxu0 0.0
    %1508 = vmatpush2.msra.mxu0 0.0
    %1509 = vmatprep.subr.mxu0 0.0
    %1510 = vmatpush2.msra.mxu0 0.0
    %1511 = vmatprep.subr.mxu0 0.0
    %1512 = vmatpush2.msra.mxu0 0.0
    %1513 = vmatprep.subr.mxu0 0.0
    %1514 = vmatpush2.msra.mxu0 0.0
    %1515 = vmatprep.subr.mxu0 0.0
    %1516 = vmatpush2.msra.mxu0 0.0
    %1517 = vmatprep.subr.mxu0 0.0
    %1518 = vmatpush2.msra.mxu0 0.0
    %1519 = vmatprep.subr.mxu0 0.0
    %1520 = vmatpush2.msra.mxu0 0.0
    %1521 = vmatprep.subr.mxu0 0.0
    %1522 = vmatpush2.msra.mxu0 0.0
    %1523 = vmatprep.subr.mxu0 0.0
    %1524 = vmatpush2.msra.mxu0 0.0
    %1525 = vmatprep.subr.mxu0 0.0
    %1526 = vmatpush2.msra.mxu0 0.0
    %1527 = vmatprep.subr.mxu0 0.0
    %1528 = vmatpush2.msra.mxu0 0.0
    %1529 = vmatprep.subr.mxu0 0.0
    %1530 = vmatpush2.msra.mxu0 0.0
    %1531 = vmatprep.subr.mxu0 0.0
    %1532 = vmatpush2.msra.mxu0 0.0
    %1533 = vmatprep.subr.mxu0 0.0
    %1534 = vmatpush2.msra.mxu0 0.0
    %1535 = vmatprep.subr.mxu0 0.0
    %1536 = vmatpush2.msra.mxu0 0.0
    %1537 = vmatprep.subr.mxu0 0.0
    %1538 = vmatpush2.msra.mxu0 0.0
    %1539 = vmatprep.mubr.f32.mxu0 0.0
    %1540 = vmatmul.mubr.f32.gmra.mxu0 %v1398
    %v1541 = vpop.f32.mrf.mxu0
    %v1542 = vadd.f32 0.0, %v1541
    %v1543 = vpop.f32.mrf.mxu0
    %1544 = vdwg.mxu0
    %v1545 = vadd.f32 %v1390, %v1542
    %v1546 = vld [vmem:[%s192] sm:$0xff]
    %v1547 = vld [vmem:[%s192 + $0x8] sm:$0xff]
    %v1548 = vld [vmem:[%s192 + $0x10] sm:$0xff]
    %v1549 = vld [vmem:[%s192 + $0x18] sm:$0xff]
    %1550 = vmatprep.subr.mxu0 0.0
    %1551 = vmatpush1.msra.mxu0 0.0
    %1552 = vmatprep.subr.mxu0 0.0
    %1553 = vmatpush1.msra.mxu0 0.0
    %1554 = vmatprep.subr.mxu0 0.0
    %1555 = vmatpush1.msra.mxu0 0.0
    %1556 = vmatprep.subr.mxu0 0.0
    %1557 = vmatpush1.msra.mxu0 0.0
    %1558 = vmatprep.subr.mxu0 0.0
    %1559 = vmatpush1.msra.mxu0 0.0
    %1560 = vmatprep.subr.mxu0 0.0
    %1561 = vmatpush1.msra.mxu0 0.0
    %1562 = vmatprep.subr.mxu0 0.0
    %1563 = vmatpush1.msra.mxu0 0.0
    %1564 = vmatprep.subr.mxu0 0.0
    %1565 = vmatpush1.msra.mxu0 0.0
    %1566 = vmatprep.subr.mxu0 0.0
    %1567 = vmatpush1.msra.mxu0 0.0
    %1568 = vmatprep.subr.mxu0 0.0
    %1569 = vmatpush1.msra.mxu0 0.0
    %1570 = vmatprep.subr.mxu0 0.0
    %1571 = vmatpush1.msra.mxu0 0.0
    %1572 = vmatprep.subr.mxu0 0.0
    %1573 = vmatpush1.msra.mxu0 0.0
    %1574 = vmatprep.subr.mxu0 0.0
    %1575 = vmatpush1.msra.mxu0 %v1549
    %1576 = vmatprep.subr.mxu0 0.0
    %1577 = vmatpush1.msra.mxu0 %v1548
    %1578 = vmatprep.subr.mxu0 0.0
    %1579 = vmatpush1.msra.mxu0 %v1547
    %1580 = vmatprep.subr.mxu0 0.0
    %1581 = vmatpush1.msra.mxu0 %v1546
    %1582 = vmatprep.subr.mxu0 0.0
    %1583 = vmatpush2.msra.mxu0 0.0
    %1584 = vmatprep.subr.mxu0 0.0
    %1585 = vmatpush2.msra.mxu0 0.0
    %1586 = vmatprep.subr.mxu0 0.0
    %1587 = vmatpush2.msra.mxu0 0.0
    %1588 = vmatprep.subr.mxu0 0.0
    %1589 = vmatpush2.msra.mxu0 0.0
    %1590 = vmatprep.subr.mxu0 0.0
    %1591 = vmatpush2.msra.mxu0 0.0
    %1592 = vmatprep.subr.mxu0 0.0
    %1593 = vmatpush2.msra.mxu0 0.0
    %1594 = vmatprep.subr.mxu0 0.0
    %1595 = vmatpush2.msra.mxu0 0.0
    %1596 = vmatprep.subr.mxu0 0.0
    %1597 = vmatpush2.msra.mxu0 0.0
    %1598 = vmatprep.subr.mxu0 0.0
    %1599 = vmatpush2.msra.mxu0 0.0
    %1600 = vmatprep.subr.mxu0 0.0
    %1601 = vmatpush2.msra.mxu0 0.0
    %1602 = vmatprep.subr.mxu0 0.0
    %1603 = vmatpush2.msra.mxu0 0.0
    %1604 = vmatprep.subr.mxu0 0.0
    %1605 = vmatpush2.msra.mxu0 0.0
    %1606 = vmatprep.subr.mxu0 0.0
    %1607 = vmatpush2.msra.mxu0 0.0
    %1608 = vmatprep.subr.mxu0 0.0
    %1609 = vmatpush2.msra.mxu0 0.0
    %1610 = vmatprep.subr.mxu0 0.0
    %1611 = vmatpush2.msra.mxu0 0.0
    %1612 = vmatprep.subr.mxu0 0.0
    %1613 = vmatpush2.msra.mxu0 0.0
    %1614 = vmatprep.mubr.f32.mxu0 0.0
    %1615 = vmatmul.mubr.f32.gmra.mxu0 %v1398
    %v1616 = vpop.f32.mrf.mxu0
    %v1617 = vadd.f32 0.0, %v1616
    %v1618 = vpop.f32.mrf.mxu0
    %1619 = vdwg.mxu0
    %v1620 = vadd.f32 %v1391, %v1617
    %v1621 = vld [vmem:[%s268] sm:$0xff]
    %v1622 = vld [vmem:[%s268 + $0x8] sm:$0xff]
    %v1623 = vld [vmem:[%s268 + $0x10] sm:$0xff]
    %v1624 = vld [vmem:[%s268 + $0x18] sm:$0xff]
    %1625 = vmatprep.subr.mxu0 0.0
    %1626 = vmatpush1.msra.mxu0 0.0
    %1627 = vmatprep.subr.mxu0 0.0
    %1628 = vmatpush1.msra.mxu0 0.0
    %1629 = vmatprep.subr.mxu0 0.0
    %1630 = vmatpush1.msra.mxu0 0.0
    %1631 = vmatprep.subr.mxu0 0.0
    %1632 = vmatpush1.msra.mxu0 0.0
    %1633 = vmatprep.subr.mxu0 0.0
    %1634 = vmatpush1.msra.mxu0 0.0
    %1635 = vmatprep.subr.mxu0 0.0
    %1636 = vmatpush1.msra.mxu0 0.0
    %1637 = vmatprep.subr.mxu0 0.0
    %1638 = vmatpush1.msra.mxu0 0.0
    %1639 = vmatprep.subr.mxu0 0.0
    %1640 = vmatpush1.msra.mxu0 0.0
    %1641 = vmatprep.subr.mxu0 0.0
    %1642 = vmatpush1.msra.mxu0 0.0
    %1643 = vmatprep.subr.mxu0 0.0
    %1644 = vmatpush1.msra.mxu0 0.0
    %1645 = vmatprep.subr.mxu0 0.0
    %1646 = vmatpush1.msra.mxu0 0.0
    %1647 = vmatprep.subr.mxu0 0.0
    %1648 = vmatpush1.msra.mxu0 0.0
    %1649 = vmatprep.subr.mxu0 0.0
    %1650 = vmatpush1.msra.mxu0 %v1624
    %1651 = vmatprep.subr.mxu0 0.0
    %1652 = vmatpush1.msra.mxu0 %v1623
    %1653 = vmatprep.subr.mxu0 0.0
    %1654 = vmatpush1.msra.mxu0 %v1622
    %1655 = vmatprep.subr.mxu0 0.0
    %1656 = vmatpush1.msra.mxu0 %v1621
    %1657 = vmatprep.subr.mxu0 0.0
    %1658 = vmatpush2.msra.mxu0 0.0
    %1659 = vmatprep.subr.mxu0 0.0
    %1660 = vmatpush2.msra.mxu0 0.0
    %1661 = vmatprep.subr.mxu0 0.0
    %1662 = vmatpush2.msra.mxu0 0.0
    %1663 = vmatprep.subr.mxu0 0.0
    %1664 = vmatpush2.msra.mxu0 0.0
    %1665 = vmatprep.subr.mxu0 0.0
    %1666 = vmatpush2.msra.mxu0 0.0
    %1667 = vmatprep.subr.mxu0 0.0
    %1668 = vmatpush2.msra.mxu0 0.0
    %1669 = vmatprep.subr.mxu0 0.0
    %1670 = vmatpush2.msra.mxu0 0.0
    %1671 = vmatprep.subr.mxu0 0.0
    %1672 = vmatpush2.msra.mxu0 0.0
    %1673 = vmatprep.subr.mxu0 0.0
    %1674 = vmatpush2.msra.mxu0 0.0
    %1675 = vmatprep.subr.mxu0 0.0
    %1676 = vmatpush2.msra.mxu0 0.0
    %1677 = vmatprep.subr.mxu0 0.0
    %1678 = vmatpush2.msra.mxu0 0.0
    %1679 = vmatprep.subr.mxu0 0.0
    %1680 = vmatpush2.msra.mxu0 0.0
    %1681 = vmatprep.subr.mxu0 0.0
    %1682 = vmatpush2.msra.mxu0 0.0
    %1683 = vmatprep.subr.mxu0 0.0
    %1684 = vmatpush2.msra.mxu0 0.0
    %1685 = vmatprep.subr.mxu0 0.0
    %1686 = vmatpush2.msra.mxu0 0.0
    %1687 = vmatprep.subr.mxu0 0.0
    %1688 = vmatpush2.msra.mxu0 0.0
    %1689 = vmatprep.mubr.f32.mxu0 0.0
    %1690 = vmatmul.mubr.f32.gmra.mxu0 %v1398
    %v1691 = vpop.f32.mrf.mxu0
    %v1692 = vadd.f32 0.0, %v1691
    %v1693 = vpop.f32.mrf.mxu0
    %1694 = vdwg.mxu0
    %v1695 = vadd.f32 %v1392, %v1692
    %v1696 = vxor.u32 %v1470, 2147483648
    %v1697 = vmul.f32 %v1696, 1.442695
    %v1698 = vpow.pop %v1697
    %v1699 = vadd.f32 %v1698, 1.0
    %v1700 = vrcp.pop %v1699
    %v1701 = vmul.f32 1.0, %v1700
    %v1702 = vxor.u32 %v1545, 2147483648
    %v1703 = vmul.f32 %v1702, 1.442695
    %v1704 = vpow.pop %v1703
    %v1705 = vadd.f32 %v1704, 1.0
    %v1706 = vrcp.pop %v1705
    %v1707 = vmul.f32 1.0, %v1706
    %v1708 = vtanh.pop %v1620
    %v1709 = vxor.u32 %v1695, 2147483648
    %v1710 = vmul.f32 %v1709, 1.442695
    %v1711 = vpow.pop %v1710
    %v1712 = vadd.f32 %v1711, 1.0
    %v1713 = vrcp.pop %v1712
    %v1714 = vmul.f32 1.0, %v1713
    %v1715 = vmul.f32 %v1707, %v1387
    %v1716 = vmul.f32 %v1701, %v1708
    %v1717 = vadd.f32 %v1715, %v1716
    %v1718 = vtanh.pop %v1717
    %v1719 = vmul.f32 %v1714, %v1718
    %1720 = vst.msk [vmem:[#allocation2] sm:$0x3] %vm368, %v1719
    %1721 = vst.msk [vmem:[#allocation3] sm:$0x3] %vm368, %v1717
    %s1722 = scalar_lea.vmem %s4, 8
    %1723 = vst.msk [vmem:[%s1722] sm:$0x3] %vm368, %v1719
    %v1724 = vld [vmem:[#allocation2] sm:$0x3]
    %v1725 = vld [vmem:[#allocation3] sm:$0x3]
    %s1726 = scalar_lea.vmem %s0, 40
    %v1727 = vld [vmem:[%s1726] sm:$0x3]
    %v1728 = vld [vmem:[%s1726 + $0x2] sm:$0x3]
    %v1729 = vld [vmem:[%s1726 + $0x4] sm:$0x3]
    %v1730 = vld [vmem:[%s1726 + $0x6] sm:$0x3]
    %v1731 = vld [vmem:[%s3] sm:$0xff]
    %v1732 = vld [vmem:[%s3 + $0x8] sm:$0xff]
    %v1733 = vld [vmem:[%s3 + $0x10] sm:$0xff]
    %v1734 = vld [vmem:[%s3 + $0x18] sm:$0xff]
    %v1736 = vsel %vm41, %v1724, 0
    %1738 = vmatprep.subr.mxu0 0.0
    %1739 = vmatpush1.msra.mxu0 0.0
    %1740 = vmatprep.subr.mxu0 0.0
    %1741 = vmatpush1.msra.mxu0 0.0
    %1742 = vmatprep.subr.mxu0 0.0
    %1743 = vmatpush1.msra.mxu0 0.0
    %1744 = vmatprep.subr.mxu0 0.0
    %1745 = vmatpush1.msra.mxu0 0.0
    %1746 = vmatprep.subr.mxu0 0.0
    %1747 = vmatpush1.msra.mxu0 0.0
    %1748 = vmatprep.subr.mxu0 0.0
    %1749 = vmatpush1.msra.mxu0 0.0
    %1750 = vmatprep.subr.mxu0 0.0
    %1751 = vmatpush1.msra.mxu0 0.0
    %1752 = vmatprep.subr.mxu0 0.0
    %1753 = vmatpush1.msra.mxu0 0.0
    %1754 = vmatprep.subr.mxu0 0.0
    %1755 = vmatpush1.msra.mxu0 0.0
    %1756 = vmatprep.subr.mxu0 0.0
    %1757 = vmatpush1.msra.mxu0 0.0
    %1758 = vmatprep.subr.mxu0 0.0
    %1759 = vmatpush1.msra.mxu0 0.0
    %1760 = vmatprep.subr.mxu0 0.0
    %1761 = vmatpush1.msra.mxu0 0.0
    %1762 = vmatprep.subr.mxu0 0.0
    %1763 = vmatpush1.msra.mxu0 %v1734
    %1764 = vmatprep.subr.mxu0 0.0
    %1765 = vmatpush1.msra.mxu0 %v1733
    %1766 = vmatprep.subr.mxu0 0.0
    %1767 = vmatpush1.msra.mxu0 %v1732
    %1768 = vmatprep.subr.mxu0 0.0
    %1769 = vmatpush1.msra.mxu0 %v1731
    %1770 = vmatprep.subr.mxu0 0.0
    %1771 = vmatpush2.msra.mxu0 0.0
    %1772 = vmatprep.subr.mxu0 0.0
    %1773 = vmatpush2.msra.mxu0 0.0
    %1774 = vmatprep.subr.mxu0 0.0
    %1775 = vmatpush2.msra.mxu0 0.0
    %1776 = vmatprep.subr.mxu0 0.0
    %1777 = vmatpush2.msra.mxu0 0.0
    %1778 = vmatprep.subr.mxu0 0.0
    %1779 = vmatpush2.msra.mxu0 0.0
    %1780 = vmatprep.subr.mxu0 0.0
    %1781 = vmatpush2.msra.mxu0 0.0
    %1782 = vmatprep.subr.mxu0 0.0
    %1783 = vmatpush2.msra.mxu0 0.0
    %1784 = vmatprep.subr.mxu0 0.0
    %1785 = vmatpush2.msra.mxu0 0.0
    %1786 = vmatprep.subr.mxu0 0.0
    %1787 = vmatpush2.msra.mxu0 0.0
    %1788 = vmatprep.subr.mxu0 0.0
    %1789 = vmatpush2.msra.mxu0 0.0
    %1790 = vmatprep.subr.mxu0 0.0
    %1791 = vmatpush2.msra.mxu0 0.0
    %1792 = vmatprep.subr.mxu0 0.0
    %1793 = vmatpush2.msra.mxu0 0.0
    %1794 = vmatprep.subr.mxu0 0.0
    %1795 = vmatpush2.msra.mxu0 0.0
    %1796 = vmatprep.subr.mxu0 0.0
    %1797 = vmatpush2.msra.mxu0 0.0
    %1798 = vmatprep.subr.mxu0 0.0
    %1799 = vmatpush2.msra.mxu0 0.0
    %1800 = vmatprep.subr.mxu0 0.0
    %1801 = vmatpush2.msra.mxu0 0.0
    %1802 = vmatprep.mubr.f32.mxu0 0.0
    %1803 = vmatmul.mubr.f32.gmra.mxu0 %v1736
    %v1804 = vpop.f32.mrf.mxu0
    %v1805 = vadd.f32 0.0, %v1804
    %v1806 = vpop.f32.mrf.mxu0
    %1807 = vdwg.mxu0
    %v1808 = vadd.f32 %v1727, %v1805
    %v1809 = vld [vmem:[%s116] sm:$0xff]
    %v1810 = vld [vmem:[%s116 + $0x8] sm:$0xff]
    %v1811 = vld [vmem:[%s116 + $0x10] sm:$0xff]
    %v1812 = vld [vmem:[%s116 + $0x18] sm:$0xff]
    %1813 = vmatprep.subr.mxu0 0.0
    %1814 = vmatpush1.msra.mxu0 0.0
    %1815 = vmatprep.subr.mxu0 0.0
    %1816 = vmatpush1.msra.mxu0 0.0
    %1817 = vmatprep.subr.mxu0 0.0
    %1818 = vmatpush1.msra.mxu0 0.0
    %1819 = vmatprep.subr.mxu0 0.0
    %1820 = vmatpush1.msra.mxu0 0.0
    %1821 = vmatprep.subr.mxu0 0.0
    %1822 = vmatpush1.msra.mxu0 0.0
    %1823 = vmatprep.subr.mxu0 0.0
    %1824 = vmatpush1.msra.mxu0 0.0
    %1825 = vmatprep.subr.mxu0 0.0
    %1826 = vmatpush1.msra.mxu0 0.0
    %1827 = vmatprep.subr.mxu0 0.0
    %1828 = vmatpush1.msra.mxu0 0.0
    %1829 = vmatprep.subr.mxu0 0.0
    %1830 = vmatpush1.msra.mxu0 0.0
    %1831 = vmatprep.subr.mxu0 0.0
    %1832 = vmatpush1.msra.mxu0 0.0
    %1833 = vmatprep.subr.mxu0 0.0
    %1834 = vmatpush1.msra.mxu0 0.0
    %1835 = vmatprep.subr.mxu0 0.0
    %1836 = vmatpush1.msra.mxu0 0.0
    %1837 = vmatprep.subr.mxu0 0.0
    %1838 = vmatpush1.msra.mxu0 %v1812
    %1839 = vmatprep.subr.mxu0 0.0
    %1840 = vmatpush1.msra.mxu0 %v1811
    %1841 = vmatprep.subr.mxu0 0.0
    %1842 = vmatpush1.msra.mxu0 %v1810
    %1843 = vmatprep.subr.mxu0 0.0
    %1844 = vmatpush1.msra.mxu0 %v1809
    %1845 = vmatprep.subr.mxu0 0.0
    %1846 = vmatpush2.msra.mxu0 0.0
    %1847 = vmatprep.subr.mxu0 0.0
    %1848 = vmatpush2.msra.mxu0 0.0
    %1849 = vmatprep.subr.mxu0 0.0
    %1850 = vmatpush2.msra.mxu0 0.0
    %1851 = vmatprep.subr.mxu0 0.0
    %1852 = vmatpush2.msra.mxu0 0.0
    %1853 = vmatprep.subr.mxu0 0.0
    %1854 = vmatpush2.msra.mxu0 0.0
    %1855 = vmatprep.subr.mxu0 0.0
    %1856 = vmatpush2.msra.mxu0 0.0
    %1857 = vmatprep.subr.mxu0 0.0
    %1858 = vmatpush2.msra.mxu0 0.0
    %1859 = vmatprep.subr.mxu0 0.0
    %1860 = vmatpush2.msra.mxu0 0.0
    %1861 = vmatprep.subr.mxu0 0.0
    %1862 = vmatpush2.msra.mxu0 0.0
    %1863 = vmatprep.subr.mxu0 0.0
    %1864 = vmatpush2.msra.mxu0 0.0
    %1865 = vmatprep.subr.mxu0 0.0
    %1866 = vmatpush2.msra.mxu0 0.0
    %1867 = vmatprep.subr.mxu0 0.0
    %1868 = vmatpush2.msra.mxu0 0.0
    %1869 = vmatprep.subr.mxu0 0.0
    %1870 = vmatpush2.msra.mxu0 0.0
    %1871 = vmatprep.subr.mxu0 0.0
    %1872 = vmatpush2.msra.mxu0 0.0
    %1873 = vmatprep.subr.mxu0 0.0
    %1874 = vmatpush2.msra.mxu0 0.0
    %1875 = vmatprep.subr.mxu0 0.0
    %1876 = vmatpush2.msra.mxu0 0.0
    %1877 = vmatprep.mubr.f32.mxu0 0.0
    %1878 = vmatmul.mubr.f32.gmra.mxu0 %v1736
    %v1879 = vpop.f32.mrf.mxu0
    %v1880 = vadd.f32 0.0, %v1879
    %v1881 = vpop.f32.mrf.mxu0
    %1882 = vdwg.mxu0
    %v1883 = vadd.f32 %v1728, %v1880
    %v1884 = vld [vmem:[%s192] sm:$0xff]
    %v1885 = vld [vmem:[%s192 + $0x8] sm:$0xff]
    %v1886 = vld [vmem:[%s192 + $0x10] sm:$0xff]
    %v1887 = vld [vmem:[%s192 + $0x18] sm:$0xff]
    %1888 = vmatprep.subr.mxu0 0.0
    %1889 = vmatpush1.msra.mxu0 0.0
    %1890 = vmatprep.subr.mxu0 0.0
    %1891 = vmatpush1.msra.mxu0 0.0
    %1892 = vmatprep.subr.mxu0 0.0
    %1893 = vmatpush1.msra.mxu0 0.0
    %1894 = vmatprep.subr.mxu0 0.0
    %1895 = vmatpush1.msra.mxu0 0.0
    %1896 = vmatprep.subr.mxu0 0.0
    %1897 = vmatpush1.msra.mxu0 0.0
    %1898 = vmatprep.subr.mxu0 0.0
    %1899 = vmatpush1.msra.mxu0 0.0
    %1900 = vmatprep.subr.mxu0 0.0
    %1901 = vmatpush1.msra.mxu0 0.0
    %1902 = vmatprep.subr.mxu0 0.0
    %1903 = vmatpush1.msra.mxu0 0.0
    %1904 = vmatprep.subr.mxu0 0.0
    %1905 = vmatpush1.msra.mxu0 0.0
    %1906 = vmatprep.subr.mxu0 0.0
    %1907 = vmatpush1.msra.mxu0 0.0
    %1908 = vmatprep.subr.mxu0 0.0
    %1909 = vmatpush1.msra.mxu0 0.0
    %1910 = vmatprep.subr.mxu0 0.0
    %1911 = vmatpush1.msra.mxu0 0.0
    %1912 = vmatprep.subr.mxu0 0.0
    %1913 = vmatpush1.msra.mxu0 %v1887
    %1914 = vmatprep.subr.mxu0 0.0
    %1915 = vmatpush1.msra.mxu0 %v1886
    %1916 = vmatprep.subr.mxu0 0.0
    %1917 = vmatpush1.msra.mxu0 %v1885
    %1918 = vmatprep.subr.mxu0 0.0
    %1919 = vmatpush1.msra.mxu0 %v1884
    %1920 = vmatprep.subr.mxu0 0.0
    %1921 = vmatpush2.msra.mxu0 0.0
    %1922 = vmatprep.subr.mxu0 0.0
    %1923 = vmatpush2.msra.mxu0 0.0
    %1924 = vmatprep.subr.mxu0 0.0
    %1925 = vmatpush2.msra.mxu0 0.0
    %1926 = vmatprep.subr.mxu0 0.0
    %1927 = vmatpush2.msra.mxu0 0.0
    %1928 = vmatprep.subr.mxu0 0.0
    %1929 = vmatpush2.msra.mxu0 0.0
    %1930 = vmatprep.subr.mxu0 0.0
    %1931 = vmatpush2.msra.mxu0 0.0
    %1932 = vmatprep.subr.mxu0 0.0
    %1933 = vmatpush2.msra.mxu0 0.0
    %1934 = vmatprep.subr.mxu0 0.0
    %1935 = vmatpush2.msra.mxu0 0.0
    %1936 = vmatprep.subr.mxu0 0.0
    %1937 = vmatpush2.msra.mxu0 0.0
    %1938 = vmatprep.subr.mxu0 0.0
    %1939 = vmatpush2.msra.mxu0 0.0
    %1940 = vmatprep.subr.mxu0 0.0
    %1941 = vmatpush2.msra.mxu0 0.0
    %1942 = vmatprep.subr.mxu0 0.0
    %1943 = vmatpush2.msra.mxu0 0.0
    %1944 = vmatprep.subr.mxu0 0.0
    %1945 = vmatpush2.msra.mxu0 0.0
    %1946 = vmatprep.subr.mxu0 0.0
    %1947 = vmatpush2.msra.mxu0 0.0
    %1948 = vmatprep.subr.mxu0 0.0
    %1949 = vmatpush2.msra.mxu0 0.0
    %1950 = vmatprep.subr.mxu0 0.0
    %1951 = vmatpush2.msra.mxu0 0.0
    %1952 = vmatprep.mubr.f32.mxu0 0.0
    %1953 = vmatmul.mubr.f32.gmra.mxu0 %v1736
    %v1954 = vpop.f32.mrf.mxu0
    %v1955 = vadd.f32 0.0, %v1954
    %v1956 = vpop.f32.mrf.mxu0
    %1957 = vdwg.mxu0
    %v1958 = vadd.f32 %v1729, %v1955
    %v1959 = vld [vmem:[%s268] sm:$0xff]
    %v1960 = vld [vmem:[%s268 + $0x8] sm:$0xff]
    %v1961 = vld [vmem:[%s268 + $0x10] sm:$0xff]
    %v1962 = vld [vmem:[%s268 + $0x18] sm:$0xff]
    %1963 = vmatprep.subr.mxu0 0.0
    %1964 = vmatpush1.msra.mxu0 0.0
    %1965 = vmatprep.subr.mxu0 0.0
    %1966 = vmatpush1.msra.mxu0 0.0
    %1967 = vmatprep.subr.mxu0 0.0
    %1968 = vmatpush1.msra.mxu0 0.0
    %1969 = vmatprep.subr.mxu0 0.0
    %1970 = vmatpush1.msra.mxu0 0.0
    %1971 = vmatprep.subr.mxu0 0.0
    %1972 = vmatpush1.msra.mxu0 0.0
    %1973 = vmatprep.subr.mxu0 0.0
    %1974 = vmatpush1.msra.mxu0 0.0
    %1975 = vmatprep.subr.mxu0 0.0
    %1976 = vmatpush1.msra.mxu0 0.0
    %1977 = vmatprep.subr.mxu0 0.0
    %1978 = vmatpush1.msra.mxu0 0.0
    %1979 = vmatprep.subr.mxu0 0.0
    %1980 = vmatpush1.msra.mxu0 0.0
    %1981 = vmatprep.subr.mxu0 0.0
    %1982 = vmatpush1.msra.mxu0 0.0
    %1983 = vmatprep.subr.mxu0 0.0
    %1984 = vmatpush1.msra.mxu0 0.0
    %1985 = vmatprep.subr.mxu0 0.0
    %1986 = vmatpush1.msra.mxu0 0.0
    %1987 = vmatprep.subr.mxu0 0.0
    %1988 = vmatpush1.msra.mxu0 %v1962
    %1989 = vmatprep.subr.mxu0 0.0
    %1990 = vmatpush1.msra.mxu0 %v1961
    %1991 = vmatprep.subr.mxu0 0.0
    %1992 = vmatpush1.msra.mxu0 %v1960
    %1993 = vmatprep.subr.mxu0 0.0
    %1994 = vmatpush1.msra.mxu0 %v1959
    %1995 = vmatprep.subr.mxu0 0.0
    %1996 = vmatpush2.msra.mxu0 0.0
    %1997 = vmatprep.subr.mxu0 0.0
    %1998 = vmatpush2.msra.mxu0 0.0
    %1999 = vmatprep.subr.mxu0 0.0
    %2000 = vmatpush2.msra.mxu0 0.0
    %2001 = vmatprep.subr.mxu0 0.0
    %2002 = vmatpush2.msra.mxu0 0.0
    %2003 = vmatprep.subr.mxu0 0.0
    %2004 = vmatpush2.msra.mxu0 0.0
    %2005 = vmatprep.subr.mxu0 0.0
    %2006 = vmatpush2.msra.mxu0 0.0
    %2007 = vmatprep.subr.mxu0 0.0
    %2008 = vmatpush2.msra.mxu0 0.0
    %2009 = vmatprep.subr.mxu0 0.0
    %2010 = vmatpush2.msra.mxu0 0.0
    %2011 = vmatprep.subr.mxu0 0.0
    %2012 = vmatpush2.msra.mxu0 0.0
    %2013 = vmatprep.subr.mxu0 0.0
    %2014 = vmatpush2.msra.mxu0 0.0
    %2015 = vmatprep.subr.mxu0 0.0
    %2016 = vmatpush2.msra.mxu0 0.0
    %2017 = vmatprep.subr.mxu0 0.0
    %2018 = vmatpush2.msra.mxu0 0.0
    %2019 = vmatprep.subr.mxu0 0.0
    %2020 = vmatpush2.msra.mxu0 0.0
    %2021 = vmatprep.subr.mxu0 0.0
    %2022 = vmatpush2.msra.mxu0 0.0
    %2023 = vmatprep.subr.mxu0 0.0
    %2024 = vmatpush2.msra.mxu0 0.0
    %2025 = vmatprep.subr.mxu0 0.0
    %2026 = vmatpush2.msra.mxu0 0.0
    %2027 = vmatprep.mubr.f32.mxu0 0.0
    %2028 = vmatmul.mubr.f32.gmra.mxu0 %v1736
    %v2029 = vpop.f32.mrf.mxu0
    %v2030 = vadd.f32 0.0, %v2029
    %v2031 = vpop.f32.mrf.mxu0
    %2032 = vdwg.mxu0
    %v2033 = vadd.f32 %v1730, %v2030
    %v2034 = vxor.u32 %v1808, 2147483648
    %v2035 = vmul.f32 %v2034, 1.442695
    %v2036 = vpow.pop %v2035
    %v2037 = vadd.f32 %v2036, 1.0
    %v2038 = vrcp.pop %v2037
    %v2039 = vmul.f32 1.0, %v2038
    %v2040 = vxor.u32 %v1883, 2147483648
    %v2041 = vmul.f32 %v2040, 1.442695
    %v2042 = vpow.pop %v2041
    %v2043 = vadd.f32 %v2042, 1.0
    %v2044 = vrcp.pop %v2043
    %v2045 = vmul.f32 1.0, %v2044
    %v2046 = vtanh.pop %v1958
    %v2047 = vxor.u32 %v2033, 2147483648
    %v2048 = vmul.f32 %v2047, 1.442695
    %v2049 = vpow.pop %v2048
    %v2050 = vadd.f32 %v2049, 1.0
    %v2051 = vrcp.pop %v2050
    %v2052 = vmul.f32 1.0, %v2051
    %v2053 = vmul.f32 %v2045, %v1725
    %v2054 = vmul.f32 %v2039, %v2046
    %v2055 = vadd.f32 %v2053, %v2054
    %v2056 = vtanh.pop %v2055
    %v2057 = vmul.f32 %v2052, %v2056
    %2058 = vst.msk [vmem:[#allocation2] sm:$0x3] %vm368, %v2057
    %2059 = vst.msk [vmem:[#allocation3] sm:$0x3] %vm368, %v2055
    %s2060 = scalar_lea.vmem %s4, 10
    %2061 = vst.msk [vmem:[%s2060] sm:$0x3] %vm368, %v2057
    %v2062 = vld [vmem:[#allocation2] sm:$0x3]
    %v2063 = vld [vmem:[#allocation3] sm:$0x3]
    %s2064 = scalar_lea.vmem %s0, 48
    %v2065 = vld [vmem:[%s2064] sm:$0x3]
    %v2066 = vld [vmem:[%s2064 + $0x2] sm:$0x3]
    %v2067 = vld [vmem:[%s2064 + $0x4] sm:$0x3]
    %v2068 = vld [vmem:[%s2064 + $0x6] sm:$0x3]
    %v2069 = vld [vmem:[%s3] sm:$0xff]
    %v2070 = vld [vmem:[%s3 + $0x8] sm:$0xff]
    %v2071 = vld [vmem:[%s3 + $0x10] sm:$0xff]
    %v2072 = vld [vmem:[%s3 + $0x18] sm:$0xff]
    %v2074 = vsel %vm41, %v2062, 0
    %2076 = vmatprep.subr.mxu0 0.0
    %2077 = vmatpush1.msra.mxu0 0.0
    %2078 = vmatprep.subr.mxu0 0.0
    %2079 = vmatpush1.msra.mxu0 0.0
    %2080 = vmatprep.subr.mxu0 0.0
    %2081 = vmatpush1.msra.mxu0 0.0
    %2082 = vmatprep.subr.mxu0 0.0
    %2083 = vmatpush1.msra.mxu0 0.0
    %2084 = vmatprep.subr.mxu0 0.0
    %2085 = vmatpush1.msra.mxu0 0.0
    %2086 = vmatprep.subr.mxu0 0.0
    %2087 = vmatpush1.msra.mxu0 0.0
    %2088 = vmatprep.subr.mxu0 0.0
    %2089 = vmatpush1.msra.mxu0 0.0
    %2090 = vmatprep.subr.mxu0 0.0
    %2091 = vmatpush1.msra.mxu0 0.0
    %2092 = vmatprep.subr.mxu0 0.0
    %2093 = vmatpush1.msra.mxu0 0.0
    %2094 = vmatprep.subr.mxu0 0.0
    %2095 = vmatpush1.msra.mxu0 0.0
    %2096 = vmatprep.subr.mxu0 0.0
    %2097 = vmatpush1.msra.mxu0 0.0
    %2098 = vmatprep.subr.mxu0 0.0
    %2099 = vmatpush1.msra.mxu0 0.0
    %2100 = vmatprep.subr.mxu0 0.0
    %2101 = vmatpush1.msra.mxu0 %v2072
    %2102 = vmatprep.subr.mxu0 0.0
    %2103 = vmatpush1.msra.mxu0 %v2071
    %2104 = vmatprep.subr.mxu0 0.0
    %2105 = vmatpush1.msra.mxu0 %v2070
    %2106 = vmatprep.subr.mxu0 0.0
    %2107 = vmatpush1.msra.mxu0 %v2069
    %2108 = vmatprep.subr.mxu0 0.0
    %2109 = vmatpush2.msra.mxu0 0.0
    %2110 = vmatprep.subr.mxu0 0.0
    %2111 = vmatpush2.msra.mxu0 0.0
    %2112 = vmatprep.subr.mxu0 0.0
    %2113 = vmatpush2.msra.mxu0 0.0
    %2114 = vmatprep.subr.mxu0 0.0
    %2115 = vmatpush2.msra.mxu0 0.0
    %2116 = vmatprep.subr.mxu0 0.0
    %2117 = vmatpush2.msra.mxu0 0.0
    %2118 = vmatprep.subr.mxu0 0.0
    %2119 = vmatpush2.msra.mxu0 0.0
    %2120 = vmatprep.subr.mxu0 0.0
    %2121 = vmatpush2.msra.mxu0 0.0
    %2122 = vmatprep.subr.mxu0 0.0
    %2123 = vmatpush2.msra.mxu0 0.0
    %2124 = vmatprep.subr.mxu0 0.0
    %2125 = vmatpush2.msra.mxu0 0.0
    %2126 = vmatprep.subr.mxu0 0.0
    %2127 = vmatpush2.msra.mxu0 0.0
    %2128 = vmatprep.subr.mxu0 0.0
    %2129 = vmatpush2.msra.mxu0 0.0
    %2130 = vmatprep.subr.mxu0 0.0
    %2131 = vmatpush2.msra.mxu0 0.0
    %2132 = vmatprep.subr.mxu0 0.0
    %2133 = vmatpush2.msra.mxu0 0.0
    %2134 = vmatprep.subr.mxu0 0.0
    %2135 = vmatpush2.msra.mxu0 0.0
    %2136 = vmatprep.subr.mxu0 0.0
    %2137 = vmatpush2.msra.mxu0 0.0
    %2138 = vmatprep.subr.mxu0 0.0
    %2139 = vmatpush2.msra.mxu0 0.0
    %2140 = vmatprep.mubr.f32.mxu0 0.0
    %2141 = vmatmul.mubr.f32.gmra.mxu0 %v2074
    %v2142 = vpop.f32.mrf.mxu0
    %v2143 = vadd.f32 0.0, %v2142
    %v2144 = vpop.f32.mrf.mxu0
    %2145 = vdwg.mxu0
    %v2146 = vadd.f32 %v2065, %v2143
    %v2147 = vld [vmem:[%s116] sm:$0xff]
    %v2148 = vld [vmem:[%s116 + $0x8] sm:$0xff]
    %v2149 = vld [vmem:[%s116 + $0x10] sm:$0xff]
    %v2150 = vld [vmem:[%s116 + $0x18] sm:$0xff]
    %2151 = vmatprep.subr.mxu0 0.0
    %2152 = vmatpush1.msra.mxu0 0.0
    %2153 = vmatprep.subr.mxu0 0.0
    %2154 = vmatpush1.msra.mxu0 0.0
    %2155 = vmatprep.subr.mxu0 0.0
    %2156 = vmatpush1.msra.mxu0 0.0
    %2157 = vmatprep.subr.mxu0 0.0
    %2158 = vmatpush1.msra.mxu0 0.0
    %2159 = vmatprep.subr.mxu0 0.0
    %2160 = vmatpush1.msra.mxu0 0.0
    %2161 = vmatprep.subr.mxu0 0.0
    %2162 = vmatpush1.msra.mxu0 0.0
    %2163 = vmatprep.subr.mxu0 0.0
    %2164 = vmatpush1.msra.mxu0 0.0
    %2165 = vmatprep.subr.mxu0 0.0
    %2166 = vmatpush1.msra.mxu0 0.0
    %2167 = vmatprep.subr.mxu0 0.0
    %2168 = vmatpush1.msra.mxu0 0.0
    %2169 = vmatprep.subr.mxu0 0.0
    %2170 = vmatpush1.msra.mxu0 0.0
    %2171 = vmatprep.subr.mxu0 0.0
    %2172 = vmatpush1.msra.mxu0 0.0
    %2173 = vmatprep.subr.mxu0 0.0
    %2174 = vmatpush1.msra.mxu0 0.0
    %2175 = vmatprep.subr.mxu0 0.0
    %2176 = vmatpush1.msra.mxu0 %v2150
    %2177 = vmatprep.subr.mxu0 0.0
    %2178 = vmatpush1.msra.mxu0 %v2149
    %2179 = vmatprep.subr.mxu0 0.0
    %2180 = vmatpush1.msra.mxu0 %v2148
    %2181 = vmatprep.subr.mxu0 0.0
    %2182 = vmatpush1.msra.mxu0 %v2147
    %2183 = vmatprep.subr.mxu0 0.0
    %2184 = vmatpush2.msra.mxu0 0.0
    %2185 = vmatprep.subr.mxu0 0.0
    %2186 = vmatpush2.msra.mxu0 0.0
    %2187 = vmatprep.subr.mxu0 0.0
    %2188 = vmatpush2.msra.mxu0 0.0
    %2189 = vmatprep.subr.mxu0 0.0
    %2190 = vmatpush2.msra.mxu0 0.0
    %2191 = vmatprep.subr.mxu0 0.0
    %2192 = vmatpush2.msra.mxu0 0.0
    %2193 = vmatprep.subr.mxu0 0.0
    %2194 = vmatpush2.msra.mxu0 0.0
    %2195 = vmatprep.subr.mxu0 0.0
    %2196 = vmatpush2.msra.mxu0 0.0
    %2197 = vmatprep.subr.mxu0 0.0
    %2198 = vmatpush2.msra.mxu0 0.0
    %2199 = vmatprep.subr.mxu0 0.0
    %2200 = vmatpush2.msra.mxu0 0.0
    %2201 = vmatprep.subr.mxu0 0.0
    %2202 = vmatpush2.msra.mxu0 0.0
    %2203 = vmatprep.subr.mxu0 0.0
    %2204 = vmatpush2.msra.mxu0 0.0
    %2205 = vmatprep.subr.mxu0 0.0
    %2206 = vmatpush2.msra.mxu0 0.0
    %2207 = vmatprep.subr.mxu0 0.0
    %2208 = vmatpush2.msra.mxu0 0.0
    %2209 = vmatprep.subr.mxu0 0.0
    %2210 = vmatpush2.msra.mxu0 0.0
    %2211 = vmatprep.subr.mxu0 0.0
    %2212 = vmatpush2.msra.mxu0 0.0
    %2213 = vmatprep.subr.mxu0 0.0
    %2214 = vmatpush2.msra.mxu0 0.0
    %2215 = vmatprep.mubr.f32.mxu0 0.0
    %2216 = vmatmul.mubr.f32.gmra.mxu0 %v2074
    %v2217 = vpop.f32.mrf.mxu0
    %v2218 = vadd.f32 0.0, %v2217
    %v2219 = vpop.f32.mrf.mxu0
    %2220 = vdwg.mxu0
    %v2221 = vadd.f32 %v2066, %v2218
    %v2222 = vld [vmem:[%s192] sm:$0xff]
    %v2223 = vld [vmem:[%s192 + $0x8] sm:$0xff]
    %v2224 = vld [vmem:[%s192 + $0x10] sm:$0xff]
    %v2225 = vld [vmem:[%s192 + $0x18] sm:$0xff]
    %2226 = vmatprep.subr.mxu0 0.0
    %2227 = vmatpush1.msra.mxu0 0.0
    %2228 = vmatprep.subr.mxu0 0.0
    %2229 = vmatpush1.msra.mxu0 0.0
    %2230 = vmatprep.subr.mxu0 0.0
    %2231 = vmatpush1.msra.mxu0 0.0
    %2232 = vmatprep.subr.mxu0 0.0
    %2233 = vmatpush1.msra.mxu0 0.0
    %2234 = vmatprep.subr.mxu0 0.0
    %2235 = vmatpush1.msra.mxu0 0.0
    %2236 = vmatprep.subr.mxu0 0.0
    %2237 = vmatpush1.msra.mxu0 0.0
    %2238 = vmatprep.subr.mxu0 0.0
    %2239 = vmatpush1.msra.mxu0 0.0
    %2240 = vmatprep.subr.mxu0 0.0
    %2241 = vmatpush1.msra.mxu0 0.0
    %2242 = vmatprep.subr.mxu0 0.0
    %2243 = vmatpush1.msra.mxu0 0.0
    %2244 = vmatprep.subr.mxu0 0.0
    %2245 = vmatpush1.msra.mxu0 0.0
    %2246 = vmatprep.subr.mxu0 0.0
    %2247 = vmatpush1.msra.mxu0 0.0
    %2248 = vmatprep.subr.mxu0 0.0
    %2249 = vmatpush1.msra.mxu0 0.0
    %2250 = vmatprep.subr.mxu0 0.0
    %2251 = vmatpush1.msra.mxu0 %v2225
    %2252 = vmatprep.subr.mxu0 0.0
    %2253 = vmatpush1.msra.mxu0 %v2224
    %2254 = vmatprep.subr.mxu0 0.0
    %2255 = vmatpush1.msra.mxu0 %v2223
    %2256 = vmatprep.subr.mxu0 0.0
    %2257 = vmatpush1.msra.mxu0 %v2222
    %2258 = vmatprep.subr.mxu0 0.0
    %2259 = vmatpush2.msra.mxu0 0.0
    %2260 = vmatprep.subr.mxu0 0.0
    %2261 = vmatpush2.msra.mxu0 0.0
    %2262 = vmatprep.subr.mxu0 0.0
    %2263 = vmatpush2.msra.mxu0 0.0
    %2264 = vmatprep.subr.mxu0 0.0
    %2265 = vmatpush2.msra.mxu0 0.0
    %2266 = vmatprep.subr.mxu0 0.0
    %2267 = vmatpush2.msra.mxu0 0.0
    %2268 = vmatprep.subr.mxu0 0.0
    %2269 = vmatpush2.msra.mxu0 0.0
    %2270 = vmatprep.subr.mxu0 0.0
    %2271 = vmatpush2.msra.mxu0 0.0
    %2272 = vmatprep.subr.mxu0 0.0
    %2273 = vmatpush2.msra.mxu0 0.0
    %2274 = vmatprep.subr.mxu0 0.0
    %2275 = vmatpush2.msra.mxu0 0.0
    %2276 = vmatprep.subr.mxu0 0.0
    %2277 = vmatpush2.msra.mxu0 0.0
    %2278 = vmatprep.subr.mxu0 0.0
    %2279 = vmatpush2.msra.mxu0 0.0
    %2280 = vmatprep.subr.mxu0 0.0
    %2281 = vmatpush2.msra.mxu0 0.0
    %2282 = vmatprep.subr.mxu0 0.0
    %2283 = vmatpush2.msra.mxu0 0.0
    %2284 = vmatprep.subr.mxu0 0.0
    %2285 = vmatpush2.msra.mxu0 0.0
    %2286 = vmatprep.subr.mxu0 0.0
    %2287 = vmatpush2.msra.mxu0 0.0
    %2288 = vmatprep.subr.mxu0 0.0
    %2289 = vmatpush2.msra.mxu0 0.0
    %2290 = vmatprep.mubr.f32.mxu0 0.0
    %2291 = vmatmul.mubr.f32.gmra.mxu0 %v2074
    %v2292 = vpop.f32.mrf.mxu0
    %v2293 = vadd.f32 0.0, %v2292
    %v2294 = vpop.f32.mrf.mxu0
    %2295 = vdwg.mxu0
    %v2296 = vadd.f32 %v2067, %v2293
    %v2297 = vld [vmem:[%s268] sm:$0xff]
    %v2298 = vld [vmem:[%s268 + $0x8] sm:$0xff]
    %v2299 = vld [vmem:[%s268 + $0x10] sm:$0xff]
    %v2300 = vld [vmem:[%s268 + $0x18] sm:$0xff]
    %2301 = vmatprep.subr.mxu0 0.0
    %2302 = vmatpush1.msra.mxu0 0.0
    %2303 = vmatprep.subr.mxu0 0.0
    %2304 = vmatpush1.msra.mxu0 0.0
    %2305 = vmatprep.subr.mxu0 0.0
    %2306 = vmatpush1.msra.mxu0 0.0
    %2307 = vmatprep.subr.mxu0 0.0
    %2308 = vmatpush1.msra.mxu0 0.0
    %2309 = vmatprep.subr.mxu0 0.0
    %2310 = vmatpush1.msra.mxu0 0.0
    %2311 = vmatprep.subr.mxu0 0.0
    %2312 = vmatpush1.msra.mxu0 0.0
    %2313 = vmatprep.subr.mxu0 0.0
    %2314 = vmatpush1.msra.mxu0 0.0
    %2315 = vmatprep.subr.mxu0 0.0
    %2316 = vmatpush1.msra.mxu0 0.0
    %2317 = vmatprep.subr.mxu0 0.0
    %2318 = vmatpush1.msra.mxu0 0.0
    %2319 = vmatprep.subr.mxu0 0.0
    %2320 = vmatpush1.msra.mxu0 0.0
    %2321 = vmatprep.subr.mxu0 0.0
    %2322 = vmatpush1.msra.mxu0 0.0
    %2323 = vmatprep.subr.mxu0 0.0
    %2324 = vmatpush1.msra.mxu0 0.0
    %2325 = vmatprep.subr.mxu0 0.0
    %2326 = vmatpush1.msra.mxu0 %v2300
    %2327 = vmatprep.subr.mxu0 0.0
    %2328 = vmatpush1.msra.mxu0 %v2299
    %2329 = vmatprep.subr.mxu0 0.0
    %2330 = vmatpush1.msra.mxu0 %v2298
    %2331 = vmatprep.subr.mxu0 0.0
    %2332 = vmatpush1.msra.mxu0 %v2297
    %2333 = vmatprep.subr.mxu0 0.0
    %2334 = vmatpush2.msra.mxu0 0.0
    %2335 = vmatprep.subr.mxu0 0.0
    %2336 = vmatpush2.msra.mxu0 0.0
    %2337 = vmatprep.subr.mxu0 0.0
    %2338 = vmatpush2.msra.mxu0 0.0
    %2339 = vmatprep.subr.mxu0 0.0
    %2340 = vmatpush2.msra.mxu0 0.0
    %2341 = vmatprep.subr.mxu0 0.0
    %2342 = vmatpush2.msra.mxu0 0.0
    %2343 = vmatprep.subr.mxu0 0.0
    %2344 = vmatpush2.msra.mxu0 0.0
    %2345 = vmatprep.subr.mxu0 0.0
    %2346 = vmatpush2.msra.mxu0 0.0
    %2347 = vmatprep.subr.mxu0 0.0
    %2348 = vmatpush2.msra.mxu0 0.0
    %2349 = vmatprep.subr.mxu0 0.0
    %2350 = vmatpush2.msra.mxu0 0.0
    %2351 = vmatprep.subr.mxu0 0.0
    %2352 = vmatpush2.msra.mxu0 0.0
    %2353 = vmatprep.subr.mxu0 0.0
    %2354 = vmatpush2.msra.mxu0 0.0
    %2355 = vmatprep.subr.mxu0 0.0
    %2356 = vmatpush2.msra.mxu0 0.0
    %2357 = vmatprep.subr.mxu0 0.0
    %2358 = vmatpush2.msra.mxu0 0.0
    %2359 = vmatprep.subr.mxu0 0.0
    %2360 = vmatpush2.msra.mxu0 0.0
    %2361 = vmatprep.subr.mxu0 0.0
    %2362 = vmatpush2.msra.mxu0 0.0
    %2363 = vmatprep.subr.mxu0 0.0
    %2364 = vmatpush2.msra.mxu0 0.0
    %2365 = vmatprep.mubr.f32.mxu0 0.0
    %2366 = vmatmul.mubr.f32.gmra.mxu0 %v2074
    %v2367 = vpop.f32.mrf.mxu0
    %v2368 = vadd.f32 0.0, %v2367
    %v2369 = vpop.f32.mrf.mxu0
    %2370 = vdwg.mxu0
    %v2371 = vadd.f32 %v2068, %v2368
    %v2372 = vxor.u32 %v2146, 2147483648
    %v2373 = vmul.f32 %v2372, 1.442695
    %v2374 = vpow.pop %v2373
    %v2375 = vadd.f32 %v2374, 1.0
    %v2376 = vrcp.pop %v2375
    %v2377 = vmul.f32 1.0, %v2376
    %v2378 = vxor.u32 %v2221, 2147483648
    %v2379 = vmul.f32 %v2378, 1.442695
    %v2380 = vpow.pop %v2379
    %v2381 = vadd.f32 %v2380, 1.0
    %v2382 = vrcp.pop %v2381
    %v2383 = vmul.f32 1.0, %v2382
    %v2384 = vtanh.pop %v2296
    %v2385 = vxor.u32 %v2371, 2147483648
    %v2386 = vmul.f32 %v2385, 1.442695
    %v2387 = vpow.pop %v2386
    %v2388 = vadd.f32 %v2387, 1.0
    %v2389 = vrcp.pop %v2388
    %v2390 = vmul.f32 1.0, %v2389
    %v2391 = vmul.f32 %v2383, %v2063
    %v2392 = vmul.f32 %v2377, %v2384
    %v2393 = vadd.f32 %v2391, %v2392
    %v2394 = vtanh.pop %v2393
    %v2395 = vmul.f32 %v2390, %v2394
    %2396 = vst.msk [vmem:[#allocation2] sm:$0x3] %vm368, %v2395
    %2397 = vst.msk [vmem:[#allocation3] sm:$0x3] %vm368, %v2393
    %s2398 = scalar_lea.vmem %s4, 12
    %2399 = vst.msk [vmem:[%s2398] sm:$0x3] %vm368, %v2395
    %v2400 = vld [vmem:[#allocation2] sm:$0x3]
    %v2401 = vld [vmem:[#allocation3] sm:$0x3]
    %s2402 = scalar_lea.vmem %s0, 56
    %v2403 = vld [vmem:[%s2402] sm:$0x3]
    %v2404 = vld [vmem:[%s2402 + $0x2] sm:$0x3]
    %v2405 = vld [vmem:[%s2402 + $0x4] sm:$0x3]
    %v2406 = vld [vmem:[%s2402 + $0x6] sm:$0x3]
    %v2407 = vld [vmem:[%s3] sm:$0xff]
    %v2408 = vld [vmem:[%s3 + $0x8] sm:$0xff]
    %v2409 = vld [vmem:[%s3 + $0x10] sm:$0xff]
    %v2410 = vld [vmem:[%s3 + $0x18] sm:$0xff]
    %v2412 = vsel %vm41, %v2400, 0
    %2414 = vmatprep.subr.mxu0 0.0
    %2415 = vmatpush1.msra.mxu0 0.0
    %2416 = vmatprep.subr.mxu0 0.0
    %2417 = vmatpush1.msra.mxu0 0.0
    %2418 = vmatprep.subr.mxu0 0.0
    %2419 = vmatpush1.msra.mxu0 0.0
    %2420 = vmatprep.subr.mxu0 0.0
    %2421 = vmatpush1.msra.mxu0 0.0
    %2422 = vmatprep.subr.mxu0 0.0
    %2423 = vmatpush1.msra.mxu0 0.0
    %2424 = vmatprep.subr.mxu0 0.0
    %2425 = vmatpush1.msra.mxu0 0.0
    %2426 = vmatprep.subr.mxu0 0.0
    %2427 = vmatpush1.msra.mxu0 0.0
    %2428 = vmatprep.subr.mxu0 0.0
    %2429 = vmatpush1.msra.mxu0 0.0
    %2430 = vmatprep.subr.mxu0 0.0
    %2431 = vmatpush1.msra.mxu0 0.0
    %2432 = vmatprep.subr.mxu0 0.0
    %2433 = vmatpush1.msra.mxu0 0.0
    %2434 = vmatprep.subr.mxu0 0.0
    %2435 = vmatpush1.msra.mxu0 0.0
    %2436 = vmatprep.subr.mxu0 0.0
    %2437 = vmatpush1.msra.mxu0 0.0
    %2438 = vmatprep.subr.mxu0 0.0
    %2439 = vmatpush1.msra.mxu0 %v2410
    %2440 = vmatprep.subr.mxu0 0.0
    %2441 = vmatpush1.msra.mxu0 %v2409
    %2442 = vmatprep.subr.mxu0 0.0
    %2443 = vmatpush1.msra.mxu0 %v2408
    %2444 = vmatprep.subr.mxu0 0.0
    %2445 = vmatpush1.msra.mxu0 %v2407
    %2446 = vmatprep.subr.mxu0 0.0
    %2447 = vmatpush2.msra.mxu0 0.0
    %2448 = vmatprep.subr.mxu0 0.0
    %2449 = vmatpush2.msra.mxu0 0.0
    %2450 = vmatprep.subr.mxu0 0.0
    %2451 = vmatpush2.msra.mxu0 0.0
    %2452 = vmatprep.subr.mxu0 0.0
    %2453 = vmatpush2.msra.mxu0 0.0
    %2454 = vmatprep.subr.mxu0 0.0
    %2455 = vmatpush2.msra.mxu0 0.0
    %2456 = vmatprep.subr.mxu0 0.0
    %2457 = vmatpush2.msra.mxu0 0.0
    %2458 = vmatprep.subr.mxu0 0.0
    %2459 = vmatpush2.msra.mxu0 0.0
    %2460 = vmatprep.subr.mxu0 0.0
    %2461 = vmatpush2.msra.mxu0 0.0
    %2462 = vmatprep.subr.mxu0 0.0
    %2463 = vmatpush2.msra.mxu0 0.0
    %2464 = vmatprep.subr.mxu0 0.0
    %2465 = vmatpush2.msra.mxu0 0.0
    %2466 = vmatprep.subr.mxu0 0.0
    %2467 = vmatpush2.msra.mxu0 0.0
    %2468 = vmatprep.subr.mxu0 0.0
    %2469 = vmatpush2.msra.mxu0 0.0
    %2470 = vmatprep.subr.mxu0 0.0
    %2471 = vmatpush2.msra.mxu0 0.0
    %2472 = vmatprep.subr.mxu0 0.0
    %2473 = vmatpush2.msra.mxu0 0.0
    %2474 = vmatprep.subr.mxu0 0.0
    %2475 = vmatpush2.msra.mxu0 0.0
    %2476 = vmatprep.subr.mxu0 0.0
    %2477 = vmatpush2.msra.mxu0 0.0
    %2478 = vmatprep.mubr.f32.mxu0 0.0
    %2479 = vmatmul.mubr.f32.gmra.mxu0 %v2412
    %v2480 = vpop.f32.mrf.mxu0
    %v2481 = vadd.f32 0.0, %v2480
    %v2482 = vpop.f32.mrf.mxu0
    %2483 = vdwg.mxu0
    %v2484 = vadd.f32 %v2403, %v2481
    %v2485 = vld [vmem:[%s116] sm:$0xff]
    %v2486 = vld [vmem:[%s116 + $0x8] sm:$0xff]
    %v2487 = vld [vmem:[%s116 + $0x10] sm:$0xff]
    %v2488 = vld [vmem:[%s116 + $0x18] sm:$0xff]
    %2489 = vmatprep.subr.mxu0 0.0
    %2490 = vmatpush1.msra.mxu0 0.0
    %2491 = vmatprep.subr.mxu0 0.0
    %2492 = vmatpush1.msra.mxu0 0.0
    %2493 = vmatprep.subr.mxu0 0.0
    %2494 = vmatpush1.msra.mxu0 0.0
    %2495 = vmatprep.subr.mxu0 0.0
    %2496 = vmatpush1.msra.mxu0 0.0
    %2497 = vmatprep.subr.mxu0 0.0
    %2498 = vmatpush1.msra.mxu0 0.0
    %2499 = vmatprep.subr.mxu0 0.0
    %2500 = vmatpush1.msra.mxu0 0.0
    %2501 = vmatprep.subr.mxu0 0.0
    %2502 = vmatpush1.msra.mxu0 0.0
    %2503 = vmatprep.subr.mxu0 0.0
    %2504 = vmatpush1.msra.mxu0 0.0
    %2505 = vmatprep.subr.mxu0 0.0
    %2506 = vmatpush1.msra.mxu0 0.0
    %2507 = vmatprep.subr.mxu0 0.0
    %2508 = vmatpush1.msra.mxu0 0.0
    %2509 = vmatprep.subr.mxu0 0.0
    %2510 = vmatpush1.msra.mxu0 0.0
    %2511 = vmatprep.subr.mxu0 0.0
    %2512 = vmatpush1.msra.mxu0 0.0
    %2513 = vmatprep.subr.mxu0 0.0
    %2514 = vmatpush1.msra.mxu0 %v2488
    %2515 = vmatprep.subr.mxu0 0.0
    %2516 = vmatpush1.msra.mxu0 %v2487
    %2517 = vmatprep.subr.mxu0 0.0
    %2518 = vmatpush1.msra.mxu0 %v2486
    %2519 = vmatprep.subr.mxu0 0.0
    %2520 = vmatpush1.msra.mxu0 %v2485
    %2521 = vmatprep.subr.mxu0 0.0
    %2522 = vmatpush2.msra.mxu0 0.0
    %2523 = vmatprep.subr.mxu0 0.0
    %2524 = vmatpush2.msra.mxu0 0.0
    %2525 = vmatprep.subr.mxu0 0.0
    %2526 = vmatpush2.msra.mxu0 0.0
    %2527 = vmatprep.subr.mxu0 0.0
    %2528 = vmatpush2.msra.mxu0 0.0
    %2529 = vmatprep.subr.mxu0 0.0
    %2530 = vmatpush2.msra.mxu0 0.0
    %2531 = vmatprep.subr.mxu0 0.0
    %2532 = vmatpush2.msra.mxu0 0.0
    %2533 = vmatprep.subr.mxu0 0.0
    %2534 = vmatpush2.msra.mxu0 0.0
    %2535 = vmatprep.subr.mxu0 0.0
    %2536 = vmatpush2.msra.mxu0 0.0
    %2537 = vmatprep.subr.mxu0 0.0
    %2538 = vmatpush2.msra.mxu0 0.0
    %2539 = vmatprep.subr.mxu0 0.0
    %2540 = vmatpush2.msra.mxu0 0.0
    %2541 = vmatprep.subr.mxu0 0.0
    %2542 = vmatpush2.msra.mxu0 0.0
    %2543 = vmatprep.subr.mxu0 0.0
    %2544 = vmatpush2.msra.mxu0 0.0
    %2545 = vmatprep.subr.mxu0 0.0
    %2546 = vmatpush2.msra.mxu0 0.0
    %2547 = vmatprep.subr.mxu0 0.0
    %2548 = vmatpush2.msra.mxu0 0.0
    %2549 = vmatprep.subr.mxu0 0.0
    %2550 = vmatpush2.msra.mxu0 0.0
    %2551 = vmatprep.subr.mxu0 0.0
    %2552 = vmatpush2.msra.mxu0 0.0
    %2553 = vmatprep.mubr.f32.mxu0 0.0
    %2554 = vmatmul.mubr.f32.gmra.mxu0 %v2412
    %v2555 = vpop.f32.mrf.mxu0
    %v2556 = vadd.f32 0.0, %v2555
    %v2557 = vpop.f32.mrf.mxu0
    %2558 = vdwg.mxu0
    %v2559 = vadd.f32 %v2404, %v2556
    %v2560 = vld [vmem:[%s192] sm:$0xff]
    %v2561 = vld [vmem:[%s192 + $0x8] sm:$0xff]
    %v2562 = vld [vmem:[%s192 + $0x10] sm:$0xff]
    %v2563 = vld [vmem:[%s192 + $0x18] sm:$0xff]
    %2564 = vmatprep.subr.mxu0 0.0
    %2565 = vmatpush1.msra.mxu0 0.0
    %2566 = vmatprep.subr.mxu0 0.0
    %2567 = vmatpush1.msra.mxu0 0.0
    %2568 = vmatprep.subr.mxu0 0.0
    %2569 = vmatpush1.msra.mxu0 0.0
    %2570 = vmatprep.subr.mxu0 0.0
    %2571 = vmatpush1.msra.mxu0 0.0
    %2572 = vmatprep.subr.mxu0 0.0
    %2573 = vmatpush1.msra.mxu0 0.0
    %2574 = vmatprep.subr.mxu0 0.0
    %2575 = vmatpush1.msra.mxu0 0.0
    %2576 = vmatprep.subr.mxu0 0.0
    %2577 = vmatpush1.msra.mxu0 0.0
    %2578 = vmatprep.subr.mxu0 0.0
    %2579 = vmatpush1.msra.mxu0 0.0
    %2580 = vmatprep.subr.mxu0 0.0
    %2581 = vmatpush1.msra.mxu0 0.0
    %2582 = vmatprep.subr.mxu0 0.0
    %2583 = vmatpush1.msra.mxu0 0.0
    %2584 = vmatprep.subr.mxu0 0.0
    %2585 = vmatpush1.msra.mxu0 0.0
    %2586 = vmatprep.subr.mxu0 0.0
    %2587 = vmatpush1.msra.mxu0 0.0
    %2588 = vmatprep.subr.mxu0 0.0
    %2589 = vmatpush1.msra.mxu0 %v2563
    %2590 = vmatprep.subr.mxu0 0.0
    %2591 = vmatpush1.msra.mxu0 %v2562
    %2592 = vmatprep.subr.mxu0 0.0
    %2593 = vmatpush1.msra.mxu0 %v2561
    %2594 = vmatprep.subr.mxu0 0.0
    %2595 = vmatpush1.msra.mxu0 %v2560
    %2596 = vmatprep.subr.mxu0 0.0
    %2597 = vmatpush2.msra.mxu0 0.0
    %2598 = vmatprep.subr.mxu0 0.0
    %2599 = vmatpush2.msra.mxu0 0.0
    %2600 = vmatprep.subr.mxu0 0.0
    %2601 = vmatpush2.msra.mxu0 0.0
    %2602 = vmatprep.subr.mxu0 0.0
    %2603 = vmatpush2.msra.mxu0 0.0
    %2604 = vmatprep.subr.mxu0 0.0
    %2605 = vmatpush2.msra.mxu0 0.0
    %2606 = vmatprep.subr.mxu0 0.0
    %2607 = vmatpush2.msra.mxu0 0.0
    %2608 = vmatprep.subr.mxu0 0.0
    %2609 = vmatpush2.msra.mxu0 0.0
    %2610 = vmatprep.subr.mxu0 0.0
    %2611 = vmatpush2.msra.mxu0 0.0
    %2612 = vmatprep.subr.mxu0 0.0
    %2613 = vmatpush2.msra.mxu0 0.0
    %2614 = vmatprep.subr.mxu0 0.0
    %2615 = vmatpush2.msra.mxu0 0.0
    %2616 = vmatprep.subr.mxu0 0.0
    %2617 = vmatpush2.msra.mxu0 0.0
    %2618 = vmatprep.subr.mxu0 0.0
    %2619 = vmatpush2.msra.mxu0 0.0
    %2620 = vmatprep.subr.mxu0 0.0
    %2621 = vmatpush2.msra.mxu0 0.0
    %2622 = vmatprep.subr.mxu0 0.0
    %2623 = vmatpush2.msra.mxu0 0.0
    %2624 = vmatprep.subr.mxu0 0.0
    %2625 = vmatpush2.msra.mxu0 0.0
    %2626 = vmatprep.subr.mxu0 0.0
    %2627 = vmatpush2.msra.mxu0 0.0
    %2628 = vmatprep.mubr.f32.mxu0 0.0
    %2629 = vmatmul.mubr.f32.gmra.mxu0 %v2412
    %v2630 = vpop.f32.mrf.mxu0
    %v2631 = vadd.f32 0.0, %v2630
    %v2632 = vpop.f32.mrf.mxu0
    %2633 = vdwg.mxu0
    %v2634 = vadd.f32 %v2405, %v2631
    %v2635 = vld [vmem:[%s268] sm:$0xff]
    %v2636 = vld [vmem:[%s268 + $0x8] sm:$0xff]
    %v2637 = vld [vmem:[%s268 + $0x10] sm:$0xff]
    %v2638 = vld [vmem:[%s268 + $0x18] sm:$0xff]
    %2639 = vmatprep.subr.mxu0 0.0
    %2640 = vmatpush1.msra.mxu0 0.0
    %2641 = vmatprep.subr.mxu0 0.0
    %2642 = vmatpush1.msra.mxu0 0.0
    %2643 = vmatprep.subr.mxu0 0.0
    %2644 = vmatpush1.msra.mxu0 0.0
    %2645 = vmatprep.subr.mxu0 0.0
    %2646 = vmatpush1.msra.mxu0 0.0
    %2647 = vmatprep.subr.mxu0 0.0
    %2648 = vmatpush1.msra.mxu0 0.0
    %2649 = vmatprep.subr.mxu0 0.0
    %2650 = vmatpush1.msra.mxu0 0.0
    %2651 = vmatprep.subr.mxu0 0.0
    %2652 = vmatpush1.msra.mxu0 0.0
    %2653 = vmatprep.subr.mxu0 0.0
    %2654 = vmatpush1.msra.mxu0 0.0
    %2655 = vmatprep.subr.mxu0 0.0
    %2656 = vmatpush1.msra.mxu0 0.0
    %2657 = vmatprep.subr.mxu0 0.0
    %2658 = vmatpush1.msra.mxu0 0.0
    %2659 = vmatprep.subr.mxu0 0.0
    %2660 = vmatpush1.msra.mxu0 0.0
    %2661 = vmatprep.subr.mxu0 0.0
    %2662 = vmatpush1.msra.mxu0 0.0
    %2663 = vmatprep.subr.mxu0 0.0
    %2664 = vmatpush1.msra.mxu0 %v2638
    %2665 = vmatprep.subr.mxu0 0.0
    %2666 = vmatpush1.msra.mxu0 %v2637
    %2667 = vmatprep.subr.mxu0 0.0
    %2668 = vmatpush1.msra.mxu0 %v2636
    %2669 = vmatprep.subr.mxu0 0.0
    %2670 = vmatpush1.msra.mxu0 %v2635
    %2671 = vmatprep.subr.mxu0 0.0
    %2672 = vmatpush2.msra.mxu0 0.0
    %2673 = vmatprep.subr.mxu0 0.0
    %2674 = vmatpush2.msra.mxu0 0.0
    %2675 = vmatprep.subr.mxu0 0.0
    %2676 = vmatpush2.msra.mxu0 0.0
    %2677 = vmatprep.subr.mxu0 0.0
    %2678 = vmatpush2.msra.mxu0 0.0
    %2679 = vmatprep.subr.mxu0 0.0
    %2680 = vmatpush2.msra.mxu0 0.0
    %2681 = vmatprep.subr.mxu0 0.0
    %2682 = vmatpush2.msra.mxu0 0.0
    %2683 = vmatprep.subr.mxu0 0.0
    %2684 = vmatpush2.msra.mxu0 0.0
    %2685 = vmatprep.subr.mxu0 0.0
    %2686 = vmatpush2.msra.mxu0 0.0
    %2687 = vmatprep.subr.mxu0 0.0
    %2688 = vmatpush2.msra.mxu0 0.0
    %2689 = vmatprep.subr.mxu0 0.0
    %2690 = vmatpush2.msra.mxu0 0.0
    %2691 = vmatprep.subr.mxu0 0.0
    %2692 = vmatpush2.msra.mxu0 0.0
    %2693 = vmatprep.subr.mxu0 0.0
    %2694 = vmatpush2.msra.mxu0 0.0
    %2695 = vmatprep.subr.mxu0 0.0
    %2696 = vmatpush2.msra.mxu0 0.0
    %2697 = vmatprep.subr.mxu0 0.0
    %2698 = vmatpush2.msra.mxu0 0.0
    %2699 = vmatprep.subr.mxu0 0.0
    %2700 = vmatpush2.msra.mxu0 0.0
    %2701 = vmatprep.subr.mxu0 0.0
    %2702 = vmatpush2.msra.mxu0 0.0
    %2703 = vmatprep.mubr.f32.mxu0 0.0
    %2704 = vmatmul.mubr.f32.gmra.mxu0 %v2412
    %v2705 = vpop.f32.mrf.mxu0
    %v2706 = vadd.f32 0.0, %v2705
    %v2707 = vpop.f32.mrf.mxu0
    %2708 = vdwg.mxu0
    %v2709 = vadd.f32 %v2406, %v2706
    %v2710 = vxor.u32 %v2484, 2147483648
    %v2711 = vmul.f32 %v2710, 1.442695
    %v2712 = vpow.pop %v2711
    %v2713 = vadd.f32 %v2712, 1.0
    %v2714 = vrcp.pop %v2713
    %v2715 = vmul.f32 1.0, %v2714
    %v2716 = vxor.u32 %v2559, 2147483648
    %v2717 = vmul.f32 %v2716, 1.442695
    %v2718 = vpow.pop %v2717
    %v2719 = vadd.f32 %v2718, 1.0
    %v2720 = vrcp.pop %v2719
    %v2721 = vmul.f32 1.0, %v2720
    %v2722 = vtanh.pop %v2634
    %v2723 = vxor.u32 %v2709, 2147483648
    %v2724 = vmul.f32 %v2723, 1.442695
    %v2725 = vpow.pop %v2724
    %v2726 = vadd.f32 %v2725, 1.0
    %v2727 = vrcp.pop %v2726
    %v2728 = vmul.f32 1.0, %v2727
    %v2729 = vmul.f32 %v2721, %v2401
    %v2730 = vmul.f32 %v2715, %v2722
    %v2731 = vadd.f32 %v2729, %v2730
    %v2732 = vtanh.pop %v2731
    %v2733 = vmul.f32 %v2728, %v2732
    %2734 = vst.msk [vmem:[#allocation2] sm:$0x3] %vm368, %v2733
    %2735 = vst.msk [vmem:[#allocation3] sm:$0x3] %vm368, %v2731
    %s2736 = scalar_lea.vmem %s4, 14
    %2737 = vst.msk [vmem:[%s2736] sm:$0x3] %vm368, %v2733
    %v2738 = vld [vmem:[#allocation2] sm:$0x3]
    %2739 = vst.msk [vmem:[#allocation4] sm:$0x3] %vm368, %v2738
    %v2740 = vld [vmem:[#allocation3] sm:$0x3]
    %2741 = vst.msk [vmem:[#allocation6] sm:$0x3] %vm368, %v2740
    // Predicated region
    $region22: #{seq2seq_forward.8} parent=1 // pred_check
      _
    $region23: #{seq2seq_forward.8} parent=1 // pred_check_branch
      %2743 = sbr.rel (0) target = $region25
    $region24: #{seq2seq_forward.8} parent=1 // pred_region
      _
    $region25: #{seq2seq_forward.8} parent=1 // pred_fallthru
      _
    // Predicated region
    $region26: #{seq2seq_forward.8} parent=1 // pred_check
      _
    $region27: #{seq2seq_forward.8} parent=1 // pred_check_branch
      %2745 = sbr.rel (0) target = $region29
    $region28: #{seq2seq_forward.8} parent=1 // pred_region
      %s2747 = ssub.s32 32, 32
      %2748 = vsyncadd [#allocation5], %s2747
      %s2750 = sshll.u32 [#allocation4], 4
      %s2751 = int_to_ptr.vmem [resolvable:$true] %s2750
      %2753 = dma.vmem_to_hbm [thread:$0]  %s2751, 32, %s5, [#allocation5]
    $region29: #{seq2seq_forward.8} parent=1 // pred_fallthru
      _
    // Predicated region
    $region30: #{seq2seq_forward.8} parent=1 // pred_check
      _
    $region31: #{seq2seq_forward.8} parent=1 // pred_check_branch
      %2755 = sbr.rel (0) target = $region33
    $region32: #{seq2seq_forward.8} parent=1 // pred_region
      %s2757 = ssub.s32 32, 32
      %2758 = vsyncadd [#allocation7], %s2757
      %s2760 = sshll.u32 [#allocation6], 4
      %s2761 = int_to_ptr.vmem [resolvable:$true] %s2760
      %2763 = dma.vmem_to_hbm [thread:$0]  %s2761, 32, %s6, [#allocation7]
    $region33: #{seq2seq_forward.8} parent=1 // pred_fallthru
      _
    // Predicated region
    $region34: #{seq2seq_forward.8} parent=1 // pred_check
      _
    $region35: #{seq2seq_forward.8} parent=1 // pred_check_branch
      %2765 = sbr.rel (0) target = $region37
    $region36: #{seq2seq_forward.8} parent=1 // pred_region
      _
    $region37: #{seq2seq_forward.8} parent=1 // pred_fallthru
      _
    // Predicated region
    $region38: #{seq2seq_forward.8} parent=1 // pred_check
      _
    $region39: #{seq2seq_forward.8} parent=1 // pred_check_branch
      %2767 = sbr.rel (0) target = $region41
    $region40: #{seq2seq_forward.8} parent=1 // pred_region
      %2768 = dma.done [#allocation5], 32
    $region41: #{seq2seq_forward.8} parent=1 // pred_fallthru
      _
    // Predicated region
    $region42: #{seq2seq_forward.8} parent=1 // pred_check
      _
    $region43: #{seq2seq_forward.8} parent=1 // pred_check_branch
      %2770 = sbr.rel (0) target = $region45
    $region44: #{seq2seq_forward.8} parent=1 // pred_region
      %2771 = dma.done [#allocation7], 32
    $region45: #{seq2seq_forward.8} parent=1 // pred_fallthru
      _
    %2772 = vsyncpa [#allocation5], 1
    %2773 = vsyncpa [#allocation7], 1

</llo_original>
